<compile_context>
chip_gen: v5e
topology: v5e:2x2
jax: 0.10.0
libtpu: 0.0.40
codegen_flags: <defaults>
</compile_context>

<pallas_src>
import jax
import jax.numpy as jnp
from jax import lax
from jax.experimental import pallas as pl
from jax.experimental.pallas import tpu as pltpu

K = 3        # kernel_size
PAD = 1      # padding
EPS = 1e-5   # BatchNorm2d eps
LANE = 128   # TPU lane width


def _bn_relu(acc, gamma, beta, count):
    """Training-mode BatchNorm (per-channel stats over N*H*W) fused to one
    scale/shift, then ReLU.  One-pass statistics (sum and sum-of-squares over
    the same read of acc); everything stays f32."""
    inv_n = 1.0 / count                                   # compile-time const
    mean = jnp.sum(acc, axis=0, keepdims=True) * inv_n    # XLU reduce
    ex2 = jnp.sum(acc * acc, axis=0, keepdims=True) * inv_n
    var = ex2 - mean * mean
    scale = gamma * lax.rsqrt(var + EPS)                  # rsqrt -> EUP slot
    shift = beta - mean * scale
    return jnp.maximum(acc * scale + shift, 0.0)


def resblock_kernel(x_ref,
                    w1_ref, g1_ref, bt1_ref,
                    w2_ref, g2_ref, bt2_ref,
                    out_ref, xpad_ref, h1pad_ref, col_ref):
    N, H, W, C = x_ref.shape
    HP, WP = H + 2 * PAD, W + 2 * PAD
    Cp = xpad_ref.shape[-1]
    NHW = N * H * W

    # --- build the halo- & channel-padded conv1 input in VMEM -------------
    # (the HBM read was the original unpadded, true-C tensor).  Zeroing the
    # whole scratch covers both the 1-px halo and the padded channel tail;
    # it is VMEM-only traffic and tiny compared to the im2col build.
    xpad_ref[...] = jnp.zeros(xpad_ref.shape, xpad_ref.dtype)
    xpad_ref[:, PAD:PAD + H, PAD:PAD + W, 0:C] = x_ref[...]

    def build_col(src_ref):
        # im2col: 9 window copies into aligned 128-lane blocks of col_ref
        # (the f32->bf16 cast rides along with the copy that must happen
        # anyway), so the conv is ONE 9*Cp-deep MXU contraction afterwards.
        for kh in range(K):
            for kw in range(K):
                t = kh * K + kw
                win = src_ref[:, kh:kh + H, kw:kw + W, :].reshape(NHW, Cp)
                col_ref[:, t * Cp:(t + 1) * Cp] = win.astype(col_ref.dtype)

    # --- conv1 -> bn1 -> relu ---------------------------------------------
    build_col(xpad_ref)
    acc1 = jnp.dot(col_ref[...], w1_ref[...],
                   preferred_element_type=jnp.float32)
    h1 = _bn_relu(acc1, g1_ref[...], bt1_ref[...], NHW)

    # Stage h1 into the conv2 padded scratch; zero only the 1-px halo
    # (interior, including padded channels which are exactly 0, is written).
    h1pad_ref[:, 0:PAD, :, :] = jnp.zeros((N, PAD, WP, Cp), h1pad_ref.dtype)
    h1pad_ref[:, PAD + H:HP, :, :] = jnp.zeros((N, PAD, WP, Cp),
                                               h1pad_ref.dtype)
    h1pad_ref[:, :, 0:PAD, :] = jnp.zeros((N, HP, PAD, Cp), h1pad_ref.dtype)
    h1pad_ref[:, :, PAD + W:WP, :] = jnp.zeros((N, HP, PAD, Cp),
                                               h1pad_ref.dtype)
    h1pad_ref[:, PAD:PAD + H, PAD:PAD + W, :] = h1.reshape(N, H, W, Cp)

    # --- conv2 -> bn2 -> relu, residual folded into the same pass ---------
    build_col(h1pad_ref)
    acc2 = jnp.dot(col_ref[...], w2_ref[...],
                   preferred_element_type=jnp.float32)
    res = xpad_ref[:, PAD:PAD + H, PAD:PAD + W, :].reshape(NHW, Cp)  # f32
    out = _bn_relu(acc2, g2_ref[...], bt2_ref[...], NHW) + res

    # Write back only the true C channels (no padded-channel HBM bytes).
    out_ref[...] = out[:, 0:C].reshape(N, H, W, C)


def residual_block(x_nchw, params, conv_dtype=jnp.bfloat16):
    """x_nchw: (N, C, H, W) float32.  Returns (N, C, H, W)."""
    w1, b1, g1, bt1, w2, b2, g2, bt2 = params
    del b1, b2   # conv bias is exactly cancelled by BN mean subtraction

    x = jnp.transpose(x_nchw, (0, 2, 3, 1)).astype(jnp.float32)   # NHWC, true C
    N, H, W, C = x.shape
    assert w1.shape[:2] == (K, K) and w2.shape[:2] == (K, K)
    assert w1.shape[2] == C and w1.shape[3] == C, (
        "residual requires in_channels == out_channels (stride=1, padding=1)")

    Cp = pl.cdiv(C, LANE) * LANE            # lane-dense channel count
    cpad = Cp - C
    HP, WP = H + 2 * PAD, W + 2 * PAD

    def pack_w(w):   # (K,K,Cin,Cout) HWIO -> (K*K*Cp, Cp) im2col weight
        w = jnp.pad(w.astype(jnp.float32),
                    ((0, 0), (0, 0), (0, cpad), (0, cpad)))
        return w.reshape(K * K * Cp, Cp).astype(conv_dtype)

    def pack_v(v):   # (1, C) -> (1, Cp), zero-padded, f32
        return jnp.pad(v.astype(jnp.float32).reshape(1, C), ((0, 0), (0, cpad)))

    args = (x, pack_w(w1), pack_v(g1), pack_v(bt1),
            pack_w(w2), pack_v(g2), pack_v(bt2))

    vmem = pl.BlockSpec(memory_space=pltpu.MemorySpace.VMEM)

    # Everything resident in VMEM (< ~4 MiB at the example shapes).  Explicit
    # scoped limit (v5e defaults to 16 MiB) kept within the v7x guidance
    # (64 MiB physical -> <= ~48 MiB scoped).
    vmem_bytes = 48 * 1024 * 1024

    out = pl.pallas_call(
        resblock_kernel,
        out_shape=jax.ShapeDtypeStruct((N, H, W, C), jnp.float32),
        in_specs=[vmem] * len(args),
        out_specs=vmem,
        scratch_shapes=[
            pltpu.VMEM((N, HP, WP, Cp), jnp.float32),          # padded input
            pltpu.VMEM((N, HP, WP, Cp), jnp.float32),          # padded h1
            pltpu.VMEM((N * H * W, K * K * Cp), conv_dtype),   # im2col buffer
        ],
        compiler_params=pltpu.CompilerParams(vmem_limit_bytes=vmem_bytes),
    )(*args)

    # Single fused layout op back to NCHW (XLA fuses transpose; no channel
    # padding ever hits HBM).
    return jnp.transpose(out, (0, 3, 1, 2))


def ref_forward(x_nchw, params):
    """Plain-JAX reference (includes the conv bias, like the PyTorch module)."""
    w1, b1, g1, bt1, w2, b2, g2, bt2 = params
    x = jnp.transpose(x_nchw, (0, 2, 3, 1)).astype(jnp.float32)

    def conv(x, w, b):
        y = lax.conv_general_dilated(x, w, (1, 1), [(PAD, PAD), (PAD, PAD)],
                                     dimension_numbers=('NHWC', 'HWIO', 'NHWC'))
        return y + b.reshape(1, 1, 1, -1)

    def bn(y, g, bt):
        mean = y.mean(axis=(0, 1, 2), keepdims=True)
        var = ((y - mean) ** 2).mean(axis=(0, 1, 2), keepdims=True)
        return ((y - mean) * lax.rsqrt(var + EPS) * g.reshape(1, 1, 1, -1)
                + bt.reshape(1, 1, 1, -1))

    h = jnp.maximum(bn(conv(x, w1, b1), g1, bt1), 0.0)
    o = jnp.maximum(bn(conv(h, w2, b2), g2, bt2), 0.0)
    o = o + x
    return jnp.transpose(o, (0, 3, 1, 2))


def init_params(key, cin, cout):
    """Deterministic init mirroring nn.Conv2d / nn.BatchNorm2d shapes."""
    k1, k2, k3, k4 = jax.random.split(key, 4)
    bound1 = 1.0 / jnp.sqrt(cin * K * K)
    bound2 = 1.0 / jnp.sqrt(cout * K * K)
    w1 = jax.random.uniform(k1, (K, K, cin, cout), jnp.float32, -bound1, bound1)
    b1 = jax.random.uniform(k2, (1, cout), jnp.float32, -bound1, bound1)
    w2 = jax.random.uniform(k3, (K, K, cout, cout), jnp.float32, -bound2, bound2)
    b2 = jax.random.uniform(k4, (1, cout), jnp.float32, -bound2, bound2)
    g1 = jnp.ones((1, cout), jnp.float32)    # BatchNorm weight (gamma)
    bt1 = jnp.zeros((1, cout), jnp.float32)  # BatchNorm bias (beta)
    g2 = jnp.ones((1, cout), jnp.float32)
    bt2 = jnp.zeros((1, cout), jnp.float32)
    return (w1, b1, g1, bt1, w2, b2, g2, bt2)


if __name__ == "__main__":
    N, C, H, W = 2, 4, 16, 16          # in_channels == out_channels == 4
    key = jax.random.PRNGKey(0)
    kx, kp = jax.random.split(key)
    x = jax.random.normal(kx, (N, C, H, W), jnp.float32)
    params = init_params(kp, C, C)

    ref = ref_forward(x, params)

    # f32 conv operands: tight numerical check of the kernel semantics.
    out32 = jax.block_until_ready(residual_block(x, params,
                                                 conv_dtype=jnp.float32))
    assert out32.shape == (N, C, H, W)
    assert jnp.allclose(out32, ref, rtol=2e-3, atol=2e-3), "f32 mismatch"

    # bf16 conv operands (default, MXU-native fast path): looser tolerance,
    # bounded by bf16 rounding of the conv inputs/weights (BN stays f32).
    out16 = jax.block_until_ready(residual_block(x, params))
    assert out16.shape == (N, C, H, W)
    assert jnp.allclose(out16, ref, rtol=5e-2, atol=8e-2), "bf16 mismatch"

    print("KERNEL_OK")
</pallas_src>

<mosaic_0001>
module attributes {stable_mosaic.version = 11 : i64} {
  func.func @resblock_kernel(%arg0: memref<2x16x16x4xf32, #tpu.memory_space<vmem>>, %arg1: memref<1152x128xf32, #tpu.memory_space<vmem>>, %arg2: memref<1x128xf32, #tpu.memory_space<vmem>>, %arg3: memref<1x128xf32, #tpu.memory_space<vmem>>, %arg4: memref<1152x128xf32, #tpu.memory_space<vmem>>, %arg5: memref<1x128xf32, #tpu.memory_space<vmem>>, %arg6: memref<1x128xf32, #tpu.memory_space<vmem>>, %arg7: memref<2x16x16x4xf32, #tpu.memory_space<vmem>>, %arg8: memref<2x18x18x128xf32, #tpu.memory_space<vmem>>, %arg9: memref<2x18x18x128xf32, #tpu.memory_space<vmem>>, %arg10: memref<512x1152xf32, #tpu.memory_space<vmem>>) attributes {dimension_semantics = [], scalar_prefetch = 0 : i64, scratch_operands = 3 : i64, tpu.core_type = #tpu.core_type<tc>} {
    %cst = arith.constant 0.000000e+00 : f32
    %0 = vector.broadcast %cst : f32 to vector<2x18x18x128xf32>
    %c0 = arith.constant 0 : index
    %c0_0 = arith.constant 0 : index
    %c0_1 = arith.constant 0 : index
    %c0_2 = arith.constant 0 : index
    %1 = vector.load %arg8[%c0, %c0_0, %c0_1, %c0_2] : memref<2x18x18x128xf32, #tpu.memory_space<vmem>>, vector<2x18x18x128xf32>
    tpu.vector_store %arg8[%c0, %c0_0, %c0_1, %c0_2], %0 {strides = array<i32>} : memref<2x18x18x128xf32, #tpu.memory_space<vmem>>, vector<2x18x18x128xf32>,
    %c0_3 = arith.constant 0 : index
    %c0_4 = arith.constant 0 : index
    %c0_5 = arith.constant 0 : index
    %c0_6 = arith.constant 0 : index
    %2 = vector.load %arg0[%c0_3, %c0_4, %c0_5, %c0_6] : memref<2x16x16x4xf32, #tpu.memory_space<vmem>>, vector<2x16x16x4xf32>
    %c0_7 = arith.constant 0 : index
    %c1 = arith.constant 1 : index
    %c1_8 = arith.constant 1 : index
    %c0_9 = arith.constant 0 : index
    %3 = vector.load %arg8[%c0_7, %c1, %c1_8, %c0_9] : memref<2x18x18x128xf32, #tpu.memory_space<vmem>>, vector<2x16x16x4xf32>
    tpu.vector_store %arg8[%c0_7, %c1, %c1_8, %c0_9], %2 {strides = array<i32>} : memref<2x18x18x128xf32, #tpu.memory_space<vmem>>, vector<2x16x16x4xf32>,
    %c0_10 = arith.constant 0 : index
    %c0_11 = arith.constant 0 : index
    %c0_12 = arith.constant 0 : index
    %c0_13 = arith.constant 0 : index
    %4 = vector.load %arg8[%c0_10, %c0_11, %c0_12, %c0_13] : memref<2x18x18x128xf32, #tpu.memory_space<vmem>>, vector<2x16x16x128xf32>
    %5 = vector.shape_cast %4 : vector<2x16x16x128xf32> to vector<512x128xf32>
    %c0_14 = arith.constant 0 : index
    %c0_15 = arith.constant 0 : index
    %6 = vector.load %arg10[%c0_14, %c0_15] : memref<512x1152xf32, #tpu.memory_space<vmem>>, vector<512x128xf32>
    tpu.vector_store %arg10[%c0_14, %c0_15], %5 {strides = array<i32>} : memref<512x1152xf32, #tpu.memory_space<vmem>>, vector<512x128xf32>,
    %c0_16 = arith.constant 0 : index
    %c0_17 = arith.constant 0 : index
    %c1_18 = arith.constant 1 : index
    %c0_19 = arith.constant 0 : index
    %7 = vector.load %arg8[%c0_16, %c0_17, %c1_18, %c0_19] : memref<2x18x18x128xf32, #tpu.memory_space<vmem>>, vector<2x16x16x128xf32>
    %8 = vector.shape_cast %7 : vector<2x16x16x128xf32> to vector<512x128xf32>
    %c0_20 = arith.constant 0 : index
    %c128 = arith.constant 128 : index
    %9 = vector.load %arg10[%c0_20, %c128] : memref<512x1152xf32, #tpu.memory_space<vmem>>, vector<512x128xf32>
    tpu.vector_store %arg10[%c0_20, %c128], %8 {strides = array<i32>} : memref<512x1152xf32, #tpu.memory_space<vmem>>, vector<512x128xf32>,
    %c0_21 = arith.constant 0 : index
    %c0_22 = arith.constant 0 : index
    %c2 = arith.constant 2 : index
    %c0_23 = arith.constant 0 : index
    %10 = vector.load %arg8[%c0_21, %c0_22, %c2, %c0_23] : memref<2x18x18x128xf32, #tpu.memory_space<vmem>>, vector<2x16x16x128xf32>
    %11 = vector.shape_cast %10 : vector<2x16x16x128xf32> to vector<512x128xf32>
    %c0_24 = arith.constant 0 : index
    %c256 = arith.constant 256 : index
    %12 = vector.load %arg10[%c0_24, %c256] : memref<512x1152xf32, #tpu.memory_space<vmem>>, vector<512x128xf32>
    tpu.vector_store %arg10[%c0_24, %c256], %11 {strides = array<i32>} : memref<512x1152xf32, #tpu.memory_space<vmem>>, vector<512x128xf32>,
    %c0_25 = arith.constant 0 : index
    %c1_26 = arith.constant 1 : index
    %c0_27 = arith.constant 0 : index
    %c0_28 = arith.constant 0 : index
    %13 = vector.load %arg8[%c0_25, %c1_26, %c0_27, %c0_28] : memref<2x18x18x128xf32, #tpu.memory_space<vmem>>, vector<2x16x16x128xf32>
    %14 = vector.shape_cast %13 : vector<2x16x16x128xf32> to vector<512x128xf32>
    %c0_29 = arith.constant 0 : index
    %c384 = arith.constant 384 : index
    %15 = vector.load %arg10[%c0_29, %c384] : memref<512x1152xf32, #tpu.memory_space<vmem>>, vector<512x128xf32>
    tpu.vector_store %arg10[%c0_29, %c384], %14 {strides = array<i32>} : memref<512x1152xf32, #tpu.memory_space<vmem>>, vector<512x128xf32>,
    %c0_30 = arith.constant 0 : index
    %c1_31 = arith.constant 1 : index
    %c1_32 = arith.constant 1 : index
    %c0_33 = arith.constant 0 : index
    %16 = vector.load %arg8[%c0_30, %c1_31, %c1_32, %c0_33] : memref<2x18x18x128xf32, #tpu.memory_space<vmem>>, vector<2x16x16x128xf32>
    %17 = vector.shape_cast %16 : vector<2x16x16x128xf32> to vector<512x128xf32>
    %c0_34 = arith.constant 0 : index
    %c512 = arith.constant 512 : index
    %18 = vector.load %arg10[%c0_34, %c512] : memref<512x1152xf32, #tpu.memory_space<vmem>>, vector<512x128xf32>
    tpu.vector_store %arg10[%c0_34, %c512], %17 {strides = array<i32>} : memref<512x1152xf32, #tpu.memory_space<vmem>>, vector<512x128xf32>,
    %c0_35 = arith.constant 0 : index
    %c1_36 = arith.constant 1 : index
    %c2_37 = arith.constant 2 : index
    %c0_38 = arith.constant 0 : index
    %19 = vector.load %arg8[%c0_35, %c1_36, %c2_37, %c0_38] : memref<2x18x18x128xf32, #tpu.memory_space<vmem>>, vector<2x16x16x128xf32>
    %20 = vector.shape_cast %19 : vector<2x16x16x128xf32> to vector<512x128xf32>
    %c0_39 = arith.constant 0 : index
    %c640 = arith.constant 640 : index
    %21 = vector.load %arg10[%c0_39, %c640] : memref<512x1152xf32, #tpu.memory_space<vmem>>, vector<512x128xf32>
    tpu.vector_store %arg10[%c0_39, %c640], %20 {strides = array<i32>} : memref<512x1152xf32, #tpu.memory_space<vmem>>, vector<512x128xf32>,
    %c0_40 = arith.constant 0 : index
    %c2_41 = arith.constant 2 : index
    %c0_42 = arith.constant 0 : index
    %c0_43 = arith.constant 0 : index
    %22 = vector.load %arg8[%c0_40, %c2_41, %c0_42, %c0_43] : memref<2x18x18x128xf32, #tpu.memory_space<vmem>>, vector<2x16x16x128xf32>
    %23 = vector.shape_cast %22 : vector<2x16x16x128xf32> to vector<512x128xf32>
    %c0_44 = arith.constant 0 : index
    %c768 = arith.constant 768 : index
    %24 = vector.load %arg10[%c0_44, %c768] : memref<512x1152xf32, #tpu.memory_space<vmem>>, vector<512x128xf32>
    tpu.vector_store %arg10[%c0_44, %c768], %23 {strides = array<i32>} : memref<512x1152xf32, #tpu.memory_space<vmem>>, vector<512x128xf32>,
    %c0_45 = arith.constant 0 : index
    %c2_46 = arith.constant 2 : index
    %c1_47 = arith.constant 1 : index
    %c0_48 = arith.constant 0 : index
    %25 = vector.load %arg8[%c0_45, %c2_46, %c1_47, %c0_48] : memref<2x18x18x128xf32, #tpu.memory_space<vmem>>, vector<2x16x16x128xf32>
    %26 = vector.shape_cast %25 : vector<2x16x16x128xf32> to vector<512x128xf32>
    %c0_49 = arith.constant 0 : index
    %c896 = arith.constant 896 : index
    %27 = vector.load %arg10[%c0_49, %c896] : memref<512x1152xf32, #tpu.memory_space<vmem>>, vector<512x128xf32>
    tpu.vector_store %arg10[%c0_49, %c896], %26 {strides = array<i32>} : memref<512x1152xf32, #tpu.memory_space<vmem>>, vector<512x128xf32>,
    %c0_50 = arith.constant 0 : index
    %c2_51 = arith.constant 2 : index
    %c2_52 = arith.constant 2 : index
    %c0_53 = arith.constant 0 : index
    %28 = vector.load %arg8[%c0_50, %c2_51, %c2_52, %c0_53] : memref<2x18x18x128xf32, #tpu.memory_space<vmem>>, vector<2x16x16x128xf32>
    %29 = vector.shape_cast %28 : vector<2x16x16x128xf32> to vector<512x128xf32>
    %c0_54 = arith.constant 0 : index
    %c1024 = arith.constant 1024 : index
    %30 = vector.load %arg10[%c0_54, %c1024] : memref<512x1152xf32, #tpu.memory_space<vmem>>, vector<512x128xf32>
    tpu.vector_store %arg10[%c0_54, %c1024], %29 {strides = array<i32>} : memref<512x1152xf32, #tpu.memory_space<vmem>>, vector<512x128xf32>,
    %c0_55 = arith.constant 0 : index
    %c0_56 = arith.constant 0 : index
    %31 = vector.load %arg10[%c0_55, %c0_56] : memref<512x1152xf32, #tpu.memory_space<vmem>>, vector<512x1152xf32>
    %c0_57 = arith.constant 0 : index
    %c0_58 = arith.constant 0 : index
    %32 = vector.load %arg1[%c0_57, %c0_58] : memref<1152x128xf32, #tpu.memory_space<vmem>>, vector<1152x128xf32>
    %cst_59 = arith.constant dense<0.000000e+00> : vector<512x128xf32>
    %33 = tpu.matmul %31, %32, %cst_59 {dimension_numbers = #tpu.dot_dimension_numbers<[1], [0], [0], [1], [0, 0, 1, 1], [], []>} : vector<512x1152xf32>, vector<1152x128xf32>, vector<512x128xf32> -> vector<512x128xf32>
    %c0_60 = arith.constant 0 : index
    %c0_61 = arith.constant 0 : index
    %34 = vector.load %arg2[%c0_60, %c0_61] : memref<1x128xf32, #tpu.memory_space<vmem>>, vector<1x128xf32>
    %c0_62 = arith.constant 0 : index
    %c0_63 = arith.constant 0 : index
    %35 = vector.load %arg3[%c0_62, %c0_63] : memref<1x128xf32, #tpu.memory_space<vmem>>, vector<1x128xf32>
    %cst_64 = arith.constant dense<0.000000e+00> : vector<128xf32>
    %36 = vector.multi_reduction <add>, %33, %cst_64 [0] : vector<512x128xf32> to vector<128xf32>
    %37 = vector.shape_cast %36 : vector<128xf32> to vector<1x128xf32>
    %cst_65 = arith.constant 0.001953125 : f32
    %38 = vector.broadcast %cst_65 : f32 to vector<1x128xf32>
    %39 = arith.mulf %37, %38 : vector<1x128xf32>
    %40 = arith.mulf %33, %33 : vector<512x128xf32>
    %cst_66 = arith.constant dense<0.000000e+00> : vector<128xf32>
    %41 = vector.multi_reduction <add>, %40, %cst_66 [0] : vector<512x128xf32> to vector<128xf32>
    %42 = vector.shape_cast %41 : vector<128xf32> to vector<1x128xf32>
    %cst_67 = arith.constant 0.001953125 : f32
    %43 = vector.broadcast %cst_67 : f32 to vector<1x128xf32>
    %44 = arith.mulf %42, %43 : vector<1x128xf32>
    %45 = arith.mulf %39, %39 : vector<1x128xf32>
    %46 = arith.subf %44, %45 : vector<1x128xf32>
    %cst_68 = arith.constant 9.99999974E-6 : f32
    %47 = vector.broadcast %cst_68 : f32 to vector<1x128xf32>
    %48 = arith.addf %46, %47 : vector<1x128xf32>
    %49 = math.rsqrt %48 : vector<1x128xf32>
    %50 = arith.mulf %34, %49 : vector<1x128xf32>
    %51 = arith.mulf %39, %50 : vector<1x128xf32>
    %52 = arith.subf %35, %51 : vector<1x128xf32>
    %53 = vector.broadcast %50 : vector<1x128xf32> to vector<512x128xf32>
    %54 = arith.mulf %33, %53 : vector<512x128xf32>
    %55 = vector.broadcast %52 : vector<1x128xf32> to vector<512x128xf32>
    %56 = arith.addf %54, %55 : vector<512x128xf32>
    %cst_69 = arith.constant 0.000000e+00 : f32
    %57 = vector.broadcast %cst_69 : f32 to vector<512x128xf32>
    %58 = arith.maximumf %56, %57 : vector<512x128xf32>
    %cst_70 = arith.constant 0.000000e+00 : f32
    %59 = vector.broadcast %cst_70 : f32 to vector<2x1x18x128xf32>
    %c0_71 = arith.constant 0 : index
    %c0_72 = arith.constant 0 : index
    %c0_73 = arith.constant 0 : index
    %c0_74 = arith.constant 0 : index
    %60 = vector.load %arg9[%c0_71, %c0_72, %c0_73, %c0_74] : memref<2x18x18x128xf32, #tpu.memory_space<vmem>>, vector<2x1x18x128xf32>
    tpu.vector_store %arg9[%c0_71, %c0_72, %c0_73, %c0_74], %59 {strides = array<i32>} : memref<2x18x18x128xf32, #tpu.memory_space<vmem>>, vector<2x1x18x128xf32>,
    %cst_75 = arith.constant 0.000000e+00 : f32
    %61 = vector.broadcast %cst_75 : f32 to vector<2x1x18x128xf32>
    %c0_76 = arith.constant 0 : index
    %c17 = arith.constant 17 : index
    %c0_77 = arith.constant 0 : index
    %c0_78 = arith.constant 0 : index
    %62 = vector.load %arg9[%c0_76, %c17, %c0_77, %c0_78] : memref<2x18x18x128xf32, #tpu.memory_space<vmem>>, vector<2x1x18x128xf32>
    tpu.vector_store %arg9[%c0_76, %c17, %c0_77, %c0_78], %61 {strides = array<i32>} : memref<2x18x18x128xf32, #tpu.memory_space<vmem>>, vector<2x1x18x128xf32>,
    %cst_79 = arith.constant 0.000000e+00 : f32
    %63 = vector.broadcast %cst_79 : f32 to vector<2x18x1x128xf32>
    %c0_80 = arith.constant 0 : index
    %c0_81 = arith.constant 0 : index
    %c0_82 = arith.constant 0 : index
    %c0_83 = arith.constant 0 : index
    %64 = vector.load %arg9[%c0_80, %c0_81, %c0_82, %c0_83] : memref<2x18x18x128xf32, #tpu.memory_space<vmem>>, vector<2x18x1x128xf32>
    tpu.vector_store %arg9[%c0_80, %c0_81, %c0_82, %c0_83], %63 {strides = array<i32>} : memref<2x18x18x128xf32, #tpu.memory_space<vmem>>, vector<2x18x1x128xf32>,
    %cst_84 = arith.constant 0.000000e+00 : f32
    %65 = vector.broadcast %cst_84 : f32 to vector<2x18x1x128xf32>
    %c0_85 = arith.constant 0 : index
    %c0_86 = arith.constant 0 : index
    %c17_87 = arith.constant 17 : index
    %c0_88 = arith.constant 0 : index
    %66 = vector.load %arg9[%c0_85, %c0_86, %c17_87, %c0_88] : memref<2x18x18x128xf32, #tpu.memory_space<vmem>>, vector<2x18x1x128xf32>
    tpu.vector_store %arg9[%c0_85, %c0_86, %c17_87, %c0_88], %65 {strides = array<i32>} : memref<2x18x18x128xf32, #tpu.memory_space<vmem>>, vector<2x18x1x128xf32>,
    %67 = vector.shape_cast %58 : vector<512x128xf32> to vector<2x16x16x128xf32>
    %c0_89 = arith.constant 0 : index
    %c1_90 = arith.constant 1 : index
    %c1_91 = arith.constant 1 : index
    %c0_92 = arith.constant 0 : index
    %68 = vector.load %arg9[%c0_89, %c1_90, %c1_91, %c0_92] : memref<2x18x18x128xf32, #tpu.memory_space<vmem>>, vector<2x16x16x128xf32>
    tpu.vector_store %arg9[%c0_89, %c1_90, %c1_91, %c0_92], %67 {strides = array<i32>} : memref<2x18x18x128xf32, #tpu.memory_space<vmem>>, vector<2x16x16x128xf32>,
    %c0_93 = arith.constant 0 : index
    %c0_94 = arith.constant 0 : index
    %c0_95 = arith.constant 0 : index
    %c0_96 = arith.constant 0 : index
    %69 = vector.load %arg9[%c0_93, %c0_94, %c0_95, %c0_96] : memref<2x18x18x128xf32, #tpu.memory_space<vmem>>, vector<2x16x16x128xf32>
    %70 = vector.shape_cast %69 : vector<2x16x16x128xf32> to vector<512x128xf32>
    %c0_97 = arith.constant 0 : index
    %c0_98 = arith.constant 0 : index
    %71 = vector.load %arg10[%c0_97, %c0_98] : memref<512x1152xf32, #tpu.memory_space<vmem>>, vector<512x128xf32>
    tpu.vector_store %arg10[%c0_97, %c0_98], %70 {strides = array<i32>} : memref<512x1152xf32, #tpu.memory_space<vmem>>, vector<512x128xf32>,
    %c0_99 = arith.constant 0 : index
    %c0_100 = arith.constant 0 : index
    %c1_101 = arith.constant 1 : index
    %c0_102 = arith.constant 0 : index
    %72 = vector.load %arg9[%c0_99, %c0_100, %c1_101, %c0_102] : memref<2x18x18x128xf32, #tpu.memory_space<vmem>>, vector<2x16x16x128xf32>
    %73 = vector.shape_cast %72 : vector<2x16x16x128xf32> to vector<512x128xf32>
    %c0_103 = arith.constant 0 : index
    %c128_104 = arith.constant 128 : index
    %74 = vector.load %arg10[%c0_103, %c128_104] : memref<512x1152xf32, #tpu.memory_space<vmem>>, vector<512x128xf32>
    tpu.vector_store %arg10[%c0_103, %c128_104], %73 {strides = array<i32>} : memref<512x1152xf32, #tpu.memory_space<vmem>>, vector<512x128xf32>,
    %c0_105 = arith.constant 0 : index
    %c0_106 = arith.constant 0 : index
    %c2_107 = arith.constant 2 : index
    %c0_108 = arith.constant 0 : index
    %75 = vector.load %arg9[%c0_105, %c0_106, %c2_107, %c0_108] : memref<2x18x18x128xf32, #tpu.memory_space<vmem>>, vector<2x16x16x128xf32>
    %76 = vector.shape_cast %75 : vector<2x16x16x128xf32> to vector<512x128xf32>
    %c0_109 = arith.constant 0 : index
    %c256_110 = arith.constant 256 : index
    %77 = vector.load %arg10[%c0_109, %c256_110] : memref<512x1152xf32, #tpu.memory_space<vmem>>, vector<512x128xf32>
    tpu.vector_store %arg10[%c0_109, %c256_110], %76 {strides = array<i32>} : memref<512x1152xf32, #tpu.memory_space<vmem>>, vector<512x128xf32>,
    %c0_111 = arith.constant 0 : index
    %c1_112 = arith.constant 1 : index
    %c0_113 = arith.constant 0 : index
    %c0_114 = arith.constant 0 : index
    %78 = vector.load %arg9[%c0_111, %c1_112, %c0_113, %c0_114] : memref<2x18x18x128xf32, #tpu.memory_space<vmem>>, vector<2x16x16x128xf32>
    %79 = vector.shape_cast %78 : vector<2x16x16x128xf32> to vector<512x128xf32>
    %c0_115 = arith.constant 0 : index
    %c384_116 = arith.constant 384 : index
    %80 = vector.load %arg10[%c0_115, %c384_116] : memref<512x1152xf32, #tpu.memory_space<vmem>>, vector<512x128xf32>
    tpu.vector_store %arg10[%c0_115, %c384_116], %79 {strides = array<i32>} : memref<512x1152xf32, #tpu.memory_space<vmem>>, vector<512x128xf32>,
    %c0_117 = arith.constant 0 : index
    %c1_118 = arith.constant 1 : index
    %c1_119 = arith.constant 1 : index
    %c0_120 = arith.constant 0 : index
    %81 = vector.load %arg9[%c0_117, %c1_118, %c1_119, %c0_120] : memref<2x18x18x128xf32, #tpu.memory_space<vmem>>, vector<2x16x16x128xf32>
    %82 = vector.shape_cast %81 : vector<2x16x16x128xf32> to vector<512x128xf32>
    %c0_121 = arith.constant 0 : index
    %c512_122 = arith.constant 512 : index
    %83 = vector.load %arg10[%c0_121, %c512_122] : memref<512x1152xf32, #tpu.memory_space<vmem>>, vector<512x128xf32>
    tpu.vector_store %arg10[%c0_121, %c512_122], %82 {strides = array<i32>} : memref<512x1152xf32, #tpu.memory_space<vmem>>, vector<512x128xf32>,
    %c0_123 = arith.constant 0 : index
    %c1_124 = arith.constant 1 : index
    %c2_125 = arith.constant 2 : index
    %c0_126 = arith.constant 0 : index
    %84 = vector.load %arg9[%c0_123, %c1_124, %c2_125, %c0_126] : memref<2x18x18x128xf32, #tpu.memory_space<vmem>>, vector<2x16x16x128xf32>
    %85 = vector.shape_cast %84 : vector<2x16x16x128xf32> to vector<512x128xf32>
    %c0_127 = arith.constant 0 : index
    %c640_128 = arith.constant 640 : index
    %86 = vector.load %arg10[%c0_127, %c640_128] : memref<512x1152xf32, #tpu.memory_space<vmem>>, vector<512x128xf32>
    tpu.vector_store %arg10[%c0_127, %c640_128], %85 {strides = array<i32>} : memref<512x1152xf32, #tpu.memory_space<vmem>>, vector<512x128xf32>,
    %c0_129 = arith.constant 0 : index
    %c2_130 = arith.constant 2 : index
    %c0_131 = arith.constant 0 : index
    %c0_132 = arith.constant 0 : index
    %87 = vector.load %arg9[%c0_129, %c2_130, %c0_131, %c0_132] : memref<2x18x18x128xf32, #tpu.memory_space<vmem>>, vector<2x16x16x128xf32>
    %88 = vector.shape_cast %87 : vector<2x16x16x128xf32> to vector<512x128xf32>
    %c0_133 = arith.constant 0 : index
    %c768_134 = arith.constant 768 : index
    %89 = vector.load %arg10[%c0_133, %c768_134] : memref<512x1152xf32, #tpu.memory_space<vmem>>, vector<512x128xf32>
    tpu.vector_store %arg10[%c0_133, %c768_134], %88 {strides = array<i32>} : memref<512x1152xf32, #tpu.memory_space<vmem>>, vector<512x128xf32>,
    %c0_135 = arith.constant 0 : index
    %c2_136 = arith.constant 2 : index
    %c1_137 = arith.constant 1 : index
    %c0_138 = arith.constant 0 : index
    %90 = vector.load %arg9[%c0_135, %c2_136, %c1_137, %c0_138] : memref<2x18x18x128xf32, #tpu.memory_space<vmem>>, vector<2x16x16x128xf32>
    %91 = vector.shape_cast %90 : vector<2x16x16x128xf32> to vector<512x128xf32>
    %c0_139 = arith.constant 0 : index
    %c896_140 = arith.constant 896 : index
    %92 = vector.load %arg10[%c0_139, %c896_140] : memref<512x1152xf32, #tpu.memory_space<vmem>>, vector<512x128xf32>
    tpu.vector_store %arg10[%c0_139, %c896_140], %91 {strides = array<i32>} : memref<512x1152xf32, #tpu.memory_space<vmem>>, vector<512x128xf32>,
    %c0_141 = arith.constant 0 : index
    %c2_142 = arith.constant 2 : index
    %c2_143 = arith.constant 2 : index
    %c0_144 = arith.constant 0 : index
    %93 = vector.load %arg9[%c0_141, %c2_142, %c2_143, %c0_144] : memref<2x18x18x128xf32, #tpu.memory_space<vmem>>, vector<2x16x16x128xf32>
    %94 = vector.shape_cast %93 : vector<2x16x16x128xf32> to vector<512x128xf32>
    %c0_145 = arith.constant 0 : index
    %c1024_146 = arith.constant 1024 : index
    %95 = vector.load %arg10[%c0_145, %c1024_146] : memref<512x1152xf32, #tpu.memory_space<vmem>>, vector<512x128xf32>
    tpu.vector_store %arg10[%c0_145, %c1024_146], %94 {strides = array<i32>} : memref<512x1152xf32, #tpu.memory_space<vmem>>, vector<512x128xf32>,
    %c0_147 = arith.constant 0 : index
    %c0_148 = arith.constant 0 : index
    %96 = vector.load %arg10[%c0_147, %c0_148] : memref<512x1152xf32, #tpu.memory_space<vmem>>, vector<512x1152xf32>
    %c0_149 = arith.constant 0 : index
    %c0_150 = arith.constant 0 : index
    %97 = vector.load %arg4[%c0_149, %c0_150] : memref<1152x128xf32, #tpu.memory_space<vmem>>, vector<1152x128xf32>
    %cst_151 = arith.constant dense<0.000000e+00> : vector<512x128xf32>
    %98 = tpu.matmul %96, %97, %cst_151 {dimension_numbers = #tpu.dot_dimension_numbers<[1], [0], [0], [1], [0, 0, 1, 1], [], []>} : vector<512x1152xf32>, vector<1152x128xf32>, vector<512x128xf32> -> vector<512x128xf32>
    %c0_152 = arith.constant 0 : index
    %c1_153 = arith.constant 1 : index
    %c1_154 = arith.constant 1 : index
    %c0_155 = arith.constant 0 : index
    %99 = vector.load %arg8[%c0_152, %c1_153, %c1_154, %c0_155] : memref<2x18x18x128xf32, #tpu.memory_space<vmem>>, vector<2x16x16x128xf32>
    %100 = vector.shape_cast %99 : vector<2x16x16x128xf32> to vector<512x128xf32>
    %c0_156 = arith.constant 0 : index
    %c0_157 = arith.constant 0 : index
    %101 = vector.load %arg5[%c0_156, %c0_157] : memref<1x128xf32, #tpu.memory_space<vmem>>, vector<1x128xf32>
    %c0_158 = arith.constant 0 : index
    %c0_159 = arith.constant 0 : index
    %102 = vector.load %arg6[%c0_158, %c0_159] : memref<1x128xf32, #tpu.memory_space<vmem>>, vector<1x128xf32>
    %cst_160 = arith.constant dense<0.000000e+00> : vector<128xf32>
    %103 = vector.multi_reduction <add>, %98, %cst_160 [0] : vector<512x128xf32> to vector<128xf32>
    %104 = vector.shape_cast %103 : vector<128xf32> to vector<1x128xf32>
    %cst_161 = arith.constant 0.001953125 : f32
    %105 = vector.broadcast %cst_161 : f32 to vector<1x128xf32>
    %106 = arith.mulf %104, %105 : vector<1x128xf32>
    %107 = arith.mulf %98, %98 : vector<512x128xf32>
    %cst_162 = arith.constant dense<0.000000e+00> : vector<128xf32>
    %108 = vector.multi_reduction <add>, %107, %cst_162 [0] : vector<512x128xf32> to vector<128xf32>
    %109 = vector.shape_cast %108 : vector<128xf32> to vector<1x128xf32>
    %cst_163 = arith.constant 0.001953125 : f32
    %110 = vector.broadcast %cst_163 : f32 to vector<1x128xf32>
    %111 = arith.mulf %109, %110 : vector<1x128xf32>
    %112 = arith.mulf %106, %106 : vector<1x128xf32>
    %113 = arith.subf %111, %112 : vector<1x128xf32>
    %cst_164 = arith.constant 9.99999974E-6 : f32
    %114 = vector.broadcast %cst_164 : f32 to vector<1x128xf32>
    %115 = arith.addf %113, %114 : vector<1x128xf32>
    %116 = math.rsqrt %115 : vector<1x128xf32>
    %117 = arith.mulf %101, %116 : vector<1x128xf32>
    %118 = arith.mulf %106, %117 : vector<1x128xf32>
    %119 = arith.subf %102, %118 : vector<1x128xf32>
    %120 = vector.broadcast %117 : vector<1x128xf32> to vector<512x128xf32>
    %121 = arith.mulf %98, %120 : vector<512x128xf32>
    %122 = vector.broadcast %119 : vector<1x128xf32> to vector<512x128xf32>
    %123 = arith.addf %121, %122 : vector<512x128xf32>
    %cst_165 = arith.constant 0.000000e+00 : f32
    %124 = vector.broadcast %cst_165 : f32 to vector<512x128xf32>
    %125 = arith.maximumf %123, %124 : vector<512x128xf32>
    %126 = arith.addf %125, %100 : vector<512x128xf32>
    %127 = vector.extract_strided_slice %126 {offsets = [0, 0], sizes = [512, 4], strides = [1, 1]} : vector<512x128xf32> to vector<512x4xf32>
    %128 = vector.shape_cast %127 : vector<512x4xf32> to vector<2x16x16x4xf32>
    %c0_166 = arith.constant 0 : index
    %c0_167 = arith.constant 0 : index
    %c0_168 = arith.constant 0 : index
    %c0_169 = arith.constant 0 : index
    %129 = vector.load %arg7[%c0_166, %c0_167, %c0_168, %c0_169] : memref<2x16x16x4xf32, #tpu.memory_space<vmem>>, vector<2x16x16x4xf32>
    tpu.vector_store %arg7[%c0_166, %c0_167, %c0_168, %c0_169], %128 {strides = array<i32>} : memref<2x16x16x4xf32, #tpu.memory_space<vmem>>, vector<2x16x16x4xf32>,
    return
  }
}

</mosaic_0001>

<llo_original>
// kernel: tpu_custom_call.1
$region0: #{tpu_custom_call.1}
  #allocation0 [shape = 'u32[]', space=smem, size = 0x4, offset = 0x4, fixed_abs, tag = 'smem constant byte address 0x4 - core index']
  #allocation1 [shape = 'u32[72,128]{1,0:T(1,128)}', space=vmem, size = 0x9000, scoped, tag = 'internal scratch']
  #allocation2 [shape = 'f32[2,18,18,128]{3,2,1,0:T(8,128)}', space=vmem, size = 0x6c000, scoped, tag = 'scratch operand']
  #allocation3 [shape = 'f32[2,18,18,128]{3,2,1,0:T(8,128)}', space=vmem, size = 0x6c000, scoped, tag = 'scratch operand']
  #allocation4 [shape = 'f32[512,1152]{1,0:T(8,128)}', space=vmem, size = 0x240000, scoped, tag = 'scratch operand']
  %s0 = inlined_call_operand.vmem [shape: f32[2,16,16,4], index: 0, kind: input, shape index: {}]
  %s1 = inlined_call_operand.hbm [shape: f32[1152,128], index: 1, kind: input, shape index: {}]
  %s2 = inlined_call_operand.vmem [shape: f32[1,128], index: 2, kind: input, shape index: {}]
  %s3 = inlined_call_operand.vmem [shape: f32[1,128], index: 3, kind: input, shape index: {}]
  %s4 = inlined_call_operand.hbm [shape: f32[1152,128], index: 4, kind: input, shape index: {}]
  %s5 = inlined_call_operand.vmem [shape: f32[1,128], index: 5, kind: input, shape index: {}]
  %s6 = inlined_call_operand.vmem [shape: f32[1,128], index: 6, kind: input, shape index: {}]
  %s7 = inlined_call_operand.vmem [shape: f32[2,16,16,4], index: 7, kind: output, shape index: {}]
  %s8 = sld [smem:[#allocation0]]
  $region46: #{tpu_custom_call.1} parent=0
    _
  %s10 = ssub.s32 1, %s8
  %s11 = scalar_select 0, %s10, %s8
  $region1: #{tpu_custom_call.1} parent=0
    #allocation5 [shape = 'u8[589824]{0}', space=vmem, size = 0x90000, scoped, tag = 'input window, operand 1, single buffered']
    #allocation6 [shape = 's32[1]{0}', space=sflag, size = 0x4, scoped, tag = 'scoped memory for tpu_custom_call.1']
    #allocation7 [shape = 'u8[589824]{0}', space=vmem, size = 0x90000, scoped, tag = 'input window, operand 4, single buffered']
    #allocation8 [shape = 's32[1]{0}', space=sflag, size = 0x4, scoped, tag = 'scoped memory for tpu_custom_call.1']
    %12 = vsyncpa [#allocation6], 0
    %13 = vsyncpa [#allocation8], 0
    // Predicated region
    $region2: #{tpu_custom_call.1} parent=1 // pred_check
      _
    $region3: #{tpu_custom_call.1} parent=1 // pred_check_branch
      %15 = sbr.rel (0) target = $region5
    $region4: #{tpu_custom_call.1} parent=1 // pred_region
      _
    $region5: #{tpu_custom_call.1} parent=1 // pred_fallthru
      _
    // Predicated region
    $region6: #{tpu_custom_call.1} parent=1 // pred_check
      _
    $region7: #{tpu_custom_call.1} parent=1 // pred_check_branch
      %17 = sbr.rel (0) target = $region9
    $region8: #{tpu_custom_call.1} parent=1 // pred_region
      %19 = vsyncadd [#allocation6], 0
      %s20 = sshll.u32 %s1, 4
      %s21 = int_to_ptr.hbm [resolvable:$true] %s20
      %s22 = sshll.u32 [#allocation5], 4
      %s23 = int_to_ptr.vmem [resolvable:$true] %s22
      %28 = dma.hbm_to_vmem [thread:$0]  %s21, 18432, %s23, [#allocation6], 128, 128, 8
    $region9: #{tpu_custom_call.1} parent=1 // pred_fallthru
      _
    // Predicated region
    $region10: #{tpu_custom_call.1} parent=1 // pred_check
      _
    $region11: #{tpu_custom_call.1} parent=1 // pred_check_branch
      %30 = sbr.rel (0) target = $region13
    $region12: #{tpu_custom_call.1} parent=1 // pred_region
      _
    $region13: #{tpu_custom_call.1} parent=1 // pred_fallthru
      _
    // Predicated region
    $region14: #{tpu_custom_call.1} parent=1 // pred_check
      _
    $region15: #{tpu_custom_call.1} parent=1 // pred_check_branch
      %32 = sbr.rel (0) target = $region17
    $region16: #{tpu_custom_call.1} parent=1 // pred_region
      _
    $region17: #{tpu_custom_call.1} parent=1 // pred_fallthru
      _
    // Predicated region
    $region18: #{tpu_custom_call.1} parent=1 // pred_check
      _
    $region19: #{tpu_custom_call.1} parent=1 // pred_check_branch
      %34 = sbr.rel (0) target = $region21
    $region20: #{tpu_custom_call.1} parent=1 // pred_region
      %36 = vsyncadd [#allocation8], 0
      %s37 = sshll.u32 %s4, 4
      %s38 = int_to_ptr.hbm [resolvable:$true] %s37
      %s39 = sshll.u32 [#allocation7], 4
      %s40 = int_to_ptr.vmem [resolvable:$true] %s39
      %45 = dma.hbm_to_vmem [thread:$0]  %s38, 18432, %s40, [#allocation8], 128, 128, 8
    $region21: #{tpu_custom_call.1} parent=1 // pred_fallthru
      _
    // Predicated region
    $region22: #{tpu_custom_call.1} parent=1 // pred_check
      _
    $region23: #{tpu_custom_call.1} parent=1 // pred_check_branch
      %47 = sbr.rel (0) target = $region25
    $region24: #{tpu_custom_call.1} parent=1 // pred_region
      _
    $region25: #{tpu_custom_call.1} parent=1 // pred_fallthru
      _
    // Predicated region
    $region26: #{tpu_custom_call.1} parent=1 // pred_check
      _
    $region27: #{tpu_custom_call.1} parent=1 // pred_check_branch
      %49 = sbr.rel (0) target = $region29
    $region28: #{tpu_custom_call.1} parent=1 // pred_region
      _
    $region29: #{tpu_custom_call.1} parent=1 // pred_fallthru
      _
    // Predicated region
    $region30: #{tpu_custom_call.1} parent=1 // pred_check
      _
    $region31: #{tpu_custom_call.1} parent=1 // pred_check_branch
      %51 = sbr.rel (0) target = $region33
    $region32: #{tpu_custom_call.1} parent=1 // pred_region
      %53 = dma.done [#allocation6], 18432
    $region33: #{tpu_custom_call.1} parent=1 // pred_fallthru
      _
    // Predicated region
    $region34: #{tpu_custom_call.1} parent=1 // pred_check
      _
    $region35: #{tpu_custom_call.1} parent=1 // pred_check_branch
      %55 = sbr.rel (0) target = $region37
    $region36: #{tpu_custom_call.1} parent=1 // pred_region
      %57 = dma.done [#allocation8], 18432
    $region37: #{tpu_custom_call.1} parent=1 // pred_fallthru
      _
    %58 = vst [vmem:[#allocation2] sm:$0xff] 0.0
    %59 = vst [vmem:[#allocation2 + $0x8] sm:$0xff] 0.0
    %60 = vst [vmem:[#allocation2 + $0x10] sm:$0x3] 0.0
    %61 = vst [vmem:[#allocation2 + $0x18] sm:$0xff] 0.0
    %62 = vst [vmem:[#allocation2 + $0x20] sm:$0xff] 0.0
    %63 = vst [vmem:[#allocation2 + $0x28] sm:$0x3] 0.0
    %64 = vst [vmem:[#allocation2 + $0x30] sm:$0xff] 0.0
    %65 = vst [vmem:[#allocation2 + $0x38] sm:$0xff] 0.0
    %66 = vst [vmem:[#allocation2 + $0x40] sm:$0x3] 0.0
    %67 = vst [vmem:[#allocation2 + $0x48] sm:$0xff] 0.0
    %68 = vst [vmem:[#allocation2 + $0x50] sm:$0xff] 0.0
    %69 = vst [vmem:[#allocation2 + $0x58] sm:$0x3] 0.0
    %70 = vst [vmem:[#allocation2 + $0x60] sm:$0xff] 0.0
    %71 = vst [vmem:[#allocation2 + $0x68] sm:$0xff] 0.0
    %72 = vst [vmem:[#allocation2 + $0x70] sm:$0x3] 0.0
    %73 = vst [vmem:[#allocation2 + $0x78] sm:$0xff] 0.0
    %74 = vst [vmem:[#allocation2 + $0x80] sm:$0xff] 0.0
    %75 = vst [vmem:[#allocation2 + $0x88] sm:$0x3] 0.0
    %76 = vst [vmem:[#allocation2 + $0x90] sm:$0xff] 0.0
    %77 = vst [vmem:[#allocation2 + $0x98] sm:$0xff] 0.0
    %78 = vst [vmem:[#allocation2 + $0xa0] sm:$0x3] 0.0
    %79 = vst [vmem:[#allocation2 + $0xa8] sm:$0xff] 0.0
    %80 = vst [vmem:[#allocation2 + $0xb0] sm:$0xff] 0.0
    %81 = vst [vmem:[#allocation2 + $0xb8] sm:$0x3] 0.0
    %82 = vst [vmem:[#allocation2 + $0xc0] sm:$0xff] 0.0
    %83 = vst [vmem:[#allocation2 + $0xc8] sm:$0xff] 0.0
    %84 = vst [vmem:[#allocation2 + $0xd0] sm:$0x3] 0.0
    %85 = vst [vmem:[#allocation2 + $0xd8] sm:$0xff] 0.0
    %86 = vst [vmem:[#allocation2 + $0xe0] sm:$0xff] 0.0
    %87 = vst [vmem:[#allocation2 + $0xe8] sm:$0x3] 0.0
    %88 = vst [vmem:[#allocation2 + $0xf0] sm:$0xff] 0.0
    %89 = vst [vmem:[#allocation2 + $0xf8] sm:$0xff] 0.0
    %90 = vst [vmem:[#allocation2 + $0x100] sm:$0x3] 0.0
    %91 = vst [vmem:[#allocation2 + $0x108] sm:$0xff] 0.0
    %92 = vst [vmem:[#allocation2 + $0x110] sm:$0xff] 0.0
    %93 = vst [vmem:[#allocation2 + $0x118] sm:$0x3] 0.0
    %94 = vst [vmem:[#allocation2 + $0x120] sm:$0xff] 0.0
    %95 = vst [vmem:[#allocation2 + $0x128] sm:$0xff] 0.0
    %96 = vst [vmem:[#allocation2 + $0x130] sm:$0x3] 0.0
    %97 = vst [vmem:[#allocation2 + $0x138] sm:$0xff] 0.0
    %98 = vst [vmem:[#allocation2 + $0x140] sm:$0xff] 0.0
    %99 = vst [vmem:[#allocation2 + $0x148] sm:$0x3] 0.0
    %100 = vst [vmem:[#allocation2 + $0x150] sm:$0xff] 0.0
    %101 = vst [vmem:[#allocation2 + $0x158] sm:$0xff] 0.0
    %102 = vst [vmem:[#allocation2 + $0x160] sm:$0x3] 0.0
    %103 = vst [vmem:[#allocation2 + $0x168] sm:$0xff] 0.0
    %104 = vst [vmem:[#allocation2 + $0x170] sm:$0xff] 0.0
    %105 = vst [vmem:[#allocation2 + $0x178] sm:$0x3] 0.0
    %106 = vst [vmem:[#allocation2 + $0x180] sm:$0xff] 0.0
    %107 = vst [vmem:[#allocation2 + $0x188] sm:$0xff] 0.0
    %108 = vst [vmem:[#allocation2 + $0x190] sm:$0x3] 0.0
    %109 = vst [vmem:[#allocation2 + $0x198] sm:$0xff] 0.0
    %110 = vst [vmem:[#allocation2 + $0x1a0] sm:$0xff] 0.0
    %111 = vst [vmem:[#allocation2 + $0x1a8] sm:$0x3] 0.0
    %112 = vst [vmem:[#allocation2 + $0x1b0] sm:$0xff] 0.0
    %113 = vst [vmem:[#allocation2 + $0x1b8] sm:$0xff] 0.0
    %114 = vst [vmem:[#allocation2 + $0x1c0] sm:$0x3] 0.0
    %115 = vst [vmem:[#allocation2 + $0x1c8] sm:$0xff] 0.0
    %116 = vst [vmem:[#allocation2 + $0x1d0] sm:$0xff] 0.0
    %117 = vst [vmem:[#allocation2 + $0x1d8] sm:$0x3] 0.0
    %118 = vst [vmem:[#allocation2 + $0x1e0] sm:$0xff] 0.0
    %119 = vst [vmem:[#allocation2 + $0x1e8] sm:$0xff] 0.0
    %120 = vst [vmem:[#allocation2 + $0x1f0] sm:$0x3] 0.0
    %121 = vst [vmem:[#allocation2 + $0x1f8] sm:$0xff] 0.0
    %122 = vst [vmem:[#allocation2 + $0x200] sm:$0xff] 0.0
    %123 = vst [vmem:[#allocation2 + $0x208] sm:$0x3] 0.0
    %124 = vst [vmem:[#allocation2 + $0x210] sm:$0xff] 0.0
    %125 = vst [vmem:[#allocation2 + $0x218] sm:$0xff] 0.0
    %126 = vst [vmem:[#allocation2 + $0x220] sm:$0x3] 0.0
    %127 = vst [vmem:[#allocation2 + $0x228] sm:$0xff] 0.0
    %128 = vst [vmem:[#allocation2 + $0x230] sm:$0xff] 0.0
    %129 = vst [vmem:[#allocation2 + $0x238] sm:$0x3] 0.0
    %130 = vst [vmem:[#allocation2 + $0x240] sm:$0xff] 0.0
    %131 = vst [vmem:[#allocation2 + $0x248] sm:$0xff] 0.0
    %132 = vst [vmem:[#allocation2 + $0x250] sm:$0x3] 0.0
    %133 = vst [vmem:[#allocation2 + $0x258] sm:$0xff] 0.0
    %134 = vst [vmem:[#allocation2 + $0x260] sm:$0xff] 0.0
    %135 = vst [vmem:[#allocation2 + $0x268] sm:$0x3] 0.0
    %136 = vst [vmem:[#allocation2 + $0x270] sm:$0xff] 0.0
    %137 = vst [vmem:[#allocation2 + $0x278] sm:$0xff] 0.0
    %138 = vst [vmem:[#allocation2 + $0x280] sm:$0x3] 0.0
    %139 = vst [vmem:[#allocation2 + $0x288] sm:$0xff] 0.0
    %140 = vst [vmem:[#allocation2 + $0x290] sm:$0xff] 0.0
    %141 = vst [vmem:[#allocation2 + $0x298] sm:$0x3] 0.0
    %142 = vst [vmem:[#allocation2 + $0x2a0] sm:$0xff] 0.0
    %143 = vst [vmem:[#allocation2 + $0x2a8] sm:$0xff] 0.0
    %144 = vst [vmem:[#allocation2 + $0x2b0] sm:$0x3] 0.0
    %145 = vst [vmem:[#allocation2 + $0x2b8] sm:$0xff] 0.0
    %146 = vst [vmem:[#allocation2 + $0x2c0] sm:$0xff] 0.0
    %147 = vst [vmem:[#allocation2 + $0x2c8] sm:$0x3] 0.0
    %148 = vst [vmem:[#allocation2 + $0x2d0] sm:$0xff] 0.0
    %149 = vst [vmem:[#allocation2 + $0x2d8] sm:$0xff] 0.0
    %150 = vst [vmem:[#allocation2 + $0x2e0] sm:$0x3] 0.0
    %151 = vst [vmem:[#allocation2 + $0x2e8] sm:$0xff] 0.0
    %152 = vst [vmem:[#allocation2 + $0x2f0] sm:$0xff] 0.0
    %153 = vst [vmem:[#allocation2 + $0x2f8] sm:$0x3] 0.0
    %154 = vst [vmem:[#allocation2 + $0x300] sm:$0xff] 0.0
    %155 = vst [vmem:[#allocation2 + $0x308] sm:$0xff] 0.0
    %156 = vst [vmem:[#allocation2 + $0x310] sm:$0x3] 0.0
    %157 = vst [vmem:[#allocation2 + $0x318] sm:$0xff] 0.0
    %158 = vst [vmem:[#allocation2 + $0x320] sm:$0xff] 0.0
    %159 = vst [vmem:[#allocation2 + $0x328] sm:$0x3] 0.0
    %160 = vst [vmem:[#allocation2 + $0x330] sm:$0xff] 0.0
    %161 = vst [vmem:[#allocation2 + $0x338] sm:$0xff] 0.0
    %162 = vst [vmem:[#allocation2 + $0x340] sm:$0x3] 0.0
    %163 = vst [vmem:[#allocation2 + $0x348] sm:$0xff] 0.0
    %164 = vst [vmem:[#allocation2 + $0x350] sm:$0xff] 0.0
    %165 = vst [vmem:[#allocation2 + $0x358] sm:$0x3] 0.0
    %v166 = vld [vmem:[%s0] sm:$0xff]
    %v167 = vld [vmem:[%s0 + $0x8] sm:$0xff]
    %v168 = vld [vmem:[%s0 + $0x10] sm:$0xff]
    %v169 = vld [vmem:[%s0 + $0x18] sm:$0xff]
    %v170 = vld [vmem:[%s0 + $0x20] sm:$0xff]
    %v171 = vld [vmem:[%s0 + $0x28] sm:$0xff]
    %v172 = vld [vmem:[%s0 + $0x30] sm:$0xff]
    %v173 = vld [vmem:[%s0 + $0x38] sm:$0xff]
    %v174 = vld [vmem:[%s0 + $0x40] sm:$0xff]
    %v175 = vld [vmem:[%s0 + $0x48] sm:$0xff]
    %v176 = vld [vmem:[%s0 + $0x50] sm:$0xff]
    %v177 = vld [vmem:[%s0 + $0x58] sm:$0xff]
    %v178 = vld [vmem:[%s0 + $0x60] sm:$0xff]
    %v179 = vld [vmem:[%s0 + $0x68] sm:$0xff]
    %v180 = vld [vmem:[%s0 + $0x70] sm:$0xff]
    %v181 = vld [vmem:[%s0 + $0x78] sm:$0xff]
    %v182 = vld [vmem:[%s0 + $0x80] sm:$0xff]
    %v183 = vld [vmem:[%s0 + $0x88] sm:$0xff]
    %v184 = vld [vmem:[%s0 + $0x90] sm:$0xff]
    %v185 = vld [vmem:[%s0 + $0x98] sm:$0xff]
    %v186 = vld [vmem:[%s0 + $0xa0] sm:$0xff]
    %v187 = vld [vmem:[%s0 + $0xa8] sm:$0xff]
    %v188 = vld [vmem:[%s0 + $0xb0] sm:$0xff]
    %v189 = vld [vmem:[%s0 + $0xb8] sm:$0xff]
    %v190 = vld [vmem:[%s0 + $0xc0] sm:$0xff]
    %v191 = vld [vmem:[%s0 + $0xc8] sm:$0xff]
    %v192 = vld [vmem:[%s0 + $0xd0] sm:$0xff]
    %v193 = vld [vmem:[%s0 + $0xd8] sm:$0xff]
    %v194 = vld [vmem:[%s0 + $0xe0] sm:$0xff]
    %v195 = vld [vmem:[%s0 + $0xe8] sm:$0xff]
    %v196 = vld [vmem:[%s0 + $0xf0] sm:$0xff]
    %v197 = vld [vmem:[%s0 + $0xf8] sm:$0xff]
    %v198 = vld [vmem:[%s0 + $0x100] sm:$0xff]
    %v199 = vld [vmem:[%s0 + $0x108] sm:$0xff]
    %v200 = vld [vmem:[%s0 + $0x110] sm:$0xff]
    %v201 = vld [vmem:[%s0 + $0x118] sm:$0xff]
    %v202 = vld [vmem:[%s0 + $0x120] sm:$0xff]
    %v203 = vld [vmem:[%s0 + $0x128] sm:$0xff]
    %v204 = vld [vmem:[%s0 + $0x130] sm:$0xff]
    %v205 = vld [vmem:[%s0 + $0x138] sm:$0xff]
    %v206 = vld [vmem:[%s0 + $0x140] sm:$0xff]
    %v207 = vld [vmem:[%s0 + $0x148] sm:$0xff]
    %v208 = vld [vmem:[%s0 + $0x150] sm:$0xff]
    %v209 = vld [vmem:[%s0 + $0x158] sm:$0xff]
    %v210 = vld [vmem:[%s0 + $0x160] sm:$0xff]
    %v211 = vld [vmem:[%s0 + $0x168] sm:$0xff]
    %v212 = vld [vmem:[%s0 + $0x170] sm:$0xff]
    %v213 = vld [vmem:[%s0 + $0x178] sm:$0xff]
    %v214 = vld [vmem:[%s0 + $0x180] sm:$0xff]
    %v215 = vld [vmem:[%s0 + $0x188] sm:$0xff]
    %v216 = vld [vmem:[%s0 + $0x190] sm:$0xff]
    %v217 = vld [vmem:[%s0 + $0x198] sm:$0xff]
    %v218 = vld [vmem:[%s0 + $0x1a0] sm:$0xff]
    %v219 = vld [vmem:[%s0 + $0x1a8] sm:$0xff]
    %v220 = vld [vmem:[%s0 + $0x1b0] sm:$0xff]
    %v221 = vld [vmem:[%s0 + $0x1b8] sm:$0xff]
    %v222 = vld [vmem:[%s0 + $0x1c0] sm:$0xff]
    %v223 = vld [vmem:[%s0 + $0x1c8] sm:$0xff]
    %v224 = vld [vmem:[%s0 + $0x1d0] sm:$0xff]
    %v225 = vld [vmem:[%s0 + $0x1d8] sm:$0xff]
    %v226 = vld [vmem:[%s0 + $0x1e0] sm:$0xff]
    %v227 = vld [vmem:[%s0 + $0x1e8] sm:$0xff]
    %v228 = vld [vmem:[%s0 + $0x1f0] sm:$0xff]
    %v229 = vld [vmem:[%s0 + $0x1f8] sm:$0xff]
    %s230 = scalar_lea.vmem [#allocation2], 24
    %vm231 = vcmask 31744
    %232 = vst.msk [vmem:[%s230 + $0x1] sm:$0xff] %vm231, %v166
    %233 = vst.msk [vmem:[%s230 + $0x9] sm:$0xff] %vm231, %v167
    %234 = vst.msk [vmem:[%s230 + $0x19] sm:$0xff] %vm231, %v168
    %235 = vst.msk [vmem:[%s230 + $0x21] sm:$0xff] %vm231, %v169
    %236 = vst.msk [vmem:[%s230 + $0x31] sm:$0xff] %vm231, %v170
    %237 = vst.msk [vmem:[%s230 + $0x39] sm:$0xff] %vm231, %v171
    %238 = vst.msk [vmem:[%s230 + $0x49] sm:$0xff] %vm231, %v172
    %239 = vst.msk [vmem:[%s230 + $0x51] sm:$0xff] %vm231, %v173
    %240 = vst.msk [vmem:[%s230 + $0x61] sm:$0xff] %vm231, %v174
    %241 = vst.msk [vmem:[%s230 + $0x69] sm:$0xff] %vm231, %v175
    %242 = vst.msk [vmem:[%s230 + $0x79] sm:$0xff] %vm231, %v176
    %243 = vst.msk [vmem:[%s230 + $0x81] sm:$0xff] %vm231, %v177
    %244 = vst.msk [vmem:[%s230 + $0x91] sm:$0xff] %vm231, %v178
    %245 = vst.msk [vmem:[%s230 + $0x99] sm:$0xff] %vm231, %v179
    %246 = vst.msk [vmem:[%s230 + $0xa9] sm:$0xff] %vm231, %v180
    %247 = vst.msk [vmem:[%s230 + $0xb1] sm:$0xff] %vm231, %v181
    %248 = vst.msk [vmem:[%s230 + $0xc1] sm:$0xff] %vm231, %v182
    %249 = vst.msk [vmem:[%s230 + $0xc9] sm:$0xff] %vm231, %v183
    %250 = vst.msk [vmem:[%s230 + $0xd9] sm:$0xff] %vm231, %v184
    %251 = vst.msk [vmem:[%s230 + $0xe1] sm:$0xff] %vm231, %v185
    %252 = vst.msk [vmem:[%s230 + $0xf1] sm:$0xff] %vm231, %v186
    %253 = vst.msk [vmem:[%s230 + $0xf9] sm:$0xff] %vm231, %v187
    %254 = vst.msk [vmem:[%s230 + $0x109] sm:$0xff] %vm231, %v188
    %255 = vst.msk [vmem:[%s230 + $0x111] sm:$0xff] %vm231, %v189
    %256 = vst.msk [vmem:[%s230 + $0x121] sm:$0xff] %vm231, %v190
    %257 = vst.msk [vmem:[%s230 + $0x129] sm:$0xff] %vm231, %v191
    %258 = vst.msk [vmem:[%s230 + $0x139] sm:$0xff] %vm231, %v192
    %259 = vst.msk [vmem:[%s230 + $0x141] sm:$0xff] %vm231, %v193
    %260 = vst.msk [vmem:[%s230 + $0x151] sm:$0xff] %vm231, %v194
    %261 = vst.msk [vmem:[%s230 + $0x159] sm:$0xff] %vm231, %v195
    %262 = vst.msk [vmem:[%s230 + $0x169] sm:$0xff] %vm231, %v196
    %263 = vst.msk [vmem:[%s230 + $0x171] sm:$0xff] %vm231, %v197
    %264 = vst.msk [vmem:[%s230 + $0x1b1] sm:$0xff] %vm231, %v198
    %265 = vst.msk [vmem:[%s230 + $0x1b9] sm:$0xff] %vm231, %v199
    %266 = vst.msk [vmem:[%s230 + $0x1c9] sm:$0xff] %vm231, %v200
    %267 = vst.msk [vmem:[%s230 + $0x1d1] sm:$0xff] %vm231, %v201
    %268 = vst.msk [vmem:[%s230 + $0x1e1] sm:$0xff] %vm231, %v202
    %269 = vst.msk [vmem:[%s230 + $0x1e9] sm:$0xff] %vm231, %v203
    %270 = vst.msk [vmem:[%s230 + $0x1f9] sm:$0xff] %vm231, %v204
    %271 = vst.msk [vmem:[%s230 + $0x201] sm:$0xff] %vm231, %v205
    %272 = vst.msk [vmem:[%s230 + $0x211] sm:$0xff] %vm231, %v206
    %273 = vst.msk [vmem:[%s230 + $0x219] sm:$0xff] %vm231, %v207
    %274 = vst.msk [vmem:[%s230 + $0x229] sm:$0xff] %vm231, %v208
    %275 = vst.msk [vmem:[%s230 + $0x231] sm:$0xff] %vm231, %v209
    %276 = vst.msk [vmem:[%s230 + $0x241] sm:$0xff] %vm231, %v210
    %277 = vst.msk [vmem:[%s230 + $0x249] sm:$0xff] %vm231, %v211
    %278 = vst.msk [vmem:[%s230 + $0x259] sm:$0xff] %vm231, %v212
    %279 = vst.msk [vmem:[%s230 + $0x261] sm:$0xff] %vm231, %v213
    %280 = vst.msk [vmem:[%s230 + $0x271] sm:$0xff] %vm231, %v214
    %281 = vst.msk [vmem:[%s230 + $0x279] sm:$0xff] %vm231, %v215
    %282 = vst.msk [vmem:[%s230 + $0x289] sm:$0xff] %vm231, %v216
    %283 = vst.msk [vmem:[%s230 + $0x291] sm:$0xff] %vm231, %v217
    %284 = vst.msk [vmem:[%s230 + $0x2a1] sm:$0xff] %vm231, %v218
    %285 = vst.msk [vmem:[%s230 + $0x2a9] sm:$0xff] %vm231, %v219
    %286 = vst.msk [vmem:[%s230 + $0x2b9] sm:$0xff] %vm231, %v220
    %287 = vst.msk [vmem:[%s230 + $0x2c1] sm:$0xff] %vm231, %v221
    %288 = vst.msk [vmem:[%s230 + $0x2d1] sm:$0xff] %vm231, %v222
    %289 = vst.msk [vmem:[%s230 + $0x2d9] sm:$0xff] %vm231, %v223
    %290 = vst.msk [vmem:[%s230 + $0x2e9] sm:$0xff] %vm231, %v224
    %291 = vst.msk [vmem:[%s230 + $0x2f1] sm:$0xff] %vm231, %v225
    %292 = vst.msk [vmem:[%s230 + $0x301] sm:$0xff] %vm231, %v226
    %293 = vst.msk [vmem:[%s230 + $0x309] sm:$0xff] %vm231, %v227
    %294 = vst.msk [vmem:[%s230 + $0x319] sm:$0xff] %vm231, %v228
    %295 = vst.msk [vmem:[%s230 + $0x321] sm:$0xff] %vm231, %v229
    %v296 = vld [vmem:[#allocation2] sm:$0xff]
    %v297 = vld [vmem:[#allocation2 + $0x8] sm:$0xff]
    %v298 = vld [vmem:[#allocation2 + $0x18] sm:$0xff]
    %v299 = vld [vmem:[#allocation2 + $0x20] sm:$0xff]
    %v300 = vld [vmem:[#allocation2 + $0x30] sm:$0xff]
    %v301 = vld [vmem:[#allocation2 + $0x38] sm:$0xff]
    %v302 = vld [vmem:[#allocation2 + $0x48] sm:$0xff]
    %v303 = vld [vmem:[#allocation2 + $0x50] sm:$0xff]
    %v304 = vld [vmem:[#allocation2 + $0x60] sm:$0xff]
    %v305 = vld [vmem:[#allocation2 + $0x68] sm:$0xff]
    %v306 = vld [vmem:[#allocation2 + $0x78] sm:$0xff]
    %v307 = vld [vmem:[#allocation2 + $0x80] sm:$0xff]
    %v308 = vld [vmem:[#allocation2 + $0x90] sm:$0xff]
    %v309 = vld [vmem:[#allocation2 + $0x98] sm:$0xff]
    %v310 = vld [vmem:[#allocation2 + $0xa8] sm:$0xff]
    %v311 = vld [vmem:[#allocation2 + $0xb0] sm:$0xff]
    %v312 = vld [vmem:[#allocation2 + $0xc0] sm:$0xff]
    %v313 = vld [vmem:[#allocation2 + $0xc8] sm:$0xff]
    %v314 = vld [vmem:[#allocation2 + $0xd8] sm:$0xff]
    %v315 = vld [vmem:[#allocation2 + $0xe0] sm:$0xff]
    %v316 = vld [vmem:[#allocation2 + $0xf0] sm:$0xff]
    %v317 = vld [vmem:[#allocation2 + $0xf8] sm:$0xff]
    %v318 = vld [vmem:[#allocation2 + $0x108] sm:$0xff]
    %v319 = vld [vmem:[#allocation2 + $0x110] sm:$0xff]
    %v320 = vld [vmem:[#allocation2 + $0x120] sm:$0xff]
    %v321 = vld [vmem:[#allocation2 + $0x128] sm:$0xff]
    %v322 = vld [vmem:[#allocation2 + $0x138] sm:$0xff]
    %v323 = vld [vmem:[#allocation2 + $0x140] sm:$0xff]
    %v324 = vld [vmem:[#allocation2 + $0x150] sm:$0xff]
    %v325 = vld [vmem:[#allocation2 + $0x158] sm:$0xff]
    %v326 = vld [vmem:[#allocation2 + $0x168] sm:$0xff]
    %v327 = vld [vmem:[#allocation2 + $0x170] sm:$0xff]
    %v328 = vld [vmem:[#allocation2 + $0x1b0] sm:$0xff]
    %v329 = vld [vmem:[#allocation2 + $0x1b8] sm:$0xff]
    %v330 = vld [vmem:[#allocation2 + $0x1c8] sm:$0xff]
    %v331 = vld [vmem:[#allocation2 + $0x1d0] sm:$0xff]
    %v332 = vld [vmem:[#allocation2 + $0x1e0] sm:$0xff]
    %v333 = vld [vmem:[#allocation2 + $0x1e8] sm:$0xff]
    %v334 = vld [vmem:[#allocation2 + $0x1f8] sm:$0xff]
    %v335 = vld [vmem:[#allocation2 + $0x200] sm:$0xff]
    %v336 = vld [vmem:[#allocation2 + $0x210] sm:$0xff]
    %v337 = vld [vmem:[#allocation2 + $0x218] sm:$0xff]
    %v338 = vld [vmem:[#allocation2 + $0x228] sm:$0xff]
    %v339 = vld [vmem:[#allocation2 + $0x230] sm:$0xff]
    %v340 = vld [vmem:[#allocation2 + $0x240] sm:$0xff]
    %v341 = vld [vmem:[#allocation2 + $0x248] sm:$0xff]
    %v342 = vld [vmem:[#allocation2 + $0x258] sm:$0xff]
    %v343 = vld [vmem:[#allocation2 + $0x260] sm:$0xff]
    %v344 = vld [vmem:[#allocation2 + $0x270] sm:$0xff]
    %v345 = vld [vmem:[#allocation2 + $0x278] sm:$0xff]
    %v346 = vld [vmem:[#allocation2 + $0x288] sm:$0xff]
    %v347 = vld [vmem:[#allocation2 + $0x290] sm:$0xff]
    %v348 = vld [vmem:[#allocation2 + $0x2a0] sm:$0xff]
    %v349 = vld [vmem:[#allocation2 + $0x2a8] sm:$0xff]
    %v350 = vld [vmem:[#allocation2 + $0x2b8] sm:$0xff]
    %v351 = vld [vmem:[#allocation2 + $0x2c0] sm:$0xff]
    %v352 = vld [vmem:[#allocation2 + $0x2d0] sm:$0xff]
    %v353 = vld [vmem:[#allocation2 + $0x2d8] sm:$0xff]
    %v354 = vld [vmem:[#allocation2 + $0x2e8] sm:$0xff]
    %v355 = vld [vmem:[#allocation2 + $0x2f0] sm:$0xff]
    %v356 = vld [vmem:[#allocation2 + $0x300] sm:$0xff]
    %v357 = vld [vmem:[#allocation2 + $0x308] sm:$0xff]
    %v358 = vld [vmem:[#allocation2 + $0x318] sm:$0xff]
    %v359 = vld [vmem:[#allocation2 + $0x320] sm:$0xff]
    %360 = vst [vmem:[#allocation4] sm:$0xff] %v296
    %361 = vst [vmem:[#allocation4 + $0x48] sm:$0xff] %v297
    %362 = vst [vmem:[#allocation4 + $0x90] sm:$0xff] %v298
    %363 = vst [vmem:[#allocation4 + $0xd8] sm:$0xff] %v299
    %364 = vst [vmem:[#allocation4 + $0x120] sm:$0xff] %v300
    %365 = vst [vmem:[#allocation4 + $0x168] sm:$0xff] %v301
    %366 = vst [vmem:[#allocation4 + $0x1b0] sm:$0xff] %v302
    %367 = vst [vmem:[#allocation4 + $0x1f8] sm:$0xff] %v303
    %368 = vst [vmem:[#allocation4 + $0x240] sm:$0xff] %v304
    %369 = vst [vmem:[#allocation4 + $0x288] sm:$0xff] %v305
    %370 = vst [vmem:[#allocation4 + $0x2d0] sm:$0xff] %v306
    %371 = vst [vmem:[#allocation4 + $0x318] sm:$0xff] %v307
    %372 = vst [vmem:[#allocation4 + $0x360] sm:$0xff] %v308
    %373 = vst [vmem:[#allocation4 + $0x3a8] sm:$0xff] %v309
    %374 = vst [vmem:[#allocation4 + $0x3f0] sm:$0xff] %v310
    %375 = vst [vmem:[#allocation4 + $0x438] sm:$0xff] %v311
    %376 = vst [vmem:[#allocation4 + $0x480] sm:$0xff] %v312
    %377 = vst [vmem:[#allocation4 + $0x4c8] sm:$0xff] %v313
    %378 = vst [vmem:[#allocation4 + $0x510] sm:$0xff] %v314
    %379 = vst [vmem:[#allocation4 + $0x558] sm:$0xff] %v315
    %380 = vst [vmem:[#allocation4 + $0x5a0] sm:$0xff] %v316
    %381 = vst [vmem:[#allocation4 + $0x5e8] sm:$0xff] %v317
    %382 = vst [vmem:[#allocation4 + $0x630] sm:$0xff] %v318
    %383 = vst [vmem:[#allocation4 + $0x678] sm:$0xff] %v319
    %384 = vst [vmem:[#allocation4 + $0x6c0] sm:$0xff] %v320
    %385 = vst [vmem:[#allocation4 + $0x708] sm:$0xff] %v321
    %386 = vst [vmem:[#allocation4 + $0x750] sm:$0xff] %v322
    %387 = vst [vmem:[#allocation4 + $0x798] sm:$0xff] %v323
    %388 = vst [vmem:[#allocation4 + $0x7e0] sm:$0xff] %v324
    %389 = vst [vmem:[#allocation4 + $0x828] sm:$0xff] %v325
    %390 = vst [vmem:[#allocation4 + $0x870] sm:$0xff] %v326
    %391 = vst [vmem:[#allocation4 + $0x8b8] sm:$0xff] %v327
    %392 = vst [vmem:[#allocation4 + $0x900] sm:$0xff] %v328
    %393 = vst [vmem:[#allocation4 + $0x948] sm:$0xff] %v329
    %394 = vst [vmem:[#allocation4 + $0x990] sm:$0xff] %v330
    %395 = vst [vmem:[#allocation4 + $0x9d8] sm:$0xff] %v331
    %396 = vst [vmem:[#allocation4 + $0xa20] sm:$0xff] %v332
    %397 = vst [vmem:[#allocation4 + $0xa68] sm:$0xff] %v333
    %398 = vst [vmem:[#allocation4 + $0xab0] sm:$0xff] %v334
    %399 = vst [vmem:[#allocation4 + $0xaf8] sm:$0xff] %v335
    %400 = vst [vmem:[#allocation4 + $0xb40] sm:$0xff] %v336
    %401 = vst [vmem:[#allocation4 + $0xb88] sm:$0xff] %v337
    %402 = vst [vmem:[#allocation4 + $0xbd0] sm:$0xff] %v338
    %403 = vst [vmem:[#allocation4 + $0xc18] sm:$0xff] %v339
    %404 = vst [vmem:[#allocation4 + $0xc60] sm:$0xff] %v340
    %405 = vst [vmem:[#allocation4 + $0xca8] sm:$0xff] %v341
    %406 = vst [vmem:[#allocation4 + $0xcf0] sm:$0xff] %v342
    %407 = vst [vmem:[#allocation4 + $0xd38] sm:$0xff] %v343
    %408 = vst [vmem:[#allocation4 + $0xd80] sm:$0xff] %v344
    %409 = vst [vmem:[#allocation4 + $0xdc8] sm:$0xff] %v345
    %410 = vst [vmem:[#allocation4 + $0xe10] sm:$0xff] %v346
    %411 = vst [vmem:[#allocation4 + $0xe58] sm:$0xff] %v347
    %412 = vst [vmem:[#allocation4 + $0xea0] sm:$0xff] %v348
    %413 = vst [vmem:[#allocation4 + $0xee8] sm:$0xff] %v349
    %414 = vst [vmem:[#allocation4 + $0xf30] sm:$0xff] %v350
    %415 = vst [vmem:[#allocation4 + $0xf78] sm:$0xff] %v351
    %416 = vst [vmem:[#allocation4 + $0xfc0] sm:$0xff] %v352
    %417 = vst [vmem:[#allocation4 + $0x1008] sm:$0xff] %v353
    %418 = vst [vmem:[#allocation4 + $0x1050] sm:$0xff] %v354
    %419 = vst [vmem:[#allocation4 + $0x1098] sm:$0xff] %v355
    %420 = vst [vmem:[#allocation4 + $0x10e0] sm:$0xff] %v356
    %421 = vst [vmem:[#allocation4 + $0x1128] sm:$0xff] %v357
    %422 = vst [vmem:[#allocation4 + $0x1170] sm:$0xff] %v358
    %423 = vst [vmem:[#allocation4 + $0x11b8] sm:$0xff] %v359
    %v424 = vld [vmem:[#allocation2 + $0x1] sm:$0xff]
    %v425 = vld [vmem:[#allocation2 + $0x9] sm:$0xff]
    %v426 = vld [vmem:[#allocation2 + $0x19] sm:$0xff]
    %v427 = vld [vmem:[#allocation2 + $0x21] sm:$0xff]
    %v428 = vld [vmem:[#allocation2 + $0x31] sm:$0xff]
    %v429 = vld [vmem:[#allocation2 + $0x39] sm:$0xff]
    %v430 = vld [vmem:[#allocation2 + $0x49] sm:$0xff]
    %v431 = vld [vmem:[#allocation2 + $0x51] sm:$0xff]
    %v432 = vld [vmem:[#allocation2 + $0x61] sm:$0xff]
    %v433 = vld [vmem:[#allocation2 + $0x69] sm:$0xff]
    %v434 = vld [vmem:[#allocation2 + $0x79] sm:$0xff]
    %v435 = vld [vmem:[#allocation2 + $0x81] sm:$0xff]
    %v436 = vld [vmem:[#allocation2 + $0x91] sm:$0xff]
    %v437 = vld [vmem:[#allocation2 + $0x99] sm:$0xff]
    %v438 = vld [vmem:[#allocation2 + $0xa9] sm:$0xff]
    %v439 = vld [vmem:[#allocation2 + $0xb1] sm:$0xff]
    %v440 = vld [vmem:[#allocation2 + $0xc1] sm:$0xff]
    %v441 = vld [vmem:[#allocation2 + $0xc9] sm:$0xff]
    %v442 = vld [vmem:[#allocation2 + $0xd9] sm:$0xff]
    %v443 = vld [vmem:[#allocation2 + $0xe1] sm:$0xff]
    %v444 = vld [vmem:[#allocation2 + $0xf1] sm:$0xff]
    %v445 = vld [vmem:[#allocation2 + $0xf9] sm:$0xff]
    %v446 = vld [vmem:[#allocation2 + $0x109] sm:$0xff]
    %v447 = vld [vmem:[#allocation2 + $0x111] sm:$0xff]
    %v448 = vld [vmem:[#allocation2 + $0x121] sm:$0xff]
    %v449 = vld [vmem:[#allocation2 + $0x129] sm:$0xff]
    %v450 = vld [vmem:[#allocation2 + $0x139] sm:$0xff]
    %v451 = vld [vmem:[#allocation2 + $0x141] sm:$0xff]
    %v452 = vld [vmem:[#allocation2 + $0x151] sm:$0xff]
    %v453 = vld [vmem:[#allocation2 + $0x159] sm:$0xff]
    %v454 = vld [vmem:[#allocation2 + $0x169] sm:$0xff]
    %v455 = vld [vmem:[#allocation2 + $0x171] sm:$0xff]
    %v456 = vld [vmem:[#allocation2 + $0x1b1] sm:$0xff]
    %v457 = vld [vmem:[#allocation2 + $0x1b9] sm:$0xff]
    %v458 = vld [vmem:[#allocation2 + $0x1c9] sm:$0xff]
    %v459 = vld [vmem:[#allocation2 + $0x1d1] sm:$0xff]
    %v460 = vld [vmem:[#allocation2 + $0x1e1] sm:$0xff]
    %v461 = vld [vmem:[#allocation2 + $0x1e9] sm:$0xff]
    %v462 = vld [vmem:[#allocation2 + $0x1f9] sm:$0xff]
    %v463 = vld [vmem:[#allocation2 + $0x201] sm:$0xff]
    %v464 = vld [vmem:[#allocation2 + $0x211] sm:$0xff]
    %v465 = vld [vmem:[#allocation2 + $0x219] sm:$0xff]
    %v466 = vld [vmem:[#allocation2 + $0x229] sm:$0xff]
    %v467 = vld [vmem:[#allocation2 + $0x231] sm:$0xff]
    %v468 = vld [vmem:[#allocation2 + $0x241] sm:$0xff]
    %v469 = vld [vmem:[#allocation2 + $0x249] sm:$0xff]
    %v470 = vld [vmem:[#allocation2 + $0x259] sm:$0xff]
    %v471 = vld [vmem:[#allocation2 + $0x261] sm:$0xff]
    %v472 = vld [vmem:[#allocation2 + $0x271] sm:$0xff]
    %v473 = vld [vmem:[#allocation2 + $0x279] sm:$0xff]
    %v474 = vld [vmem:[#allocation2 + $0x289] sm:$0xff]
    %v475 = vld [vmem:[#allocation2 + $0x291] sm:$0xff]
    %v476 = vld [vmem:[#allocation2 + $0x2a1] sm:$0xff]
    %v477 = vld [vmem:[#allocation2 + $0x2a9] sm:$0xff]
    %v478 = vld [vmem:[#allocation2 + $0x2b9] sm:$0xff]
    %v479 = vld [vmem:[#allocation2 + $0x2c1] sm:$0xff]
    %v480 = vld [vmem:[#allocation2 + $0x2d1] sm:$0xff]
    %v481 = vld [vmem:[#allocation2 + $0x2d9] sm:$0xff]
    %v482 = vld [vmem:[#allocation2 + $0x2e9] sm:$0xff]
    %v483 = vld [vmem:[#allocation2 + $0x2f1] sm:$0xff]
    %v484 = vld [vmem:[#allocation2 + $0x301] sm:$0xff]
    %v485 = vld [vmem:[#allocation2 + $0x309] sm:$0xff]
    %v486 = vld [vmem:[#allocation2 + $0x319] sm:$0xff]
    %v487 = vld [vmem:[#allocation2 + $0x321] sm:$0xff]
    %488 = vst [vmem:[#allocation4 + $0x8] sm:$0xff] %v424
    %489 = vst [vmem:[#allocation4 + $0x50] sm:$0xff] %v425
    %490 = vst [vmem:[#allocation4 + $0x98] sm:$0xff] %v426
    %491 = vst [vmem:[#allocation4 + $0xe0] sm:$0xff] %v427
    %492 = vst [vmem:[#allocation4 + $0x128] sm:$0xff] %v428
    %493 = vst [vmem:[#allocation4 + $0x170] sm:$0xff] %v429
    %494 = vst [vmem:[#allocation4 + $0x1b8] sm:$0xff] %v430
    %495 = vst [vmem:[#allocation4 + $0x200] sm:$0xff] %v431
    %496 = vst [vmem:[#allocation4 + $0x248] sm:$0xff] %v432
    %497 = vst [vmem:[#allocation4 + $0x290] sm:$0xff] %v433
    %498 = vst [vmem:[#allocation4 + $0x2d8] sm:$0xff] %v434
    %499 = vst [vmem:[#allocation4 + $0x320] sm:$0xff] %v435
    %500 = vst [vmem:[#allocation4 + $0x368] sm:$0xff] %v436
    %501 = vst [vmem:[#allocation4 + $0x3b0] sm:$0xff] %v437
    %502 = vst [vmem:[#allocation4 + $0x3f8] sm:$0xff] %v438
    %503 = vst [vmem:[#allocation4 + $0x440] sm:$0xff] %v439
    %504 = vst [vmem:[#allocation4 + $0x488] sm:$0xff] %v440
    %505 = vst [vmem:[#allocation4 + $0x4d0] sm:$0xff] %v441
    %506 = vst [vmem:[#allocation4 + $0x518] sm:$0xff] %v442
    %507 = vst [vmem:[#allocation4 + $0x560] sm:$0xff] %v443
    %508 = vst [vmem:[#allocation4 + $0x5a8] sm:$0xff] %v444
    %509 = vst [vmem:[#allocation4 + $0x5f0] sm:$0xff] %v445
    %510 = vst [vmem:[#allocation4 + $0x638] sm:$0xff] %v446
    %511 = vst [vmem:[#allocation4 + $0x680] sm:$0xff] %v447
    %512 = vst [vmem:[#allocation4 + $0x6c8] sm:$0xff] %v448
    %513 = vst [vmem:[#allocation4 + $0x710] sm:$0xff] %v449
    %514 = vst [vmem:[#allocation4 + $0x758] sm:$0xff] %v450
    %515 = vst [vmem:[#allocation4 + $0x7a0] sm:$0xff] %v451
    %516 = vst [vmem:[#allocation4 + $0x7e8] sm:$0xff] %v452
    %517 = vst [vmem:[#allocation4 + $0x830] sm:$0xff] %v453
    %518 = vst [vmem:[#allocation4 + $0x878] sm:$0xff] %v454
    %519 = vst [vmem:[#allocation4 + $0x8c0] sm:$0xff] %v455
    %520 = vst [vmem:[#allocation4 + $0x908] sm:$0xff] %v456
    %521 = vst [vmem:[#allocation4 + $0x950] sm:$0xff] %v457
    %522 = vst [vmem:[#allocation4 + $0x998] sm:$0xff] %v458
    %523 = vst [vmem:[#allocation4 + $0x9e0] sm:$0xff] %v459
    %524 = vst [vmem:[#allocation4 + $0xa28] sm:$0xff] %v460
    %525 = vst [vmem:[#allocation4 + $0xa70] sm:$0xff] %v461
    %526 = vst [vmem:[#allocation4 + $0xab8] sm:$0xff] %v462
    %527 = vst [vmem:[#allocation4 + $0xb00] sm:$0xff] %v463
    %528 = vst [vmem:[#allocation4 + $0xb48] sm:$0xff] %v464
    %529 = vst [vmem:[#allocation4 + $0xb90] sm:$0xff] %v465
    %530 = vst [vmem:[#allocation4 + $0xbd8] sm:$0xff] %v466
    %531 = vst [vmem:[#allocation4 + $0xc20] sm:$0xff] %v467
    %532 = vst [vmem:[#allocation4 + $0xc68] sm:$0xff] %v468
    %533 = vst [vmem:[#allocation4 + $0xcb0] sm:$0xff] %v469
    %534 = vst [vmem:[#allocation4 + $0xcf8] sm:$0xff] %v470
    %535 = vst [vmem:[#allocation4 + $0xd40] sm:$0xff] %v471
    %536 = vst [vmem:[#allocation4 + $0xd88] sm:$0xff] %v472
    %537 = vst [vmem:[#allocation4 + $0xdd0] sm:$0xff] %v473
    %538 = vst [vmem:[#allocation4 + $0xe18] sm:$0xff] %v474
    %539 = vst [vmem:[#allocation4 + $0xe60] sm:$0xff] %v475
    %540 = vst [vmem:[#allocation4 + $0xea8] sm:$0xff] %v476
    %541 = vst [vmem:[#allocation4 + $0xef0] sm:$0xff] %v477
    %542 = vst [vmem:[#allocation4 + $0xf38] sm:$0xff] %v478
    %543 = vst [vmem:[#allocation4 + $0xf80] sm:$0xff] %v479
    %544 = vst [vmem:[#allocation4 + $0xfc8] sm:$0xff] %v480
    %545 = vst [vmem:[#allocation4 + $0x1010] sm:$0xff] %v481
    %546 = vst [vmem:[#allocation4 + $0x1058] sm:$0xff] %v482
    %547 = vst [vmem:[#allocation4 + $0x10a0] sm:$0xff] %v483
    %548 = vst [vmem:[#allocation4 + $0x10e8] sm:$0xff] %v484
    %549 = vst [vmem:[#allocation4 + $0x1130] sm:$0xff] %v485
    %550 = vst [vmem:[#allocation4 + $0x1178] sm:$0xff] %v486
    %551 = vst [vmem:[#allocation4 + $0x11c0] sm:$0xff] %v487
    %v552 = vld [vmem:[#allocation2 + $0x2] sm:$0xff]
    %v553 = vld [vmem:[#allocation2 + $0xa] sm:$0xff]
    %v554 = vld [vmem:[#allocation2 + $0x1a] sm:$0xff]
    %v555 = vld [vmem:[#allocation2 + $0x22] sm:$0xff]
    %v556 = vld [vmem:[#allocation2 + $0x32] sm:$0xff]
    %v557 = vld [vmem:[#allocation2 + $0x3a] sm:$0xff]
    %v558 = vld [vmem:[#allocation2 + $0x4a] sm:$0xff]
    %v559 = vld [vmem:[#allocation2 + $0x52] sm:$0xff]
    %v560 = vld [vmem:[#allocation2 + $0x62] sm:$0xff]
    %v561 = vld [vmem:[#allocation2 + $0x6a] sm:$0xff]
    %v562 = vld [vmem:[#allocation2 + $0x7a] sm:$0xff]
    %v563 = vld [vmem:[#allocation2 + $0x82] sm:$0xff]
    %v564 = vld [vmem:[#allocation2 + $0x92] sm:$0xff]
    %v565 = vld [vmem:[#allocation2 + $0x9a] sm:$0xff]
    %v566 = vld [vmem:[#allocation2 + $0xaa] sm:$0xff]
    %v567 = vld [vmem:[#allocation2 + $0xb2] sm:$0xff]
    %v568 = vld [vmem:[#allocation2 + $0xc2] sm:$0xff]
    %v569 = vld [vmem:[#allocation2 + $0xca] sm:$0xff]
    %v570 = vld [vmem:[#allocation2 + $0xda] sm:$0xff]
    %v571 = vld [vmem:[#allocation2 + $0xe2] sm:$0xff]
    %v572 = vld [vmem:[#allocation2 + $0xf2] sm:$0xff]
    %v573 = vld [vmem:[#allocation2 + $0xfa] sm:$0xff]
    %v574 = vld [vmem:[#allocation2 + $0x10a] sm:$0xff]
    %v575 = vld [vmem:[#allocation2 + $0x112] sm:$0xff]
    %v576 = vld [vmem:[#allocation2 + $0x122] sm:$0xff]
    %v577 = vld [vmem:[#allocation2 + $0x12a] sm:$0xff]
    %v578 = vld [vmem:[#allocation2 + $0x13a] sm:$0xff]
    %v579 = vld [vmem:[#allocation2 + $0x142] sm:$0xff]
    %v580 = vld [vmem:[#allocation2 + $0x152] sm:$0xff]
    %v581 = vld [vmem:[#allocation2 + $0x15a] sm:$0xff]
    %v582 = vld [vmem:[#allocation2 + $0x16a] sm:$0xff]
    %v583 = vld [vmem:[#allocation2 + $0x172] sm:$0xff]
    %v584 = vld [vmem:[#allocation2 + $0x1b2] sm:$0xff]
    %v585 = vld [vmem:[#allocation2 + $0x1ba] sm:$0xff]
    %v586 = vld [vmem:[#allocation2 + $0x1ca] sm:$0xff]
    %v587 = vld [vmem:[#allocation2 + $0x1d2] sm:$0xff]
    %v588 = vld [vmem:[#allocation2 + $0x1e2] sm:$0xff]
    %v589 = vld [vmem:[#allocation2 + $0x1ea] sm:$0xff]
    %v590 = vld [vmem:[#allocation2 + $0x1fa] sm:$0xff]
    %v591 = vld [vmem:[#allocation2 + $0x202] sm:$0xff]
    %v592 = vld [vmem:[#allocation2 + $0x212] sm:$0xff]
    %v593 = vld [vmem:[#allocation2 + $0x21a] sm:$0xff]
    %v594 = vld [vmem:[#allocation2 + $0x22a] sm:$0xff]
    %v595 = vld [vmem:[#allocation2 + $0x232] sm:$0xff]
    %v596 = vld [vmem:[#allocation2 + $0x242] sm:$0xff]
    %v597 = vld [vmem:[#allocation2 + $0x24a] sm:$0xff]
    %v598 = vld [vmem:[#allocation2 + $0x25a] sm:$0xff]
    %v599 = vld [vmem:[#allocation2 + $0x262] sm:$0xff]
    %v600 = vld [vmem:[#allocation2 + $0x272] sm:$0xff]
    %v601 = vld [vmem:[#allocation2 + $0x27a] sm:$0xff]
    %v602 = vld [vmem:[#allocation2 + $0x28a] sm:$0xff]
    %v603 = vld [vmem:[#allocation2 + $0x292] sm:$0xff]
    %v604 = vld [vmem:[#allocation2 + $0x2a2] sm:$0xff]
    %v605 = vld [vmem:[#allocation2 + $0x2aa] sm:$0xff]
    %v606 = vld [vmem:[#allocation2 + $0x2ba] sm:$0xff]
    %v607 = vld [vmem:[#allocation2 + $0x2c2] sm:$0xff]
    %v608 = vld [vmem:[#allocation2 + $0x2d2] sm:$0xff]
    %v609 = vld [vmem:[#allocation2 + $0x2da] sm:$0xff]
    %v610 = vld [vmem:[#allocation2 + $0x2ea] sm:$0xff]
    %v611 = vld [vmem:[#allocation2 + $0x2f2] sm:$0xff]
    %v612 = vld [vmem:[#allocation2 + $0x302] sm:$0xff]
    %v613 = vld [vmem:[#allocation2 + $0x30a] sm:$0xff]
    %v614 = vld [vmem:[#allocation2 + $0x31a] sm:$0xff]
    %v615 = vld [vmem:[#allocation2 + $0x322] sm:$0xff]
    %616 = vst [vmem:[#allocation4 + $0x10] sm:$0xff] %v552
    %617 = vst [vmem:[#allocation4 + $0x58] sm:$0xff] %v553
    %618 = vst [vmem:[#allocation4 + $0xa0] sm:$0xff] %v554
    %619 = vst [vmem:[#allocation4 + $0xe8] sm:$0xff] %v555
    %620 = vst [vmem:[#allocation4 + $0x130] sm:$0xff] %v556
    %621 = vst [vmem:[#allocation4 + $0x178] sm:$0xff] %v557
    %622 = vst [vmem:[#allocation4 + $0x1c0] sm:$0xff] %v558
    %623 = vst [vmem:[#allocation4 + $0x208] sm:$0xff] %v559
    %624 = vst [vmem:[#allocation4 + $0x250] sm:$0xff] %v560
    %625 = vst [vmem:[#allocation4 + $0x298] sm:$0xff] %v561
    %626 = vst [vmem:[#allocation4 + $0x2e0] sm:$0xff] %v562
    %627 = vst [vmem:[#allocation4 + $0x328] sm:$0xff] %v563
    %628 = vst [vmem:[#allocation4 + $0x370] sm:$0xff] %v564
    %629 = vst [vmem:[#allocation4 + $0x3b8] sm:$0xff] %v565
    %630 = vst [vmem:[#allocation4 + $0x400] sm:$0xff] %v566
    %631 = vst [vmem:[#allocation4 + $0x448] sm:$0xff] %v567
    %632 = vst [vmem:[#allocation4 + $0x490] sm:$0xff] %v568
    %633 = vst [vmem:[#allocation4 + $0x4d8] sm:$0xff] %v569
    %634 = vst [vmem:[#allocation4 + $0x520] sm:$0xff] %v570
    %635 = vst [vmem:[#allocation4 + $0x568] sm:$0xff] %v571
    %636 = vst [vmem:[#allocation4 + $0x5b0] sm:$0xff] %v572
    %637 = vst [vmem:[#allocation4 + $0x5f8] sm:$0xff] %v573
    %638 = vst [vmem:[#allocation4 + $0x640] sm:$0xff] %v574
    %639 = vst [vmem:[#allocation4 + $0x688] sm:$0xff] %v575
    %640 = vst [vmem:[#allocation4 + $0x6d0] sm:$0xff] %v576
    %641 = vst [vmem:[#allocation4 + $0x718] sm:$0xff] %v577
    %642 = vst [vmem:[#allocation4 + $0x760] sm:$0xff] %v578
    %643 = vst [vmem:[#allocation4 + $0x7a8] sm:$0xff] %v579
    %644 = vst [vmem:[#allocation4 + $0x7f0] sm:$0xff] %v580
    %645 = vst [vmem:[#allocation4 + $0x838] sm:$0xff] %v581
    %646 = vst [vmem:[#allocation4 + $0x880] sm:$0xff] %v582
    %647 = vst [vmem:[#allocation4 + $0x8c8] sm:$0xff] %v583
    %648 = vst [vmem:[#allocation4 + $0x910] sm:$0xff] %v584
    %649 = vst [vmem:[#allocation4 + $0x958] sm:$0xff] %v585
    %650 = vst [vmem:[#allocation4 + $0x9a0] sm:$0xff] %v586
    %651 = vst [vmem:[#allocation4 + $0x9e8] sm:$0xff] %v587
    %652 = vst [vmem:[#allocation4 + $0xa30] sm:$0xff] %v588
    %653 = vst [vmem:[#allocation4 + $0xa78] sm:$0xff] %v589
    %654 = vst [vmem:[#allocation4 + $0xac0] sm:$0xff] %v590
    %655 = vst [vmem:[#allocation4 + $0xb08] sm:$0xff] %v591
    %656 = vst [vmem:[#allocation4 + $0xb50] sm:$0xff] %v592
    %657 = vst [vmem:[#allocation4 + $0xb98] sm:$0xff] %v593
    %658 = vst [vmem:[#allocation4 + $0xbe0] sm:$0xff] %v594
    %659 = vst [vmem:[#allocation4 + $0xc28] sm:$0xff] %v595
    %660 = vst [vmem:[#allocation4 + $0xc70] sm:$0xff] %v596
    %661 = vst [vmem:[#allocation4 + $0xcb8] sm:$0xff] %v597
    %662 = vst [vmem:[#allocation4 + $0xd00] sm:$0xff] %v598
    %663 = vst [vmem:[#allocation4 + $0xd48] sm:$0xff] %v599
    %664 = vst [vmem:[#allocation4 + $0xd90] sm:$0xff] %v600
    %665 = vst [vmem:[#allocation4 + $0xdd8] sm:$0xff] %v601
    %666 = vst [vmem:[#allocation4 + $0xe20] sm:$0xff] %v602
    %667 = vst [vmem:[#allocation4 + $0xe68] sm:$0xff] %v603
    %668 = vst [vmem:[#allocation4 + $0xeb0] sm:$0xff] %v604
    %669 = vst [vmem:[#allocation4 + $0xef8] sm:$0xff] %v605
    %670 = vst [vmem:[#allocation4 + $0xf40] sm:$0xff] %v606
    %671 = vst [vmem:[#allocation4 + $0xf88] sm:$0xff] %v607
    %672 = vst [vmem:[#allocation4 + $0xfd0] sm:$0xff] %v608
    %673 = vst [vmem:[#allocation4 + $0x1018] sm:$0xff] %v609
    %674 = vst [vmem:[#allocation4 + $0x1060] sm:$0xff] %v610
    %675 = vst [vmem:[#allocation4 + $0x10a8] sm:$0xff] %v611
    %676 = vst [vmem:[#allocation4 + $0x10f0] sm:$0xff] %v612
    %677 = vst [vmem:[#allocation4 + $0x1138] sm:$0xff] %v613
    %678 = vst [vmem:[#allocation4 + $0x1180] sm:$0xff] %v614
    %679 = vst [vmem:[#allocation4 + $0x11c8] sm:$0xff] %v615
    %v680 = vld [vmem:[%s230] sm:$0xff]
    %v681 = vld [vmem:[%s230 + $0x8] sm:$0xff]
    %v682 = vld [vmem:[%s230 + $0x18] sm:$0xff]
    %v683 = vld [vmem:[%s230 + $0x20] sm:$0xff]
    %v684 = vld [vmem:[%s230 + $0x30] sm:$0xff]
    %v685 = vld [vmem:[%s230 + $0x38] sm:$0xff]
    %v686 = vld [vmem:[%s230 + $0x48] sm:$0xff]
    %v687 = vld [vmem:[%s230 + $0x50] sm:$0xff]
    %v688 = vld [vmem:[%s230 + $0x60] sm:$0xff]
    %v689 = vld [vmem:[%s230 + $0x68] sm:$0xff]
    %v690 = vld [vmem:[%s230 + $0x78] sm:$0xff]
    %v691 = vld [vmem:[%s230 + $0x80] sm:$0xff]
    %v692 = vld [vmem:[%s230 + $0x90] sm:$0xff]
    %v693 = vld [vmem:[%s230 + $0x98] sm:$0xff]
    %v694 = vld [vmem:[%s230 + $0xa8] sm:$0xff]
    %v695 = vld [vmem:[%s230 + $0xb0] sm:$0xff]
    %v696 = vld [vmem:[%s230 + $0xc0] sm:$0xff]
    %v697 = vld [vmem:[%s230 + $0xc8] sm:$0xff]
    %v698 = vld [vmem:[%s230 + $0xd8] sm:$0xff]
    %v699 = vld [vmem:[%s230 + $0xe0] sm:$0xff]
    %v700 = vld [vmem:[%s230 + $0xf0] sm:$0xff]
    %v701 = vld [vmem:[%s230 + $0xf8] sm:$0xff]
    %v702 = vld [vmem:[%s230 + $0x108] sm:$0xff]
    %v703 = vld [vmem:[%s230 + $0x110] sm:$0xff]
    %v704 = vld [vmem:[%s230 + $0x120] sm:$0xff]
    %v705 = vld [vmem:[%s230 + $0x128] sm:$0xff]
    %v706 = vld [vmem:[%s230 + $0x138] sm:$0xff]
    %v707 = vld [vmem:[%s230 + $0x140] sm:$0xff]
    %v708 = vld [vmem:[%s230 + $0x150] sm:$0xff]
    %v709 = vld [vmem:[%s230 + $0x158] sm:$0xff]
    %v710 = vld [vmem:[%s230 + $0x168] sm:$0xff]
    %v711 = vld [vmem:[%s230 + $0x170] sm:$0xff]
    %v712 = vld [vmem:[%s230 + $0x1b0] sm:$0xff]
    %v713 = vld [vmem:[%s230 + $0x1b8] sm:$0xff]
    %v714 = vld [vmem:[%s230 + $0x1c8] sm:$0xff]
    %v715 = vld [vmem:[%s230 + $0x1d0] sm:$0xff]
    %v716 = vld [vmem:[%s230 + $0x1e0] sm:$0xff]
    %v717 = vld [vmem:[%s230 + $0x1e8] sm:$0xff]
    %v718 = vld [vmem:[%s230 + $0x1f8] sm:$0xff]
    %v719 = vld [vmem:[%s230 + $0x200] sm:$0xff]
    %v720 = vld [vmem:[%s230 + $0x210] sm:$0xff]
    %v721 = vld [vmem:[%s230 + $0x218] sm:$0xff]
    %v722 = vld [vmem:[%s230 + $0x228] sm:$0xff]
    %v723 = vld [vmem:[%s230 + $0x230] sm:$0xff]
    %v724 = vld [vmem:[%s230 + $0x240] sm:$0xff]
    %v725 = vld [vmem:[%s230 + $0x248] sm:$0xff]
    %v726 = vld [vmem:[%s230 + $0x258] sm:$0xff]
    %v727 = vld [vmem:[%s230 + $0x260] sm:$0xff]
    %v728 = vld [vmem:[%s230 + $0x270] sm:$0xff]
    %v729 = vld [vmem:[%s230 + $0x278] sm:$0xff]
    %v730 = vld [vmem:[%s230 + $0x288] sm:$0xff]
    %v731 = vld [vmem:[%s230 + $0x290] sm:$0xff]
    %v732 = vld [vmem:[%s230 + $0x2a0] sm:$0xff]
    %v733 = vld [vmem:[%s230 + $0x2a8] sm:$0xff]
    %v734 = vld [vmem:[%s230 + $0x2b8] sm:$0xff]
    %v735 = vld [vmem:[%s230 + $0x2c0] sm:$0xff]
    %v736 = vld [vmem:[%s230 + $0x2d0] sm:$0xff]
    %v737 = vld [vmem:[%s230 + $0x2d8] sm:$0xff]
    %v738 = vld [vmem:[%s230 + $0x2e8] sm:$0xff]
    %v739 = vld [vmem:[%s230 + $0x2f0] sm:$0xff]
    %v740 = vld [vmem:[%s230 + $0x300] sm:$0xff]
    %v741 = vld [vmem:[%s230 + $0x308] sm:$0xff]
    %v742 = vld [vmem:[%s230 + $0x318] sm:$0xff]
    %v743 = vld [vmem:[%s230 + $0x320] sm:$0xff]
    %744 = vst [vmem:[#allocation4 + $0x18] sm:$0xff] %v680
    %745 = vst [vmem:[#allocation4 + $0x60] sm:$0xff] %v681
    %746 = vst [vmem:[#allocation4 + $0xa8] sm:$0xff] %v682
    %747 = vst [vmem:[#allocation4 + $0xf0] sm:$0xff] %v683
    %748 = vst [vmem:[#allocation4 + $0x138] sm:$0xff] %v684
    %749 = vst [vmem:[#allocation4 + $0x180] sm:$0xff] %v685
    %750 = vst [vmem:[#allocation4 + $0x1c8] sm:$0xff] %v686
    %751 = vst [vmem:[#allocation4 + $0x210] sm:$0xff] %v687
    %752 = vst [vmem:[#allocation4 + $0x258] sm:$0xff] %v688
    %753 = vst [vmem:[#allocation4 + $0x2a0] sm:$0xff] %v689
    %754 = vst [vmem:[#allocation4 + $0x2e8] sm:$0xff] %v690
    %755 = vst [vmem:[#allocation4 + $0x330] sm:$0xff] %v691
    %756 = vst [vmem:[#allocation4 + $0x378] sm:$0xff] %v692
    %757 = vst [vmem:[#allocation4 + $0x3c0] sm:$0xff] %v693
    %758 = vst [vmem:[#allocation4 + $0x408] sm:$0xff] %v694
    %759 = vst [vmem:[#allocation4 + $0x450] sm:$0xff] %v695
    %760 = vst [vmem:[#allocation4 + $0x498] sm:$0xff] %v696
    %761 = vst [vmem:[#allocation4 + $0x4e0] sm:$0xff] %v697
    %762 = vst [vmem:[#allocation4 + $0x528] sm:$0xff] %v698
    %763 = vst [vmem:[#allocation4 + $0x570] sm:$0xff] %v699
    %764 = vst [vmem:[#allocation4 + $0x5b8] sm:$0xff] %v700
    %765 = vst [vmem:[#allocation4 + $0x600] sm:$0xff] %v701
    %766 = vst [vmem:[#allocation4 + $0x648] sm:$0xff] %v702
    %767 = vst [vmem:[#allocation4 + $0x690] sm:$0xff] %v703
    %768 = vst [vmem:[#allocation4 + $0x6d8] sm:$0xff] %v704
    %769 = vst [vmem:[#allocation4 + $0x720] sm:$0xff] %v705
    %770 = vst [vmem:[#allocation4 + $0x768] sm:$0xff] %v706
    %771 = vst [vmem:[#allocation4 + $0x7b0] sm:$0xff] %v707
    %772 = vst [vmem:[#allocation4 + $0x7f8] sm:$0xff] %v708
    %773 = vst [vmem:[#allocation4 + $0x840] sm:$0xff] %v709
    %774 = vst [vmem:[#allocation4 + $0x888] sm:$0xff] %v710
    %775 = vst [vmem:[#allocation4 + $0x8d0] sm:$0xff] %v711
    %776 = vst [vmem:[#allocation4 + $0x918] sm:$0xff] %v712
    %777 = vst [vmem:[#allocation4 + $0x960] sm:$0xff] %v713
    %778 = vst [vmem:[#allocation4 + $0x9a8] sm:$0xff] %v714
    %779 = vst [vmem:[#allocation4 + $0x9f0] sm:$0xff] %v715
    %780 = vst [vmem:[#allocation4 + $0xa38] sm:$0xff] %v716
    %781 = vst [vmem:[#allocation4 + $0xa80] sm:$0xff] %v717
    %782 = vst [vmem:[#allocation4 + $0xac8] sm:$0xff] %v718
    %783 = vst [vmem:[#allocation4 + $0xb10] sm:$0xff] %v719
    %784 = vst [vmem:[#allocation4 + $0xb58] sm:$0xff] %v720
    %785 = vst [vmem:[#allocation4 + $0xba0] sm:$0xff] %v721
    %786 = vst [vmem:[#allocation4 + $0xbe8] sm:$0xff] %v722
    %787 = vst [vmem:[#allocation4 + $0xc30] sm:$0xff] %v723
    %788 = vst [vmem:[#allocation4 + $0xc78] sm:$0xff] %v724
    %789 = vst [vmem:[#allocation4 + $0xcc0] sm:$0xff] %v725
    %790 = vst [vmem:[#allocation4 + $0xd08] sm:$0xff] %v726
    %791 = vst [vmem:[#allocation4 + $0xd50] sm:$0xff] %v727
    %792 = vst [vmem:[#allocation4 + $0xd98] sm:$0xff] %v728
    %793 = vst [vmem:[#allocation4 + $0xde0] sm:$0xff] %v729
    %794 = vst [vmem:[#allocation4 + $0xe28] sm:$0xff] %v730
    %795 = vst [vmem:[#allocation4 + $0xe70] sm:$0xff] %v731
    %796 = vst [vmem:[#allocation4 + $0xeb8] sm:$0xff] %v732
    %797 = vst [vmem:[#allocation4 + $0xf00] sm:$0xff] %v733
    %798 = vst [vmem:[#allocation4 + $0xf48] sm:$0xff] %v734
    %799 = vst [vmem:[#allocation4 + $0xf90] sm:$0xff] %v735
    %800 = vst [vmem:[#allocation4 + $0xfd8] sm:$0xff] %v736
    %801 = vst [vmem:[#allocation4 + $0x1020] sm:$0xff] %v737
    %802 = vst [vmem:[#allocation4 + $0x1068] sm:$0xff] %v738
    %803 = vst [vmem:[#allocation4 + $0x10b0] sm:$0xff] %v739
    %804 = vst [vmem:[#allocation4 + $0x10f8] sm:$0xff] %v740
    %805 = vst [vmem:[#allocation4 + $0x1140] sm:$0xff] %v741
    %806 = vst [vmem:[#allocation4 + $0x1188] sm:$0xff] %v742
    %807 = vst [vmem:[#allocation4 + $0x11d0] sm:$0xff] %v743
    %v808 = vld [vmem:[%s230 + $0x1] sm:$0xff]
    %v809 = vld [vmem:[%s230 + $0x9] sm:$0xff]
    %v810 = vld [vmem:[%s230 + $0x19] sm:$0xff]
    %v811 = vld [vmem:[%s230 + $0x21] sm:$0xff]
    %v812 = vld [vmem:[%s230 + $0x31] sm:$0xff]
    %v813 = vld [vmem:[%s230 + $0x39] sm:$0xff]
    %v814 = vld [vmem:[%s230 + $0x49] sm:$0xff]
    %v815 = vld [vmem:[%s230 + $0x51] sm:$0xff]
    %v816 = vld [vmem:[%s230 + $0x61] sm:$0xff]
    %v817 = vld [vmem:[%s230 + $0x69] sm:$0xff]
    %v818 = vld [vmem:[%s230 + $0x79] sm:$0xff]
    %v819 = vld [vmem:[%s230 + $0x81] sm:$0xff]
    %v820 = vld [vmem:[%s230 + $0x91] sm:$0xff]
    %v821 = vld [vmem:[%s230 + $0x99] sm:$0xff]
    %v822 = vld [vmem:[%s230 + $0xa9] sm:$0xff]
    %v823 = vld [vmem:[%s230 + $0xb1] sm:$0xff]
    %v824 = vld [vmem:[%s230 + $0xc1] sm:$0xff]
    %v825 = vld [vmem:[%s230 + $0xc9] sm:$0xff]
    %v826 = vld [vmem:[%s230 + $0xd9] sm:$0xff]
    %v827 = vld [vmem:[%s230 + $0xe1] sm:$0xff]
    %v828 = vld [vmem:[%s230 + $0xf1] sm:$0xff]
    %v829 = vld [vmem:[%s230 + $0xf9] sm:$0xff]
    %v830 = vld [vmem:[%s230 + $0x109] sm:$0xff]
    %v831 = vld [vmem:[%s230 + $0x111] sm:$0xff]
    %v832 = vld [vmem:[%s230 + $0x121] sm:$0xff]
    %v833 = vld [vmem:[%s230 + $0x129] sm:$0xff]
    %v834 = vld [vmem:[%s230 + $0x139] sm:$0xff]
    %v835 = vld [vmem:[%s230 + $0x141] sm:$0xff]
    %v836 = vld [vmem:[%s230 + $0x151] sm:$0xff]
    %v837 = vld [vmem:[%s230 + $0x159] sm:$0xff]
    %v838 = vld [vmem:[%s230 + $0x169] sm:$0xff]
    %v839 = vld [vmem:[%s230 + $0x171] sm:$0xff]
    %v840 = vld [vmem:[%s230 + $0x1b1] sm:$0xff]
    %v841 = vld [vmem:[%s230 + $0x1b9] sm:$0xff]
    %v842 = vld [vmem:[%s230 + $0x1c9] sm:$0xff]
    %v843 = vld [vmem:[%s230 + $0x1d1] sm:$0xff]
    %v844 = vld [vmem:[%s230 + $0x1e1] sm:$0xff]
    %v845 = vld [vmem:[%s230 + $0x1e9] sm:$0xff]
    %v846 = vld [vmem:[%s230 + $0x1f9] sm:$0xff]
    %v847 = vld [vmem:[%s230 + $0x201] sm:$0xff]
    %v848 = vld [vmem:[%s230 + $0x211] sm:$0xff]
    %v849 = vld [vmem:[%s230 + $0x219] sm:$0xff]
    %v850 = vld [vmem:[%s230 + $0x229] sm:$0xff]
    %v851 = vld [vmem:[%s230 + $0x231] sm:$0xff]
    %v852 = vld [vmem:[%s230 + $0x241] sm:$0xff]
    %v853 = vld [vmem:[%s230 + $0x249] sm:$0xff]
    %v854 = vld [vmem:[%s230 + $0x259] sm:$0xff]
    %v855 = vld [vmem:[%s230 + $0x261] sm:$0xff]
    %v856 = vld [vmem:[%s230 + $0x271] sm:$0xff]
    %v857 = vld [vmem:[%s230 + $0x279] sm:$0xff]
    %v858 = vld [vmem:[%s230 + $0x289] sm:$0xff]
    %v859 = vld [vmem:[%s230 + $0x291] sm:$0xff]
    %v860 = vld [vmem:[%s230 + $0x2a1] sm:$0xff]
    %v861 = vld [vmem:[%s230 + $0x2a9] sm:$0xff]
    %v862 = vld [vmem:[%s230 + $0x2b9] sm:$0xff]
    %v863 = vld [vmem:[%s230 + $0x2c1] sm:$0xff]
    %v864 = vld [vmem:[%s230 + $0x2d1] sm:$0xff]
    %v865 = vld [vmem:[%s230 + $0x2d9] sm:$0xff]
    %v866 = vld [vmem:[%s230 + $0x2e9] sm:$0xff]
    %v867 = vld [vmem:[%s230 + $0x2f1] sm:$0xff]
    %v868 = vld [vmem:[%s230 + $0x301] sm:$0xff]
    %v869 = vld [vmem:[%s230 + $0x309] sm:$0xff]
    %v870 = vld [vmem:[%s230 + $0x319] sm:$0xff]
    %v871 = vld [vmem:[%s230 + $0x321] sm:$0xff]
    %872 = vst [vmem:[#allocation4 + $0x20] sm:$0xff] %v808
    %873 = vst [vmem:[#allocation4 + $0x68] sm:$0xff] %v809
    %874 = vst [vmem:[#allocation4 + $0xb0] sm:$0xff] %v810
    %875 = vst [vmem:[#allocation4 + $0xf8] sm:$0xff] %v811
    %876 = vst [vmem:[#allocation4 + $0x140] sm:$0xff] %v812
    %877 = vst [vmem:[#allocation4 + $0x188] sm:$0xff] %v813
    %878 = vst [vmem:[#allocation4 + $0x1d0] sm:$0xff] %v814
    %879 = vst [vmem:[#allocation4 + $0x218] sm:$0xff] %v815
    %880 = vst [vmem:[#allocation4 + $0x260] sm:$0xff] %v816
    %881 = vst [vmem:[#allocation4 + $0x2a8] sm:$0xff] %v817
    %882 = vst [vmem:[#allocation4 + $0x2f0] sm:$0xff] %v818
    %883 = vst [vmem:[#allocation4 + $0x338] sm:$0xff] %v819
    %884 = vst [vmem:[#allocation4 + $0x380] sm:$0xff] %v820
    %885 = vst [vmem:[#allocation4 + $0x3c8] sm:$0xff] %v821
    %886 = vst [vmem:[#allocation4 + $0x410] sm:$0xff] %v822
    %887 = vst [vmem:[#allocation4 + $0x458] sm:$0xff] %v823
    %888 = vst [vmem:[#allocation4 + $0x4a0] sm:$0xff] %v824
    %889 = vst [vmem:[#allocation4 + $0x4e8] sm:$0xff] %v825
    %890 = vst [vmem:[#allocation4 + $0x530] sm:$0xff] %v826
    %891 = vst [vmem:[#allocation4 + $0x578] sm:$0xff] %v827
    %892 = vst [vmem:[#allocation4 + $0x5c0] sm:$0xff] %v828
    %893 = vst [vmem:[#allocation4 + $0x608] sm:$0xff] %v829
    %894 = vst [vmem:[#allocation4 + $0x650] sm:$0xff] %v830
    %895 = vst [vmem:[#allocation4 + $0x698] sm:$0xff] %v831
    %896 = vst [vmem:[#allocation4 + $0x6e0] sm:$0xff] %v832
    %897 = vst [vmem:[#allocation4 + $0x728] sm:$0xff] %v833
    %898 = vst [vmem:[#allocation4 + $0x770] sm:$0xff] %v834
    %899 = vst [vmem:[#allocation4 + $0x7b8] sm:$0xff] %v835
    %900 = vst [vmem:[#allocation4 + $0x800] sm:$0xff] %v836
    %901 = vst [vmem:[#allocation4 + $0x848] sm:$0xff] %v837
    %902 = vst [vmem:[#allocation4 + $0x890] sm:$0xff] %v838
    %903 = vst [vmem:[#allocation4 + $0x8d8] sm:$0xff] %v839
    %904 = vst [vmem:[#allocation4 + $0x920] sm:$0xff] %v840
    %905 = vst [vmem:[#allocation4 + $0x968] sm:$0xff] %v841
    %906 = vst [vmem:[#allocation4 + $0x9b0] sm:$0xff] %v842
    %907 = vst [vmem:[#allocation4 + $0x9f8] sm:$0xff] %v843
    %908 = vst [vmem:[#allocation4 + $0xa40] sm:$0xff] %v844
    %909 = vst [vmem:[#allocation4 + $0xa88] sm:$0xff] %v845
    %910 = vst [vmem:[#allocation4 + $0xad0] sm:$0xff] %v846
    %911 = vst [vmem:[#allocation4 + $0xb18] sm:$0xff] %v847
    %912 = vst [vmem:[#allocation4 + $0xb60] sm:$0xff] %v848
    %913 = vst [vmem:[#allocation4 + $0xba8] sm:$0xff] %v849
    %914 = vst [vmem:[#allocation4 + $0xbf0] sm:$0xff] %v850
    %915 = vst [vmem:[#allocation4 + $0xc38] sm:$0xff] %v851
    %916 = vst [vmem:[#allocation4 + $0xc80] sm:$0xff] %v852
    %917 = vst [vmem:[#allocation4 + $0xcc8] sm:$0xff] %v853
    %918 = vst [vmem:[#allocation4 + $0xd10] sm:$0xff] %v854
    %919 = vst [vmem:[#allocation4 + $0xd58] sm:$0xff] %v855
    %920 = vst [vmem:[#allocation4 + $0xda0] sm:$0xff] %v856
    %921 = vst [vmem:[#allocation4 + $0xde8] sm:$0xff] %v857
    %922 = vst [vmem:[#allocation4 + $0xe30] sm:$0xff] %v858
    %923 = vst [vmem:[#allocation4 + $0xe78] sm:$0xff] %v859
    %924 = vst [vmem:[#allocation4 + $0xec0] sm:$0xff] %v860
    %925 = vst [vmem:[#allocation4 + $0xf08] sm:$0xff] %v861
    %926 = vst [vmem:[#allocation4 + $0xf50] sm:$0xff] %v862
    %927 = vst [vmem:[#allocation4 + $0xf98] sm:$0xff] %v863
    %928 = vst [vmem:[#allocation4 + $0xfe0] sm:$0xff] %v864
    %929 = vst [vmem:[#allocation4 + $0x1028] sm:$0xff] %v865
    %930 = vst [vmem:[#allocation4 + $0x1070] sm:$0xff] %v866
    %931 = vst [vmem:[#allocation4 + $0x10b8] sm:$0xff] %v867
    %932 = vst [vmem:[#allocation4 + $0x1100] sm:$0xff] %v868
    %933 = vst [vmem:[#allocation4 + $0x1148] sm:$0xff] %v869
    %934 = vst [vmem:[#allocation4 + $0x1190] sm:$0xff] %v870
    %935 = vst [vmem:[#allocation4 + $0x11d8] sm:$0xff] %v871
    %v936 = vld [vmem:[%s230 + $0x2] sm:$0xff]
    %v937 = vld [vmem:[%s230 + $0xa] sm:$0xff]
    %v938 = vld [vmem:[%s230 + $0x1a] sm:$0xff]
    %v939 = vld [vmem:[%s230 + $0x22] sm:$0xff]
    %v940 = vld [vmem:[%s230 + $0x32] sm:$0xff]
    %v941 = vld [vmem:[%s230 + $0x3a] sm:$0xff]
    %v942 = vld [vmem:[%s230 + $0x4a] sm:$0xff]
    %v943 = vld [vmem:[%s230 + $0x52] sm:$0xff]
    %v944 = vld [vmem:[%s230 + $0x62] sm:$0xff]
    %v945 = vld [vmem:[%s230 + $0x6a] sm:$0xff]
    %v946 = vld [vmem:[%s230 + $0x7a] sm:$0xff]
    %v947 = vld [vmem:[%s230 + $0x82] sm:$0xff]
    %v948 = vld [vmem:[%s230 + $0x92] sm:$0xff]
    %v949 = vld [vmem:[%s230 + $0x9a] sm:$0xff]
    %v950 = vld [vmem:[%s230 + $0xaa] sm:$0xff]
    %v951 = vld [vmem:[%s230 + $0xb2] sm:$0xff]
    %v952 = vld [vmem:[%s230 + $0xc2] sm:$0xff]
    %v953 = vld [vmem:[%s230 + $0xca] sm:$0xff]
    %v954 = vld [vmem:[%s230 + $0xda] sm:$0xff]
    %v955 = vld [vmem:[%s230 + $0xe2] sm:$0xff]
    %v956 = vld [vmem:[%s230 + $0xf2] sm:$0xff]
    %v957 = vld [vmem:[%s230 + $0xfa] sm:$0xff]
    %v958 = vld [vmem:[%s230 + $0x10a] sm:$0xff]
    %v959 = vld [vmem:[%s230 + $0x112] sm:$0xff]
    %v960 = vld [vmem:[%s230 + $0x122] sm:$0xff]
    %v961 = vld [vmem:[%s230 + $0x12a] sm:$0xff]
    %v962 = vld [vmem:[%s230 + $0x13a] sm:$0xff]
    %v963 = vld [vmem:[%s230 + $0x142] sm:$0xff]
    %v964 = vld [vmem:[%s230 + $0x152] sm:$0xff]
    %v965 = vld [vmem:[%s230 + $0x15a] sm:$0xff]
    %v966 = vld [vmem:[%s230 + $0x16a] sm:$0xff]
    %v967 = vld [vmem:[%s230 + $0x172] sm:$0xff]
    %v968 = vld [vmem:[%s230 + $0x1b2] sm:$0xff]
    %v969 = vld [vmem:[%s230 + $0x1ba] sm:$0xff]
    %v970 = vld [vmem:[%s230 + $0x1ca] sm:$0xff]
    %v971 = vld [vmem:[%s230 + $0x1d2] sm:$0xff]
    %v972 = vld [vmem:[%s230 + $0x1e2] sm:$0xff]
    %v973 = vld [vmem:[%s230 + $0x1ea] sm:$0xff]
    %v974 = vld [vmem:[%s230 + $0x1fa] sm:$0xff]
    %v975 = vld [vmem:[%s230 + $0x202] sm:$0xff]
    %v976 = vld [vmem:[%s230 + $0x212] sm:$0xff]
    %v977 = vld [vmem:[%s230 + $0x21a] sm:$0xff]
    %v978 = vld [vmem:[%s230 + $0x22a] sm:$0xff]
    %v979 = vld [vmem:[%s230 + $0x232] sm:$0xff]
    %v980 = vld [vmem:[%s230 + $0x242] sm:$0xff]
    %v981 = vld [vmem:[%s230 + $0x24a] sm:$0xff]
    %v982 = vld [vmem:[%s230 + $0x25a] sm:$0xff]
    %v983 = vld [vmem:[%s230 + $0x262] sm:$0xff]
    %v984 = vld [vmem:[%s230 + $0x272] sm:$0xff]
    %v985 = vld [vmem:[%s230 + $0x27a] sm:$0xff]
    %v986 = vld [vmem:[%s230 + $0x28a] sm:$0xff]
    %v987 = vld [vmem:[%s230 + $0x292] sm:$0xff]
    %v988 = vld [vmem:[%s230 + $0x2a2] sm:$0xff]
    %v989 = vld [vmem:[%s230 + $0x2aa] sm:$0xff]
    %v990 = vld [vmem:[%s230 + $0x2ba] sm:$0xff]
    %v991 = vld [vmem:[%s230 + $0x2c2] sm:$0xff]
    %v992 = vld [vmem:[%s230 + $0x2d2] sm:$0xff]
    %v993 = vld [vmem:[%s230 + $0x2da] sm:$0xff]
    %v994 = vld [vmem:[%s230 + $0x2ea] sm:$0xff]
    %v995 = vld [vmem:[%s230 + $0x2f2] sm:$0xff]
    %v996 = vld [vmem:[%s230 + $0x302] sm:$0xff]
    %v997 = vld [vmem:[%s230 + $0x30a] sm:$0xff]
    %v998 = vld [vmem:[%s230 + $0x31a] sm:$0xff]
    %v999 = vld [vmem:[%s230 + $0x322] sm:$0xff]
    %1000 = vst [vmem:[#allocation4 + $0x28] sm:$0xff] %v936
    %1001 = vst [vmem:[#allocation4 + $0x70] sm:$0xff] %v937
    %1002 = vst [vmem:[#allocation4 + $0xb8] sm:$0xff] %v938
    %1003 = vst [vmem:[#allocation4 + $0x100] sm:$0xff] %v939
    %1004 = vst [vmem:[#allocation4 + $0x148] sm:$0xff] %v940
    %1005 = vst [vmem:[#allocation4 + $0x190] sm:$0xff] %v941
    %1006 = vst [vmem:[#allocation4 + $0x1d8] sm:$0xff] %v942
    %1007 = vst [vmem:[#allocation4 + $0x220] sm:$0xff] %v943
    %1008 = vst [vmem:[#allocation4 + $0x268] sm:$0xff] %v944
    %1009 = vst [vmem:[#allocation4 + $0x2b0] sm:$0xff] %v945
    %1010 = vst [vmem:[#allocation4 + $0x2f8] sm:$0xff] %v946
    %1011 = vst [vmem:[#allocation4 + $0x340] sm:$0xff] %v947
    %1012 = vst [vmem:[#allocation4 + $0x388] sm:$0xff] %v948
    %1013 = vst [vmem:[#allocation4 + $0x3d0] sm:$0xff] %v949
    %1014 = vst [vmem:[#allocation4 + $0x418] sm:$0xff] %v950
    %1015 = vst [vmem:[#allocation4 + $0x460] sm:$0xff] %v951
    %1016 = vst [vmem:[#allocation4 + $0x4a8] sm:$0xff] %v952
    %1017 = vst [vmem:[#allocation4 + $0x4f0] sm:$0xff] %v953
    %1018 = vst [vmem:[#allocation4 + $0x538] sm:$0xff] %v954
    %1019 = vst [vmem:[#allocation4 + $0x580] sm:$0xff] %v955
    %1020 = vst [vmem:[#allocation4 + $0x5c8] sm:$0xff] %v956
    %1021 = vst [vmem:[#allocation4 + $0x610] sm:$0xff] %v957
    %1022 = vst [vmem:[#allocation4 + $0x658] sm:$0xff] %v958
    %1023 = vst [vmem:[#allocation4 + $0x6a0] sm:$0xff] %v959
    %1024 = vst [vmem:[#allocation4 + $0x6e8] sm:$0xff] %v960
    %1025 = vst [vmem:[#allocation4 + $0x730] sm:$0xff] %v961
    %1026 = vst [vmem:[#allocation4 + $0x778] sm:$0xff] %v962
    %1027 = vst [vmem:[#allocation4 + $0x7c0] sm:$0xff] %v963
    %1028 = vst [vmem:[#allocation4 + $0x808] sm:$0xff] %v964
    %1029 = vst [vmem:[#allocation4 + $0x850] sm:$0xff] %v965
    %1030 = vst [vmem:[#allocation4 + $0x898] sm:$0xff] %v966
    %1031 = vst [vmem:[#allocation4 + $0x8e0] sm:$0xff] %v967
    %1032 = vst [vmem:[#allocation4 + $0x928] sm:$0xff] %v968
    %1033 = vst [vmem:[#allocation4 + $0x970] sm:$0xff] %v969
    %1034 = vst [vmem:[#allocation4 + $0x9b8] sm:$0xff] %v970
    %1035 = vst [vmem:[#allocation4 + $0xa00] sm:$0xff] %v971
    %1036 = vst [vmem:[#allocation4 + $0xa48] sm:$0xff] %v972
    %1037 = vst [vmem:[#allocation4 + $0xa90] sm:$0xff] %v973
    %1038 = vst [vmem:[#allocation4 + $0xad8] sm:$0xff] %v974
    %1039 = vst [vmem:[#allocation4 + $0xb20] sm:$0xff] %v975
    %1040 = vst [vmem:[#allocation4 + $0xb68] sm:$0xff] %v976
    %1041 = vst [vmem:[#allocation4 + $0xbb0] sm:$0xff] %v977
    %1042 = vst [vmem:[#allocation4 + $0xbf8] sm:$0xff] %v978
    %1043 = vst [vmem:[#allocation4 + $0xc40] sm:$0xff] %v979
    %1044 = vst [vmem:[#allocation4 + $0xc88] sm:$0xff] %v980
    %1045 = vst [vmem:[#allocation4 + $0xcd0] sm:$0xff] %v981
    %1046 = vst [vmem:[#allocation4 + $0xd18] sm:$0xff] %v982
    %1047 = vst [vmem:[#allocation4 + $0xd60] sm:$0xff] %v983
    %1048 = vst [vmem:[#allocation4 + $0xda8] sm:$0xff] %v984
    %1049 = vst [vmem:[#allocation4 + $0xdf0] sm:$0xff] %v985
    %1050 = vst [vmem:[#allocation4 + $0xe38] sm:$0xff] %v986
    %1051 = vst [vmem:[#allocation4 + $0xe80] sm:$0xff] %v987
    %1052 = vst [vmem:[#allocation4 + $0xec8] sm:$0xff] %v988
    %1053 = vst [vmem:[#allocation4 + $0xf10] sm:$0xff] %v989
    %1054 = vst [vmem:[#allocation4 + $0xf58] sm:$0xff] %v990
    %1055 = vst [vmem:[#allocation4 + $0xfa0] sm:$0xff] %v991
    %1056 = vst [vmem:[#allocation4 + $0xfe8] sm:$0xff] %v992
    %1057 = vst [vmem:[#allocation4 + $0x1030] sm:$0xff] %v993
    %1058 = vst [vmem:[#allocation4 + $0x1078] sm:$0xff] %v994
    %1059 = vst [vmem:[#allocation4 + $0x10c0] sm:$0xff] %v995
    %1060 = vst [vmem:[#allocation4 + $0x1108] sm:$0xff] %v996
    %1061 = vst [vmem:[#allocation4 + $0x1150] sm:$0xff] %v997
    %1062 = vst [vmem:[#allocation4 + $0x1198] sm:$0xff] %v998
    %1063 = vst [vmem:[#allocation4 + $0x11e0] sm:$0xff] %v999
    %s1064 = scalar_lea.vmem [#allocation2], 48
    %v1065 = vld [vmem:[%s1064] sm:$0xff]
    %v1066 = vld [vmem:[%s1064 + $0x8] sm:$0xff]
    %v1067 = vld [vmem:[%s1064 + $0x18] sm:$0xff]
    %v1068 = vld [vmem:[%s1064 + $0x20] sm:$0xff]
    %v1069 = vld [vmem:[%s1064 + $0x30] sm:$0xff]
    %v1070 = vld [vmem:[%s1064 + $0x38] sm:$0xff]
    %v1071 = vld [vmem:[%s1064 + $0x48] sm:$0xff]
    %v1072 = vld [vmem:[%s1064 + $0x50] sm:$0xff]
    %v1073 = vld [vmem:[%s1064 + $0x60] sm:$0xff]
    %v1074 = vld [vmem:[%s1064 + $0x68] sm:$0xff]
    %v1075 = vld [vmem:[%s1064 + $0x78] sm:$0xff]
    %v1076 = vld [vmem:[%s1064 + $0x80] sm:$0xff]
    %v1077 = vld [vmem:[%s1064 + $0x90] sm:$0xff]
    %v1078 = vld [vmem:[%s1064 + $0x98] sm:$0xff]
    %v1079 = vld [vmem:[%s1064 + $0xa8] sm:$0xff]
    %v1080 = vld [vmem:[%s1064 + $0xb0] sm:$0xff]
    %v1081 = vld [vmem:[%s1064 + $0xc0] sm:$0xff]
    %v1082 = vld [vmem:[%s1064 + $0xc8] sm:$0xff]
    %v1083 = vld [vmem:[%s1064 + $0xd8] sm:$0xff]
    %v1084 = vld [vmem:[%s1064 + $0xe0] sm:$0xff]
    %v1085 = vld [vmem:[%s1064 + $0xf0] sm:$0xff]
    %v1086 = vld [vmem:[%s1064 + $0xf8] sm:$0xff]
    %v1087 = vld [vmem:[%s1064 + $0x108] sm:$0xff]
    %v1088 = vld [vmem:[%s1064 + $0x110] sm:$0xff]
    %v1089 = vld [vmem:[%s1064 + $0x120] sm:$0xff]
    %v1090 = vld [vmem:[%s1064 + $0x128] sm:$0xff]
    %v1091 = vld [vmem:[%s1064 + $0x138] sm:$0xff]
    %v1092 = vld [vmem:[%s1064 + $0x140] sm:$0xff]
    %v1093 = vld [vmem:[%s1064 + $0x150] sm:$0xff]
    %v1094 = vld [vmem:[%s1064 + $0x158] sm:$0xff]
    %v1095 = vld [vmem:[%s1064 + $0x168] sm:$0xff]
    %v1096 = vld [vmem:[%s1064 + $0x170] sm:$0xff]
    %v1097 = vld [vmem:[%s1064 + $0x1b0] sm:$0xff]
    %v1098 = vld [vmem:[%s1064 + $0x1b8] sm:$0xff]
    %v1099 = vld [vmem:[%s1064 + $0x1c8] sm:$0xff]
    %v1100 = vld [vmem:[%s1064 + $0x1d0] sm:$0xff]
    %v1101 = vld [vmem:[%s1064 + $0x1e0] sm:$0xff]
    %v1102 = vld [vmem:[%s1064 + $0x1e8] sm:$0xff]
    %v1103 = vld [vmem:[%s1064 + $0x1f8] sm:$0xff]
    %v1104 = vld [vmem:[%s1064 + $0x200] sm:$0xff]
    %v1105 = vld [vmem:[%s1064 + $0x210] sm:$0xff]
    %v1106 = vld [vmem:[%s1064 + $0x218] sm:$0xff]
    %v1107 = vld [vmem:[%s1064 + $0x228] sm:$0xff]
    %v1108 = vld [vmem:[%s1064 + $0x230] sm:$0xff]
    %v1109 = vld [vmem:[%s1064 + $0x240] sm:$0xff]
    %v1110 = vld [vmem:[%s1064 + $0x248] sm:$0xff]
    %v1111 = vld [vmem:[%s1064 + $0x258] sm:$0xff]
    %v1112 = vld [vmem:[%s1064 + $0x260] sm:$0xff]
    %v1113 = vld [vmem:[%s1064 + $0x270] sm:$0xff]
    %v1114 = vld [vmem:[%s1064 + $0x278] sm:$0xff]
    %v1115 = vld [vmem:[%s1064 + $0x288] sm:$0xff]
    %v1116 = vld [vmem:[%s1064 + $0x290] sm:$0xff]
    %v1117 = vld [vmem:[%s1064 + $0x2a0] sm:$0xff]
    %v1118 = vld [vmem:[%s1064 + $0x2a8] sm:$0xff]
    %v1119 = vld [vmem:[%s1064 + $0x2b8] sm:$0xff]
    %v1120 = vld [vmem:[%s1064 + $0x2c0] sm:$0xff]
    %v1121 = vld [vmem:[%s1064 + $0x2d0] sm:$0xff]
    %v1122 = vld [vmem:[%s1064 + $0x2d8] sm:$0xff]
    %v1123 = vld [vmem:[%s1064 + $0x2e8] sm:$0xff]
    %v1124 = vld [vmem:[%s1064 + $0x2f0] sm:$0xff]
    %v1125 = vld [vmem:[%s1064 + $0x300] sm:$0xff]
    %v1126 = vld [vmem:[%s1064 + $0x308] sm:$0xff]
    %v1127 = vld [vmem:[%s1064 + $0x318] sm:$0xff]
    %v1128 = vld [vmem:[%s1064 + $0x320] sm:$0xff]
    %1129 = vst [vmem:[#allocation4 + $0x30] sm:$0xff] %v1065
    %1130 = vst [vmem:[#allocation4 + $0x78] sm:$0xff] %v1066
    %1131 = vst [vmem:[#allocation4 + $0xc0] sm:$0xff] %v1067
    %1132 = vst [vmem:[#allocation4 + $0x108] sm:$0xff] %v1068
    %1133 = vst [vmem:[#allocation4 + $0x150] sm:$0xff] %v1069
    %1134 = vst [vmem:[#allocation4 + $0x198] sm:$0xff] %v1070
    %1135 = vst [vmem:[#allocation4 + $0x1e0] sm:$0xff] %v1071
    %1136 = vst [vmem:[#allocation4 + $0x228] sm:$0xff] %v1072
    %1137 = vst [vmem:[#allocation4 + $0x270] sm:$0xff] %v1073
    %1138 = vst [vmem:[#allocation4 + $0x2b8] sm:$0xff] %v1074
    %1139 = vst [vmem:[#allocation4 + $0x300] sm:$0xff] %v1075
    %1140 = vst [vmem:[#allocation4 + $0x348] sm:$0xff] %v1076
    %1141 = vst [vmem:[#allocation4 + $0x390] sm:$0xff] %v1077
    %1142 = vst [vmem:[#allocation4 + $0x3d8] sm:$0xff] %v1078
    %1143 = vst [vmem:[#allocation4 + $0x420] sm:$0xff] %v1079
    %1144 = vst [vmem:[#allocation4 + $0x468] sm:$0xff] %v1080
    %1145 = vst [vmem:[#allocation4 + $0x4b0] sm:$0xff] %v1081
    %1146 = vst [vmem:[#allocation4 + $0x4f8] sm:$0xff] %v1082
    %1147 = vst [vmem:[#allocation4 + $0x540] sm:$0xff] %v1083
    %1148 = vst [vmem:[#allocation4 + $0x588] sm:$0xff] %v1084
    %1149 = vst [vmem:[#allocation4 + $0x5d0] sm:$0xff] %v1085
    %1150 = vst [vmem:[#allocation4 + $0x618] sm:$0xff] %v1086
    %1151 = vst [vmem:[#allocation4 + $0x660] sm:$0xff] %v1087
    %1152 = vst [vmem:[#allocation4 + $0x6a8] sm:$0xff] %v1088
    %1153 = vst [vmem:[#allocation4 + $0x6f0] sm:$0xff] %v1089
    %1154 = vst [vmem:[#allocation4 + $0x738] sm:$0xff] %v1090
    %1155 = vst [vmem:[#allocation4 + $0x780] sm:$0xff] %v1091
    %1156 = vst [vmem:[#allocation4 + $0x7c8] sm:$0xff] %v1092
    %1157 = vst [vmem:[#allocation4 + $0x810] sm:$0xff] %v1093
    %1158 = vst [vmem:[#allocation4 + $0x858] sm:$0xff] %v1094
    %1159 = vst [vmem:[#allocation4 + $0x8a0] sm:$0xff] %v1095
    %1160 = vst [vmem:[#allocation4 + $0x8e8] sm:$0xff] %v1096
    %1161 = vst [vmem:[#allocation4 + $0x930] sm:$0xff] %v1097
    %1162 = vst [vmem:[#allocation4 + $0x978] sm:$0xff] %v1098
    %1163 = vst [vmem:[#allocation4 + $0x9c0] sm:$0xff] %v1099
    %1164 = vst [vmem:[#allocation4 + $0xa08] sm:$0xff] %v1100
    %1165 = vst [vmem:[#allocation4 + $0xa50] sm:$0xff] %v1101
    %1166 = vst [vmem:[#allocation4 + $0xa98] sm:$0xff] %v1102
    %1167 = vst [vmem:[#allocation4 + $0xae0] sm:$0xff] %v1103
    %1168 = vst [vmem:[#allocation4 + $0xb28] sm:$0xff] %v1104
    %1169 = vst [vmem:[#allocation4 + $0xb70] sm:$0xff] %v1105
    %1170 = vst [vmem:[#allocation4 + $0xbb8] sm:$0xff] %v1106
    %1171 = vst [vmem:[#allocation4 + $0xc00] sm:$0xff] %v1107
    %1172 = vst [vmem:[#allocation4 + $0xc48] sm:$0xff] %v1108
    %1173 = vst [vmem:[#allocation4 + $0xc90] sm:$0xff] %v1109
    %1174 = vst [vmem:[#allocation4 + $0xcd8] sm:$0xff] %v1110
    %1175 = vst [vmem:[#allocation4 + $0xd20] sm:$0xff] %v1111
    %1176 = vst [vmem:[#allocation4 + $0xd68] sm:$0xff] %v1112
    %1177 = vst [vmem:[#allocation4 + $0xdb0] sm:$0xff] %v1113
    %1178 = vst [vmem:[#allocation4 + $0xdf8] sm:$0xff] %v1114
    %1179 = vst [vmem:[#allocation4 + $0xe40] sm:$0xff] %v1115
    %1180 = vst [vmem:[#allocation4 + $0xe88] sm:$0xff] %v1116
    %1181 = vst [vmem:[#allocation4 + $0xed0] sm:$0xff] %v1117
    %1182 = vst [vmem:[#allocation4 + $0xf18] sm:$0xff] %v1118
    %1183 = vst [vmem:[#allocation4 + $0xf60] sm:$0xff] %v1119
    %1184 = vst [vmem:[#allocation4 + $0xfa8] sm:$0xff] %v1120
    %1185 = vst [vmem:[#allocation4 + $0xff0] sm:$0xff] %v1121
    %1186 = vst [vmem:[#allocation4 + $0x1038] sm:$0xff] %v1122
    %1187 = vst [vmem:[#allocation4 + $0x1080] sm:$0xff] %v1123
    %1188 = vst [vmem:[#allocation4 + $0x10c8] sm:$0xff] %v1124
    %1189 = vst [vmem:[#allocation4 + $0x1110] sm:$0xff] %v1125
    %1190 = vst [vmem:[#allocation4 + $0x1158] sm:$0xff] %v1126
    %1191 = vst [vmem:[#allocation4 + $0x11a0] sm:$0xff] %v1127
    %1192 = vst [vmem:[#allocation4 + $0x11e8] sm:$0xff] %v1128
    %v1193 = vld [vmem:[%s1064 + $0x1] sm:$0xff]
    %v1194 = vld [vmem:[%s1064 + $0x9] sm:$0xff]
    %v1195 = vld [vmem:[%s1064 + $0x19] sm:$0xff]
    %v1196 = vld [vmem:[%s1064 + $0x21] sm:$0xff]
    %v1197 = vld [vmem:[%s1064 + $0x31] sm:$0xff]
    %v1198 = vld [vmem:[%s1064 + $0x39] sm:$0xff]
    %v1199 = vld [vmem:[%s1064 + $0x49] sm:$0xff]
    %v1200 = vld [vmem:[%s1064 + $0x51] sm:$0xff]
    %v1201 = vld [vmem:[%s1064 + $0x61] sm:$0xff]
    %v1202 = vld [vmem:[%s1064 + $0x69] sm:$0xff]
    %v1203 = vld [vmem:[%s1064 + $0x79] sm:$0xff]
    %v1204 = vld [vmem:[%s1064 + $0x81] sm:$0xff]
    %v1205 = vld [vmem:[%s1064 + $0x91] sm:$0xff]
    %v1206 = vld [vmem:[%s1064 + $0x99] sm:$0xff]
    %v1207 = vld [vmem:[%s1064 + $0xa9] sm:$0xff]
    %v1208 = vld [vmem:[%s1064 + $0xb1] sm:$0xff]
    %v1209 = vld [vmem:[%s1064 + $0xc1] sm:$0xff]
    %v1210 = vld [vmem:[%s1064 + $0xc9] sm:$0xff]
    %v1211 = vld [vmem:[%s1064 + $0xd9] sm:$0xff]
    %v1212 = vld [vmem:[%s1064 + $0xe1] sm:$0xff]
    %v1213 = vld [vmem:[%s1064 + $0xf1] sm:$0xff]
    %v1214 = vld [vmem:[%s1064 + $0xf9] sm:$0xff]
    %v1215 = vld [vmem:[%s1064 + $0x109] sm:$0xff]
    %v1216 = vld [vmem:[%s1064 + $0x111] sm:$0xff]
    %v1217 = vld [vmem:[%s1064 + $0x121] sm:$0xff]
    %v1218 = vld [vmem:[%s1064 + $0x129] sm:$0xff]
    %v1219 = vld [vmem:[%s1064 + $0x139] sm:$0xff]
    %v1220 = vld [vmem:[%s1064 + $0x141] sm:$0xff]
    %v1221 = vld [vmem:[%s1064 + $0x151] sm:$0xff]
    %v1222 = vld [vmem:[%s1064 + $0x159] sm:$0xff]
    %v1223 = vld [vmem:[%s1064 + $0x169] sm:$0xff]
    %v1224 = vld [vmem:[%s1064 + $0x171] sm:$0xff]
    %v1225 = vld [vmem:[%s1064 + $0x1b1] sm:$0xff]
    %v1226 = vld [vmem:[%s1064 + $0x1b9] sm:$0xff]
    %v1227 = vld [vmem:[%s1064 + $0x1c9] sm:$0xff]
    %v1228 = vld [vmem:[%s1064 + $0x1d1] sm:$0xff]
    %v1229 = vld [vmem:[%s1064 + $0x1e1] sm:$0xff]
    %v1230 = vld [vmem:[%s1064 + $0x1e9] sm:$0xff]
    %v1231 = vld [vmem:[%s1064 + $0x1f9] sm:$0xff]
    %v1232 = vld [vmem:[%s1064 + $0x201] sm:$0xff]
    %v1233 = vld [vmem:[%s1064 + $0x211] sm:$0xff]
    %v1234 = vld [vmem:[%s1064 + $0x219] sm:$0xff]
    %v1235 = vld [vmem:[%s1064 + $0x229] sm:$0xff]
    %v1236 = vld [vmem:[%s1064 + $0x231] sm:$0xff]
    %v1237 = vld [vmem:[%s1064 + $0x241] sm:$0xff]
    %v1238 = vld [vmem:[%s1064 + $0x249] sm:$0xff]
    %v1239 = vld [vmem:[%s1064 + $0x259] sm:$0xff]
    %v1240 = vld [vmem:[%s1064 + $0x261] sm:$0xff]
    %v1241 = vld [vmem:[%s1064 + $0x271] sm:$0xff]
    %v1242 = vld [vmem:[%s1064 + $0x279] sm:$0xff]
    %v1243 = vld [vmem:[%s1064 + $0x289] sm:$0xff]
    %v1244 = vld [vmem:[%s1064 + $0x291] sm:$0xff]
    %v1245 = vld [vmem:[%s1064 + $0x2a1] sm:$0xff]
    %v1246 = vld [vmem:[%s1064 + $0x2a9] sm:$0xff]
    %v1247 = vld [vmem:[%s1064 + $0x2b9] sm:$0xff]
    %v1248 = vld [vmem:[%s1064 + $0x2c1] sm:$0xff]
    %v1249 = vld [vmem:[%s1064 + $0x2d1] sm:$0xff]
    %v1250 = vld [vmem:[%s1064 + $0x2d9] sm:$0xff]
    %v1251 = vld [vmem:[%s1064 + $0x2e9] sm:$0xff]
    %v1252 = vld [vmem:[%s1064 + $0x2f1] sm:$0xff]
    %v1253 = vld [vmem:[%s1064 + $0x301] sm:$0xff]
    %v1254 = vld [vmem:[%s1064 + $0x309] sm:$0xff]
    %v1255 = vld [vmem:[%s1064 + $0x319] sm:$0xff]
    %v1256 = vld [vmem:[%s1064 + $0x321] sm:$0xff]
    %1257 = vst [vmem:[#allocation4 + $0x38] sm:$0xff] %v1193
    %1258 = vst [vmem:[#allocation4 + $0x80] sm:$0xff] %v1194
    %1259 = vst [vmem:[#allocation4 + $0xc8] sm:$0xff] %v1195
    %1260 = vst [vmem:[#allocation4 + $0x110] sm:$0xff] %v1196
    %1261 = vst [vmem:[#allocation4 + $0x158] sm:$0xff] %v1197
    %1262 = vst [vmem:[#allocation4 + $0x1a0] sm:$0xff] %v1198
    %1263 = vst [vmem:[#allocation4 + $0x1e8] sm:$0xff] %v1199
    %1264 = vst [vmem:[#allocation4 + $0x230] sm:$0xff] %v1200
    %1265 = vst [vmem:[#allocation4 + $0x278] sm:$0xff] %v1201
    %1266 = vst [vmem:[#allocation4 + $0x2c0] sm:$0xff] %v1202
    %1267 = vst [vmem:[#allocation4 + $0x308] sm:$0xff] %v1203
    %1268 = vst [vmem:[#allocation4 + $0x350] sm:$0xff] %v1204
    %1269 = vst [vmem:[#allocation4 + $0x398] sm:$0xff] %v1205
    %1270 = vst [vmem:[#allocation4 + $0x3e0] sm:$0xff] %v1206
    %1271 = vst [vmem:[#allocation4 + $0x428] sm:$0xff] %v1207
    %1272 = vst [vmem:[#allocation4 + $0x470] sm:$0xff] %v1208
    %1273 = vst [vmem:[#allocation4 + $0x4b8] sm:$0xff] %v1209
    %1274 = vst [vmem:[#allocation4 + $0x500] sm:$0xff] %v1210
    %1275 = vst [vmem:[#allocation4 + $0x548] sm:$0xff] %v1211
    %1276 = vst [vmem:[#allocation4 + $0x590] sm:$0xff] %v1212
    %1277 = vst [vmem:[#allocation4 + $0x5d8] sm:$0xff] %v1213
    %1278 = vst [vmem:[#allocation4 + $0x620] sm:$0xff] %v1214
    %1279 = vst [vmem:[#allocation4 + $0x668] sm:$0xff] %v1215
    %1280 = vst [vmem:[#allocation4 + $0x6b0] sm:$0xff] %v1216
    %1281 = vst [vmem:[#allocation4 + $0x6f8] sm:$0xff] %v1217
    %1282 = vst [vmem:[#allocation4 + $0x740] sm:$0xff] %v1218
    %1283 = vst [vmem:[#allocation4 + $0x788] sm:$0xff] %v1219
    %1284 = vst [vmem:[#allocation4 + $0x7d0] sm:$0xff] %v1220
    %1285 = vst [vmem:[#allocation4 + $0x818] sm:$0xff] %v1221
    %1286 = vst [vmem:[#allocation4 + $0x860] sm:$0xff] %v1222
    %1287 = vst [vmem:[#allocation4 + $0x8a8] sm:$0xff] %v1223
    %1288 = vst [vmem:[#allocation4 + $0x8f0] sm:$0xff] %v1224
    %1289 = vst [vmem:[#allocation4 + $0x938] sm:$0xff] %v1225
    %1290 = vst [vmem:[#allocation4 + $0x980] sm:$0xff] %v1226
    %1291 = vst [vmem:[#allocation4 + $0x9c8] sm:$0xff] %v1227
    %1292 = vst [vmem:[#allocation4 + $0xa10] sm:$0xff] %v1228
    %1293 = vst [vmem:[#allocation4 + $0xa58] sm:$0xff] %v1229
    %1294 = vst [vmem:[#allocation4 + $0xaa0] sm:$0xff] %v1230
    %1295 = vst [vmem:[#allocation4 + $0xae8] sm:$0xff] %v1231
    %1296 = vst [vmem:[#allocation4 + $0xb30] sm:$0xff] %v1232
    %1297 = vst [vmem:[#allocation4 + $0xb78] sm:$0xff] %v1233
    %1298 = vst [vmem:[#allocation4 + $0xbc0] sm:$0xff] %v1234
    %1299 = vst [vmem:[#allocation4 + $0xc08] sm:$0xff] %v1235
    %1300 = vst [vmem:[#allocation4 + $0xc50] sm:$0xff] %v1236
    %1301 = vst [vmem:[#allocation4 + $0xc98] sm:$0xff] %v1237
    %1302 = vst [vmem:[#allocation4 + $0xce0] sm:$0xff] %v1238
    %1303 = vst [vmem:[#allocation4 + $0xd28] sm:$0xff] %v1239
    %1304 = vst [vmem:[#allocation4 + $0xd70] sm:$0xff] %v1240
    %1305 = vst [vmem:[#allocation4 + $0xdb8] sm:$0xff] %v1241
    %1306 = vst [vmem:[#allocation4 + $0xe00] sm:$0xff] %v1242
    %1307 = vst [vmem:[#allocation4 + $0xe48] sm:$0xff] %v1243
    %1308 = vst [vmem:[#allocation4 + $0xe90] sm:$0xff] %v1244
    %1309 = vst [vmem:[#allocation4 + $0xed8] sm:$0xff] %v1245
    %1310 = vst [vmem:[#allocation4 + $0xf20] sm:$0xff] %v1246
    %1311 = vst [vmem:[#allocation4 + $0xf68] sm:$0xff] %v1247
    %1312 = vst [vmem:[#allocation4 + $0xfb0] sm:$0xff] %v1248
    %1313 = vst [vmem:[#allocation4 + $0xff8] sm:$0xff] %v1249
    %1314 = vst [vmem:[#allocation4 + $0x1040] sm:$0xff] %v1250
    %1315 = vst [vmem:[#allocation4 + $0x1088] sm:$0xff] %v1251
    %1316 = vst [vmem:[#allocation4 + $0x10d0] sm:$0xff] %v1252
    %1317 = vst [vmem:[#allocation4 + $0x1118] sm:$0xff] %v1253
    %1318 = vst [vmem:[#allocation4 + $0x1160] sm:$0xff] %v1254
    %1319 = vst [vmem:[#allocation4 + $0x11a8] sm:$0xff] %v1255
    %1320 = vst [vmem:[#allocation4 + $0x11f0] sm:$0xff] %v1256
    %v1321 = vld [vmem:[%s1064 + $0x2] sm:$0xff]
    %v1322 = vld [vmem:[%s1064 + $0xa] sm:$0xff]
    %v1323 = vld [vmem:[%s1064 + $0x1a] sm:$0xff]
    %v1324 = vld [vmem:[%s1064 + $0x22] sm:$0xff]
    %v1325 = vld [vmem:[%s1064 + $0x32] sm:$0xff]
    %v1326 = vld [vmem:[%s1064 + $0x3a] sm:$0xff]
    %v1327 = vld [vmem:[%s1064 + $0x4a] sm:$0xff]
    %v1328 = vld [vmem:[%s1064 + $0x52] sm:$0xff]
    %v1329 = vld [vmem:[%s1064 + $0x62] sm:$0xff]
    %v1330 = vld [vmem:[%s1064 + $0x6a] sm:$0xff]
    %v1331 = vld [vmem:[%s1064 + $0x7a] sm:$0xff]
    %v1332 = vld [vmem:[%s1064 + $0x82] sm:$0xff]
    %v1333 = vld [vmem:[%s1064 + $0x92] sm:$0xff]
    %v1334 = vld [vmem:[%s1064 + $0x9a] sm:$0xff]
    %v1335 = vld [vmem:[%s1064 + $0xaa] sm:$0xff]
    %v1336 = vld [vmem:[%s1064 + $0xb2] sm:$0xff]
    %v1337 = vld [vmem:[%s1064 + $0xc2] sm:$0xff]
    %v1338 = vld [vmem:[%s1064 + $0xca] sm:$0xff]
    %v1339 = vld [vmem:[%s1064 + $0xda] sm:$0xff]
    %v1340 = vld [vmem:[%s1064 + $0xe2] sm:$0xff]
    %v1341 = vld [vmem:[%s1064 + $0xf2] sm:$0xff]
    %v1342 = vld [vmem:[%s1064 + $0xfa] sm:$0xff]
    %v1343 = vld [vmem:[%s1064 + $0x10a] sm:$0xff]
    %v1344 = vld [vmem:[%s1064 + $0x112] sm:$0xff]
    %v1345 = vld [vmem:[%s1064 + $0x122] sm:$0xff]
    %v1346 = vld [vmem:[%s1064 + $0x12a] sm:$0xff]
    %v1347 = vld [vmem:[%s1064 + $0x13a] sm:$0xff]
    %v1348 = vld [vmem:[%s1064 + $0x142] sm:$0xff]
    %v1349 = vld [vmem:[%s1064 + $0x152] sm:$0xff]
    %v1350 = vld [vmem:[%s1064 + $0x15a] sm:$0xff]
    %v1351 = vld [vmem:[%s1064 + $0x16a] sm:$0xff]
    %v1352 = vld [vmem:[%s1064 + $0x172] sm:$0xff]
    %v1353 = vld [vmem:[%s1064 + $0x1b2] sm:$0xff]
    %v1354 = vld [vmem:[%s1064 + $0x1ba] sm:$0xff]
    %v1355 = vld [vmem:[%s1064 + $0x1ca] sm:$0xff]
    %v1356 = vld [vmem:[%s1064 + $0x1d2] sm:$0xff]
    %v1357 = vld [vmem:[%s1064 + $0x1e2] sm:$0xff]
    %v1358 = vld [vmem:[%s1064 + $0x1ea] sm:$0xff]
    %v1359 = vld [vmem:[%s1064 + $0x1fa] sm:$0xff]
    %v1360 = vld [vmem:[%s1064 + $0x202] sm:$0xff]
    %v1361 = vld [vmem:[%s1064 + $0x212] sm:$0xff]
    %v1362 = vld [vmem:[%s1064 + $0x21a] sm:$0xff]
    %v1363 = vld [vmem:[%s1064 + $0x22a] sm:$0xff]
    %v1364 = vld [vmem:[%s1064 + $0x232] sm:$0xff]
    %v1365 = vld [vmem:[%s1064 + $0x242] sm:$0xff]
    %v1366 = vld [vmem:[%s1064 + $0x24a] sm:$0xff]
    %v1367 = vld [vmem:[%s1064 + $0x25a] sm:$0xff]
    %v1368 = vld [vmem:[%s1064 + $0x262] sm:$0xff]
    %v1369 = vld [vmem:[%s1064 + $0x272] sm:$0xff]
    %v1370 = vld [vmem:[%s1064 + $0x27a] sm:$0xff]
    %v1371 = vld [vmem:[%s1064 + $0x28a] sm:$0xff]
    %v1372 = vld [vmem:[%s1064 + $0x292] sm:$0xff]
    %v1373 = vld [vmem:[%s1064 + $0x2a2] sm:$0xff]
    %v1374 = vld [vmem:[%s1064 + $0x2aa] sm:$0xff]
    %v1375 = vld [vmem:[%s1064 + $0x2ba] sm:$0xff]
    %v1376 = vld [vmem:[%s1064 + $0x2c2] sm:$0xff]
    %v1377 = vld [vmem:[%s1064 + $0x2d2] sm:$0xff]
    %v1378 = vld [vmem:[%s1064 + $0x2da] sm:$0xff]
    %v1379 = vld [vmem:[%s1064 + $0x2ea] sm:$0xff]
    %v1380 = vld [vmem:[%s1064 + $0x2f2] sm:$0xff]
    %v1381 = vld [vmem:[%s1064 + $0x302] sm:$0xff]
    %v1382 = vld [vmem:[%s1064 + $0x30a] sm:$0xff]
    %v1383 = vld [vmem:[%s1064 + $0x31a] sm:$0xff]
    %v1384 = vld [vmem:[%s1064 + $0x322] sm:$0xff]
    %1385 = vst [vmem:[#allocation4 + $0x40] sm:$0xff] %v1321
    %1386 = vst [vmem:[#allocation4 + $0x88] sm:$0xff] %v1322
    %1387 = vst [vmem:[#allocation4 + $0xd0] sm:$0xff] %v1323
    %1388 = vst [vmem:[#allocation4 + $0x118] sm:$0xff] %v1324
    %1389 = vst [vmem:[#allocation4 + $0x160] sm:$0xff] %v1325
    %1390 = vst [vmem:[#allocation4 + $0x1a8] sm:$0xff] %v1326
    %1391 = vst [vmem:[#allocation4 + $0x1f0] sm:$0xff] %v1327
    %1392 = vst [vmem:[#allocation4 + $0x238] sm:$0xff] %v1328
    %1393 = vst [vmem:[#allocation4 + $0x280] sm:$0xff] %v1329
    %1394 = vst [vmem:[#allocation4 + $0x2c8] sm:$0xff] %v1330
    %1395 = vst [vmem:[#allocation4 + $0x310] sm:$0xff] %v1331
    %1396 = vst [vmem:[#allocation4 + $0x358] sm:$0xff] %v1332
    %1397 = vst [vmem:[#allocation4 + $0x3a0] sm:$0xff] %v1333
    %1398 = vst [vmem:[#allocation4 + $0x3e8] sm:$0xff] %v1334
    %1399 = vst [vmem:[#allocation4 + $0x430] sm:$0xff] %v1335
    %1400 = vst [vmem:[#allocation4 + $0x478] sm:$0xff] %v1336
    %1401 = vst [vmem:[#allocation4 + $0x4c0] sm:$0xff] %v1337
    %1402 = vst [vmem:[#allocation4 + $0x508] sm:$0xff] %v1338
    %1403 = vst [vmem:[#allocation4 + $0x550] sm:$0xff] %v1339
    %1404 = vst [vmem:[#allocation4 + $0x598] sm:$0xff] %v1340
    %1405 = vst [vmem:[#allocation4 + $0x5e0] sm:$0xff] %v1341
    %1406 = vst [vmem:[#allocation4 + $0x628] sm:$0xff] %v1342
    %1407 = vst [vmem:[#allocation4 + $0x670] sm:$0xff] %v1343
    %1408 = vst [vmem:[#allocation4 + $0x6b8] sm:$0xff] %v1344
    %1409 = vst [vmem:[#allocation4 + $0x700] sm:$0xff] %v1345
    %1410 = vst [vmem:[#allocation4 + $0x748] sm:$0xff] %v1346
    %1411 = vst [vmem:[#allocation4 + $0x790] sm:$0xff] %v1347
    %1412 = vst [vmem:[#allocation4 + $0x7d8] sm:$0xff] %v1348
    %1413 = vst [vmem:[#allocation4 + $0x820] sm:$0xff] %v1349
    %1414 = vst [vmem:[#allocation4 + $0x868] sm:$0xff] %v1350
    %1415 = vst [vmem:[#allocation4 + $0x8b0] sm:$0xff] %v1351
    %1416 = vst [vmem:[#allocation4 + $0x8f8] sm:$0xff] %v1352
    %1417 = vst [vmem:[#allocation4 + $0x940] sm:$0xff] %v1353
    %1418 = vst [vmem:[#allocation4 + $0x988] sm:$0xff] %v1354
    %1419 = vst [vmem:[#allocation4 + $0x9d0] sm:$0xff] %v1355
    %1420 = vst [vmem:[#allocation4 + $0xa18] sm:$0xff] %v1356
    %1421 = vst [vmem:[#allocation4 + $0xa60] sm:$0xff] %v1357
    %1422 = vst [vmem:[#allocation4 + $0xaa8] sm:$0xff] %v1358
    %1423 = vst [vmem:[#allocation4 + $0xaf0] sm:$0xff] %v1359
    %1424 = vst [vmem:[#allocation4 + $0xb38] sm:$0xff] %v1360
    %1425 = vst [vmem:[#allocation4 + $0xb80] sm:$0xff] %v1361
    %1426 = vst [vmem:[#allocation4 + $0xbc8] sm:$0xff] %v1362
    %1427 = vst [vmem:[#allocation4 + $0xc10] sm:$0xff] %v1363
    %1428 = vst [vmem:[#allocation4 + $0xc58] sm:$0xff] %v1364
    %1429 = vst [vmem:[#allocation4 + $0xca0] sm:$0xff] %v1365
    %1430 = vst [vmem:[#allocation4 + $0xce8] sm:$0xff] %v1366
    %1431 = vst [vmem:[#allocation4 + $0xd30] sm:$0xff] %v1367
    %1432 = vst [vmem:[#allocation4 + $0xd78] sm:$0xff] %v1368
    %1433 = vst [vmem:[#allocation4 + $0xdc0] sm:$0xff] %v1369
    %1434 = vst [vmem:[#allocation4 + $0xe08] sm:$0xff] %v1370
    %1435 = vst [vmem:[#allocation4 + $0xe50] sm:$0xff] %v1371
    %1436 = vst [vmem:[#allocation4 + $0xe98] sm:$0xff] %v1372
    %1437 = vst [vmem:[#allocation4 + $0xee0] sm:$0xff] %v1373
    %1438 = vst [vmem:[#allocation4 + $0xf28] sm:$0xff] %v1374
    %1439 = vst [vmem:[#allocation4 + $0xf70] sm:$0xff] %v1375
    %1440 = vst [vmem:[#allocation4 + $0xfb8] sm:$0xff] %v1376
    %1441 = vst [vmem:[#allocation4 + $0x1000] sm:$0xff] %v1377
    %1442 = vst [vmem:[#allocation4 + $0x1048] sm:$0xff] %v1378
    %1443 = vst [vmem:[#allocation4 + $0x1090] sm:$0xff] %v1379
    %1444 = vst [vmem:[#allocation4 + $0x10d8] sm:$0xff] %v1380
    %1445 = vst [vmem:[#allocation4 + $0x1120] sm:$0xff] %v1381
    %1446 = vst [vmem:[#allocation4 + $0x1168] sm:$0xff] %v1382
    %1447 = vst [vmem:[#allocation4 + $0x11b0] sm:$0xff] %v1383
    %1448 = vst [vmem:[#allocation4 + $0x11f8] sm:$0xff] %v1384
    %v1449 = vld [vmem:[#allocation4] sm:$0xff]
    %v1450 = vld [vmem:[#allocation4 + $0x8] sm:$0xff]
    %v1451 = vld [vmem:[#allocation4 + $0x10] sm:$0xff]
    %v1452 = vld [vmem:[#allocation4 + $0x18] sm:$0xff]
    %v1453 = vld [vmem:[#allocation4 + $0x20] sm:$0xff]
    %v1454 = vld [vmem:[#allocation4 + $0x28] sm:$0xff]
    %v1455 = vld [vmem:[#allocation4 + $0x30] sm:$0xff]
    %v1456 = vld [vmem:[#allocation4 + $0x38] sm:$0xff]
    %v1457 = vld [vmem:[#allocation4 + $0x40] sm:$0xff]
    %v1458 = vld [vmem:[#allocation4 + $0x48] sm:$0xff]
    %v1459 = vld [vmem:[#allocation4 + $0x50] sm:$0xff]
    %v1460 = vld [vmem:[#allocation4 + $0x58] sm:$0xff]
    %v1461 = vld [vmem:[#allocation4 + $0x60] sm:$0xff]
    %v1462 = vld [vmem:[#allocation4 + $0x68] sm:$0xff]
    %v1463 = vld [vmem:[#allocation4 + $0x70] sm:$0xff]
    %v1464 = vld [vmem:[#allocation4 + $0x78] sm:$0xff]
    %v1465 = vld [vmem:[#allocation4 + $0x80] sm:$0xff]
    %v1466 = vld [vmem:[#allocation4 + $0x88] sm:$0xff]
    %v1467 = vld [vmem:[#allocation4 + $0x90] sm:$0xff]
    %v1468 = vld [vmem:[#allocation4 + $0x98] sm:$0xff]
    %v1469 = vld [vmem:[#allocation4 + $0xa0] sm:$0xff]
    %v1470 = vld [vmem:[#allocation4 + $0xa8] sm:$0xff]
    %v1471 = vld [vmem:[#allocation4 + $0xb0] sm:$0xff]
    %v1472 = vld [vmem:[#allocation4 + $0xb8] sm:$0xff]
    %v1473 = vld [vmem:[#allocation4 + $0xc0] sm:$0xff]
    %v1474 = vld [vmem:[#allocation4 + $0xc8] sm:$0xff]
    %v1475 = vld [vmem:[#allocation4 + $0xd0] sm:$0xff]
    %v1476 = vld [vmem:[#allocation4 + $0xd8] sm:$0xff]
    %v1477 = vld [vmem:[#allocation4 + $0xe0] sm:$0xff]
    %v1478 = vld [vmem:[#allocation4 + $0xe8] sm:$0xff]
    %v1479 = vld [vmem:[#allocation4 + $0xf0] sm:$0xff]
    %v1480 = vld [vmem:[#allocation4 + $0xf8] sm:$0xff]
    %v1481 = vld [vmem:[#allocation4 + $0x100] sm:$0xff]
    %v1482 = vld [vmem:[#allocation4 + $0x108] sm:$0xff]
    %v1483 = vld [vmem:[#allocation4 + $0x110] sm:$0xff]
    %v1484 = vld [vmem:[#allocation4 + $0x118] sm:$0xff]
    %v1485 = vld [vmem:[#allocation4 + $0x120] sm:$0xff]
    %v1486 = vld [vmem:[#allocation4 + $0x128] sm:$0xff]
    %v1487 = vld [vmem:[#allocation4 + $0x130] sm:$0xff]
    %v1488 = vld [vmem:[#allocation4 + $0x138] sm:$0xff]
    %v1489 = vld [vmem:[#allocation4 + $0x140] sm:$0xff]
    %v1490 = vld [vmem:[#allocation4 + $0x148] sm:$0xff]
    %v1491 = vld [vmem:[#allocation4 + $0x150] sm:$0xff]
    %v1492 = vld [vmem:[#allocation4 + $0x158] sm:$0xff]
    %v1493 = vld [vmem:[#allocation4 + $0x160] sm:$0xff]
    %v1494 = vld [vmem:[#allocation4 + $0x168] sm:$0xff]
    %v1495 = vld [vmem:[#allocation4 + $0x170] sm:$0xff]
    %v1496 = vld [vmem:[#allocation4 + $0x178] sm:$0xff]
    %v1497 = vld [vmem:[#allocation4 + $0x180] sm:$0xff]
    %v1498 = vld [vmem:[#allocation4 + $0x188] sm:$0xff]
    %v1499 = vld [vmem:[#allocation4 + $0x190] sm:$0xff]
    %v1500 = vld [vmem:[#allocation4 + $0x198] sm:$0xff]
    %v1501 = vld [vmem:[#allocation4 + $0x1a0] sm:$0xff]
    %v1502 = vld [vmem:[#allocation4 + $0x1a8] sm:$0xff]
    %v1503 = vld [vmem:[#allocation4 + $0x1b0] sm:$0xff]
    %v1504 = vld [vmem:[#allocation4 + $0x1b8] sm:$0xff]
    %v1505 = vld [vmem:[#allocation4 + $0x1c0] sm:$0xff]
    %v1506 = vld [vmem:[#allocation4 + $0x1c8] sm:$0xff]
    %v1507 = vld [vmem:[#allocation4 + $0x1d0] sm:$0xff]
    %v1508 = vld [vmem:[#allocation4 + $0x1d8] sm:$0xff]
    %v1509 = vld [vmem:[#allocation4 + $0x1e0] sm:$0xff]
    %v1510 = vld [vmem:[#allocation4 + $0x1e8] sm:$0xff]
    %v1511 = vld [vmem:[#allocation4 + $0x1f0] sm:$0xff]
    %v1512 = vld [vmem:[#allocation4 + $0x1f8] sm:$0xff]
    %v1513 = vld [vmem:[#allocation4 + $0x200] sm:$0xff]
    %v1514 = vld [vmem:[#allocation4 + $0x208] sm:$0xff]
    %v1515 = vld [vmem:[#allocation4 + $0x210] sm:$0xff]
    %v1516 = vld [vmem:[#allocation4 + $0x218] sm:$0xff]
    %v1517 = vld [vmem:[#allocation4 + $0x220] sm:$0xff]
    %v1518 = vld [vmem:[#allocation4 + $0x228] sm:$0xff]
    %v1519 = vld [vmem:[#allocation4 + $0x230] sm:$0xff]
    %v1520 = vld [vmem:[#allocation4 + $0x238] sm:$0xff]
    %v1521 = vld [vmem:[#allocation4 + $0x240] sm:$0xff]
    %v1522 = vld [vmem:[#allocation4 + $0x248] sm:$0xff]
    %v1523 = vld [vmem:[#allocation4 + $0x250] sm:$0xff]
    %v1524 = vld [vmem:[#allocation4 + $0x258] sm:$0xff]
    %v1525 = vld [vmem:[#allocation4 + $0x260] sm:$0xff]
    %v1526 = vld [vmem:[#allocation4 + $0x268] sm:$0xff]
    %v1527 = vld [vmem:[#allocation4 + $0x270] sm:$0xff]
    %v1528 = vld [vmem:[#allocation4 + $0x278] sm:$0xff]
    %v1529 = vld [vmem:[#allocation4 + $0x280] sm:$0xff]
    %v1530 = vld [vmem:[#allocation4 + $0x288] sm:$0xff]
    %v1531 = vld [vmem:[#allocation4 + $0x290] sm:$0xff]
    %v1532 = vld [vmem:[#allocation4 + $0x298] sm:$0xff]
    %v1533 = vld [vmem:[#allocation4 + $0x2a0] sm:$0xff]
    %v1534 = vld [vmem:[#allocation4 + $0x2a8] sm:$0xff]
    %v1535 = vld [vmem:[#allocation4 + $0x2b0] sm:$0xff]
    %v1536 = vld [vmem:[#allocation4 + $0x2b8] sm:$0xff]
    %v1537 = vld [vmem:[#allocation4 + $0x2c0] sm:$0xff]
    %v1538 = vld [vmem:[#allocation4 + $0x2c8] sm:$0xff]
    %v1539 = vld [vmem:[#allocation4 + $0x2d0] sm:$0xff]
    %v1540 = vld [vmem:[#allocation4 + $0x2d8] sm:$0xff]
    %v1541 = vld [vmem:[#allocation4 + $0x2e0] sm:$0xff]
    %v1542 = vld [vmem:[#allocation4 + $0x2e8] sm:$0xff]
    %v1543 = vld [vmem:[#allocation4 + $0x2f0] sm:$0xff]
    %v1544 = vld [vmem:[#allocation4 + $0x2f8] sm:$0xff]
    %v1545 = vld [vmem:[#allocation4 + $0x300] sm:$0xff]
    %v1546 = vld [vmem:[#allocation4 + $0x308] sm:$0xff]
    %v1547 = vld [vmem:[#allocation4 + $0x310] sm:$0xff]
    %v1548 = vld [vmem:[#allocation4 + $0x318] sm:$0xff]
    %v1549 = vld [vmem:[#allocation4 + $0x320] sm:$0xff]
    %v1550 = vld [vmem:[#allocation4 + $0x328] sm:$0xff]
    %v1551 = vld [vmem:[#allocation4 + $0x330] sm:$0xff]
    %v1552 = vld [vmem:[#allocation4 + $0x338] sm:$0xff]
    %v1553 = vld [vmem:[#allocation4 + $0x340] sm:$0xff]
    %v1554 = vld [vmem:[#allocation4 + $0x348] sm:$0xff]
    %v1555 = vld [vmem:[#allocation4 + $0x350] sm:$0xff]
    %v1556 = vld [vmem:[#allocation4 + $0x358] sm:$0xff]
    %v1557 = vld [vmem:[#allocation4 + $0x360] sm:$0xff]
    %v1558 = vld [vmem:[#allocation4 + $0x368] sm:$0xff]
    %v1559 = vld [vmem:[#allocation4 + $0x370] sm:$0xff]
    %v1560 = vld [vmem:[#allocation4 + $0x378] sm:$0xff]
    %v1561 = vld [vmem:[#allocation4 + $0x380] sm:$0xff]
    %v1562 = vld [vmem:[#allocation4 + $0x388] sm:$0xff]
    %v1563 = vld [vmem:[#allocation4 + $0x390] sm:$0xff]
    %v1564 = vld [vmem:[#allocation4 + $0x398] sm:$0xff]
    %v1565 = vld [vmem:[#allocation4 + $0x3a0] sm:$0xff]
    %v1566 = vld [vmem:[#allocation4 + $0x3a8] sm:$0xff]
    %v1567 = vld [vmem:[#allocation4 + $0x3b0] sm:$0xff]
    %v1568 = vld [vmem:[#allocation4 + $0x3b8] sm:$0xff]
    %v1569 = vld [vmem:[#allocation4 + $0x3c0] sm:$0xff]
    %v1570 = vld [vmem:[#allocation4 + $0x3c8] sm:$0xff]
    %v1571 = vld [vmem:[#allocation4 + $0x3d0] sm:$0xff]
    %v1572 = vld [vmem:[#allocation4 + $0x3d8] sm:$0xff]
    %v1573 = vld [vmem:[#allocation4 + $0x3e0] sm:$0xff]
    %v1574 = vld [vmem:[#allocation4 + $0x3e8] sm:$0xff]
    %v1575 = vld [vmem:[#allocation4 + $0x3f0] sm:$0xff]
    %v1576 = vld [vmem:[#allocation4 + $0x3f8] sm:$0xff]
    %v1577 = vld [vmem:[#allocation4 + $0x400] sm:$0xff]
    %v1578 = vld [vmem:[#allocation4 + $0x408] sm:$0xff]
    %v1579 = vld [vmem:[#allocation4 + $0x410] sm:$0xff]
    %v1580 = vld [vmem:[#allocation4 + $0x418] sm:$0xff]
    %v1581 = vld [vmem:[#allocation4 + $0x420] sm:$0xff]
    %v1582 = vld [vmem:[#allocation4 + $0x428] sm:$0xff]
    %v1583 = vld [vmem:[#allocation4 + $0x430] sm:$0xff]
    %v1584 = vld [vmem:[#allocation4 + $0x438] sm:$0xff]
    %v1585 = vld [vmem:[#allocation4 + $0x440] sm:$0xff]
    %v1586 = vld [vmem:[#allocation4 + $0x448] sm:$0xff]
    %v1587 = vld [vmem:[#allocation4 + $0x450] sm:$0xff]
    %v1588 = vld [vmem:[#allocation4 + $0x458] sm:$0xff]
    %v1589 = vld [vmem:[#allocation4 + $0x460] sm:$0xff]
    %v1590 = vld [vmem:[#allocation4 + $0x468] sm:$0xff]
    %v1591 = vld [vmem:[#allocation4 + $0x470] sm:$0xff]
    %v1592 = vld [vmem:[#allocation4 + $0x478] sm:$0xff]
    %v1593 = vld [vmem:[#allocation4 + $0x480] sm:$0xff]
    %v1594 = vld [vmem:[#allocation4 + $0x488] sm:$0xff]
    %v1595 = vld [vmem:[#allocation4 + $0x490] sm:$0xff]
    %v1596 = vld [vmem:[#allocation4 + $0x498] sm:$0xff]
    %v1597 = vld [vmem:[#allocation4 + $0x4a0] sm:$0xff]
    %v1598 = vld [vmem:[#allocation4 + $0x4a8] sm:$0xff]
    %v1599 = vld [vmem:[#allocation4 + $0x4b0] sm:$0xff]
    %v1600 = vld [vmem:[#allocation4 + $0x4b8] sm:$0xff]
    %v1601 = vld [vmem:[#allocation4 + $0x4c0] sm:$0xff]
    %v1602 = vld [vmem:[#allocation4 + $0x4c8] sm:$0xff]
    %v1603 = vld [vmem:[#allocation4 + $0x4d0] sm:$0xff]
    %v1604 = vld [vmem:[#allocation4 + $0x4d8] sm:$0xff]
    %v1605 = vld [vmem:[#allocation4 + $0x4e0] sm:$0xff]
    %v1606 = vld [vmem:[#allocation4 + $0x4e8] sm:$0xff]
    %v1607 = vld [vmem:[#allocation4 + $0x4f0] sm:$0xff]
    %v1608 = vld [vmem:[#allocation4 + $0x4f8] sm:$0xff]
    %v1609 = vld [vmem:[#allocation4 + $0x500] sm:$0xff]
    %v1610 = vld [vmem:[#allocation4 + $0x508] sm:$0xff]
    %v1611 = vld [vmem:[#allocation4 + $0x510] sm:$0xff]
    %v1612 = vld [vmem:[#allocation4 + $0x518] sm:$0xff]
    %v1613 = vld [vmem:[#allocation4 + $0x520] sm:$0xff]
    %v1614 = vld [vmem:[#allocation4 + $0x528] sm:$0xff]
    %v1615 = vld [vmem:[#allocation4 + $0x530] sm:$0xff]
    %v1616 = vld [vmem:[#allocation4 + $0x538] sm:$0xff]
    %v1617 = vld [vmem:[#allocation4 + $0x540] sm:$0xff]
    %v1618 = vld [vmem:[#allocation4 + $0x548] sm:$0xff]
    %v1619 = vld [vmem:[#allocation4 + $0x550] sm:$0xff]
    %v1620 = vld [vmem:[#allocation4 + $0x558] sm:$0xff]
    %v1621 = vld [vmem:[#allocation4 + $0x560] sm:$0xff]
    %v1622 = vld [vmem:[#allocation4 + $0x568] sm:$0xff]
    %v1623 = vld [vmem:[#allocation4 + $0x570] sm:$0xff]
    %v1624 = vld [vmem:[#allocation4 + $0x578] sm:$0xff]
    %v1625 = vld [vmem:[#allocation4 + $0x580] sm:$0xff]
    %v1626 = vld [vmem:[#allocation4 + $0x588] sm:$0xff]
    %v1627 = vld [vmem:[#allocation4 + $0x590] sm:$0xff]
    %v1628 = vld [vmem:[#allocation4 + $0x598] sm:$0xff]
    %v1629 = vld [vmem:[#allocation4 + $0x5a0] sm:$0xff]
    %v1630 = vld [vmem:[#allocation4 + $0x5a8] sm:$0xff]
    %v1631 = vld [vmem:[#allocation4 + $0x5b0] sm:$0xff]
    %v1632 = vld [vmem:[#allocation4 + $0x5b8] sm:$0xff]
    %v1633 = vld [vmem:[#allocation4 + $0x5c0] sm:$0xff]
    %v1634 = vld [vmem:[#allocation4 + $0x5c8] sm:$0xff]
    %v1635 = vld [vmem:[#allocation4 + $0x5d0] sm:$0xff]
    %v1636 = vld [vmem:[#allocation4 + $0x5d8] sm:$0xff]
    %v1637 = vld [vmem:[#allocation4 + $0x5e0] sm:$0xff]
    %v1638 = vld [vmem:[#allocation4 + $0x5e8] sm:$0xff]
    %v1639 = vld [vmem:[#allocation4 + $0x5f0] sm:$0xff]
    %v1640 = vld [vmem:[#allocation4 + $0x5f8] sm:$0xff]
    %v1641 = vld [vmem:[#allocation4 + $0x600] sm:$0xff]
    %v1642 = vld [vmem:[#allocation4 + $0x608] sm:$0xff]
    %v1643 = vld [vmem:[#allocation4 + $0x610] sm:$0xff]
    %v1644 = vld [vmem:[#allocation4 + $0x618] sm:$0xff]
    %v1645 = vld [vmem:[#allocation4 + $0x620] sm:$0xff]
    %v1646 = vld [vmem:[#allocation4 + $0x628] sm:$0xff]
    %v1647 = vld [vmem:[#allocation4 + $0x630] sm:$0xff]
    %v1648 = vld [vmem:[#allocation4 + $0x638] sm:$0xff]
    %v1649 = vld [vmem:[#allocation4 + $0x640] sm:$0xff]
    %v1650 = vld [vmem:[#allocation4 + $0x648] sm:$0xff]
    %v1651 = vld [vmem:[#allocation4 + $0x650] sm:$0xff]
    %v1652 = vld [vmem:[#allocation4 + $0x658] sm:$0xff]
    %v1653 = vld [vmem:[#allocation4 + $0x660] sm:$0xff]
    %v1654 = vld [vmem:[#allocation4 + $0x668] sm:$0xff]
    %v1655 = vld [vmem:[#allocation4 + $0x670] sm:$0xff]
    %v1656 = vld [vmem:[#allocation4 + $0x678] sm:$0xff]
    %v1657 = vld [vmem:[#allocation4 + $0x680] sm:$0xff]
    %v1658 = vld [vmem:[#allocation4 + $0x688] sm:$0xff]
    %v1659 = vld [vmem:[#allocation4 + $0x690] sm:$0xff]
    %v1660 = vld [vmem:[#allocation4 + $0x698] sm:$0xff]
    %v1661 = vld [vmem:[#allocation4 + $0x6a0] sm:$0xff]
    %v1662 = vld [vmem:[#allocation4 + $0x6a8] sm:$0xff]
    %v1663 = vld [vmem:[#allocation4 + $0x6b0] sm:$0xff]
    %v1664 = vld [vmem:[#allocation4 + $0x6b8] sm:$0xff]
    %v1665 = vld [vmem:[#allocation4 + $0x6c0] sm:$0xff]
    %v1666 = vld [vmem:[#allocation4 + $0x6c8] sm:$0xff]
    %v1667 = vld [vmem:[#allocation4 + $0x6d0] sm:$0xff]
    %v1668 = vld [vmem:[#allocation4 + $0x6d8] sm:$0xff]
    %v1669 = vld [vmem:[#allocation4 + $0x6e0] sm:$0xff]
    %v1670 = vld [vmem:[#allocation4 + $0x6e8] sm:$0xff]
    %v1671 = vld [vmem:[#allocation4 + $0x6f0] sm:$0xff]
    %v1672 = vld [vmem:[#allocation4 + $0x6f8] sm:$0xff]
    %v1673 = vld [vmem:[#allocation4 + $0x700] sm:$0xff]
    %v1674 = vld [vmem:[#allocation4 + $0x708] sm:$0xff]
    %v1675 = vld [vmem:[#allocation4 + $0x710] sm:$0xff]
    %v1676 = vld [vmem:[#allocation4 + $0x718] sm:$0xff]
    %v1677 = vld [vmem:[#allocation4 + $0x720] sm:$0xff]
    %v1678 = vld [vmem:[#allocation4 + $0x728] sm:$0xff]
    %v1679 = vld [vmem:[#allocation4 + $0x730] sm:$0xff]
    %v1680 = vld [vmem:[#allocation4 + $0x738] sm:$0xff]
    %v1681 = vld [vmem:[#allocation4 + $0x740] sm:$0xff]
    %v1682 = vld [vmem:[#allocation4 + $0x748] sm:$0xff]
    %v1683 = vld [vmem:[#allocation4 + $0x750] sm:$0xff]
    %v1684 = vld [vmem:[#allocation4 + $0x758] sm:$0xff]
    %v1685 = vld [vmem:[#allocation4 + $0x760] sm:$0xff]
    %v1686 = vld [vmem:[#allocation4 + $0x768] sm:$0xff]
    %v1687 = vld [vmem:[#allocation4 + $0x770] sm:$0xff]
    %v1688 = vld [vmem:[#allocation4 + $0x778] sm:$0xff]
    %v1689 = vld [vmem:[#allocation4 + $0x780] sm:$0xff]
    %v1690 = vld [vmem:[#allocation4 + $0x788] sm:$0xff]
    %v1691 = vld [vmem:[#allocation4 + $0x790] sm:$0xff]
    %v1692 = vld [vmem:[#allocation4 + $0x798] sm:$0xff]
    %v1693 = vld [vmem:[#allocation4 + $0x7a0] sm:$0xff]
    %v1694 = vld [vmem:[#allocation4 + $0x7a8] sm:$0xff]
    %v1695 = vld [vmem:[#allocation4 + $0x7b0] sm:$0xff]
    %v1696 = vld [vmem:[#allocation4 + $0x7b8] sm:$0xff]
    %v1697 = vld [vmem:[#allocation4 + $0x7c0] sm:$0xff]
    %v1698 = vld [vmem:[#allocation4 + $0x7c8] sm:$0xff]
    %v1699 = vld [vmem:[#allocation4 + $0x7d0] sm:$0xff]
    %v1700 = vld [vmem:[#allocation4 + $0x7d8] sm:$0xff]
    %v1701 = vld [vmem:[#allocation4 + $0x7e0] sm:$0xff]
    %v1702 = vld [vmem:[#allocation4 + $0x7e8] sm:$0xff]
    %v1703 = vld [vmem:[#allocation4 + $0x7f0] sm:$0xff]
    %v1704 = vld [vmem:[#allocation4 + $0x7f8] sm:$0xff]
    %v1705 = vld [vmem:[#allocation4 + $0x800] sm:$0xff]
    %v1706 = vld [vmem:[#allocation4 + $0x808] sm:$0xff]
    %v1707 = vld [vmem:[#allocation4 + $0x810] sm:$0xff]
    %v1708 = vld [vmem:[#allocation4 + $0x818] sm:$0xff]
    %v1709 = vld [vmem:[#allocation4 + $0x820] sm:$0xff]
    %v1710 = vld [vmem:[#allocation4 + $0x828] sm:$0xff]
    %v1711 = vld [vmem:[#allocation4 + $0x830] sm:$0xff]
    %v1712 = vld [vmem:[#allocation4 + $0x838] sm:$0xff]
    %v1713 = vld [vmem:[#allocation4 + $0x840] sm:$0xff]
    %v1714 = vld [vmem:[#allocation4 + $0x848] sm:$0xff]
    %v1715 = vld [vmem:[#allocation4 + $0x850] sm:$0xff]
    %v1716 = vld [vmem:[#allocation4 + $0x858] sm:$0xff]
    %v1717 = vld [vmem:[#allocation4 + $0x860] sm:$0xff]
    %v1718 = vld [vmem:[#allocation4 + $0x868] sm:$0xff]
    %v1719 = vld [vmem:[#allocation4 + $0x870] sm:$0xff]
    %v1720 = vld [vmem:[#allocation4 + $0x878] sm:$0xff]
    %v1721 = vld [vmem:[#allocation4 + $0x880] sm:$0xff]
    %v1722 = vld [vmem:[#allocation4 + $0x888] sm:$0xff]
    %v1723 = vld [vmem:[#allocation4 + $0x890] sm:$0xff]
    %v1724 = vld [vmem:[#allocation4 + $0x898] sm:$0xff]
    %v1725 = vld [vmem:[#allocation4 + $0x8a0] sm:$0xff]
    %v1726 = vld [vmem:[#allocation4 + $0x8a8] sm:$0xff]
    %v1727 = vld [vmem:[#allocation4 + $0x8b0] sm:$0xff]
    %v1728 = vld [vmem:[#allocation4 + $0x8b8] sm:$0xff]
    %v1729 = vld [vmem:[#allocation4 + $0x8c0] sm:$0xff]
    %v1730 = vld [vmem:[#allocation4 + $0x8c8] sm:$0xff]
    %v1731 = vld [vmem:[#allocation4 + $0x8d0] sm:$0xff]
    %v1732 = vld [vmem:[#allocation4 + $0x8d8] sm:$0xff]
    %v1733 = vld [vmem:[#allocation4 + $0x8e0] sm:$0xff]
    %v1734 = vld [vmem:[#allocation4 + $0x8e8] sm:$0xff]
    %v1735 = vld [vmem:[#allocation4 + $0x8f0] sm:$0xff]
    %v1736 = vld [vmem:[#allocation4 + $0x8f8] sm:$0xff]
    %v1737 = vld [vmem:[#allocation4 + $0x900] sm:$0xff]
    %v1738 = vld [vmem:[#allocation4 + $0x908] sm:$0xff]
    %v1739 = vld [vmem:[#allocation4 + $0x910] sm:$0xff]
    %v1740 = vld [vmem:[#allocation4 + $0x918] sm:$0xff]
    %v1741 = vld [vmem:[#allocation4 + $0x920] sm:$0xff]
    %v1742 = vld [vmem:[#allocation4 + $0x928] sm:$0xff]
    %v1743 = vld [vmem:[#allocation4 + $0x930] sm:$0xff]
    %v1744 = vld [vmem:[#allocation4 + $0x938] sm:$0xff]
    %v1745 = vld [vmem:[#allocation4 + $0x940] sm:$0xff]
    %v1746 = vld [vmem:[#allocation4 + $0x948] sm:$0xff]
    %v1747 = vld [vmem:[#allocation4 + $0x950] sm:$0xff]
    %v1748 = vld [vmem:[#allocation4 + $0x958] sm:$0xff]
    %v1749 = vld [vmem:[#allocation4 + $0x960] sm:$0xff]
    %v1750 = vld [vmem:[#allocation4 + $0x968] sm:$0xff]
    %v1751 = vld [vmem:[#allocation4 + $0x970] sm:$0xff]
    %v1752 = vld [vmem:[#allocation4 + $0x978] sm:$0xff]
    %v1753 = vld [vmem:[#allocation4 + $0x980] sm:$0xff]
    %v1754 = vld [vmem:[#allocation4 + $0x988] sm:$0xff]
    %v1755 = vld [vmem:[#allocation4 + $0x990] sm:$0xff]
    %v1756 = vld [vmem:[#allocation4 + $0x998] sm:$0xff]
    %v1757 = vld [vmem:[#allocation4 + $0x9a0] sm:$0xff]
    %v1758 = vld [vmem:[#allocation4 + $0x9a8] sm:$0xff]
    %v1759 = vld [vmem:[#allocation4 + $0x9b0] sm:$0xff]
    %v1760 = vld [vmem:[#allocation4 + $0x9b8] sm:$0xff]
    %v1761 = vld [vmem:[#allocation4 + $0x9c0] sm:$0xff]
    %v1762 = vld [vmem:[#allocation4 + $0x9c8] sm:$0xff]
    %v1763 = vld [vmem:[#allocation4 + $0x9d0] sm:$0xff]
    %v1764 = vld [vmem:[#allocation4 + $0x9d8] sm:$0xff]
    %v1765 = vld [vmem:[#allocation4 + $0x9e0] sm:$0xff]
    %v1766 = vld [vmem:[#allocation4 + $0x9e8] sm:$0xff]
    %v1767 = vld [vmem:[#allocation4 + $0x9f0] sm:$0xff]
    %v1768 = vld [vmem:[#allocation4 + $0x9f8] sm:$0xff]
    %v1769 = vld [vmem:[#allocation4 + $0xa00] sm:$0xff]
    %v1770 = vld [vmem:[#allocation4 + $0xa08] sm:$0xff]
    %v1771 = vld [vmem:[#allocation4 + $0xa10] sm:$0xff]
    %v1772 = vld [vmem:[#allocation4 + $0xa18] sm:$0xff]
    %v1773 = vld [vmem:[#allocation4 + $0xa20] sm:$0xff]
    %v1774 = vld [vmem:[#allocation4 + $0xa28] sm:$0xff]
    %v1775 = vld [vmem:[#allocation4 + $0xa30] sm:$0xff]
    %v1776 = vld [vmem:[#allocation4 + $0xa38] sm:$0xff]
    %v1777 = vld [vmem:[#allocation4 + $0xa40] sm:$0xff]
    %v1778 = vld [vmem:[#allocation4 + $0xa48] sm:$0xff]
    %v1779 = vld [vmem:[#allocation4 + $0xa50] sm:$0xff]
    %v1780 = vld [vmem:[#allocation4 + $0xa58] sm:$0xff]
    %v1781 = vld [vmem:[#allocation4 + $0xa60] sm:$0xff]
    %v1782 = vld [vmem:[#allocation4 + $0xa68] sm:$0xff]
    %v1783 = vld [vmem:[#allocation4 + $0xa70] sm:$0xff]
    %v1784 = vld [vmem:[#allocation4 + $0xa78] sm:$0xff]
    %v1785 = vld [vmem:[#allocation4 + $0xa80] sm:$0xff]
    %v1786 = vld [vmem:[#allocation4 + $0xa88] sm:$0xff]
    %v1787 = vld [vmem:[#allocation4 + $0xa90] sm:$0xff]
    %v1788 = vld [vmem:[#allocation4 + $0xa98] sm:$0xff]
    %v1789 = vld [vmem:[#allocation4 + $0xaa0] sm:$0xff]
    %v1790 = vld [vmem:[#allocation4 + $0xaa8] sm:$0xff]
    %v1791 = vld [vmem:[#allocation4 + $0xab0] sm:$0xff]
    %v1792 = vld [vmem:[#allocation4 + $0xab8] sm:$0xff]
    %v1793 = vld [vmem:[#allocation4 + $0xac0] sm:$0xff]
    %v1794 = vld [vmem:[#allocation4 + $0xac8] sm:$0xff]
    %v1795 = vld [vmem:[#allocation4 + $0xad0] sm:$0xff]
    %v1796 = vld [vmem:[#allocation4 + $0xad8] sm:$0xff]
    %v1797 = vld [vmem:[#allocation4 + $0xae0] sm:$0xff]
    %v1798 = vld [vmem:[#allocation4 + $0xae8] sm:$0xff]
    %v1799 = vld [vmem:[#allocation4 + $0xaf0] sm:$0xff]
    %v1800 = vld [vmem:[#allocation4 + $0xaf8] sm:$0xff]
    %v1801 = vld [vmem:[#allocation4 + $0xb00] sm:$0xff]
    %v1802 = vld [vmem:[#allocation4 + $0xb08] sm:$0xff]
    %v1803 = vld [vmem:[#allocation4 + $0xb10] sm:$0xff]
    %v1804 = vld [vmem:[#allocation4 + $0xb18] sm:$0xff]
    %v1805 = vld [vmem:[#allocation4 + $0xb20] sm:$0xff]
    %v1806 = vld [vmem:[#allocation4 + $0xb28] sm:$0xff]
    %v1807 = vld [vmem:[#allocation4 + $0xb30] sm:$0xff]
    %v1808 = vld [vmem:[#allocation4 + $0xb38] sm:$0xff]
    %v1809 = vld [vmem:[#allocation4 + $0xb40] sm:$0xff]
    %v1810 = vld [vmem:[#allocation4 + $0xb48] sm:$0xff]
    %v1811 = vld [vmem:[#allocation4 + $0xb50] sm:$0xff]
    %v1812 = vld [vmem:[#allocation4 + $0xb58] sm:$0xff]
    %v1813 = vld [vmem:[#allocation4 + $0xb60] sm:$0xff]
    %v1814 = vld [vmem:[#allocation4 + $0xb68] sm:$0xff]
    %v1815 = vld [vmem:[#allocation4 + $0xb70] sm:$0xff]
    %v1816 = vld [vmem:[#allocation4 + $0xb78] sm:$0xff]
    %v1817 = vld [vmem:[#allocation4 + $0xb80] sm:$0xff]
    %v1818 = vld [vmem:[#allocation4 + $0xb88] sm:$0xff]
    %v1819 = vld [vmem:[#allocation4 + $0xb90] sm:$0xff]
    %v1820 = vld [vmem:[#allocation4 + $0xb98] sm:$0xff]
    %v1821 = vld [vmem:[#allocation4 + $0xba0] sm:$0xff]
    %v1822 = vld [vmem:[#allocation4 + $0xba8] sm:$0xff]
    %v1823 = vld [vmem:[#allocation4 + $0xbb0] sm:$0xff]
    %v1824 = vld [vmem:[#allocation4 + $0xbb8] sm:$0xff]
    %v1825 = vld [vmem:[#allocation4 + $0xbc0] sm:$0xff]
    %v1826 = vld [vmem:[#allocation4 + $0xbc8] sm:$0xff]
    %v1827 = vld [vmem:[#allocation4 + $0xbd0] sm:$0xff]
    %v1828 = vld [vmem:[#allocation4 + $0xbd8] sm:$0xff]
    %v1829 = vld [vmem:[#allocation4 + $0xbe0] sm:$0xff]
    %v1830 = vld [vmem:[#allocation4 + $0xbe8] sm:$0xff]
    %v1831 = vld [vmem:[#allocation4 + $0xbf0] sm:$0xff]
    %v1832 = vld [vmem:[#allocation4 + $0xbf8] sm:$0xff]
    %v1833 = vld [vmem:[#allocation4 + $0xc00] sm:$0xff]
    %v1834 = vld [vmem:[#allocation4 + $0xc08] sm:$0xff]
    %v1835 = vld [vmem:[#allocation4 + $0xc10] sm:$0xff]
    %v1836 = vld [vmem:[#allocation4 + $0xc18] sm:$0xff]
    %v1837 = vld [vmem:[#allocation4 + $0xc20] sm:$0xff]
    %v1838 = vld [vmem:[#allocation4 + $0xc28] sm:$0xff]
    %v1839 = vld [vmem:[#allocation4 + $0xc30] sm:$0xff]
    %v1840 = vld [vmem:[#allocation4 + $0xc38] sm:$0xff]
    %v1841 = vld [vmem:[#allocation4 + $0xc40] sm:$0xff]
    %v1842 = vld [vmem:[#allocation4 + $0xc48] sm:$0xff]
    %v1843 = vld [vmem:[#allocation4 + $0xc50] sm:$0xff]
    %v1844 = vld [vmem:[#allocation4 + $0xc58] sm:$0xff]
    %v1845 = vld [vmem:[#allocation4 + $0xc60] sm:$0xff]
    %v1846 = vld [vmem:[#allocation4 + $0xc68] sm:$0xff]
    %v1847 = vld [vmem:[#allocation4 + $0xc70] sm:$0xff]
    %v1848 = vld [vmem:[#allocation4 + $0xc78] sm:$0xff]
    %v1849 = vld [vmem:[#allocation4 + $0xc80] sm:$0xff]
    %v1850 = vld [vmem:[#allocation4 + $0xc88] sm:$0xff]
    %v1851 = vld [vmem:[#allocation4 + $0xc90] sm:$0xff]
    %v1852 = vld [vmem:[#allocation4 + $0xc98] sm:$0xff]
    %v1853 = vld [vmem:[#allocation4 + $0xca0] sm:$0xff]
    %v1854 = vld [vmem:[#allocation4 + $0xca8] sm:$0xff]
    %v1855 = vld [vmem:[#allocation4 + $0xcb0] sm:$0xff]
    %v1856 = vld [vmem:[#allocation4 + $0xcb8] sm:$0xff]
    %v1857 = vld [vmem:[#allocation4 + $0xcc0] sm:$0xff]
    %v1858 = vld [vmem:[#allocation4 + $0xcc8] sm:$0xff]
    %v1859 = vld [vmem:[#allocation4 + $0xcd0] sm:$0xff]
    %v1860 = vld [vmem:[#allocation4 + $0xcd8] sm:$0xff]
    %v1861 = vld [vmem:[#allocation4 + $0xce0] sm:$0xff]
    %v1862 = vld [vmem:[#allocation4 + $0xce8] sm:$0xff]
    %v1863 = vld [vmem:[#allocation4 + $0xcf0] sm:$0xff]
    %v1864 = vld [vmem:[#allocation4 + $0xcf8] sm:$0xff]
    %v1865 = vld [vmem:[#allocation4 + $0xd00] sm:$0xff]
    %v1866 = vld [vmem:[#allocation4 + $0xd08] sm:$0xff]
    %v1867 = vld [vmem:[#allocation4 + $0xd10] sm:$0xff]
    %v1868 = vld [vmem:[#allocation4 + $0xd18] sm:$0xff]
    %v1869 = vld [vmem:[#allocation4 + $0xd20] sm:$0xff]
    %v1870 = vld [vmem:[#allocation4 + $0xd28] sm:$0xff]
    %v1871 = vld [vmem:[#allocation4 + $0xd30] sm:$0xff]
    %v1872 = vld [vmem:[#allocation4 + $0xd38] sm:$0xff]
    %v1873 = vld [vmem:[#allocation4 + $0xd40] sm:$0xff]
    %v1874 = vld [vmem:[#allocation4 + $0xd48] sm:$0xff]
    %v1875 = vld [vmem:[#allocation4 + $0xd50] sm:$0xff]
    %v1876 = vld [vmem:[#allocation4 + $0xd58] sm:$0xff]
    %v1877 = vld [vmem:[#allocation4 + $0xd60] sm:$0xff]
    %v1878 = vld [vmem:[#allocation4 + $0xd68] sm:$0xff]
    %v1879 = vld [vmem:[#allocation4 + $0xd70] sm:$0xff]
    %v1880 = vld [vmem:[#allocation4 + $0xd78] sm:$0xff]
    %v1881 = vld [vmem:[#allocation4 + $0xd80] sm:$0xff]
    %v1882 = vld [vmem:[#allocation4 + $0xd88] sm:$0xff]
    %v1883 = vld [vmem:[#allocation4 + $0xd90] sm:$0xff]
    %v1884 = vld [vmem:[#allocation4 + $0xd98] sm:$0xff]
    %v1885 = vld [vmem:[#allocation4 + $0xda0] sm:$0xff]
    %v1886 = vld [vmem:[#allocation4 + $0xda8] sm:$0xff]
    %v1887 = vld [vmem:[#allocation4 + $0xdb0] sm:$0xff]
    %v1888 = vld [vmem:[#allocation4 + $0xdb8] sm:$0xff]
    %v1889 = vld [vmem:[#allocation4 + $0xdc0] sm:$0xff]
    %v1890 = vld [vmem:[#allocation4 + $0xdc8] sm:$0xff]
    %v1891 = vld [vmem:[#allocation4 + $0xdd0] sm:$0xff]
    %v1892 = vld [vmem:[#allocation4 + $0xdd8] sm:$0xff]
    %v1893 = vld [vmem:[#allocation4 + $0xde0] sm:$0xff]
    %v1894 = vld [vmem:[#allocation4 + $0xde8] sm:$0xff]
    %v1895 = vld [vmem:[#allocation4 + $0xdf0] sm:$0xff]
    %v1896 = vld [vmem:[#allocation4 + $0xdf8] sm:$0xff]
    %v1897 = vld [vmem:[#allocation4 + $0xe00] sm:$0xff]
    %v1898 = vld [vmem:[#allocation4 + $0xe08] sm:$0xff]
    %v1899 = vld [vmem:[#allocation4 + $0xe10] sm:$0xff]
    %v1900 = vld [vmem:[#allocation4 + $0xe18] sm:$0xff]
    %v1901 = vld [vmem:[#allocation4 + $0xe20] sm:$0xff]
    %v1902 = vld [vmem:[#allocation4 + $0xe28] sm:$0xff]
    %v1903 = vld [vmem:[#allocation4 + $0xe30] sm:$0xff]
    %v1904 = vld [vmem:[#allocation4 + $0xe38] sm:$0xff]
    %v1905 = vld [vmem:[#allocation4 + $0xe40] sm:$0xff]
    %v1906 = vld [vmem:[#allocation4 + $0xe48] sm:$0xff]
    %v1907 = vld [vmem:[#allocation4 + $0xe50] sm:$0xff]
    %v1908 = vld [vmem:[#allocation4 + $0xe58] sm:$0xff]
    %v1909 = vld [vmem:[#allocation4 + $0xe60] sm:$0xff]
    %v1910 = vld [vmem:[#allocation4 + $0xe68] sm:$0xff]
    %v1911 = vld [vmem:[#allocation4 + $0xe70] sm:$0xff]
    %v1912 = vld [vmem:[#allocation4 + $0xe78] sm:$0xff]
    %v1913 = vld [vmem:[#allocation4 + $0xe80] sm:$0xff]
    %v1914 = vld [vmem:[#allocation4 + $0xe88] sm:$0xff]
    %v1915 = vld [vmem:[#allocation4 + $0xe90] sm:$0xff]
    %v1916 = vld [vmem:[#allocation4 + $0xe98] sm:$0xff]
    %v1917 = vld [vmem:[#allocation4 + $0xea0] sm:$0xff]
    %v1918 = vld [vmem:[#allocation4 + $0xea8] sm:$0xff]
    %v1919 = vld [vmem:[#allocation4 + $0xeb0] sm:$0xff]
    %v1920 = vld [vmem:[#allocation4 + $0xeb8] sm:$0xff]
    %v1921 = vld [vmem:[#allocation4 + $0xec0] sm:$0xff]
    %v1922 = vld [vmem:[#allocation4 + $0xec8] sm:$0xff]
    %v1923 = vld [vmem:[#allocation4 + $0xed0] sm:$0xff]
    %v1924 = vld [vmem:[#allocation4 + $0xed8] sm:$0xff]
    %v1925 = vld [vmem:[#allocation4 + $0xee0] sm:$0xff]
    %v1926 = vld [vmem:[#allocation4 + $0xee8] sm:$0xff]
    %v1927 = vld [vmem:[#allocation4 + $0xef0] sm:$0xff]
    %v1928 = vld [vmem:[#allocation4 + $0xef8] sm:$0xff]
    %v1929 = vld [vmem:[#allocation4 + $0xf00] sm:$0xff]
    %v1930 = vld [vmem:[#allocation4 + $0xf08] sm:$0xff]
    %v1931 = vld [vmem:[#allocation4 + $0xf10] sm:$0xff]
    %v1932 = vld [vmem:[#allocation4 + $0xf18] sm:$0xff]
    %v1933 = vld [vmem:[#allocation4 + $0xf20] sm:$0xff]
    %v1934 = vld [vmem:[#allocation4 + $0xf28] sm:$0xff]
    %v1935 = vld [vmem:[#allocation4 + $0xf30] sm:$0xff]
    %v1936 = vld [vmem:[#allocation4 + $0xf38] sm:$0xff]
    %v1937 = vld [vmem:[#allocation4 + $0xf40] sm:$0xff]
    %v1938 = vld [vmem:[#allocation4 + $0xf48] sm:$0xff]
    %v1939 = vld [vmem:[#allocation4 + $0xf50] sm:$0xff]
    %v1940 = vld [vmem:[#allocation4 + $0xf58] sm:$0xff]
    %v1941 = vld [vmem:[#allocation4 + $0xf60] sm:$0xff]
    %v1942 = vld [vmem:[#allocation4 + $0xf68] sm:$0xff]
    %v1943 = vld [vmem:[#allocation4 + $0xf70] sm:$0xff]
    %v1944 = vld [vmem:[#allocation4 + $0xf78] sm:$0xff]
    %v1945 = vld [vmem:[#allocation4 + $0xf80] sm:$0xff]
    %v1946 = vld [vmem:[#allocation4 + $0xf88] sm:$0xff]
    %v1947 = vld [vmem:[#allocation4 + $0xf90] sm:$0xff]
    %v1948 = vld [vmem:[#allocation4 + $0xf98] sm:$0xff]
    %v1949 = vld [vmem:[#allocation4 + $0xfa0] sm:$0xff]
    %v1950 = vld [vmem:[#allocation4 + $0xfa8] sm:$0xff]
    %v1951 = vld [vmem:[#allocation4 + $0xfb0] sm:$0xff]
    %v1952 = vld [vmem:[#allocation4 + $0xfb8] sm:$0xff]
    %v1953 = vld [vmem:[#allocation4 + $0xfc0] sm:$0xff]
    %v1954 = vld [vmem:[#allocation4 + $0xfc8] sm:$0xff]
    %v1955 = vld [vmem:[#allocation4 + $0xfd0] sm:$0xff]
    %v1956 = vld [vmem:[#allocation4 + $0xfd8] sm:$0xff]
    %v1957 = vld [vmem:[#allocation4 + $0xfe0] sm:$0xff]
    %v1958 = vld [vmem:[#allocation4 + $0xfe8] sm:$0xff]
    %v1959 = vld [vmem:[#allocation4 + $0xff0] sm:$0xff]
    %v1960 = vld [vmem:[#allocation4 + $0xff8] sm:$0xff]
    %v1961 = vld [vmem:[#allocation4 + $0x1000] sm:$0xff]
    %v1962 = vld [vmem:[#allocation4 + $0x1008] sm:$0xff]
    %v1963 = vld [vmem:[#allocation4 + $0x1010] sm:$0xff]
    %v1964 = vld [vmem:[#allocation4 + $0x1018] sm:$0xff]
    %v1965 = vld [vmem:[#allocation4 + $0x1020] sm:$0xff]
    %v1966 = vld [vmem:[#allocation4 + $0x1028] sm:$0xff]
    %v1967 = vld [vmem:[#allocation4 + $0x1030] sm:$0xff]
    %v1968 = vld [vmem:[#allocation4 + $0x1038] sm:$0xff]
    %v1969 = vld [vmem:[#allocation4 + $0x1040] sm:$0xff]
    %v1970 = vld [vmem:[#allocation4 + $0x1048] sm:$0xff]
    %v1971 = vld [vmem:[#allocation4 + $0x1050] sm:$0xff]
    %v1972 = vld [vmem:[#allocation4 + $0x1058] sm:$0xff]
    %v1973 = vld [vmem:[#allocation4 + $0x1060] sm:$0xff]
    %v1974 = vld [vmem:[#allocation4 + $0x1068] sm:$0xff]
    %v1975 = vld [vmem:[#allocation4 + $0x1070] sm:$0xff]
    %v1976 = vld [vmem:[#allocation4 + $0x1078] sm:$0xff]
    %v1977 = vld [vmem:[#allocation4 + $0x1080] sm:$0xff]
    %v1978 = vld [vmem:[#allocation4 + $0x1088] sm:$0xff]
    %v1979 = vld [vmem:[#allocation4 + $0x1090] sm:$0xff]
    %v1980 = vld [vmem:[#allocation4 + $0x1098] sm:$0xff]
    %v1981 = vld [vmem:[#allocation4 + $0x10a0] sm:$0xff]
    %v1982 = vld [vmem:[#allocation4 + $0x10a8] sm:$0xff]
    %v1983 = vld [vmem:[#allocation4 + $0x10b0] sm:$0xff]
    %v1984 = vld [vmem:[#allocation4 + $0x10b8] sm:$0xff]
    %v1985 = vld [vmem:[#allocation4 + $0x10c0] sm:$0xff]
    %v1986 = vld [vmem:[#allocation4 + $0x10c8] sm:$0xff]
    %v1987 = vld [vmem:[#allocation4 + $0x10d0] sm:$0xff]
    %v1988 = vld [vmem:[#allocation4 + $0x10d8] sm:$0xff]
    %v1989 = vld [vmem:[#allocation4 + $0x10e0] sm:$0xff]
    %v1990 = vld [vmem:[#allocation4 + $0x10e8] sm:$0xff]
    %v1991 = vld [vmem:[#allocation4 + $0x10f0] sm:$0xff]
    %v1992 = vld [vmem:[#allocation4 + $0x10f8] sm:$0xff]
    %v1993 = vld [vmem:[#allocation4 + $0x1100] sm:$0xff]
    %v1994 = vld [vmem:[#allocation4 + $0x1108] sm:$0xff]
    %v1995 = vld [vmem:[#allocation4 + $0x1110] sm:$0xff]
    %v1996 = vld [vmem:[#allocation4 + $0x1118] sm:$0xff]
    %v1997 = vld [vmem:[#allocation4 + $0x1120] sm:$0xff]
    %v1998 = vld [vmem:[#allocation4 + $0x1128] sm:$0xff]
    %v1999 = vld [vmem:[#allocation4 + $0x1130] sm:$0xff]
    %v2000 = vld [vmem:[#allocation4 + $0x1138] sm:$0xff]
    %v2001 = vld [vmem:[#allocation4 + $0x1140] sm:$0xff]
    %v2002 = vld [vmem:[#allocation4 + $0x1148] sm:$0xff]
    %v2003 = vld [vmem:[#allocation4 + $0x1150] sm:$0xff]
    %v2004 = vld [vmem:[#allocation4 + $0x1158] sm:$0xff]
    %v2005 = vld [vmem:[#allocation4 + $0x1160] sm:$0xff]
    %v2006 = vld [vmem:[#allocation4 + $0x1168] sm:$0xff]
    %v2007 = vld [vmem:[#allocation4 + $0x1170] sm:$0xff]
    %v2008 = vld [vmem:[#allocation4 + $0x1178] sm:$0xff]
    %v2009 = vld [vmem:[#allocation4 + $0x1180] sm:$0xff]
    %v2010 = vld [vmem:[#allocation4 + $0x1188] sm:$0xff]
    %v2011 = vld [vmem:[#allocation4 + $0x1190] sm:$0xff]
    %v2012 = vld [vmem:[#allocation4 + $0x1198] sm:$0xff]
    %v2013 = vld [vmem:[#allocation4 + $0x11a0] sm:$0xff]
    %v2014 = vld [vmem:[#allocation4 + $0x11a8] sm:$0xff]
    %v2015 = vld [vmem:[#allocation4 + $0x11b0] sm:$0xff]
    %v2016 = vld [vmem:[#allocation4 + $0x11b8] sm:$0xff]
    %v2017 = vld [vmem:[#allocation4 + $0x11c0] sm:$0xff]
    %v2018 = vld [vmem:[#allocation4 + $0x11c8] sm:$0xff]
    %v2019 = vld [vmem:[#allocation4 + $0x11d0] sm:$0xff]
    %v2020 = vld [vmem:[#allocation4 + $0x11d8] sm:$0xff]
    %v2021 = vld [vmem:[#allocation4 + $0x11e0] sm:$0xff]
    %v2022 = vld [vmem:[#allocation4 + $0x11e8] sm:$0xff]
    %v2023 = vld [vmem:[#allocation4 + $0x11f0] sm:$0xff]
    %v2024 = vld [vmem:[#allocation4 + $0x11f8] sm:$0xff]
    %v2025 = vld [vmem:[#allocation5] sm:$0xff]
    %v2026 = vld [vmem:[#allocation5 + $0x8] sm:$0xff]
    %v2027 = vld [vmem:[#allocation5 + $0x10] sm:$0xff]
    %v2028 = vld [vmem:[#allocation5 + $0x18] sm:$0xff]
    %v2029 = vld [vmem:[#allocation5 + $0x20] sm:$0xff]
    %v2030 = vld [vmem:[#allocation5 + $0x28] sm:$0xff]
    %v2031 = vld [vmem:[#allocation5 + $0x30] sm:$0xff]
    %v2032 = vld [vmem:[#allocation5 + $0x38] sm:$0xff]
    %v2033 = vld [vmem:[#allocation5 + $0x40] sm:$0xff]
    %v2034 = vld [vmem:[#allocation5 + $0x48] sm:$0xff]
    %v2035 = vld [vmem:[#allocation5 + $0x50] sm:$0xff]
    %v2036 = vld [vmem:[#allocation5 + $0x58] sm:$0xff]
    %v2037 = vld [vmem:[#allocation5 + $0x60] sm:$0xff]
    %v2038 = vld [vmem:[#allocation5 + $0x68] sm:$0xff]
    %v2039 = vld [vmem:[#allocation5 + $0x70] sm:$0xff]
    %v2040 = vld [vmem:[#allocation5 + $0x78] sm:$0xff]
    %v2041 = vld [vmem:[#allocation5 + $0x80] sm:$0xff]
    %v2042 = vld [vmem:[#allocation5 + $0x88] sm:$0xff]
    %v2043 = vld [vmem:[#allocation5 + $0x90] sm:$0xff]
    %v2044 = vld [vmem:[#allocation5 + $0x98] sm:$0xff]
    %v2045 = vld [vmem:[#allocation5 + $0xa0] sm:$0xff]
    %v2046 = vld [vmem:[#allocation5 + $0xa8] sm:$0xff]
    %v2047 = vld [vmem:[#allocation5 + $0xb0] sm:$0xff]
    %v2048 = vld [vmem:[#allocation5 + $0xb8] sm:$0xff]
    %v2049 = vld [vmem:[#allocation5 + $0xc0] sm:$0xff]
    %v2050 = vld [vmem:[#allocation5 + $0xc8] sm:$0xff]
    %v2051 = vld [vmem:[#allocation5 + $0xd0] sm:$0xff]
    %v2052 = vld [vmem:[#allocation5 + $0xd8] sm:$0xff]
    %v2053 = vld [vmem:[#allocation5 + $0xe0] sm:$0xff]
    %v2054 = vld [vmem:[#allocation5 + $0xe8] sm:$0xff]
    %v2055 = vld [vmem:[#allocation5 + $0xf0] sm:$0xff]
    %v2056 = vld [vmem:[#allocation5 + $0xf8] sm:$0xff]
    %v2057 = vld [vmem:[#allocation5 + $0x100] sm:$0xff]
    %v2058 = vld [vmem:[#allocation5 + $0x108] sm:$0xff]
    %v2059 = vld [vmem:[#allocation5 + $0x110] sm:$0xff]
    %v2060 = vld [vmem:[#allocation5 + $0x118] sm:$0xff]
    %v2061 = vld [vmem:[#allocation5 + $0x120] sm:$0xff]
    %v2062 = vld [vmem:[#allocation5 + $0x128] sm:$0xff]
    %v2063 = vld [vmem:[#allocation5 + $0x130] sm:$0xff]
    %v2064 = vld [vmem:[#allocation5 + $0x138] sm:$0xff]
    %v2065 = vld [vmem:[#allocation5 + $0x140] sm:$0xff]
    %v2066 = vld [vmem:[#allocation5 + $0x148] sm:$0xff]
    %v2067 = vld [vmem:[#allocation5 + $0x150] sm:$0xff]
    %v2068 = vld [vmem:[#allocation5 + $0x158] sm:$0xff]
    %v2069 = vld [vmem:[#allocation5 + $0x160] sm:$0xff]
    %v2070 = vld [vmem:[#allocation5 + $0x168] sm:$0xff]
    %v2071 = vld [vmem:[#allocation5 + $0x170] sm:$0xff]
    %v2072 = vld [vmem:[#allocation5 + $0x178] sm:$0xff]
    %v2073 = vld [vmem:[#allocation5 + $0x180] sm:$0xff]
    %v2074 = vld [vmem:[#allocation5 + $0x188] sm:$0xff]
    %v2075 = vld [vmem:[#allocation5 + $0x190] sm:$0xff]
    %v2076 = vld [vmem:[#allocation5 + $0x198] sm:$0xff]
    %v2077 = vld [vmem:[#allocation5 + $0x1a0] sm:$0xff]
    %v2078 = vld [vmem:[#allocation5 + $0x1a8] sm:$0xff]
    %v2079 = vld [vmem:[#allocation5 + $0x1b0] sm:$0xff]
    %v2080 = vld [vmem:[#allocation5 + $0x1b8] sm:$0xff]
    %v2081 = vld [vmem:[#allocation5 + $0x1c0] sm:$0xff]
    %v2082 = vld [vmem:[#allocation5 + $0x1c8] sm:$0xff]
    %v2083 = vld [vmem:[#allocation5 + $0x1d0] sm:$0xff]
    %v2084 = vld [vmem:[#allocation5 + $0x1d8] sm:$0xff]
    %v2085 = vld [vmem:[#allocation5 + $0x1e0] sm:$0xff]
    %v2086 = vld [vmem:[#allocation5 + $0x1e8] sm:$0xff]
    %v2087 = vld [vmem:[#allocation5 + $0x1f0] sm:$0xff]
    %v2088 = vld [vmem:[#allocation5 + $0x1f8] sm:$0xff]
    %v2089 = vld [vmem:[#allocation5 + $0x200] sm:$0xff]
    %v2090 = vld [vmem:[#allocation5 + $0x208] sm:$0xff]
    %v2091 = vld [vmem:[#allocation5 + $0x210] sm:$0xff]
    %v2092 = vld [vmem:[#allocation5 + $0x218] sm:$0xff]
    %v2093 = vld [vmem:[#allocation5 + $0x220] sm:$0xff]
    %v2094 = vld [vmem:[#allocation5 + $0x228] sm:$0xff]
    %v2095 = vld [vmem:[#allocation5 + $0x230] sm:$0xff]
    %v2096 = vld [vmem:[#allocation5 + $0x238] sm:$0xff]
    %v2097 = vld [vmem:[#allocation5 + $0x240] sm:$0xff]
    %v2098 = vld [vmem:[#allocation5 + $0x248] sm:$0xff]
    %v2099 = vld [vmem:[#allocation5 + $0x250] sm:$0xff]
    %v2100 = vld [vmem:[#allocation5 + $0x258] sm:$0xff]
    %v2101 = vld [vmem:[#allocation5 + $0x260] sm:$0xff]
    %v2102 = vld [vmem:[#allocation5 + $0x268] sm:$0xff]
    %v2103 = vld [vmem:[#allocation5 + $0x270] sm:$0xff]
    %v2104 = vld [vmem:[#allocation5 + $0x278] sm:$0xff]
    %v2105 = vld [vmem:[#allocation5 + $0x280] sm:$0xff]
    %v2106 = vld [vmem:[#allocation5 + $0x288] sm:$0xff]
    %v2107 = vld [vmem:[#allocation5 + $0x290] sm:$0xff]
    %v2108 = vld [vmem:[#allocation5 + $0x298] sm:$0xff]
    %v2109 = vld [vmem:[#allocation5 + $0x2a0] sm:$0xff]
    %v2110 = vld [vmem:[#allocation5 + $0x2a8] sm:$0xff]
    %v2111 = vld [vmem:[#allocation5 + $0x2b0] sm:$0xff]
    %v2112 = vld [vmem:[#allocation5 + $0x2b8] sm:$0xff]
    %v2113 = vld [vmem:[#allocation5 + $0x2c0] sm:$0xff]
    %v2114 = vld [vmem:[#allocation5 + $0x2c8] sm:$0xff]
    %v2115 = vld [vmem:[#allocation5 + $0x2d0] sm:$0xff]
    %v2116 = vld [vmem:[#allocation5 + $0x2d8] sm:$0xff]
    %v2117 = vld [vmem:[#allocation5 + $0x2e0] sm:$0xff]
    %v2118 = vld [vmem:[#allocation5 + $0x2e8] sm:$0xff]
    %v2119 = vld [vmem:[#allocation5 + $0x2f0] sm:$0xff]
    %v2120 = vld [vmem:[#allocation5 + $0x2f8] sm:$0xff]
    %v2121 = vld [vmem:[#allocation5 + $0x300] sm:$0xff]
    %v2122 = vld [vmem:[#allocation5 + $0x308] sm:$0xff]
    %v2123 = vld [vmem:[#allocation5 + $0x310] sm:$0xff]
    %v2124 = vld [vmem:[#allocation5 + $0x318] sm:$0xff]
    %v2125 = vld [vmem:[#allocation5 + $0x320] sm:$0xff]
    %v2126 = vld [vmem:[#allocation5 + $0x328] sm:$0xff]
    %v2127 = vld [vmem:[#allocation5 + $0x330] sm:$0xff]
    %v2128 = vld [vmem:[#allocation5 + $0x338] sm:$0xff]
    %v2129 = vld [vmem:[#allocation5 + $0x340] sm:$0xff]
    %v2130 = vld [vmem:[#allocation5 + $0x348] sm:$0xff]
    %v2131 = vld [vmem:[#allocation5 + $0x350] sm:$0xff]
    %v2132 = vld [vmem:[#allocation5 + $0x358] sm:$0xff]
    %v2133 = vld [vmem:[#allocation5 + $0x360] sm:$0xff]
    %v2134 = vld [vmem:[#allocation5 + $0x368] sm:$0xff]
    %v2135 = vld [vmem:[#allocation5 + $0x370] sm:$0xff]
    %v2136 = vld [vmem:[#allocation5 + $0x378] sm:$0xff]
    %v2137 = vld [vmem:[#allocation5 + $0x380] sm:$0xff]
    %v2138 = vld [vmem:[#allocation5 + $0x388] sm:$0xff]
    %v2139 = vld [vmem:[#allocation5 + $0x390] sm:$0xff]
    %v2140 = vld [vmem:[#allocation5 + $0x398] sm:$0xff]
    %v2141 = vld [vmem:[#allocation5 + $0x3a0] sm:$0xff]
    %v2142 = vld [vmem:[#allocation5 + $0x3a8] sm:$0xff]
    %v2143 = vld [vmem:[#allocation5 + $0x3b0] sm:$0xff]
    %v2144 = vld [vmem:[#allocation5 + $0x3b8] sm:$0xff]
    %v2145 = vld [vmem:[#allocation5 + $0x3c0] sm:$0xff]
    %v2146 = vld [vmem:[#allocation5 + $0x3c8] sm:$0xff]
    %v2147 = vld [vmem:[#allocation5 + $0x3d0] sm:$0xff]
    %v2148 = vld [vmem:[#allocation5 + $0x3d8] sm:$0xff]
    %v2149 = vld [vmem:[#allocation5 + $0x3e0] sm:$0xff]
    %v2150 = vld [vmem:[#allocation5 + $0x3e8] sm:$0xff]
    %v2151 = vld [vmem:[#allocation5 + $0x3f0] sm:$0xff]
    %v2152 = vld [vmem:[#allocation5 + $0x3f8] sm:$0xff]
    %v2153 = vld [vmem:[#allocation5 + $0x400] sm:$0xff]
    %v2154 = vld [vmem:[#allocation5 + $0x408] sm:$0xff]
    %v2155 = vld [vmem:[#allocation5 + $0x410] sm:$0xff]
    %v2156 = vld [vmem:[#allocation5 + $0x418] sm:$0xff]
    %v2157 = vld [vmem:[#allocation5 + $0x420] sm:$0xff]
    %v2158 = vld [vmem:[#allocation5 + $0x428] sm:$0xff]
    %v2159 = vld [vmem:[#allocation5 + $0x430] sm:$0xff]
    %v2160 = vld [vmem:[#allocation5 + $0x438] sm:$0xff]
    %v2161 = vld [vmem:[#allocation5 + $0x440] sm:$0xff]
    %v2162 = vld [vmem:[#allocation5 + $0x448] sm:$0xff]
    %v2163 = vld [vmem:[#allocation5 + $0x450] sm:$0xff]
    %v2164 = vld [vmem:[#allocation5 + $0x458] sm:$0xff]
    %v2165 = vld [vmem:[#allocation5 + $0x460] sm:$0xff]
    %v2166 = vld [vmem:[#allocation5 + $0x468] sm:$0xff]
    %v2167 = vld [vmem:[#allocation5 + $0x470] sm:$0xff]
    %v2168 = vld [vmem:[#allocation5 + $0x478] sm:$0xff]
    %2169 = vmatpush.msra.mxu0 %v2040
    %2170 = vmatpush.msra.mxu0 %v2039
    %2171 = vmatpush.msra.mxu0 %v2038
    %2172 = vmatpush.msra.mxu0 %v2037
    %2173 = vmatpush.msra.mxu0 %v2036
    %2174 = vmatpush.msra.mxu0 %v2035
    %2175 = vmatpush.msra.mxu0 %v2034
    %2176 = vmatpush.msra.mxu0 %v2033
    %2177 = vmatpush.msra.mxu0 %v2032
    %2178 = vmatpush.msra.mxu0 %v2031
    %2179 = vmatpush.msra.mxu0 %v2030
    %2180 = vmatpush.msra.mxu0 %v2029
    %2181 = vmatpush.msra.mxu0 %v2028
    %2182 = vmatpush.msra.mxu0 %v2027
    %2183 = vmatpush.msra.mxu0 %v2026
    %2184 = vmatpush.msra.mxu0 %v2025
    %2185 = vmatmul.f32.gmra.mxu0 %v1449
    %v2186 = vpop.f32.mrf.mxu0
    %v2187 = vadd.f32 0.0, %v2186
    %2188 = vmatmul.f32.gmra.mxu0 %v1458
    %v2189 = vpop.f32.mrf.mxu0
    %v2190 = vadd.f32 0.0, %v2189
    %2191 = vmatmul.f32.gmra.mxu0 %v1467
    %v2192 = vpop.f32.mrf.mxu0
    %v2193 = vadd.f32 0.0, %v2192
    %2194 = vmatmul.f32.gmra.mxu0 %v1476
    %v2195 = vpop.f32.mrf.mxu0
    %v2196 = vadd.f32 0.0, %v2195
    %2197 = vmatmul.f32.gmra.mxu0 %v1485
    %v2198 = vpop.f32.mrf.mxu0
    %v2199 = vadd.f32 0.0, %v2198
    %2200 = vmatmul.f32.gmra.mxu0 %v1494
    %v2201 = vpop.f32.mrf.mxu0
    %v2202 = vadd.f32 0.0, %v2201
    %2203 = vmatmul.f32.gmra.mxu0 %v1503
    %v2204 = vpop.f32.mrf.mxu0
    %v2205 = vadd.f32 0.0, %v2204
    %2206 = vmatmul.f32.gmra.mxu0 %v1512
    %v2207 = vpop.f32.mrf.mxu0
    %v2208 = vadd.f32 0.0, %v2207
    %2209 = vmatmul.f32.gmra.mxu0 %v1521
    %v2210 = vpop.f32.mrf.mxu0
    %v2211 = vadd.f32 0.0, %v2210
    %2212 = vmatmul.f32.gmra.mxu0 %v1530
    %v2213 = vpop.f32.mrf.mxu0
    %v2214 = vadd.f32 0.0, %v2213
    %2215 = vmatmul.f32.gmra.mxu0 %v1539
    %v2216 = vpop.f32.mrf.mxu0
    %v2217 = vadd.f32 0.0, %v2216
    %2218 = vmatmul.f32.gmra.mxu0 %v1548
    %v2219 = vpop.f32.mrf.mxu0
    %v2220 = vadd.f32 0.0, %v2219
    %2221 = vmatmul.f32.gmra.mxu0 %v1557
    %v2222 = vpop.f32.mrf.mxu0
    %v2223 = vadd.f32 0.0, %v2222
    %2224 = vmatmul.f32.gmra.mxu0 %v1566
    %v2225 = vpop.f32.mrf.mxu0
    %v2226 = vadd.f32 0.0, %v2225
    %2227 = vmatmul.f32.gmra.mxu0 %v1575
    %v2228 = vpop.f32.mrf.mxu0
    %v2229 = vadd.f32 0.0, %v2228
    %2230 = vmatmul.f32.gmra.mxu0 %v1584
    %v2231 = vpop.f32.mrf.mxu0
    %v2232 = vadd.f32 0.0, %v2231
    %2233 = vmatmul.f32.gmra.mxu0 %v1593
    %v2234 = vpop.f32.mrf.mxu0
    %v2235 = vadd.f32 0.0, %v2234
    %2236 = vmatmul.f32.gmra.mxu0 %v1602
    %v2237 = vpop.f32.mrf.mxu0
    %v2238 = vadd.f32 0.0, %v2237
    %2239 = vmatmul.f32.gmra.mxu0 %v1611
    %v2240 = vpop.f32.mrf.mxu0
    %v2241 = vadd.f32 0.0, %v2240
    %2242 = vmatmul.f32.gmra.mxu0 %v1620
    %v2243 = vpop.f32.mrf.mxu0
    %v2244 = vadd.f32 0.0, %v2243
    %2245 = vmatmul.f32.gmra.mxu0 %v1629
    %v2246 = vpop.f32.mrf.mxu0
    %v2247 = vadd.f32 0.0, %v2246
    %2248 = vmatmul.f32.gmra.mxu0 %v1638
    %v2249 = vpop.f32.mrf.mxu0
    %v2250 = vadd.f32 0.0, %v2249
    %2251 = vmatmul.f32.gmra.mxu0 %v1647
    %v2252 = vpop.f32.mrf.mxu0
    %v2253 = vadd.f32 0.0, %v2252
    %2254 = vmatmul.f32.gmra.mxu0 %v1656
    %v2255 = vpop.f32.mrf.mxu0
    %v2256 = vadd.f32 0.0, %v2255
    %2257 = vmatmul.f32.gmra.mxu0 %v1665
    %v2258 = vpop.f32.mrf.mxu0
    %v2259 = vadd.f32 0.0, %v2258
    %2260 = vmatmul.f32.gmra.mxu0 %v1674
    %v2261 = vpop.f32.mrf.mxu0
    %v2262 = vadd.f32 0.0, %v2261
    %2263 = vmatmul.f32.gmra.mxu0 %v1683
    %v2264 = vpop.f32.mrf.mxu0
    %v2265 = vadd.f32 0.0, %v2264
    %2266 = vmatmul.f32.gmra.mxu0 %v1692
    %v2267 = vpop.f32.mrf.mxu0
    %v2268 = vadd.f32 0.0, %v2267
    %2269 = vmatmul.f32.gmra.mxu0 %v1701
    %v2270 = vpop.f32.mrf.mxu0
    %v2271 = vadd.f32 0.0, %v2270
    %2272 = vmatmul.f32.gmra.mxu0 %v1710
    %v2273 = vpop.f32.mrf.mxu0
    %v2274 = vadd.f32 0.0, %v2273
    %2275 = vmatmul.f32.gmra.mxu0 %v1719
    %v2276 = vpop.f32.mrf.mxu0
    %v2277 = vadd.f32 0.0, %v2276
    %2278 = vmatmul.f32.gmra.mxu0 %v1728
    %v2279 = vpop.f32.mrf.mxu0
    %v2280 = vadd.f32 0.0, %v2279
    %2281 = vmatmul.f32.gmra.mxu0 %v1737
    %v2282 = vpop.f32.mrf.mxu0
    %v2283 = vadd.f32 0.0, %v2282
    %2284 = vmatmul.f32.gmra.mxu0 %v1746
    %v2285 = vpop.f32.mrf.mxu0
    %v2286 = vadd.f32 0.0, %v2285
    %2287 = vmatmul.f32.gmra.mxu0 %v1755
    %v2288 = vpop.f32.mrf.mxu0
    %v2289 = vadd.f32 0.0, %v2288
    %2290 = vmatmul.f32.gmra.mxu0 %v1764
    %v2291 = vpop.f32.mrf.mxu0
    %v2292 = vadd.f32 0.0, %v2291
    %2293 = vmatmul.f32.gmra.mxu0 %v1773
    %v2294 = vpop.f32.mrf.mxu0
    %v2295 = vadd.f32 0.0, %v2294
    %2296 = vmatmul.f32.gmra.mxu0 %v1782
    %v2297 = vpop.f32.mrf.mxu0
    %v2298 = vadd.f32 0.0, %v2297
    %2299 = vmatmul.f32.gmra.mxu0 %v1791
    %v2300 = vpop.f32.mrf.mxu0
    %v2301 = vadd.f32 0.0, %v2300
    %2302 = vmatmul.f32.gmra.mxu0 %v1800
    %v2303 = vpop.f32.mrf.mxu0
    %v2304 = vadd.f32 0.0, %v2303
    %2305 = vmatmul.f32.gmra.mxu0 %v1809
    %v2306 = vpop.f32.mrf.mxu0
    %v2307 = vadd.f32 0.0, %v2306
    %2308 = vmatmul.f32.gmra.mxu0 %v1818
    %v2309 = vpop.f32.mrf.mxu0
    %v2310 = vadd.f32 0.0, %v2309
    %2311 = vmatmul.f32.gmra.mxu0 %v1827
    %v2312 = vpop.f32.mrf.mxu0
    %v2313 = vadd.f32 0.0, %v2312
    %2314 = vmatmul.f32.gmra.mxu0 %v1836
    %v2315 = vpop.f32.mrf.mxu0
    %v2316 = vadd.f32 0.0, %v2315
    %2317 = vmatmul.f32.gmra.mxu0 %v1845
    %v2318 = vpop.f32.mrf.mxu0
    %v2319 = vadd.f32 0.0, %v2318
    %2320 = vmatmul.f32.gmra.mxu0 %v1854
    %v2321 = vpop.f32.mrf.mxu0
    %v2322 = vadd.f32 0.0, %v2321
    %2323 = vmatmul.f32.gmra.mxu0 %v1863
    %v2324 = vpop.f32.mrf.mxu0
    %v2325 = vadd.f32 0.0, %v2324
    %2326 = vmatmul.f32.gmra.mxu0 %v1872
    %v2327 = vpop.f32.mrf.mxu0
    %v2328 = vadd.f32 0.0, %v2327
    %2329 = vmatmul.f32.gmra.mxu0 %v1881
    %v2330 = vpop.f32.mrf.mxu0
    %v2331 = vadd.f32 0.0, %v2330
    %2332 = vmatmul.f32.gmra.mxu0 %v1890
    %v2333 = vpop.f32.mrf.mxu0
    %v2334 = vadd.f32 0.0, %v2333
    %2335 = vmatmul.f32.gmra.mxu0 %v1899
    %v2336 = vpop.f32.mrf.mxu0
    %v2337 = vadd.f32 0.0, %v2336
    %2338 = vmatmul.f32.gmra.mxu0 %v1908
    %v2339 = vpop.f32.mrf.mxu0
    %v2340 = vadd.f32 0.0, %v2339
    %2341 = vmatmul.f32.gmra.mxu0 %v1917
    %v2342 = vpop.f32.mrf.mxu0
    %v2343 = vadd.f32 0.0, %v2342
    %2344 = vmatmul.f32.gmra.mxu0 %v1926
    %v2345 = vpop.f32.mrf.mxu0
    %v2346 = vadd.f32 0.0, %v2345
    %2347 = vmatmul.f32.gmra.mxu0 %v1935
    %v2348 = vpop.f32.mrf.mxu0
    %v2349 = vadd.f32 0.0, %v2348
    %2350 = vmatmul.f32.gmra.mxu0 %v1944
    %v2351 = vpop.f32.mrf.mxu0
    %v2352 = vadd.f32 0.0, %v2351
    %2353 = vmatmul.f32.gmra.mxu0 %v1953
    %v2354 = vpop.f32.mrf.mxu0
    %v2355 = vadd.f32 0.0, %v2354
    %2356 = vmatmul.f32.gmra.mxu0 %v1962
    %v2357 = vpop.f32.mrf.mxu0
    %v2358 = vadd.f32 0.0, %v2357
    %2359 = vmatmul.f32.gmra.mxu0 %v1971
    %v2360 = vpop.f32.mrf.mxu0
    %v2361 = vadd.f32 0.0, %v2360
    %2362 = vmatmul.f32.gmra.mxu0 %v1980
    %v2363 = vpop.f32.mrf.mxu0
    %v2364 = vadd.f32 0.0, %v2363
    %2365 = vmatmul.f32.gmra.mxu0 %v1989
    %v2366 = vpop.f32.mrf.mxu0
    %v2367 = vadd.f32 0.0, %v2366
    %2368 = vmatmul.f32.gmra.mxu0 %v1998
    %v2369 = vpop.f32.mrf.mxu0
    %v2370 = vadd.f32 0.0, %v2369
    %2371 = vmatmul.f32.gmra.mxu0 %v2007
    %v2372 = vpop.f32.mrf.mxu0
    %v2373 = vadd.f32 0.0, %v2372
    %2374 = vmatmul.f32.gmra.mxu0 %v2016
    %v2375 = vpop.f32.mrf.mxu0
    %v2376 = vadd.f32 0.0, %v2375
    %2377 = vdwg.mxu0
    %2378 = vmatpush.msra.mxu0 %v2056
    %2379 = vmatpush.msra.mxu0 %v2055
    %2380 = vmatpush.msra.mxu0 %v2054
    %2381 = vmatpush.msra.mxu0 %v2053
    %2382 = vmatpush.msra.mxu0 %v2052
    %2383 = vmatpush.msra.mxu0 %v2051
    %2384 = vmatpush.msra.mxu0 %v2050
    %2385 = vmatpush.msra.mxu0 %v2049
    %2386 = vmatpush.msra.mxu0 %v2048
    %2387 = vmatpush.msra.mxu0 %v2047
    %2388 = vmatpush.msra.mxu0 %v2046
    %2389 = vmatpush.msra.mxu0 %v2045
    %2390 = vmatpush.msra.mxu0 %v2044
    %2391 = vmatpush.msra.mxu0 %v2043
    %2392 = vmatpush.msra.mxu0 %v2042
    %2393 = vmatpush.msra.mxu0 %v2041
    %2394 = vmatmul.f32.gmra.mxu0 %v1450
    %v2395 = vpop.f32.mrf.mxu0
    %v2396 = vadd.f32 %v2187, %v2395
    %2397 = vmatmul.f32.gmra.mxu0 %v1459
    %v2398 = vpop.f32.mrf.mxu0
    %v2399 = vadd.f32 %v2190, %v2398
    %2400 = vmatmul.f32.gmra.mxu0 %v1468
    %v2401 = vpop.f32.mrf.mxu0
    %v2402 = vadd.f32 %v2193, %v2401
    %2403 = vmatmul.f32.gmra.mxu0 %v1477
    %v2404 = vpop.f32.mrf.mxu0
    %v2405 = vadd.f32 %v2196, %v2404
    %2406 = vmatmul.f32.gmra.mxu0 %v1486
    %v2407 = vpop.f32.mrf.mxu0
    %v2408 = vadd.f32 %v2199, %v2407
    %2409 = vmatmul.f32.gmra.mxu0 %v1495
    %v2410 = vpop.f32.mrf.mxu0
    %v2411 = vadd.f32 %v2202, %v2410
    %2412 = vmatmul.f32.gmra.mxu0 %v1504
    %v2413 = vpop.f32.mrf.mxu0
    %v2414 = vadd.f32 %v2205, %v2413
    %2415 = vmatmul.f32.gmra.mxu0 %v1513
    %v2416 = vpop.f32.mrf.mxu0
    %v2417 = vadd.f32 %v2208, %v2416
    %2418 = vmatmul.f32.gmra.mxu0 %v1522
    %v2419 = vpop.f32.mrf.mxu0
    %v2420 = vadd.f32 %v2211, %v2419
    %2421 = vmatmul.f32.gmra.mxu0 %v1531
    %v2422 = vpop.f32.mrf.mxu0
    %v2423 = vadd.f32 %v2214, %v2422
    %2424 = vmatmul.f32.gmra.mxu0 %v1540
    %v2425 = vpop.f32.mrf.mxu0
    %v2426 = vadd.f32 %v2217, %v2425
    %2427 = vmatmul.f32.gmra.mxu0 %v1549
    %v2428 = vpop.f32.mrf.mxu0
    %v2429 = vadd.f32 %v2220, %v2428
    %2430 = vmatmul.f32.gmra.mxu0 %v1558
    %v2431 = vpop.f32.mrf.mxu0
    %v2432 = vadd.f32 %v2223, %v2431
    %2433 = vmatmul.f32.gmra.mxu0 %v1567
    %v2434 = vpop.f32.mrf.mxu0
    %v2435 = vadd.f32 %v2226, %v2434
    %2436 = vmatmul.f32.gmra.mxu0 %v1576
    %v2437 = vpop.f32.mrf.mxu0
    %v2438 = vadd.f32 %v2229, %v2437
    %2439 = vmatmul.f32.gmra.mxu0 %v1585
    %v2440 = vpop.f32.mrf.mxu0
    %v2441 = vadd.f32 %v2232, %v2440
    %2442 = vmatmul.f32.gmra.mxu0 %v1594
    %v2443 = vpop.f32.mrf.mxu0
    %v2444 = vadd.f32 %v2235, %v2443
    %2445 = vmatmul.f32.gmra.mxu0 %v1603
    %v2446 = vpop.f32.mrf.mxu0
    %v2447 = vadd.f32 %v2238, %v2446
    %2448 = vmatmul.f32.gmra.mxu0 %v1612
    %v2449 = vpop.f32.mrf.mxu0
    %v2450 = vadd.f32 %v2241, %v2449
    %2451 = vmatmul.f32.gmra.mxu0 %v1621
    %v2452 = vpop.f32.mrf.mxu0
    %v2453 = vadd.f32 %v2244, %v2452
    %2454 = vmatmul.f32.gmra.mxu0 %v1630
    %v2455 = vpop.f32.mrf.mxu0
    %v2456 = vadd.f32 %v2247, %v2455
    %2457 = vmatmul.f32.gmra.mxu0 %v1639
    %v2458 = vpop.f32.mrf.mxu0
    %v2459 = vadd.f32 %v2250, %v2458
    %2460 = vmatmul.f32.gmra.mxu0 %v1648
    %v2461 = vpop.f32.mrf.mxu0
    %v2462 = vadd.f32 %v2253, %v2461
    %2463 = vmatmul.f32.gmra.mxu0 %v1657
    %v2464 = vpop.f32.mrf.mxu0
    %v2465 = vadd.f32 %v2256, %v2464
    %2466 = vmatmul.f32.gmra.mxu0 %v1666
    %v2467 = vpop.f32.mrf.mxu0
    %v2468 = vadd.f32 %v2259, %v2467
    %2469 = vmatmul.f32.gmra.mxu0 %v1675
    %v2470 = vpop.f32.mrf.mxu0
    %v2471 = vadd.f32 %v2262, %v2470
    %2472 = vmatmul.f32.gmra.mxu0 %v1684
    %v2473 = vpop.f32.mrf.mxu0
    %v2474 = vadd.f32 %v2265, %v2473
    %2475 = vmatmul.f32.gmra.mxu0 %v1693
    %v2476 = vpop.f32.mrf.mxu0
    %v2477 = vadd.f32 %v2268, %v2476
    %2478 = vmatmul.f32.gmra.mxu0 %v1702
    %v2479 = vpop.f32.mrf.mxu0
    %v2480 = vadd.f32 %v2271, %v2479
    %2481 = vmatmul.f32.gmra.mxu0 %v1711
    %v2482 = vpop.f32.mrf.mxu0
    %v2483 = vadd.f32 %v2274, %v2482
    %2484 = vmatmul.f32.gmra.mxu0 %v1720
    %v2485 = vpop.f32.mrf.mxu0
    %v2486 = vadd.f32 %v2277, %v2485
    %2487 = vmatmul.f32.gmra.mxu0 %v1729
    %v2488 = vpop.f32.mrf.mxu0
    %v2489 = vadd.f32 %v2280, %v2488
    %2490 = vmatmul.f32.gmra.mxu0 %v1738
    %v2491 = vpop.f32.mrf.mxu0
    %v2492 = vadd.f32 %v2283, %v2491
    %2493 = vmatmul.f32.gmra.mxu0 %v1747
    %v2494 = vpop.f32.mrf.mxu0
    %v2495 = vadd.f32 %v2286, %v2494
    %2496 = vmatmul.f32.gmra.mxu0 %v1756
    %v2497 = vpop.f32.mrf.mxu0
    %v2498 = vadd.f32 %v2289, %v2497
    %2499 = vmatmul.f32.gmra.mxu0 %v1765
    %v2500 = vpop.f32.mrf.mxu0
    %v2501 = vadd.f32 %v2292, %v2500
    %2502 = vmatmul.f32.gmra.mxu0 %v1774
    %v2503 = vpop.f32.mrf.mxu0
    %v2504 = vadd.f32 %v2295, %v2503
    %2505 = vmatmul.f32.gmra.mxu0 %v1783
    %v2506 = vpop.f32.mrf.mxu0
    %v2507 = vadd.f32 %v2298, %v2506
    %2508 = vmatmul.f32.gmra.mxu0 %v1792
    %v2509 = vpop.f32.mrf.mxu0
    %v2510 = vadd.f32 %v2301, %v2509
    %2511 = vmatmul.f32.gmra.mxu0 %v1801
    %v2512 = vpop.f32.mrf.mxu0
    %v2513 = vadd.f32 %v2304, %v2512
    %2514 = vmatmul.f32.gmra.mxu0 %v1810
    %v2515 = vpop.f32.mrf.mxu0
    %v2516 = vadd.f32 %v2307, %v2515
    %2517 = vmatmul.f32.gmra.mxu0 %v1819
    %v2518 = vpop.f32.mrf.mxu0
    %v2519 = vadd.f32 %v2310, %v2518
    %2520 = vmatmul.f32.gmra.mxu0 %v1828
    %v2521 = vpop.f32.mrf.mxu0
    %v2522 = vadd.f32 %v2313, %v2521
    %2523 = vmatmul.f32.gmra.mxu0 %v1837
    %v2524 = vpop.f32.mrf.mxu0
    %v2525 = vadd.f32 %v2316, %v2524
    %2526 = vmatmul.f32.gmra.mxu0 %v1846
    %v2527 = vpop.f32.mrf.mxu0
    %v2528 = vadd.f32 %v2319, %v2527
    %2529 = vmatmul.f32.gmra.mxu0 %v1855
    %v2530 = vpop.f32.mrf.mxu0
    %v2531 = vadd.f32 %v2322, %v2530
    %2532 = vmatmul.f32.gmra.mxu0 %v1864
    %v2533 = vpop.f32.mrf.mxu0
    %v2534 = vadd.f32 %v2325, %v2533
    %2535 = vmatmul.f32.gmra.mxu0 %v1873
    %v2536 = vpop.f32.mrf.mxu0
    %v2537 = vadd.f32 %v2328, %v2536
    %2538 = vmatmul.f32.gmra.mxu0 %v1882
    %v2539 = vpop.f32.mrf.mxu0
    %v2540 = vadd.f32 %v2331, %v2539
    %2541 = vmatmul.f32.gmra.mxu0 %v1891
    %v2542 = vpop.f32.mrf.mxu0
    %v2543 = vadd.f32 %v2334, %v2542
    %2544 = vmatmul.f32.gmra.mxu0 %v1900
    %v2545 = vpop.f32.mrf.mxu0
    %v2546 = vadd.f32 %v2337, %v2545
    %2547 = vmatmul.f32.gmra.mxu0 %v1909
    %v2548 = vpop.f32.mrf.mxu0
    %v2549 = vadd.f32 %v2340, %v2548
    %2550 = vmatmul.f32.gmra.mxu0 %v1918
    %v2551 = vpop.f32.mrf.mxu0
    %v2552 = vadd.f32 %v2343, %v2551
    %2553 = vmatmul.f32.gmra.mxu0 %v1927
    %v2554 = vpop.f32.mrf.mxu0
    %v2555 = vadd.f32 %v2346, %v2554
    %2556 = vmatmul.f32.gmra.mxu0 %v1936
    %v2557 = vpop.f32.mrf.mxu0
    %v2558 = vadd.f32 %v2349, %v2557
    %2559 = vmatmul.f32.gmra.mxu0 %v1945
    %v2560 = vpop.f32.mrf.mxu0
    %v2561 = vadd.f32 %v2352, %v2560
    %2562 = vmatmul.f32.gmra.mxu0 %v1954
    %v2563 = vpop.f32.mrf.mxu0
    %v2564 = vadd.f32 %v2355, %v2563
    %2565 = vmatmul.f32.gmra.mxu0 %v1963
    %v2566 = vpop.f32.mrf.mxu0
    %v2567 = vadd.f32 %v2358, %v2566
    %2568 = vmatmul.f32.gmra.mxu0 %v1972
    %v2569 = vpop.f32.mrf.mxu0
    %v2570 = vadd.f32 %v2361, %v2569
    %2571 = vmatmul.f32.gmra.mxu0 %v1981
    %v2572 = vpop.f32.mrf.mxu0
    %v2573 = vadd.f32 %v2364, %v2572
    %2574 = vmatmul.f32.gmra.mxu0 %v1990
    %v2575 = vpop.f32.mrf.mxu0
    %v2576 = vadd.f32 %v2367, %v2575
    %2577 = vmatmul.f32.gmra.mxu0 %v1999
    %v2578 = vpop.f32.mrf.mxu0
    %v2579 = vadd.f32 %v2370, %v2578
    %2580 = vmatmul.f32.gmra.mxu0 %v2008
    %v2581 = vpop.f32.mrf.mxu0
    %v2582 = vadd.f32 %v2373, %v2581
    %2583 = vmatmul.f32.gmra.mxu0 %v2017
    %v2584 = vpop.f32.mrf.mxu0
    %v2585 = vadd.f32 %v2376, %v2584
    %2586 = vdwg.mxu0
    %2587 = vmatpush.msra.mxu0 %v2072
    %2588 = vmatpush.msra.mxu0 %v2071
    %2589 = vmatpush.msra.mxu0 %v2070
    %2590 = vmatpush.msra.mxu0 %v2069
    %2591 = vmatpush.msra.mxu0 %v2068
    %2592 = vmatpush.msra.mxu0 %v2067
    %2593 = vmatpush.msra.mxu0 %v2066
    %2594 = vmatpush.msra.mxu0 %v2065
    %2595 = vmatpush.msra.mxu0 %v2064
    %2596 = vmatpush.msra.mxu0 %v2063
    %2597 = vmatpush.msra.mxu0 %v2062
    %2598 = vmatpush.msra.mxu0 %v2061
    %2599 = vmatpush.msra.mxu0 %v2060
    %2600 = vmatpush.msra.mxu0 %v2059
    %2601 = vmatpush.msra.mxu0 %v2058
    %2602 = vmatpush.msra.mxu0 %v2057
    %2603 = vmatmul.f32.gmra.mxu0 %v1451
    %v2604 = vpop.f32.mrf.mxu0
    %v2605 = vadd.f32 %v2396, %v2604
    %2606 = vmatmul.f32.gmra.mxu0 %v1460
    %v2607 = vpop.f32.mrf.mxu0
    %v2608 = vadd.f32 %v2399, %v2607
    %2609 = vmatmul.f32.gmra.mxu0 %v1469
    %v2610 = vpop.f32.mrf.mxu0
    %v2611 = vadd.f32 %v2402, %v2610
    %2612 = vmatmul.f32.gmra.mxu0 %v1478
    %v2613 = vpop.f32.mrf.mxu0
    %v2614 = vadd.f32 %v2405, %v2613
    %2615 = vmatmul.f32.gmra.mxu0 %v1487
    %v2616 = vpop.f32.mrf.mxu0
    %v2617 = vadd.f32 %v2408, %v2616
    %2618 = vmatmul.f32.gmra.mxu0 %v1496
    %v2619 = vpop.f32.mrf.mxu0
    %v2620 = vadd.f32 %v2411, %v2619
    %2621 = vmatmul.f32.gmra.mxu0 %v1505
    %v2622 = vpop.f32.mrf.mxu0
    %v2623 = vadd.f32 %v2414, %v2622
    %2624 = vmatmul.f32.gmra.mxu0 %v1514
    %v2625 = vpop.f32.mrf.mxu0
    %v2626 = vadd.f32 %v2417, %v2625
    %2627 = vmatmul.f32.gmra.mxu0 %v1523
    %v2628 = vpop.f32.mrf.mxu0
    %v2629 = vadd.f32 %v2420, %v2628
    %2630 = vmatmul.f32.gmra.mxu0 %v1532
    %v2631 = vpop.f32.mrf.mxu0
    %v2632 = vadd.f32 %v2423, %v2631
    %2633 = vmatmul.f32.gmra.mxu0 %v1541
    %v2634 = vpop.f32.mrf.mxu0
    %v2635 = vadd.f32 %v2426, %v2634
    %2636 = vmatmul.f32.gmra.mxu0 %v1550
    %v2637 = vpop.f32.mrf.mxu0
    %v2638 = vadd.f32 %v2429, %v2637
    %2639 = vmatmul.f32.gmra.mxu0 %v1559
    %v2640 = vpop.f32.mrf.mxu0
    %v2641 = vadd.f32 %v2432, %v2640
    %2642 = vmatmul.f32.gmra.mxu0 %v1568
    %v2643 = vpop.f32.mrf.mxu0
    %v2644 = vadd.f32 %v2435, %v2643
    %2645 = vmatmul.f32.gmra.mxu0 %v1577
    %v2646 = vpop.f32.mrf.mxu0
    %v2647 = vadd.f32 %v2438, %v2646
    %2648 = vmatmul.f32.gmra.mxu0 %v1586
    %v2649 = vpop.f32.mrf.mxu0
    %v2650 = vadd.f32 %v2441, %v2649
    %2651 = vmatmul.f32.gmra.mxu0 %v1595
    %v2652 = vpop.f32.mrf.mxu0
    %v2653 = vadd.f32 %v2444, %v2652
    %2654 = vmatmul.f32.gmra.mxu0 %v1604
    %v2655 = vpop.f32.mrf.mxu0
    %v2656 = vadd.f32 %v2447, %v2655
    %2657 = vmatmul.f32.gmra.mxu0 %v1613
    %v2658 = vpop.f32.mrf.mxu0
    %v2659 = vadd.f32 %v2450, %v2658
    %2660 = vmatmul.f32.gmra.mxu0 %v1622
    %v2661 = vpop.f32.mrf.mxu0
    %v2662 = vadd.f32 %v2453, %v2661
    %2663 = vmatmul.f32.gmra.mxu0 %v1631
    %v2664 = vpop.f32.mrf.mxu0
    %v2665 = vadd.f32 %v2456, %v2664
    %2666 = vmatmul.f32.gmra.mxu0 %v1640
    %v2667 = vpop.f32.mrf.mxu0
    %v2668 = vadd.f32 %v2459, %v2667
    %2669 = vmatmul.f32.gmra.mxu0 %v1649
    %v2670 = vpop.f32.mrf.mxu0
    %v2671 = vadd.f32 %v2462, %v2670
    %2672 = vmatmul.f32.gmra.mxu0 %v1658
    %v2673 = vpop.f32.mrf.mxu0
    %v2674 = vadd.f32 %v2465, %v2673
    %2675 = vmatmul.f32.gmra.mxu0 %v1667
    %v2676 = vpop.f32.mrf.mxu0
    %v2677 = vadd.f32 %v2468, %v2676
    %2678 = vmatmul.f32.gmra.mxu0 %v1676
    %v2679 = vpop.f32.mrf.mxu0
    %v2680 = vadd.f32 %v2471, %v2679
    %2681 = vmatmul.f32.gmra.mxu0 %v1685
    %v2682 = vpop.f32.mrf.mxu0
    %v2683 = vadd.f32 %v2474, %v2682
    %2684 = vmatmul.f32.gmra.mxu0 %v1694
    %v2685 = vpop.f32.mrf.mxu0
    %v2686 = vadd.f32 %v2477, %v2685
    %2687 = vmatmul.f32.gmra.mxu0 %v1703
    %v2688 = vpop.f32.mrf.mxu0
    %v2689 = vadd.f32 %v2480, %v2688
    %2690 = vmatmul.f32.gmra.mxu0 %v1712
    %v2691 = vpop.f32.mrf.mxu0
    %v2692 = vadd.f32 %v2483, %v2691
    %2693 = vmatmul.f32.gmra.mxu0 %v1721
    %v2694 = vpop.f32.mrf.mxu0
    %v2695 = vadd.f32 %v2486, %v2694
    %2696 = vmatmul.f32.gmra.mxu0 %v1730
    %v2697 = vpop.f32.mrf.mxu0
    %v2698 = vadd.f32 %v2489, %v2697
    %2699 = vmatmul.f32.gmra.mxu0 %v1739
    %v2700 = vpop.f32.mrf.mxu0
    %v2701 = vadd.f32 %v2492, %v2700
    %2702 = vmatmul.f32.gmra.mxu0 %v1748
    %v2703 = vpop.f32.mrf.mxu0
    %v2704 = vadd.f32 %v2495, %v2703
    %2705 = vmatmul.f32.gmra.mxu0 %v1757
    %v2706 = vpop.f32.mrf.mxu0
    %v2707 = vadd.f32 %v2498, %v2706
    %2708 = vmatmul.f32.gmra.mxu0 %v1766
    %v2709 = vpop.f32.mrf.mxu0
    %v2710 = vadd.f32 %v2501, %v2709
    %2711 = vmatmul.f32.gmra.mxu0 %v1775
    %v2712 = vpop.f32.mrf.mxu0
    %v2713 = vadd.f32 %v2504, %v2712
    %2714 = vmatmul.f32.gmra.mxu0 %v1784
    %v2715 = vpop.f32.mrf.mxu0
    %v2716 = vadd.f32 %v2507, %v2715
    %2717 = vmatmul.f32.gmra.mxu0 %v1793
    %v2718 = vpop.f32.mrf.mxu0
    %v2719 = vadd.f32 %v2510, %v2718
    %2720 = vmatmul.f32.gmra.mxu0 %v1802
    %v2721 = vpop.f32.mrf.mxu0
    %v2722 = vadd.f32 %v2513, %v2721
    %2723 = vmatmul.f32.gmra.mxu0 %v1811
    %v2724 = vpop.f32.mrf.mxu0
    %v2725 = vadd.f32 %v2516, %v2724
    %2726 = vmatmul.f32.gmra.mxu0 %v1820
    %v2727 = vpop.f32.mrf.mxu0
    %v2728 = vadd.f32 %v2519, %v2727
    %2729 = vmatmul.f32.gmra.mxu0 %v1829
    %v2730 = vpop.f32.mrf.mxu0
    %v2731 = vadd.f32 %v2522, %v2730
    %2732 = vmatmul.f32.gmra.mxu0 %v1838
    %v2733 = vpop.f32.mrf.mxu0
    %v2734 = vadd.f32 %v2525, %v2733
    %2735 = vmatmul.f32.gmra.mxu0 %v1847
    %v2736 = vpop.f32.mrf.mxu0
    %v2737 = vadd.f32 %v2528, %v2736
    %2738 = vmatmul.f32.gmra.mxu0 %v1856
    %v2739 = vpop.f32.mrf.mxu0
    %v2740 = vadd.f32 %v2531, %v2739
    %2741 = vmatmul.f32.gmra.mxu0 %v1865
    %v2742 = vpop.f32.mrf.mxu0
    %v2743 = vadd.f32 %v2534, %v2742
    %2744 = vmatmul.f32.gmra.mxu0 %v1874
    %v2745 = vpop.f32.mrf.mxu0
    %v2746 = vadd.f32 %v2537, %v2745
    %2747 = vmatmul.f32.gmra.mxu0 %v1883
    %v2748 = vpop.f32.mrf.mxu0
    %v2749 = vadd.f32 %v2540, %v2748
    %2750 = vmatmul.f32.gmra.mxu0 %v1892
    %v2751 = vpop.f32.mrf.mxu0
    %v2752 = vadd.f32 %v2543, %v2751
    %2753 = vmatmul.f32.gmra.mxu0 %v1901
    %v2754 = vpop.f32.mrf.mxu0
    %v2755 = vadd.f32 %v2546, %v2754
    %2756 = vmatmul.f32.gmra.mxu0 %v1910
    %v2757 = vpop.f32.mrf.mxu0
    %v2758 = vadd.f32 %v2549, %v2757
    %2759 = vmatmul.f32.gmra.mxu0 %v1919
    %v2760 = vpop.f32.mrf.mxu0
    %v2761 = vadd.f32 %v2552, %v2760
    %2762 = vmatmul.f32.gmra.mxu0 %v1928
    %v2763 = vpop.f32.mrf.mxu0
    %v2764 = vadd.f32 %v2555, %v2763
    %2765 = vmatmul.f32.gmra.mxu0 %v1937
    %v2766 = vpop.f32.mrf.mxu0
    %v2767 = vadd.f32 %v2558, %v2766
    %2768 = vmatmul.f32.gmra.mxu0 %v1946
    %v2769 = vpop.f32.mrf.mxu0
    %v2770 = vadd.f32 %v2561, %v2769
    %2771 = vmatmul.f32.gmra.mxu0 %v1955
    %v2772 = vpop.f32.mrf.mxu0
    %v2773 = vadd.f32 %v2564, %v2772
    %2774 = vmatmul.f32.gmra.mxu0 %v1964
    %v2775 = vpop.f32.mrf.mxu0
    %v2776 = vadd.f32 %v2567, %v2775
    %2777 = vmatmul.f32.gmra.mxu0 %v1973
    %v2778 = vpop.f32.mrf.mxu0
    %v2779 = vadd.f32 %v2570, %v2778
    %2780 = vmatmul.f32.gmra.mxu0 %v1982
    %v2781 = vpop.f32.mrf.mxu0
    %v2782 = vadd.f32 %v2573, %v2781
    %2783 = vmatmul.f32.gmra.mxu0 %v1991
    %v2784 = vpop.f32.mrf.mxu0
    %v2785 = vadd.f32 %v2576, %v2784
    %2786 = vmatmul.f32.gmra.mxu0 %v2000
    %v2787 = vpop.f32.mrf.mxu0
    %v2788 = vadd.f32 %v2579, %v2787
    %2789 = vmatmul.f32.gmra.mxu0 %v2009
    %v2790 = vpop.f32.mrf.mxu0
    %v2791 = vadd.f32 %v2582, %v2790
    %2792 = vmatmul.f32.gmra.mxu0 %v2018
    %v2793 = vpop.f32.mrf.mxu0
    %v2794 = vadd.f32 %v2585, %v2793
    %2795 = vdwg.mxu0
    %2796 = vmatpush.msra.mxu0 %v2088
    %2797 = vmatpush.msra.mxu0 %v2087
    %2798 = vmatpush.msra.mxu0 %v2086
    %2799 = vmatpush.msra.mxu0 %v2085
    %2800 = vmatpush.msra.mxu0 %v2084
    %2801 = vmatpush.msra.mxu0 %v2083
    %2802 = vmatpush.msra.mxu0 %v2082
    %2803 = vmatpush.msra.mxu0 %v2081
    %2804 = vmatpush.msra.mxu0 %v2080
    %2805 = vmatpush.msra.mxu0 %v2079
    %2806 = vmatpush.msra.mxu0 %v2078
    %2807 = vmatpush.msra.mxu0 %v2077
    %2808 = vmatpush.msra.mxu0 %v2076
    %2809 = vmatpush.msra.mxu0 %v2075
    %2810 = vmatpush.msra.mxu0 %v2074
    %2811 = vmatpush.msra.mxu0 %v2073
    %2812 = vmatmul.f32.gmra.mxu0 %v1452
    %v2813 = vpop.f32.mrf.mxu0
    %v2814 = vadd.f32 %v2605, %v2813
    %2815 = vmatmul.f32.gmra.mxu0 %v1461
    %v2816 = vpop.f32.mrf.mxu0
    %v2817 = vadd.f32 %v2608, %v2816
    %2818 = vmatmul.f32.gmra.mxu0 %v1470
    %v2819 = vpop.f32.mrf.mxu0
    %v2820 = vadd.f32 %v2611, %v2819
    %2821 = vmatmul.f32.gmra.mxu0 %v1479
    %v2822 = vpop.f32.mrf.mxu0
    %v2823 = vadd.f32 %v2614, %v2822
    %2824 = vmatmul.f32.gmra.mxu0 %v1488
    %v2825 = vpop.f32.mrf.mxu0
    %v2826 = vadd.f32 %v2617, %v2825
    %2827 = vmatmul.f32.gmra.mxu0 %v1497
    %v2828 = vpop.f32.mrf.mxu0
    %v2829 = vadd.f32 %v2620, %v2828
    %2830 = vmatmul.f32.gmra.mxu0 %v1506
    %v2831 = vpop.f32.mrf.mxu0
    %v2832 = vadd.f32 %v2623, %v2831
    %2833 = vmatmul.f32.gmra.mxu0 %v1515
    %v2834 = vpop.f32.mrf.mxu0
    %v2835 = vadd.f32 %v2626, %v2834
    %2836 = vmatmul.f32.gmra.mxu0 %v1524
    %v2837 = vpop.f32.mrf.mxu0
    %v2838 = vadd.f32 %v2629, %v2837
    %2839 = vmatmul.f32.gmra.mxu0 %v1533
    %v2840 = vpop.f32.mrf.mxu0
    %v2841 = vadd.f32 %v2632, %v2840
    %2842 = vmatmul.f32.gmra.mxu0 %v1542
    %v2843 = vpop.f32.mrf.mxu0
    %v2844 = vadd.f32 %v2635, %v2843
    %2845 = vmatmul.f32.gmra.mxu0 %v1551
    %v2846 = vpop.f32.mrf.mxu0
    %v2847 = vadd.f32 %v2638, %v2846
    %2848 = vmatmul.f32.gmra.mxu0 %v1560
    %v2849 = vpop.f32.mrf.mxu0
    %v2850 = vadd.f32 %v2641, %v2849
    %2851 = vmatmul.f32.gmra.mxu0 %v1569
    %v2852 = vpop.f32.mrf.mxu0
    %v2853 = vadd.f32 %v2644, %v2852
    %2854 = vmatmul.f32.gmra.mxu0 %v1578
    %v2855 = vpop.f32.mrf.mxu0
    %v2856 = vadd.f32 %v2647, %v2855
    %2857 = vmatmul.f32.gmra.mxu0 %v1587
    %v2858 = vpop.f32.mrf.mxu0
    %v2859 = vadd.f32 %v2650, %v2858
    %2860 = vmatmul.f32.gmra.mxu0 %v1596
    %v2861 = vpop.f32.mrf.mxu0
    %v2862 = vadd.f32 %v2653, %v2861
    %2863 = vmatmul.f32.gmra.mxu0 %v1605
    %v2864 = vpop.f32.mrf.mxu0
    %v2865 = vadd.f32 %v2656, %v2864
    %2866 = vmatmul.f32.gmra.mxu0 %v1614
    %v2867 = vpop.f32.mrf.mxu0
    %v2868 = vadd.f32 %v2659, %v2867
    %2869 = vmatmul.f32.gmra.mxu0 %v1623
    %v2870 = vpop.f32.mrf.mxu0
    %v2871 = vadd.f32 %v2662, %v2870
    %2872 = vmatmul.f32.gmra.mxu0 %v1632
    %v2873 = vpop.f32.mrf.mxu0
    %v2874 = vadd.f32 %v2665, %v2873
    %2875 = vmatmul.f32.gmra.mxu0 %v1641
    %v2876 = vpop.f32.mrf.mxu0
    %v2877 = vadd.f32 %v2668, %v2876
    %2878 = vmatmul.f32.gmra.mxu0 %v1650
    %v2879 = vpop.f32.mrf.mxu0
    %v2880 = vadd.f32 %v2671, %v2879
    %2881 = vmatmul.f32.gmra.mxu0 %v1659
    %v2882 = vpop.f32.mrf.mxu0
    %v2883 = vadd.f32 %v2674, %v2882
    %2884 = vmatmul.f32.gmra.mxu0 %v1668
    %v2885 = vpop.f32.mrf.mxu0
    %v2886 = vadd.f32 %v2677, %v2885
    %2887 = vmatmul.f32.gmra.mxu0 %v1677
    %v2888 = vpop.f32.mrf.mxu0
    %v2889 = vadd.f32 %v2680, %v2888
    %2890 = vmatmul.f32.gmra.mxu0 %v1686
    %v2891 = vpop.f32.mrf.mxu0
    %v2892 = vadd.f32 %v2683, %v2891
    %2893 = vmatmul.f32.gmra.mxu0 %v1695
    %v2894 = vpop.f32.mrf.mxu0
    %v2895 = vadd.f32 %v2686, %v2894
    %2896 = vmatmul.f32.gmra.mxu0 %v1704
    %v2897 = vpop.f32.mrf.mxu0
    %v2898 = vadd.f32 %v2689, %v2897
    %2899 = vmatmul.f32.gmra.mxu0 %v1713
    %v2900 = vpop.f32.mrf.mxu0
    %v2901 = vadd.f32 %v2692, %v2900
    %2902 = vmatmul.f32.gmra.mxu0 %v1722
    %v2903 = vpop.f32.mrf.mxu0
    %v2904 = vadd.f32 %v2695, %v2903
    %2905 = vmatmul.f32.gmra.mxu0 %v1731
    %v2906 = vpop.f32.mrf.mxu0
    %v2907 = vadd.f32 %v2698, %v2906
    %2908 = vmatmul.f32.gmra.mxu0 %v1740
    %v2909 = vpop.f32.mrf.mxu0
    %v2910 = vadd.f32 %v2701, %v2909
    %2911 = vmatmul.f32.gmra.mxu0 %v1749
    %v2912 = vpop.f32.mrf.mxu0
    %v2913 = vadd.f32 %v2704, %v2912
    %2914 = vmatmul.f32.gmra.mxu0 %v1758
    %v2915 = vpop.f32.mrf.mxu0
    %v2916 = vadd.f32 %v2707, %v2915
    %2917 = vmatmul.f32.gmra.mxu0 %v1767
    %v2918 = vpop.f32.mrf.mxu0
    %v2919 = vadd.f32 %v2710, %v2918
    %2920 = vmatmul.f32.gmra.mxu0 %v1776
    %v2921 = vpop.f32.mrf.mxu0
    %v2922 = vadd.f32 %v2713, %v2921
    %2923 = vmatmul.f32.gmra.mxu0 %v1785
    %v2924 = vpop.f32.mrf.mxu0
    %v2925 = vadd.f32 %v2716, %v2924
    %2926 = vmatmul.f32.gmra.mxu0 %v1794
    %v2927 = vpop.f32.mrf.mxu0
    %v2928 = vadd.f32 %v2719, %v2927
    %2929 = vmatmul.f32.gmra.mxu0 %v1803
    %v2930 = vpop.f32.mrf.mxu0
    %v2931 = vadd.f32 %v2722, %v2930
    %2932 = vmatmul.f32.gmra.mxu0 %v1812
    %v2933 = vpop.f32.mrf.mxu0
    %v2934 = vadd.f32 %v2725, %v2933
    %2935 = vmatmul.f32.gmra.mxu0 %v1821
    %v2936 = vpop.f32.mrf.mxu0
    %v2937 = vadd.f32 %v2728, %v2936
    %2938 = vmatmul.f32.gmra.mxu0 %v1830
    %v2939 = vpop.f32.mrf.mxu0
    %v2940 = vadd.f32 %v2731, %v2939
    %2941 = vmatmul.f32.gmra.mxu0 %v1839
    %v2942 = vpop.f32.mrf.mxu0
    %v2943 = vadd.f32 %v2734, %v2942
    %2944 = vmatmul.f32.gmra.mxu0 %v1848
    %v2945 = vpop.f32.mrf.mxu0
    %v2946 = vadd.f32 %v2737, %v2945
    %2947 = vmatmul.f32.gmra.mxu0 %v1857
    %v2948 = vpop.f32.mrf.mxu0
    %v2949 = vadd.f32 %v2740, %v2948
    %2950 = vmatmul.f32.gmra.mxu0 %v1866
    %v2951 = vpop.f32.mrf.mxu0
    %v2952 = vadd.f32 %v2743, %v2951
    %2953 = vmatmul.f32.gmra.mxu0 %v1875
    %v2954 = vpop.f32.mrf.mxu0
    %v2955 = vadd.f32 %v2746, %v2954
    %2956 = vmatmul.f32.gmra.mxu0 %v1884
    %v2957 = vpop.f32.mrf.mxu0
    %v2958 = vadd.f32 %v2749, %v2957
    %2959 = vmatmul.f32.gmra.mxu0 %v1893
    %v2960 = vpop.f32.mrf.mxu0
    %v2961 = vadd.f32 %v2752, %v2960
    %2962 = vmatmul.f32.gmra.mxu0 %v1902
    %v2963 = vpop.f32.mrf.mxu0
    %v2964 = vadd.f32 %v2755, %v2963
    %2965 = vmatmul.f32.gmra.mxu0 %v1911
    %v2966 = vpop.f32.mrf.mxu0
    %v2967 = vadd.f32 %v2758, %v2966
    %2968 = vmatmul.f32.gmra.mxu0 %v1920
    %v2969 = vpop.f32.mrf.mxu0
    %v2970 = vadd.f32 %v2761, %v2969
    %2971 = vmatmul.f32.gmra.mxu0 %v1929
    %v2972 = vpop.f32.mrf.mxu0
    %v2973 = vadd.f32 %v2764, %v2972
    %2974 = vmatmul.f32.gmra.mxu0 %v1938
    %v2975 = vpop.f32.mrf.mxu0
    %v2976 = vadd.f32 %v2767, %v2975
    %2977 = vmatmul.f32.gmra.mxu0 %v1947
    %v2978 = vpop.f32.mrf.mxu0
    %v2979 = vadd.f32 %v2770, %v2978
    %2980 = vmatmul.f32.gmra.mxu0 %v1956
    %v2981 = vpop.f32.mrf.mxu0
    %v2982 = vadd.f32 %v2773, %v2981
    %2983 = vmatmul.f32.gmra.mxu0 %v1965
    %v2984 = vpop.f32.mrf.mxu0
    %v2985 = vadd.f32 %v2776, %v2984
    %2986 = vmatmul.f32.gmra.mxu0 %v1974
    %v2987 = vpop.f32.mrf.mxu0
    %v2988 = vadd.f32 %v2779, %v2987
    %2989 = vmatmul.f32.gmra.mxu0 %v1983
    %v2990 = vpop.f32.mrf.mxu0
    %v2991 = vadd.f32 %v2782, %v2990
    %2992 = vmatmul.f32.gmra.mxu0 %v1992
    %v2993 = vpop.f32.mrf.mxu0
    %v2994 = vadd.f32 %v2785, %v2993
    %2995 = vmatmul.f32.gmra.mxu0 %v2001
    %v2996 = vpop.f32.mrf.mxu0
    %v2997 = vadd.f32 %v2788, %v2996
    %2998 = vmatmul.f32.gmra.mxu0 %v2010
    %v2999 = vpop.f32.mrf.mxu0
    %v3000 = vadd.f32 %v2791, %v2999
    %3001 = vmatmul.f32.gmra.mxu0 %v2019
    %v3002 = vpop.f32.mrf.mxu0
    %v3003 = vadd.f32 %v2794, %v3002
    %3004 = vdwg.mxu0
    %3005 = vmatpush.msra.mxu0 %v2104
    %3006 = vmatpush.msra.mxu0 %v2103
    %3007 = vmatpush.msra.mxu0 %v2102
    %3008 = vmatpush.msra.mxu0 %v2101
    %3009 = vmatpush.msra.mxu0 %v2100
    %3010 = vmatpush.msra.mxu0 %v2099
    %3011 = vmatpush.msra.mxu0 %v2098
    %3012 = vmatpush.msra.mxu0 %v2097
    %3013 = vmatpush.msra.mxu0 %v2096
    %3014 = vmatpush.msra.mxu0 %v2095
    %3015 = vmatpush.msra.mxu0 %v2094
    %3016 = vmatpush.msra.mxu0 %v2093
    %3017 = vmatpush.msra.mxu0 %v2092
    %3018 = vmatpush.msra.mxu0 %v2091
    %3019 = vmatpush.msra.mxu0 %v2090
    %3020 = vmatpush.msra.mxu0 %v2089
    %3021 = vmatmul.f32.gmra.mxu0 %v1453
    %v3022 = vpop.f32.mrf.mxu0
    %v3023 = vadd.f32 %v2814, %v3022
    %3024 = vmatmul.f32.gmra.mxu0 %v1462
    %v3025 = vpop.f32.mrf.mxu0
    %v3026 = vadd.f32 %v2817, %v3025
    %3027 = vmatmul.f32.gmra.mxu0 %v1471
    %v3028 = vpop.f32.mrf.mxu0
    %v3029 = vadd.f32 %v2820, %v3028
    %3030 = vmatmul.f32.gmra.mxu0 %v1480
    %v3031 = vpop.f32.mrf.mxu0
    %v3032 = vadd.f32 %v2823, %v3031
    %3033 = vmatmul.f32.gmra.mxu0 %v1489
    %v3034 = vpop.f32.mrf.mxu0
    %v3035 = vadd.f32 %v2826, %v3034
    %3036 = vmatmul.f32.gmra.mxu0 %v1498
    %v3037 = vpop.f32.mrf.mxu0
    %v3038 = vadd.f32 %v2829, %v3037
    %3039 = vmatmul.f32.gmra.mxu0 %v1507
    %v3040 = vpop.f32.mrf.mxu0
    %v3041 = vadd.f32 %v2832, %v3040
    %3042 = vmatmul.f32.gmra.mxu0 %v1516
    %v3043 = vpop.f32.mrf.mxu0
    %v3044 = vadd.f32 %v2835, %v3043
    %3045 = vmatmul.f32.gmra.mxu0 %v1525
    %v3046 = vpop.f32.mrf.mxu0
    %v3047 = vadd.f32 %v2838, %v3046
    %3048 = vmatmul.f32.gmra.mxu0 %v1534
    %v3049 = vpop.f32.mrf.mxu0
    %v3050 = vadd.f32 %v2841, %v3049
    %3051 = vmatmul.f32.gmra.mxu0 %v1543
    %v3052 = vpop.f32.mrf.mxu0
    %v3053 = vadd.f32 %v2844, %v3052
    %3054 = vmatmul.f32.gmra.mxu0 %v1552
    %v3055 = vpop.f32.mrf.mxu0
    %v3056 = vadd.f32 %v2847, %v3055
    %3057 = vmatmul.f32.gmra.mxu0 %v1561
    %v3058 = vpop.f32.mrf.mxu0
    %v3059 = vadd.f32 %v2850, %v3058
    %3060 = vmatmul.f32.gmra.mxu0 %v1570
    %v3061 = vpop.f32.mrf.mxu0
    %v3062 = vadd.f32 %v2853, %v3061
    %3063 = vmatmul.f32.gmra.mxu0 %v1579
    %v3064 = vpop.f32.mrf.mxu0
    %v3065 = vadd.f32 %v2856, %v3064
    %3066 = vmatmul.f32.gmra.mxu0 %v1588
    %v3067 = vpop.f32.mrf.mxu0
    %v3068 = vadd.f32 %v2859, %v3067
    %3069 = vmatmul.f32.gmra.mxu0 %v1597
    %v3070 = vpop.f32.mrf.mxu0
    %v3071 = vadd.f32 %v2862, %v3070
    %3072 = vmatmul.f32.gmra.mxu0 %v1606
    %v3073 = vpop.f32.mrf.mxu0
    %v3074 = vadd.f32 %v2865, %v3073
    %3075 = vmatmul.f32.gmra.mxu0 %v1615
    %v3076 = vpop.f32.mrf.mxu0
    %v3077 = vadd.f32 %v2868, %v3076
    %3078 = vmatmul.f32.gmra.mxu0 %v1624
    %v3079 = vpop.f32.mrf.mxu0
    %v3080 = vadd.f32 %v2871, %v3079
    %3081 = vmatmul.f32.gmra.mxu0 %v1633
    %v3082 = vpop.f32.mrf.mxu0
    %v3083 = vadd.f32 %v2874, %v3082
    %3084 = vmatmul.f32.gmra.mxu0 %v1642
    %v3085 = vpop.f32.mrf.mxu0
    %v3086 = vadd.f32 %v2877, %v3085
    %3087 = vmatmul.f32.gmra.mxu0 %v1651
    %v3088 = vpop.f32.mrf.mxu0
    %v3089 = vadd.f32 %v2880, %v3088
    %3090 = vmatmul.f32.gmra.mxu0 %v1660
    %v3091 = vpop.f32.mrf.mxu0
    %v3092 = vadd.f32 %v2883, %v3091
    %3093 = vmatmul.f32.gmra.mxu0 %v1669
    %v3094 = vpop.f32.mrf.mxu0
    %v3095 = vadd.f32 %v2886, %v3094
    %3096 = vmatmul.f32.gmra.mxu0 %v1678
    %v3097 = vpop.f32.mrf.mxu0
    %v3098 = vadd.f32 %v2889, %v3097
    %3099 = vmatmul.f32.gmra.mxu0 %v1687
    %v3100 = vpop.f32.mrf.mxu0
    %v3101 = vadd.f32 %v2892, %v3100
    %3102 = vmatmul.f32.gmra.mxu0 %v1696
    %v3103 = vpop.f32.mrf.mxu0
    %v3104 = vadd.f32 %v2895, %v3103
    %3105 = vmatmul.f32.gmra.mxu0 %v1705
    %v3106 = vpop.f32.mrf.mxu0
    %v3107 = vadd.f32 %v2898, %v3106
    %3108 = vmatmul.f32.gmra.mxu0 %v1714
    %v3109 = vpop.f32.mrf.mxu0
    %v3110 = vadd.f32 %v2901, %v3109
    %3111 = vmatmul.f32.gmra.mxu0 %v1723
    %v3112 = vpop.f32.mrf.mxu0
    %v3113 = vadd.f32 %v2904, %v3112
    %3114 = vmatmul.f32.gmra.mxu0 %v1732
    %v3115 = vpop.f32.mrf.mxu0
    %v3116 = vadd.f32 %v2907, %v3115
    %3117 = vmatmul.f32.gmra.mxu0 %v1741
    %v3118 = vpop.f32.mrf.mxu0
    %v3119 = vadd.f32 %v2910, %v3118
    %3120 = vmatmul.f32.gmra.mxu0 %v1750
    %v3121 = vpop.f32.mrf.mxu0
    %v3122 = vadd.f32 %v2913, %v3121
    %3123 = vmatmul.f32.gmra.mxu0 %v1759
    %v3124 = vpop.f32.mrf.mxu0
    %v3125 = vadd.f32 %v2916, %v3124
    %3126 = vmatmul.f32.gmra.mxu0 %v1768
    %v3127 = vpop.f32.mrf.mxu0
    %v3128 = vadd.f32 %v2919, %v3127
    %3129 = vmatmul.f32.gmra.mxu0 %v1777
    %v3130 = vpop.f32.mrf.mxu0
    %v3131 = vadd.f32 %v2922, %v3130
    %3132 = vmatmul.f32.gmra.mxu0 %v1786
    %v3133 = vpop.f32.mrf.mxu0
    %v3134 = vadd.f32 %v2925, %v3133
    %3135 = vmatmul.f32.gmra.mxu0 %v1795
    %v3136 = vpop.f32.mrf.mxu0
    %v3137 = vadd.f32 %v2928, %v3136
    %3138 = vmatmul.f32.gmra.mxu0 %v1804
    %v3139 = vpop.f32.mrf.mxu0
    %v3140 = vadd.f32 %v2931, %v3139
    %3141 = vmatmul.f32.gmra.mxu0 %v1813
    %v3142 = vpop.f32.mrf.mxu0
    %v3143 = vadd.f32 %v2934, %v3142
    %3144 = vmatmul.f32.gmra.mxu0 %v1822
    %v3145 = vpop.f32.mrf.mxu0
    %v3146 = vadd.f32 %v2937, %v3145
    %3147 = vmatmul.f32.gmra.mxu0 %v1831
    %v3148 = vpop.f32.mrf.mxu0
    %v3149 = vadd.f32 %v2940, %v3148
    %3150 = vmatmul.f32.gmra.mxu0 %v1840
    %v3151 = vpop.f32.mrf.mxu0
    %v3152 = vadd.f32 %v2943, %v3151
    %3153 = vmatmul.f32.gmra.mxu0 %v1849
    %v3154 = vpop.f32.mrf.mxu0
    %v3155 = vadd.f32 %v2946, %v3154
    %3156 = vmatmul.f32.gmra.mxu0 %v1858
    %v3157 = vpop.f32.mrf.mxu0
    %v3158 = vadd.f32 %v2949, %v3157
    %3159 = vmatmul.f32.gmra.mxu0 %v1867
    %v3160 = vpop.f32.mrf.mxu0
    %v3161 = vadd.f32 %v2952, %v3160
    %3162 = vmatmul.f32.gmra.mxu0 %v1876
    %v3163 = vpop.f32.mrf.mxu0
    %v3164 = vadd.f32 %v2955, %v3163
    %3165 = vmatmul.f32.gmra.mxu0 %v1885
    %v3166 = vpop.f32.mrf.mxu0
    %v3167 = vadd.f32 %v2958, %v3166
    %3168 = vmatmul.f32.gmra.mxu0 %v1894
    %v3169 = vpop.f32.mrf.mxu0
    %v3170 = vadd.f32 %v2961, %v3169
    %3171 = vmatmul.f32.gmra.mxu0 %v1903
    %v3172 = vpop.f32.mrf.mxu0
    %v3173 = vadd.f32 %v2964, %v3172
    %3174 = vmatmul.f32.gmra.mxu0 %v1912
    %v3175 = vpop.f32.mrf.mxu0
    %v3176 = vadd.f32 %v2967, %v3175
    %3177 = vmatmul.f32.gmra.mxu0 %v1921
    %v3178 = vpop.f32.mrf.mxu0
    %v3179 = vadd.f32 %v2970, %v3178
    %3180 = vmatmul.f32.gmra.mxu0 %v1930
    %v3181 = vpop.f32.mrf.mxu0
    %v3182 = vadd.f32 %v2973, %v3181
    %3183 = vmatmul.f32.gmra.mxu0 %v1939
    %v3184 = vpop.f32.mrf.mxu0
    %v3185 = vadd.f32 %v2976, %v3184
    %3186 = vmatmul.f32.gmra.mxu0 %v1948
    %v3187 = vpop.f32.mrf.mxu0
    %v3188 = vadd.f32 %v2979, %v3187
    %3189 = vmatmul.f32.gmra.mxu0 %v1957
    %v3190 = vpop.f32.mrf.mxu0
    %v3191 = vadd.f32 %v2982, %v3190
    %3192 = vmatmul.f32.gmra.mxu0 %v1966
    %v3193 = vpop.f32.mrf.mxu0
    %v3194 = vadd.f32 %v2985, %v3193
    %3195 = vmatmul.f32.gmra.mxu0 %v1975
    %v3196 = vpop.f32.mrf.mxu0
    %v3197 = vadd.f32 %v2988, %v3196
    %3198 = vmatmul.f32.gmra.mxu0 %v1984
    %v3199 = vpop.f32.mrf.mxu0
    %v3200 = vadd.f32 %v2991, %v3199
    %3201 = vmatmul.f32.gmra.mxu0 %v1993
    %v3202 = vpop.f32.mrf.mxu0
    %v3203 = vadd.f32 %v2994, %v3202
    %3204 = vmatmul.f32.gmra.mxu0 %v2002
    %v3205 = vpop.f32.mrf.mxu0
    %v3206 = vadd.f32 %v2997, %v3205
    %3207 = vmatmul.f32.gmra.mxu0 %v2011
    %v3208 = vpop.f32.mrf.mxu0
    %v3209 = vadd.f32 %v3000, %v3208
    %3210 = vmatmul.f32.gmra.mxu0 %v2020
    %v3211 = vpop.f32.mrf.mxu0
    %v3212 = vadd.f32 %v3003, %v3211
    %3213 = vdwg.mxu0
    %3214 = vmatpush.msra.mxu0 %v2120
    %3215 = vmatpush.msra.mxu0 %v2119
    %3216 = vmatpush.msra.mxu0 %v2118
    %3217 = vmatpush.msra.mxu0 %v2117
    %3218 = vmatpush.msra.mxu0 %v2116
    %3219 = vmatpush.msra.mxu0 %v2115
    %3220 = vmatpush.msra.mxu0 %v2114
    %3221 = vmatpush.msra.mxu0 %v2113
    %3222 = vmatpush.msra.mxu0 %v2112
    %3223 = vmatpush.msra.mxu0 %v2111
    %3224 = vmatpush.msra.mxu0 %v2110
    %3225 = vmatpush.msra.mxu0 %v2109
    %3226 = vmatpush.msra.mxu0 %v2108
    %3227 = vmatpush.msra.mxu0 %v2107
    %3228 = vmatpush.msra.mxu0 %v2106
    %3229 = vmatpush.msra.mxu0 %v2105
    %3230 = vmatmul.f32.gmra.mxu0 %v1454
    %v3231 = vpop.f32.mrf.mxu0
    %v3232 = vadd.f32 %v3023, %v3231
    %3233 = vmatmul.f32.gmra.mxu0 %v1463
    %v3234 = vpop.f32.mrf.mxu0
    %v3235 = vadd.f32 %v3026, %v3234
    %3236 = vmatmul.f32.gmra.mxu0 %v1472
    %v3237 = vpop.f32.mrf.mxu0
    %v3238 = vadd.f32 %v3029, %v3237
    %3239 = vmatmul.f32.gmra.mxu0 %v1481
    %v3240 = vpop.f32.mrf.mxu0
    %v3241 = vadd.f32 %v3032, %v3240
    %3242 = vmatmul.f32.gmra.mxu0 %v1490
    %v3243 = vpop.f32.mrf.mxu0
    %v3244 = vadd.f32 %v3035, %v3243
    %3245 = vmatmul.f32.gmra.mxu0 %v1499
    %v3246 = vpop.f32.mrf.mxu0
    %v3247 = vadd.f32 %v3038, %v3246
    %3248 = vmatmul.f32.gmra.mxu0 %v1508
    %v3249 = vpop.f32.mrf.mxu0
    %v3250 = vadd.f32 %v3041, %v3249
    %3251 = vmatmul.f32.gmra.mxu0 %v1517
    %v3252 = vpop.f32.mrf.mxu0
    %v3253 = vadd.f32 %v3044, %v3252
    %3254 = vmatmul.f32.gmra.mxu0 %v1526
    %v3255 = vpop.f32.mrf.mxu0
    %v3256 = vadd.f32 %v3047, %v3255
    %3257 = vmatmul.f32.gmra.mxu0 %v1535
    %v3258 = vpop.f32.mrf.mxu0
    %v3259 = vadd.f32 %v3050, %v3258
    %3260 = vmatmul.f32.gmra.mxu0 %v1544
    %v3261 = vpop.f32.mrf.mxu0
    %v3262 = vadd.f32 %v3053, %v3261
    %3263 = vmatmul.f32.gmra.mxu0 %v1553
    %v3264 = vpop.f32.mrf.mxu0
    %v3265 = vadd.f32 %v3056, %v3264
    %3266 = vmatmul.f32.gmra.mxu0 %v1562
    %v3267 = vpop.f32.mrf.mxu0
    %v3268 = vadd.f32 %v3059, %v3267
    %3269 = vmatmul.f32.gmra.mxu0 %v1571
    %v3270 = vpop.f32.mrf.mxu0
    %v3271 = vadd.f32 %v3062, %v3270
    %3272 = vmatmul.f32.gmra.mxu0 %v1580
    %v3273 = vpop.f32.mrf.mxu0
    %v3274 = vadd.f32 %v3065, %v3273
    %3275 = vmatmul.f32.gmra.mxu0 %v1589
    %v3276 = vpop.f32.mrf.mxu0
    %v3277 = vadd.f32 %v3068, %v3276
    %3278 = vmatmul.f32.gmra.mxu0 %v1598
    %v3279 = vpop.f32.mrf.mxu0
    %v3280 = vadd.f32 %v3071, %v3279
    %3281 = vmatmul.f32.gmra.mxu0 %v1607
    %v3282 = vpop.f32.mrf.mxu0
    %v3283 = vadd.f32 %v3074, %v3282
    %3284 = vmatmul.f32.gmra.mxu0 %v1616
    %v3285 = vpop.f32.mrf.mxu0
    %v3286 = vadd.f32 %v3077, %v3285
    %3287 = vmatmul.f32.gmra.mxu0 %v1625
    %v3288 = vpop.f32.mrf.mxu0
    %v3289 = vadd.f32 %v3080, %v3288
    %3290 = vmatmul.f32.gmra.mxu0 %v1634
    %v3291 = vpop.f32.mrf.mxu0
    %v3292 = vadd.f32 %v3083, %v3291
    %3293 = vmatmul.f32.gmra.mxu0 %v1643
    %v3294 = vpop.f32.mrf.mxu0
    %v3295 = vadd.f32 %v3086, %v3294
    %3296 = vmatmul.f32.gmra.mxu0 %v1652
    %v3297 = vpop.f32.mrf.mxu0
    %v3298 = vadd.f32 %v3089, %v3297
    %3299 = vmatmul.f32.gmra.mxu0 %v1661
    %v3300 = vpop.f32.mrf.mxu0
    %v3301 = vadd.f32 %v3092, %v3300
    %3302 = vmatmul.f32.gmra.mxu0 %v1670
    %v3303 = vpop.f32.mrf.mxu0
    %v3304 = vadd.f32 %v3095, %v3303
    %3305 = vmatmul.f32.gmra.mxu0 %v1679
    %v3306 = vpop.f32.mrf.mxu0
    %v3307 = vadd.f32 %v3098, %v3306
    %3308 = vmatmul.f32.gmra.mxu0 %v1688
    %v3309 = vpop.f32.mrf.mxu0
    %v3310 = vadd.f32 %v3101, %v3309
    %3311 = vmatmul.f32.gmra.mxu0 %v1697
    %v3312 = vpop.f32.mrf.mxu0
    %v3313 = vadd.f32 %v3104, %v3312
    %3314 = vmatmul.f32.gmra.mxu0 %v1706
    %v3315 = vpop.f32.mrf.mxu0
    %v3316 = vadd.f32 %v3107, %v3315
    %3317 = vmatmul.f32.gmra.mxu0 %v1715
    %v3318 = vpop.f32.mrf.mxu0
    %v3319 = vadd.f32 %v3110, %v3318
    %3320 = vmatmul.f32.gmra.mxu0 %v1724
    %v3321 = vpop.f32.mrf.mxu0
    %v3322 = vadd.f32 %v3113, %v3321
    %3323 = vmatmul.f32.gmra.mxu0 %v1733
    %v3324 = vpop.f32.mrf.mxu0
    %v3325 = vadd.f32 %v3116, %v3324
    %3326 = vmatmul.f32.gmra.mxu0 %v1742
    %v3327 = vpop.f32.mrf.mxu0
    %v3328 = vadd.f32 %v3119, %v3327
    %3329 = vmatmul.f32.gmra.mxu0 %v1751
    %v3330 = vpop.f32.mrf.mxu0
    %v3331 = vadd.f32 %v3122, %v3330
    %3332 = vmatmul.f32.gmra.mxu0 %v1760
    %v3333 = vpop.f32.mrf.mxu0
    %v3334 = vadd.f32 %v3125, %v3333
    %3335 = vmatmul.f32.gmra.mxu0 %v1769
    %v3336 = vpop.f32.mrf.mxu0
    %v3337 = vadd.f32 %v3128, %v3336
    %3338 = vmatmul.f32.gmra.mxu0 %v1778
    %v3339 = vpop.f32.mrf.mxu0
    %v3340 = vadd.f32 %v3131, %v3339
    %3341 = vmatmul.f32.gmra.mxu0 %v1787
    %v3342 = vpop.f32.mrf.mxu0
    %v3343 = vadd.f32 %v3134, %v3342
    %3344 = vmatmul.f32.gmra.mxu0 %v1796
    %v3345 = vpop.f32.mrf.mxu0
    %v3346 = vadd.f32 %v3137, %v3345
    %3347 = vmatmul.f32.gmra.mxu0 %v1805
    %v3348 = vpop.f32.mrf.mxu0
    %v3349 = vadd.f32 %v3140, %v3348
    %3350 = vmatmul.f32.gmra.mxu0 %v1814
    %v3351 = vpop.f32.mrf.mxu0
    %v3352 = vadd.f32 %v3143, %v3351
    %3353 = vmatmul.f32.gmra.mxu0 %v1823
    %v3354 = vpop.f32.mrf.mxu0
    %v3355 = vadd.f32 %v3146, %v3354
    %3356 = vmatmul.f32.gmra.mxu0 %v1832
    %v3357 = vpop.f32.mrf.mxu0
    %v3358 = vadd.f32 %v3149, %v3357
    %3359 = vmatmul.f32.gmra.mxu0 %v1841
    %v3360 = vpop.f32.mrf.mxu0
    %v3361 = vadd.f32 %v3152, %v3360
    %3362 = vmatmul.f32.gmra.mxu0 %v1850
    %v3363 = vpop.f32.mrf.mxu0
    %v3364 = vadd.f32 %v3155, %v3363
    %3365 = vmatmul.f32.gmra.mxu0 %v1859
    %v3366 = vpop.f32.mrf.mxu0
    %v3367 = vadd.f32 %v3158, %v3366
    %3368 = vmatmul.f32.gmra.mxu0 %v1868
    %v3369 = vpop.f32.mrf.mxu0
    %v3370 = vadd.f32 %v3161, %v3369
    %3371 = vmatmul.f32.gmra.mxu0 %v1877
    %v3372 = vpop.f32.mrf.mxu0
    %v3373 = vadd.f32 %v3164, %v3372
    %3374 = vmatmul.f32.gmra.mxu0 %v1886
    %v3375 = vpop.f32.mrf.mxu0
    %v3376 = vadd.f32 %v3167, %v3375
    %3377 = vmatmul.f32.gmra.mxu0 %v1895
    %v3378 = vpop.f32.mrf.mxu0
    %v3379 = vadd.f32 %v3170, %v3378
    %3380 = vmatmul.f32.gmra.mxu0 %v1904
    %v3381 = vpop.f32.mrf.mxu0
    %v3382 = vadd.f32 %v3173, %v3381
    %3383 = vmatmul.f32.gmra.mxu0 %v1913
    %v3384 = vpop.f32.mrf.mxu0
    %v3385 = vadd.f32 %v3176, %v3384
    %3386 = vmatmul.f32.gmra.mxu0 %v1922
    %v3387 = vpop.f32.mrf.mxu0
    %v3388 = vadd.f32 %v3179, %v3387
    %3389 = vmatmul.f32.gmra.mxu0 %v1931
    %v3390 = vpop.f32.mrf.mxu0
    %v3391 = vadd.f32 %v3182, %v3390
    %3392 = vmatmul.f32.gmra.mxu0 %v1940
    %v3393 = vpop.f32.mrf.mxu0
    %v3394 = vadd.f32 %v3185, %v3393
    %3395 = vmatmul.f32.gmra.mxu0 %v1949
    %v3396 = vpop.f32.mrf.mxu0
    %v3397 = vadd.f32 %v3188, %v3396
    %3398 = vmatmul.f32.gmra.mxu0 %v1958
    %v3399 = vpop.f32.mrf.mxu0
    %v3400 = vadd.f32 %v3191, %v3399
    %3401 = vmatmul.f32.gmra.mxu0 %v1967
    %v3402 = vpop.f32.mrf.mxu0
    %v3403 = vadd.f32 %v3194, %v3402
    %3404 = vmatmul.f32.gmra.mxu0 %v1976
    %v3405 = vpop.f32.mrf.mxu0
    %v3406 = vadd.f32 %v3197, %v3405
    %3407 = vmatmul.f32.gmra.mxu0 %v1985
    %v3408 = vpop.f32.mrf.mxu0
    %v3409 = vadd.f32 %v3200, %v3408
    %3410 = vmatmul.f32.gmra.mxu0 %v1994
    %v3411 = vpop.f32.mrf.mxu0
    %v3412 = vadd.f32 %v3203, %v3411
    %3413 = vmatmul.f32.gmra.mxu0 %v2003
    %v3414 = vpop.f32.mrf.mxu0
    %v3415 = vadd.f32 %v3206, %v3414
    %3416 = vmatmul.f32.gmra.mxu0 %v2012
    %v3417 = vpop.f32.mrf.mxu0
    %v3418 = vadd.f32 %v3209, %v3417
    %3419 = vmatmul.f32.gmra.mxu0 %v2021
    %v3420 = vpop.f32.mrf.mxu0
    %v3421 = vadd.f32 %v3212, %v3420
    %3422 = vdwg.mxu0
    %3423 = vmatpush.msra.mxu0 %v2136
    %3424 = vmatpush.msra.mxu0 %v2135
    %3425 = vmatpush.msra.mxu0 %v2134
    %3426 = vmatpush.msra.mxu0 %v2133
    %3427 = vmatpush.msra.mxu0 %v2132
    %3428 = vmatpush.msra.mxu0 %v2131
    %3429 = vmatpush.msra.mxu0 %v2130
    %3430 = vmatpush.msra.mxu0 %v2129
    %3431 = vmatpush.msra.mxu0 %v2128
    %3432 = vmatpush.msra.mxu0 %v2127
    %3433 = vmatpush.msra.mxu0 %v2126
    %3434 = vmatpush.msra.mxu0 %v2125
    %3435 = vmatpush.msra.mxu0 %v2124
    %3436 = vmatpush.msra.mxu0 %v2123
    %3437 = vmatpush.msra.mxu0 %v2122
    %3438 = vmatpush.msra.mxu0 %v2121
    %3439 = vmatmul.f32.gmra.mxu0 %v1455
    %v3440 = vpop.f32.mrf.mxu0
    %v3441 = vadd.f32 %v3232, %v3440
    %3442 = vmatmul.f32.gmra.mxu0 %v1464
    %v3443 = vpop.f32.mrf.mxu0
    %v3444 = vadd.f32 %v3235, %v3443
    %3445 = vmatmul.f32.gmra.mxu0 %v1473
    %v3446 = vpop.f32.mrf.mxu0
    %v3447 = vadd.f32 %v3238, %v3446
    %3448 = vmatmul.f32.gmra.mxu0 %v1482
    %v3449 = vpop.f32.mrf.mxu0
    %v3450 = vadd.f32 %v3241, %v3449
    %3451 = vmatmul.f32.gmra.mxu0 %v1491
    %v3452 = vpop.f32.mrf.mxu0
    %v3453 = vadd.f32 %v3244, %v3452
    %3454 = vmatmul.f32.gmra.mxu0 %v1500
    %v3455 = vpop.f32.mrf.mxu0
    %v3456 = vadd.f32 %v3247, %v3455
    %3457 = vmatmul.f32.gmra.mxu0 %v1509
    %v3458 = vpop.f32.mrf.mxu0
    %v3459 = vadd.f32 %v3250, %v3458
    %3460 = vmatmul.f32.gmra.mxu0 %v1518
    %v3461 = vpop.f32.mrf.mxu0
    %v3462 = vadd.f32 %v3253, %v3461
    %3463 = vmatmul.f32.gmra.mxu0 %v1527
    %v3464 = vpop.f32.mrf.mxu0
    %v3465 = vadd.f32 %v3256, %v3464
    %3466 = vmatmul.f32.gmra.mxu0 %v1536
    %v3467 = vpop.f32.mrf.mxu0
    %v3468 = vadd.f32 %v3259, %v3467
    %3469 = vmatmul.f32.gmra.mxu0 %v1545
    %v3470 = vpop.f32.mrf.mxu0
    %v3471 = vadd.f32 %v3262, %v3470
    %3472 = vmatmul.f32.gmra.mxu0 %v1554
    %v3473 = vpop.f32.mrf.mxu0
    %v3474 = vadd.f32 %v3265, %v3473
    %3475 = vmatmul.f32.gmra.mxu0 %v1563
    %v3476 = vpop.f32.mrf.mxu0
    %v3477 = vadd.f32 %v3268, %v3476
    %3478 = vmatmul.f32.gmra.mxu0 %v1572
    %v3479 = vpop.f32.mrf.mxu0
    %v3480 = vadd.f32 %v3271, %v3479
    %3481 = vmatmul.f32.gmra.mxu0 %v1581
    %v3482 = vpop.f32.mrf.mxu0
    %v3483 = vadd.f32 %v3274, %v3482
    %3484 = vmatmul.f32.gmra.mxu0 %v1590
    %v3485 = vpop.f32.mrf.mxu0
    %v3486 = vadd.f32 %v3277, %v3485
    %3487 = vmatmul.f32.gmra.mxu0 %v1599
    %v3488 = vpop.f32.mrf.mxu0
    %v3489 = vadd.f32 %v3280, %v3488
    %3490 = vmatmul.f32.gmra.mxu0 %v1608
    %v3491 = vpop.f32.mrf.mxu0
    %v3492 = vadd.f32 %v3283, %v3491
    %3493 = vmatmul.f32.gmra.mxu0 %v1617
    %v3494 = vpop.f32.mrf.mxu0
    %v3495 = vadd.f32 %v3286, %v3494
    %3496 = vmatmul.f32.gmra.mxu0 %v1626
    %v3497 = vpop.f32.mrf.mxu0
    %v3498 = vadd.f32 %v3289, %v3497
    %3499 = vmatmul.f32.gmra.mxu0 %v1635
    %v3500 = vpop.f32.mrf.mxu0
    %v3501 = vadd.f32 %v3292, %v3500
    %3502 = vmatmul.f32.gmra.mxu0 %v1644
    %v3503 = vpop.f32.mrf.mxu0
    %v3504 = vadd.f32 %v3295, %v3503
    %3505 = vmatmul.f32.gmra.mxu0 %v1653
    %v3506 = vpop.f32.mrf.mxu0
    %v3507 = vadd.f32 %v3298, %v3506
    %3508 = vmatmul.f32.gmra.mxu0 %v1662
    %v3509 = vpop.f32.mrf.mxu0
    %v3510 = vadd.f32 %v3301, %v3509
    %3511 = vmatmul.f32.gmra.mxu0 %v1671
    %v3512 = vpop.f32.mrf.mxu0
    %v3513 = vadd.f32 %v3304, %v3512
    %3514 = vmatmul.f32.gmra.mxu0 %v1680
    %v3515 = vpop.f32.mrf.mxu0
    %v3516 = vadd.f32 %v3307, %v3515
    %3517 = vmatmul.f32.gmra.mxu0 %v1689
    %v3518 = vpop.f32.mrf.mxu0
    %v3519 = vadd.f32 %v3310, %v3518
    %3520 = vmatmul.f32.gmra.mxu0 %v1698
    %v3521 = vpop.f32.mrf.mxu0
    %v3522 = vadd.f32 %v3313, %v3521
    %3523 = vmatmul.f32.gmra.mxu0 %v1707
    %v3524 = vpop.f32.mrf.mxu0
    %v3525 = vadd.f32 %v3316, %v3524
    %3526 = vmatmul.f32.gmra.mxu0 %v1716
    %v3527 = vpop.f32.mrf.mxu0
    %v3528 = vadd.f32 %v3319, %v3527
    %3529 = vmatmul.f32.gmra.mxu0 %v1725
    %v3530 = vpop.f32.mrf.mxu0
    %v3531 = vadd.f32 %v3322, %v3530
    %3532 = vmatmul.f32.gmra.mxu0 %v1734
    %v3533 = vpop.f32.mrf.mxu0
    %v3534 = vadd.f32 %v3325, %v3533
    %3535 = vmatmul.f32.gmra.mxu0 %v1743
    %v3536 = vpop.f32.mrf.mxu0
    %v3537 = vadd.f32 %v3328, %v3536
    %3538 = vmatmul.f32.gmra.mxu0 %v1752
    %v3539 = vpop.f32.mrf.mxu0
    %v3540 = vadd.f32 %v3331, %v3539
    %3541 = vmatmul.f32.gmra.mxu0 %v1761
    %v3542 = vpop.f32.mrf.mxu0
    %v3543 = vadd.f32 %v3334, %v3542
    %3544 = vmatmul.f32.gmra.mxu0 %v1770
    %v3545 = vpop.f32.mrf.mxu0
    %v3546 = vadd.f32 %v3337, %v3545
    %3547 = vmatmul.f32.gmra.mxu0 %v1779
    %v3548 = vpop.f32.mrf.mxu0
    %v3549 = vadd.f32 %v3340, %v3548
    %3550 = vmatmul.f32.gmra.mxu0 %v1788
    %v3551 = vpop.f32.mrf.mxu0
    %v3552 = vadd.f32 %v3343, %v3551
    %3553 = vmatmul.f32.gmra.mxu0 %v1797
    %v3554 = vpop.f32.mrf.mxu0
    %v3555 = vadd.f32 %v3346, %v3554
    %3556 = vmatmul.f32.gmra.mxu0 %v1806
    %v3557 = vpop.f32.mrf.mxu0
    %v3558 = vadd.f32 %v3349, %v3557
    %3559 = vmatmul.f32.gmra.mxu0 %v1815
    %v3560 = vpop.f32.mrf.mxu0
    %v3561 = vadd.f32 %v3352, %v3560
    %3562 = vmatmul.f32.gmra.mxu0 %v1824
    %v3563 = vpop.f32.mrf.mxu0
    %v3564 = vadd.f32 %v3355, %v3563
    %3565 = vmatmul.f32.gmra.mxu0 %v1833
    %v3566 = vpop.f32.mrf.mxu0
    %v3567 = vadd.f32 %v3358, %v3566
    %3568 = vmatmul.f32.gmra.mxu0 %v1842
    %v3569 = vpop.f32.mrf.mxu0
    %v3570 = vadd.f32 %v3361, %v3569
    %3571 = vmatmul.f32.gmra.mxu0 %v1851
    %v3572 = vpop.f32.mrf.mxu0
    %v3573 = vadd.f32 %v3364, %v3572
    %3574 = vmatmul.f32.gmra.mxu0 %v1860
    %v3575 = vpop.f32.mrf.mxu0
    %v3576 = vadd.f32 %v3367, %v3575
    %3577 = vmatmul.f32.gmra.mxu0 %v1869
    %v3578 = vpop.f32.mrf.mxu0
    %v3579 = vadd.f32 %v3370, %v3578
    %3580 = vmatmul.f32.gmra.mxu0 %v1878
    %v3581 = vpop.f32.mrf.mxu0
    %v3582 = vadd.f32 %v3373, %v3581
    %3583 = vmatmul.f32.gmra.mxu0 %v1887
    %v3584 = vpop.f32.mrf.mxu0
    %v3585 = vadd.f32 %v3376, %v3584
    %3586 = vmatmul.f32.gmra.mxu0 %v1896
    %v3587 = vpop.f32.mrf.mxu0
    %v3588 = vadd.f32 %v3379, %v3587
    %3589 = vmatmul.f32.gmra.mxu0 %v1905
    %v3590 = vpop.f32.mrf.mxu0
    %v3591 = vadd.f32 %v3382, %v3590
    %3592 = vmatmul.f32.gmra.mxu0 %v1914
    %v3593 = vpop.f32.mrf.mxu0
    %v3594 = vadd.f32 %v3385, %v3593
    %3595 = vmatmul.f32.gmra.mxu0 %v1923
    %v3596 = vpop.f32.mrf.mxu0
    %v3597 = vadd.f32 %v3388, %v3596
    %3598 = vmatmul.f32.gmra.mxu0 %v1932
    %v3599 = vpop.f32.mrf.mxu0
    %v3600 = vadd.f32 %v3391, %v3599
    %3601 = vmatmul.f32.gmra.mxu0 %v1941
    %v3602 = vpop.f32.mrf.mxu0
    %v3603 = vadd.f32 %v3394, %v3602
    %3604 = vmatmul.f32.gmra.mxu0 %v1950
    %v3605 = vpop.f32.mrf.mxu0
    %v3606 = vadd.f32 %v3397, %v3605
    %3607 = vmatmul.f32.gmra.mxu0 %v1959
    %v3608 = vpop.f32.mrf.mxu0
    %v3609 = vadd.f32 %v3400, %v3608
    %3610 = vmatmul.f32.gmra.mxu0 %v1968
    %v3611 = vpop.f32.mrf.mxu0
    %v3612 = vadd.f32 %v3403, %v3611
    %3613 = vmatmul.f32.gmra.mxu0 %v1977
    %v3614 = vpop.f32.mrf.mxu0
    %v3615 = vadd.f32 %v3406, %v3614
    %3616 = vmatmul.f32.gmra.mxu0 %v1986
    %v3617 = vpop.f32.mrf.mxu0
    %v3618 = vadd.f32 %v3409, %v3617
    %3619 = vmatmul.f32.gmra.mxu0 %v1995
    %v3620 = vpop.f32.mrf.mxu0
    %v3621 = vadd.f32 %v3412, %v3620
    %3622 = vmatmul.f32.gmra.mxu0 %v2004
    %v3623 = vpop.f32.mrf.mxu0
    %v3624 = vadd.f32 %v3415, %v3623
    %3625 = vmatmul.f32.gmra.mxu0 %v2013
    %v3626 = vpop.f32.mrf.mxu0
    %v3627 = vadd.f32 %v3418, %v3626
    %3628 = vmatmul.f32.gmra.mxu0 %v2022
    %v3629 = vpop.f32.mrf.mxu0
    %v3630 = vadd.f32 %v3421, %v3629
    %3631 = vdwg.mxu0
    %3632 = vmatpush.msra.mxu0 %v2152
    %3633 = vmatpush.msra.mxu0 %v2151
    %3634 = vmatpush.msra.mxu0 %v2150
    %3635 = vmatpush.msra.mxu0 %v2149
    %3636 = vmatpush.msra.mxu0 %v2148
    %3637 = vmatpush.msra.mxu0 %v2147
    %3638 = vmatpush.msra.mxu0 %v2146
    %3639 = vmatpush.msra.mxu0 %v2145
    %3640 = vmatpush.msra.mxu0 %v2144
    %3641 = vmatpush.msra.mxu0 %v2143
    %3642 = vmatpush.msra.mxu0 %v2142
    %3643 = vmatpush.msra.mxu0 %v2141
    %3644 = vmatpush.msra.mxu0 %v2140
    %3645 = vmatpush.msra.mxu0 %v2139
    %3646 = vmatpush.msra.mxu0 %v2138
    %3647 = vmatpush.msra.mxu0 %v2137
    %3648 = vmatmul.f32.gmra.mxu0 %v1456
    %v3649 = vpop.f32.mrf.mxu0
    %v3650 = vadd.f32 %v3441, %v3649
    %3651 = vmatmul.f32.gmra.mxu0 %v1465
    %v3652 = vpop.f32.mrf.mxu0
    %v3653 = vadd.f32 %v3444, %v3652
    %3654 = vmatmul.f32.gmra.mxu0 %v1474
    %v3655 = vpop.f32.mrf.mxu0
    %v3656 = vadd.f32 %v3447, %v3655
    %3657 = vmatmul.f32.gmra.mxu0 %v1483
    %v3658 = vpop.f32.mrf.mxu0
    %v3659 = vadd.f32 %v3450, %v3658
    %3660 = vmatmul.f32.gmra.mxu0 %v1492
    %v3661 = vpop.f32.mrf.mxu0
    %v3662 = vadd.f32 %v3453, %v3661
    %3663 = vmatmul.f32.gmra.mxu0 %v1501
    %v3664 = vpop.f32.mrf.mxu0
    %v3665 = vadd.f32 %v3456, %v3664
    %3666 = vmatmul.f32.gmra.mxu0 %v1510
    %v3667 = vpop.f32.mrf.mxu0
    %v3668 = vadd.f32 %v3459, %v3667
    %3669 = vmatmul.f32.gmra.mxu0 %v1519
    %v3670 = vpop.f32.mrf.mxu0
    %v3671 = vadd.f32 %v3462, %v3670
    %3672 = vmatmul.f32.gmra.mxu0 %v1528
    %v3673 = vpop.f32.mrf.mxu0
    %v3674 = vadd.f32 %v3465, %v3673
    %3675 = vmatmul.f32.gmra.mxu0 %v1537
    %v3676 = vpop.f32.mrf.mxu0
    %v3677 = vadd.f32 %v3468, %v3676
    %3678 = vmatmul.f32.gmra.mxu0 %v1546
    %v3679 = vpop.f32.mrf.mxu0
    %v3680 = vadd.f32 %v3471, %v3679
    %3681 = vmatmul.f32.gmra.mxu0 %v1555
    %v3682 = vpop.f32.mrf.mxu0
    %v3683 = vadd.f32 %v3474, %v3682
    %3684 = vmatmul.f32.gmra.mxu0 %v1564
    %v3685 = vpop.f32.mrf.mxu0
    %v3686 = vadd.f32 %v3477, %v3685
    %3687 = vmatmul.f32.gmra.mxu0 %v1573
    %v3688 = vpop.f32.mrf.mxu0
    %v3689 = vadd.f32 %v3480, %v3688
    %3690 = vmatmul.f32.gmra.mxu0 %v1582
    %v3691 = vpop.f32.mrf.mxu0
    %v3692 = vadd.f32 %v3483, %v3691
    %3693 = vmatmul.f32.gmra.mxu0 %v1591
    %v3694 = vpop.f32.mrf.mxu0
    %v3695 = vadd.f32 %v3486, %v3694
    %3696 = vmatmul.f32.gmra.mxu0 %v1600
    %v3697 = vpop.f32.mrf.mxu0
    %v3698 = vadd.f32 %v3489, %v3697
    %3699 = vmatmul.f32.gmra.mxu0 %v1609
    %v3700 = vpop.f32.mrf.mxu0
    %v3701 = vadd.f32 %v3492, %v3700
    %3702 = vmatmul.f32.gmra.mxu0 %v1618
    %v3703 = vpop.f32.mrf.mxu0
    %v3704 = vadd.f32 %v3495, %v3703
    %3705 = vmatmul.f32.gmra.mxu0 %v1627
    %v3706 = vpop.f32.mrf.mxu0
    %v3707 = vadd.f32 %v3498, %v3706
    %3708 = vmatmul.f32.gmra.mxu0 %v1636
    %v3709 = vpop.f32.mrf.mxu0
    %v3710 = vadd.f32 %v3501, %v3709
    %3711 = vmatmul.f32.gmra.mxu0 %v1645
    %v3712 = vpop.f32.mrf.mxu0
    %v3713 = vadd.f32 %v3504, %v3712
    %3714 = vmatmul.f32.gmra.mxu0 %v1654
    %v3715 = vpop.f32.mrf.mxu0
    %v3716 = vadd.f32 %v3507, %v3715
    %3717 = vmatmul.f32.gmra.mxu0 %v1663
    %v3718 = vpop.f32.mrf.mxu0
    %v3719 = vadd.f32 %v3510, %v3718
    %3720 = vmatmul.f32.gmra.mxu0 %v1672
    %v3721 = vpop.f32.mrf.mxu0
    %v3722 = vadd.f32 %v3513, %v3721
    %3723 = vmatmul.f32.gmra.mxu0 %v1681
    %v3724 = vpop.f32.mrf.mxu0
    %v3725 = vadd.f32 %v3516, %v3724
    %3726 = vmatmul.f32.gmra.mxu0 %v1690
    %v3727 = vpop.f32.mrf.mxu0
    %v3728 = vadd.f32 %v3519, %v3727
    %3729 = vmatmul.f32.gmra.mxu0 %v1699
    %v3730 = vpop.f32.mrf.mxu0
    %v3731 = vadd.f32 %v3522, %v3730
    %3732 = vmatmul.f32.gmra.mxu0 %v1708
    %v3733 = vpop.f32.mrf.mxu0
    %v3734 = vadd.f32 %v3525, %v3733
    %3735 = vmatmul.f32.gmra.mxu0 %v1717
    %v3736 = vpop.f32.mrf.mxu0
    %v3737 = vadd.f32 %v3528, %v3736
    %3738 = vmatmul.f32.gmra.mxu0 %v1726
    %v3739 = vpop.f32.mrf.mxu0
    %v3740 = vadd.f32 %v3531, %v3739
    %3741 = vmatmul.f32.gmra.mxu0 %v1735
    %v3742 = vpop.f32.mrf.mxu0
    %v3743 = vadd.f32 %v3534, %v3742
    %3744 = vmatmul.f32.gmra.mxu0 %v1744
    %v3745 = vpop.f32.mrf.mxu0
    %v3746 = vadd.f32 %v3537, %v3745
    %3747 = vmatmul.f32.gmra.mxu0 %v1753
    %v3748 = vpop.f32.mrf.mxu0
    %v3749 = vadd.f32 %v3540, %v3748
    %3750 = vmatmul.f32.gmra.mxu0 %v1762
    %v3751 = vpop.f32.mrf.mxu0
    %v3752 = vadd.f32 %v3543, %v3751
    %3753 = vmatmul.f32.gmra.mxu0 %v1771
    %v3754 = vpop.f32.mrf.mxu0
    %v3755 = vadd.f32 %v3546, %v3754
    %3756 = vmatmul.f32.gmra.mxu0 %v1780
    %v3757 = vpop.f32.mrf.mxu0
    %v3758 = vadd.f32 %v3549, %v3757
    %3759 = vmatmul.f32.gmra.mxu0 %v1789
    %v3760 = vpop.f32.mrf.mxu0
    %v3761 = vadd.f32 %v3552, %v3760
    %3762 = vmatmul.f32.gmra.mxu0 %v1798
    %v3763 = vpop.f32.mrf.mxu0
    %v3764 = vadd.f32 %v3555, %v3763
    %3765 = vmatmul.f32.gmra.mxu0 %v1807
    %v3766 = vpop.f32.mrf.mxu0
    %v3767 = vadd.f32 %v3558, %v3766
    %3768 = vmatmul.f32.gmra.mxu0 %v1816
    %v3769 = vpop.f32.mrf.mxu0
    %v3770 = vadd.f32 %v3561, %v3769
    %3771 = vmatmul.f32.gmra.mxu0 %v1825
    %v3772 = vpop.f32.mrf.mxu0
    %v3773 = vadd.f32 %v3564, %v3772
    %3774 = vmatmul.f32.gmra.mxu0 %v1834
    %v3775 = vpop.f32.mrf.mxu0
    %v3776 = vadd.f32 %v3567, %v3775
    %3777 = vmatmul.f32.gmra.mxu0 %v1843
    %v3778 = vpop.f32.mrf.mxu0
    %v3779 = vadd.f32 %v3570, %v3778
    %3780 = vmatmul.f32.gmra.mxu0 %v1852
    %v3781 = vpop.f32.mrf.mxu0
    %v3782 = vadd.f32 %v3573, %v3781
    %3783 = vmatmul.f32.gmra.mxu0 %v1861
    %v3784 = vpop.f32.mrf.mxu0
    %v3785 = vadd.f32 %v3576, %v3784
    %3786 = vmatmul.f32.gmra.mxu0 %v1870
    %v3787 = vpop.f32.mrf.mxu0
    %v3788 = vadd.f32 %v3579, %v3787
    %3789 = vmatmul.f32.gmra.mxu0 %v1879
    %v3790 = vpop.f32.mrf.mxu0
    %v3791 = vadd.f32 %v3582, %v3790
    %3792 = vmatmul.f32.gmra.mxu0 %v1888
    %v3793 = vpop.f32.mrf.mxu0
    %v3794 = vadd.f32 %v3585, %v3793
    %3795 = vmatmul.f32.gmra.mxu0 %v1897
    %v3796 = vpop.f32.mrf.mxu0
    %v3797 = vadd.f32 %v3588, %v3796
    %3798 = vmatmul.f32.gmra.mxu0 %v1906
    %v3799 = vpop.f32.mrf.mxu0
    %v3800 = vadd.f32 %v3591, %v3799
    %3801 = vmatmul.f32.gmra.mxu0 %v1915
    %v3802 = vpop.f32.mrf.mxu0
    %v3803 = vadd.f32 %v3594, %v3802
    %3804 = vmatmul.f32.gmra.mxu0 %v1924
    %v3805 = vpop.f32.mrf.mxu0
    %v3806 = vadd.f32 %v3597, %v3805
    %3807 = vmatmul.f32.gmra.mxu0 %v1933
    %v3808 = vpop.f32.mrf.mxu0
    %v3809 = vadd.f32 %v3600, %v3808
    %3810 = vmatmul.f32.gmra.mxu0 %v1942
    %v3811 = vpop.f32.mrf.mxu0
    %v3812 = vadd.f32 %v3603, %v3811
    %3813 = vmatmul.f32.gmra.mxu0 %v1951
    %v3814 = vpop.f32.mrf.mxu0
    %v3815 = vadd.f32 %v3606, %v3814
    %3816 = vmatmul.f32.gmra.mxu0 %v1960
    %v3817 = vpop.f32.mrf.mxu0
    %v3818 = vadd.f32 %v3609, %v3817
    %3819 = vmatmul.f32.gmra.mxu0 %v1969
    %v3820 = vpop.f32.mrf.mxu0
    %v3821 = vadd.f32 %v3612, %v3820
    %3822 = vmatmul.f32.gmra.mxu0 %v1978
    %v3823 = vpop.f32.mrf.mxu0
    %v3824 = vadd.f32 %v3615, %v3823
    %3825 = vmatmul.f32.gmra.mxu0 %v1987
    %v3826 = vpop.f32.mrf.mxu0
    %v3827 = vadd.f32 %v3618, %v3826
    %3828 = vmatmul.f32.gmra.mxu0 %v1996
    %v3829 = vpop.f32.mrf.mxu0
    %v3830 = vadd.f32 %v3621, %v3829
    %3831 = vmatmul.f32.gmra.mxu0 %v2005
    %v3832 = vpop.f32.mrf.mxu0
    %v3833 = vadd.f32 %v3624, %v3832
    %3834 = vmatmul.f32.gmra.mxu0 %v2014
    %v3835 = vpop.f32.mrf.mxu0
    %v3836 = vadd.f32 %v3627, %v3835
    %3837 = vmatmul.f32.gmra.mxu0 %v2023
    %v3838 = vpop.f32.mrf.mxu0
    %v3839 = vadd.f32 %v3630, %v3838
    %3840 = vdwg.mxu0
    %3841 = vmatpush.msra.mxu0 %v2168
    %3842 = vmatpush.msra.mxu0 %v2167
    %3843 = vmatpush.msra.mxu0 %v2166
    %3844 = vmatpush.msra.mxu0 %v2165
    %3845 = vmatpush.msra.mxu0 %v2164
    %3846 = vmatpush.msra.mxu0 %v2163
    %3847 = vmatpush.msra.mxu0 %v2162
    %3848 = vmatpush.msra.mxu0 %v2161
    %3849 = vmatpush.msra.mxu0 %v2160
    %3850 = vmatpush.msra.mxu0 %v2159
    %3851 = vmatpush.msra.mxu0 %v2158
    %3852 = vmatpush.msra.mxu0 %v2157
    %3853 = vmatpush.msra.mxu0 %v2156
    %3854 = vmatpush.msra.mxu0 %v2155
    %3855 = vmatpush.msra.mxu0 %v2154
    %3856 = vmatpush.msra.mxu0 %v2153
    %3857 = vmatmul.f32.gmra.mxu0 %v1457
    %v3858 = vpop.f32.mrf.mxu0
    %v3859 = vadd.f32 %v3650, %v3858
    %3860 = vmatmul.f32.gmra.mxu0 %v1466
    %v3861 = vpop.f32.mrf.mxu0
    %v3862 = vadd.f32 %v3653, %v3861
    %3863 = vmatmul.f32.gmra.mxu0 %v1475
    %v3864 = vpop.f32.mrf.mxu0
    %v3865 = vadd.f32 %v3656, %v3864
    %3866 = vmatmul.f32.gmra.mxu0 %v1484
    %v3867 = vpop.f32.mrf.mxu0
    %v3868 = vadd.f32 %v3659, %v3867
    %3869 = vmatmul.f32.gmra.mxu0 %v1493
    %v3870 = vpop.f32.mrf.mxu0
    %v3871 = vadd.f32 %v3662, %v3870
    %3872 = vmatmul.f32.gmra.mxu0 %v1502
    %v3873 = vpop.f32.mrf.mxu0
    %v3874 = vadd.f32 %v3665, %v3873
    %3875 = vmatmul.f32.gmra.mxu0 %v1511
    %v3876 = vpop.f32.mrf.mxu0
    %v3877 = vadd.f32 %v3668, %v3876
    %3878 = vmatmul.f32.gmra.mxu0 %v1520
    %v3879 = vpop.f32.mrf.mxu0
    %v3880 = vadd.f32 %v3671, %v3879
    %3881 = vmatmul.f32.gmra.mxu0 %v1529
    %v3882 = vpop.f32.mrf.mxu0
    %v3883 = vadd.f32 %v3674, %v3882
    %3884 = vmatmul.f32.gmra.mxu0 %v1538
    %v3885 = vpop.f32.mrf.mxu0
    %v3886 = vadd.f32 %v3677, %v3885
    %3887 = vmatmul.f32.gmra.mxu0 %v1547
    %v3888 = vpop.f32.mrf.mxu0
    %v3889 = vadd.f32 %v3680, %v3888
    %3890 = vmatmul.f32.gmra.mxu0 %v1556
    %v3891 = vpop.f32.mrf.mxu0
    %v3892 = vadd.f32 %v3683, %v3891
    %3893 = vmatmul.f32.gmra.mxu0 %v1565
    %v3894 = vpop.f32.mrf.mxu0
    %v3895 = vadd.f32 %v3686, %v3894
    %3896 = vmatmul.f32.gmra.mxu0 %v1574
    %v3897 = vpop.f32.mrf.mxu0
    %v3898 = vadd.f32 %v3689, %v3897
    %3899 = vmatmul.f32.gmra.mxu0 %v1583
    %v3900 = vpop.f32.mrf.mxu0
    %v3901 = vadd.f32 %v3692, %v3900
    %3902 = vmatmul.f32.gmra.mxu0 %v1592
    %v3903 = vpop.f32.mrf.mxu0
    %v3904 = vadd.f32 %v3695, %v3903
    %3905 = vmatmul.f32.gmra.mxu0 %v1601
    %v3906 = vpop.f32.mrf.mxu0
    %v3907 = vadd.f32 %v3698, %v3906
    %3908 = vmatmul.f32.gmra.mxu0 %v1610
    %v3909 = vpop.f32.mrf.mxu0
    %v3910 = vadd.f32 %v3701, %v3909
    %3911 = vmatmul.f32.gmra.mxu0 %v1619
    %v3912 = vpop.f32.mrf.mxu0
    %v3913 = vadd.f32 %v3704, %v3912
    %3914 = vmatmul.f32.gmra.mxu0 %v1628
    %v3915 = vpop.f32.mrf.mxu0
    %v3916 = vadd.f32 %v3707, %v3915
    %3917 = vmatmul.f32.gmra.mxu0 %v1637
    %v3918 = vpop.f32.mrf.mxu0
    %v3919 = vadd.f32 %v3710, %v3918
    %3920 = vmatmul.f32.gmra.mxu0 %v1646
    %v3921 = vpop.f32.mrf.mxu0
    %v3922 = vadd.f32 %v3713, %v3921
    %3923 = vmatmul.f32.gmra.mxu0 %v1655
    %v3924 = vpop.f32.mrf.mxu0
    %v3925 = vadd.f32 %v3716, %v3924
    %3926 = vmatmul.f32.gmra.mxu0 %v1664
    %v3927 = vpop.f32.mrf.mxu0
    %v3928 = vadd.f32 %v3719, %v3927
    %3929 = vmatmul.f32.gmra.mxu0 %v1673
    %v3930 = vpop.f32.mrf.mxu0
    %v3931 = vadd.f32 %v3722, %v3930
    %3932 = vmatmul.f32.gmra.mxu0 %v1682
    %v3933 = vpop.f32.mrf.mxu0
    %v3934 = vadd.f32 %v3725, %v3933
    %3935 = vmatmul.f32.gmra.mxu0 %v1691
    %v3936 = vpop.f32.mrf.mxu0
    %v3937 = vadd.f32 %v3728, %v3936
    %3938 = vmatmul.f32.gmra.mxu0 %v1700
    %v3939 = vpop.f32.mrf.mxu0
    %v3940 = vadd.f32 %v3731, %v3939
    %3941 = vmatmul.f32.gmra.mxu0 %v1709
    %v3942 = vpop.f32.mrf.mxu0
    %v3943 = vadd.f32 %v3734, %v3942
    %3944 = vmatmul.f32.gmra.mxu0 %v1718
    %v3945 = vpop.f32.mrf.mxu0
    %v3946 = vadd.f32 %v3737, %v3945
    %3947 = vmatmul.f32.gmra.mxu0 %v1727
    %v3948 = vpop.f32.mrf.mxu0
    %v3949 = vadd.f32 %v3740, %v3948
    %3950 = vmatmul.f32.gmra.mxu0 %v1736
    %v3951 = vpop.f32.mrf.mxu0
    %v3952 = vadd.f32 %v3743, %v3951
    %3953 = vmatmul.f32.gmra.mxu0 %v1745
    %v3954 = vpop.f32.mrf.mxu0
    %v3955 = vadd.f32 %v3746, %v3954
    %3956 = vmatmul.f32.gmra.mxu0 %v1754
    %v3957 = vpop.f32.mrf.mxu0
    %v3958 = vadd.f32 %v3749, %v3957
    %3959 = vmatmul.f32.gmra.mxu0 %v1763
    %v3960 = vpop.f32.mrf.mxu0
    %v3961 = vadd.f32 %v3752, %v3960
    %3962 = vmatmul.f32.gmra.mxu0 %v1772
    %v3963 = vpop.f32.mrf.mxu0
    %v3964 = vadd.f32 %v3755, %v3963
    %3965 = vmatmul.f32.gmra.mxu0 %v1781
    %v3966 = vpop.f32.mrf.mxu0
    %v3967 = vadd.f32 %v3758, %v3966
    %3968 = vmatmul.f32.gmra.mxu0 %v1790
    %v3969 = vpop.f32.mrf.mxu0
    %v3970 = vadd.f32 %v3761, %v3969
    %3971 = vmatmul.f32.gmra.mxu0 %v1799
    %v3972 = vpop.f32.mrf.mxu0
    %v3973 = vadd.f32 %v3764, %v3972
    %3974 = vmatmul.f32.gmra.mxu0 %v1808
    %v3975 = vpop.f32.mrf.mxu0
    %v3976 = vadd.f32 %v3767, %v3975
    %3977 = vmatmul.f32.gmra.mxu0 %v1817
    %v3978 = vpop.f32.mrf.mxu0
    %v3979 = vadd.f32 %v3770, %v3978
    %3980 = vmatmul.f32.gmra.mxu0 %v1826
    %v3981 = vpop.f32.mrf.mxu0
    %v3982 = vadd.f32 %v3773, %v3981
    %3983 = vmatmul.f32.gmra.mxu0 %v1835
    %v3984 = vpop.f32.mrf.mxu0
    %v3985 = vadd.f32 %v3776, %v3984
    %3986 = vmatmul.f32.gmra.mxu0 %v1844
    %v3987 = vpop.f32.mrf.mxu0
    %v3988 = vadd.f32 %v3779, %v3987
    %3989 = vmatmul.f32.gmra.mxu0 %v1853
    %v3990 = vpop.f32.mrf.mxu0
    %v3991 = vadd.f32 %v3782, %v3990
    %3992 = vmatmul.f32.gmra.mxu0 %v1862
    %v3993 = vpop.f32.mrf.mxu0
    %v3994 = vadd.f32 %v3785, %v3993
    %3995 = vmatmul.f32.gmra.mxu0 %v1871
    %v3996 = vpop.f32.mrf.mxu0
    %v3997 = vadd.f32 %v3788, %v3996
    %3998 = vmatmul.f32.gmra.mxu0 %v1880
    %v3999 = vpop.f32.mrf.mxu0
    %v4000 = vadd.f32 %v3791, %v3999
    %4001 = vmatmul.f32.gmra.mxu0 %v1889
    %v4002 = vpop.f32.mrf.mxu0
    %v4003 = vadd.f32 %v3794, %v4002
    %4004 = vmatmul.f32.gmra.mxu0 %v1898
    %v4005 = vpop.f32.mrf.mxu0
    %v4006 = vadd.f32 %v3797, %v4005
    %4007 = vmatmul.f32.gmra.mxu0 %v1907
    %v4008 = vpop.f32.mrf.mxu0
    %v4009 = vadd.f32 %v3800, %v4008
    %4010 = vmatmul.f32.gmra.mxu0 %v1916
    %v4011 = vpop.f32.mrf.mxu0
    %v4012 = vadd.f32 %v3803, %v4011
    %4013 = vmatmul.f32.gmra.mxu0 %v1925
    %v4014 = vpop.f32.mrf.mxu0
    %v4015 = vadd.f32 %v3806, %v4014
    %4016 = vmatmul.f32.gmra.mxu0 %v1934
    %v4017 = vpop.f32.mrf.mxu0
    %v4018 = vadd.f32 %v3809, %v4017
    %4019 = vmatmul.f32.gmra.mxu0 %v1943
    %v4020 = vpop.f32.mrf.mxu0
    %v4021 = vadd.f32 %v3812, %v4020
    %4022 = vmatmul.f32.gmra.mxu0 %v1952
    %v4023 = vpop.f32.mrf.mxu0
    %v4024 = vadd.f32 %v3815, %v4023
    %4025 = vmatmul.f32.gmra.mxu0 %v1961
    %v4026 = vpop.f32.mrf.mxu0
    %v4027 = vadd.f32 %v3818, %v4026
    %4028 = vmatmul.f32.gmra.mxu0 %v1970
    %v4029 = vpop.f32.mrf.mxu0
    %v4030 = vadd.f32 %v3821, %v4029
    %4031 = vmatmul.f32.gmra.mxu0 %v1979
    %v4032 = vpop.f32.mrf.mxu0
    %v4033 = vadd.f32 %v3824, %v4032
    %4034 = vmatmul.f32.gmra.mxu0 %v1988
    %v4035 = vpop.f32.mrf.mxu0
    %v4036 = vadd.f32 %v3827, %v4035
    %4037 = vmatmul.f32.gmra.mxu0 %v1997
    %v4038 = vpop.f32.mrf.mxu0
    %v4039 = vadd.f32 %v3830, %v4038
    %4040 = vmatmul.f32.gmra.mxu0 %v2006
    %v4041 = vpop.f32.mrf.mxu0
    %v4042 = vadd.f32 %v3833, %v4041
    %4043 = vmatmul.f32.gmra.mxu0 %v2015
    %v4044 = vpop.f32.mrf.mxu0
    %v4045 = vadd.f32 %v3836, %v4044
    %4046 = vmatmul.f32.gmra.mxu0 %v2024
    %v4047 = vpop.f32.mrf.mxu0
    %v4048 = vadd.f32 %v3839, %v4047
    %4049 = vdwg.mxu0
    %v4050 = vld [vmem:[%s2] sm:$0x1]
    %v4051 = vld [vmem:[%s3] sm:$0x1]
    %v4052 = vadd.f32 %v3859, %v3862
    %v4053 = vadd.f32 %v4052, %v3865
    %v4054 = vadd.f32 %v4053, %v3868
    %v4055 = vadd.f32 %v4054, %v3871
    %v4056 = vadd.f32 %v4055, %v3874
    %v4057 = vadd.f32 %v4056, %v3877
    %v4058 = vadd.f32 %v4057, %v3880
    %v4059 = vadd.f32 %v4058, %v3883
    %v4060 = vadd.f32 %v4059, %v3886
    %v4061 = vadd.f32 %v4060, %v3889
    %v4062 = vadd.f32 %v4061, %v3892
    %v4063 = vadd.f32 %v4062, %v3895
    %v4064 = vadd.f32 %v4063, %v3898
    %v4065 = vadd.f32 %v4064, %v3901
    %v4066 = vadd.f32 %v4065, %v3904
    %v4067 = vadd.f32 %v4066, %v3907
    %v4068 = vadd.f32 %v4067, %v3910
    %v4069 = vadd.f32 %v4068, %v3913
    %v4070 = vadd.f32 %v4069, %v3916
    %v4071 = vadd.f32 %v4070, %v3919
    %v4072 = vadd.f32 %v4071, %v3922
    %v4073 = vadd.f32 %v4072, %v3925
    %v4074 = vadd.f32 %v4073, %v3928
    %v4075 = vadd.f32 %v4074, %v3931
    %v4076 = vadd.f32 %v4075, %v3934
    %v4077 = vadd.f32 %v4076, %v3937
    %v4078 = vadd.f32 %v4077, %v3940
    %v4079 = vadd.f32 %v4078, %v3943
    %v4080 = vadd.f32 %v4079, %v3946
    %v4081 = vadd.f32 %v4080, %v3949
    %v4082 = vadd.f32 %v4081, %v3952
    %v4083 = vadd.f32 %v4082, %v3955
    %v4084 = vadd.f32 %v4083, %v3958
    %v4085 = vadd.f32 %v4084, %v3961
    %v4086 = vadd.f32 %v4085, %v3964
    %v4087 = vadd.f32 %v4086, %v3967
    %v4088 = vadd.f32 %v4087, %v3970
    %v4089 = vadd.f32 %v4088, %v3973
    %v4090 = vadd.f32 %v4089, %v3976
    %v4091 = vadd.f32 %v4090, %v3979
    %v4092 = vadd.f32 %v4091, %v3982
    %v4093 = vadd.f32 %v4092, %v3985
    %v4094 = vadd.f32 %v4093, %v3988
    %v4095 = vadd.f32 %v4094, %v3991
    %v4096 = vadd.f32 %v4095, %v3994
    %v4097 = vadd.f32 %v4096, %v3997
    %v4098 = vadd.f32 %v4097, %v4000
    %v4099 = vadd.f32 %v4098, %v4003
    %v4100 = vadd.f32 %v4099, %v4006
    %v4101 = vadd.f32 %v4100, %v4009
    %v4102 = vadd.f32 %v4101, %v4012
    %v4103 = vadd.f32 %v4102, %v4015
    %v4104 = vadd.f32 %v4103, %v4018
    %v4105 = vadd.f32 %v4104, %v4021
    %v4106 = vadd.f32 %v4105, %v4024
    %v4107 = vadd.f32 %v4106, %v4027
    %v4108 = vadd.f32 %v4107, %v4030
    %v4109 = vadd.f32 %v4108, %v4033
    %v4110 = vadd.f32 %v4109, %v4036
    %v4111 = vadd.f32 %v4110, %v4039
    %v4112 = vadd.f32 %v4111, %v4042
    %v4113 = vadd.f32 %v4112, %v4045
    %v4114 = vadd.f32 %v4113, %v4048
    %v4115 = vrot.slane %v4114, 4
    %v4116 = vadd.f32 %v4114, %v4115
    %v4117 = vrot.slane %v4116, 2
    %v4118 = vadd.f32 %v4116, %v4117
    %v4119 = vrot.slane %v4118, 1
    %v4120 = vadd.f32 %v4118, %v4119
    %v4121 = vmul.f32 %v4120, 0.001953125
    %v4122 = vmul.f32 %v3859, %v3859
    %v4123 = vmul.f32 %v3862, %v3862
    %v4124 = vmul.f32 %v3865, %v3865
    %v4125 = vmul.f32 %v3868, %v3868
    %v4126 = vmul.f32 %v3871, %v3871
    %v4127 = vmul.f32 %v3874, %v3874
    %v4128 = vmul.f32 %v3877, %v3877
    %v4129 = vmul.f32 %v3880, %v3880
    %v4130 = vmul.f32 %v3883, %v3883
    %v4131 = vmul.f32 %v3886, %v3886
    %v4132 = vmul.f32 %v3889, %v3889
    %v4133 = vmul.f32 %v3892, %v3892
    %v4134 = vmul.f32 %v3895, %v3895
    %v4135 = vmul.f32 %v3898, %v3898
    %v4136 = vmul.f32 %v3901, %v3901
    %v4137 = vmul.f32 %v3904, %v3904
    %v4138 = vmul.f32 %v3907, %v3907
    %v4139 = vmul.f32 %v3910, %v3910
    %v4140 = vmul.f32 %v3913, %v3913
    %v4141 = vmul.f32 %v3916, %v3916
    %v4142 = vmul.f32 %v3919, %v3919
    %v4143 = vmul.f32 %v3922, %v3922
    %v4144 = vmul.f32 %v3925, %v3925
    %v4145 = vmul.f32 %v3928, %v3928
    %v4146 = vmul.f32 %v3931, %v3931
    %v4147 = vmul.f32 %v3934, %v3934
    %v4148 = vmul.f32 %v3937, %v3937
    %v4149 = vmul.f32 %v3940, %v3940
    %v4150 = vmul.f32 %v3943, %v3943
    %v4151 = vmul.f32 %v3946, %v3946
    %v4152 = vmul.f32 %v3949, %v3949
    %v4153 = vmul.f32 %v3952, %v3952
    %v4154 = vmul.f32 %v3955, %v3955
    %v4155 = vmul.f32 %v3958, %v3958
    %v4156 = vmul.f32 %v3961, %v3961
    %v4157 = vmul.f32 %v3964, %v3964
    %v4158 = vmul.f32 %v3967, %v3967
    %v4159 = vmul.f32 %v3970, %v3970
    %v4160 = vmul.f32 %v3973, %v3973
    %v4161 = vmul.f32 %v3976, %v3976
    %v4162 = vmul.f32 %v3979, %v3979
    %v4163 = vmul.f32 %v3982, %v3982
    %v4164 = vmul.f32 %v3985, %v3985
    %v4165 = vmul.f32 %v3988, %v3988
    %v4166 = vmul.f32 %v3991, %v3991
    %v4167 = vmul.f32 %v3994, %v3994
    %v4168 = vmul.f32 %v3997, %v3997
    %v4169 = vmul.f32 %v4000, %v4000
    %v4170 = vmul.f32 %v4003, %v4003
    %v4171 = vmul.f32 %v4006, %v4006
    %v4172 = vmul.f32 %v4009, %v4009
    %v4173 = vmul.f32 %v4012, %v4012
    %v4174 = vmul.f32 %v4015, %v4015
    %v4175 = vmul.f32 %v4018, %v4018
    %v4176 = vmul.f32 %v4021, %v4021
    %v4177 = vmul.f32 %v4024, %v4024
    %v4178 = vmul.f32 %v4027, %v4027
    %v4179 = vmul.f32 %v4030, %v4030
    %v4180 = vmul.f32 %v4033, %v4033
    %v4181 = vmul.f32 %v4036, %v4036
    %v4182 = vmul.f32 %v4039, %v4039
    %v4183 = vmul.f32 %v4042, %v4042
    %v4184 = vmul.f32 %v4045, %v4045
    %v4185 = vmul.f32 %v4048, %v4048
    %v4186 = vadd.f32 %v4122, %v4123
    %v4187 = vadd.f32 %v4186, %v4124
    %v4188 = vadd.f32 %v4187, %v4125
    %v4189 = vadd.f32 %v4188, %v4126
    %v4190 = vadd.f32 %v4189, %v4127
    %v4191 = vadd.f32 %v4190, %v4128
    %v4192 = vadd.f32 %v4191, %v4129
    %v4193 = vadd.f32 %v4192, %v4130
    %v4194 = vadd.f32 %v4193, %v4131
    %v4195 = vadd.f32 %v4194, %v4132
    %v4196 = vadd.f32 %v4195, %v4133
    %v4197 = vadd.f32 %v4196, %v4134
    %v4198 = vadd.f32 %v4197, %v4135
    %v4199 = vadd.f32 %v4198, %v4136
    %v4200 = vadd.f32 %v4199, %v4137
    %v4201 = vadd.f32 %v4200, %v4138
    %v4202 = vadd.f32 %v4201, %v4139
    %v4203 = vadd.f32 %v4202, %v4140
    %v4204 = vadd.f32 %v4203, %v4141
    %v4205 = vadd.f32 %v4204, %v4142
    %v4206 = vadd.f32 %v4205, %v4143
    %v4207 = vadd.f32 %v4206, %v4144
    %v4208 = vadd.f32 %v4207, %v4145
    %v4209 = vadd.f32 %v4208, %v4146
    %v4210 = vadd.f32 %v4209, %v4147
    %v4211 = vadd.f32 %v4210, %v4148
    %v4212 = vadd.f32 %v4211, %v4149
    %v4213 = vadd.f32 %v4212, %v4150
    %v4214 = vadd.f32 %v4213, %v4151
    %v4215 = vadd.f32 %v4214, %v4152
    %v4216 = vadd.f32 %v4215, %v4153
    %v4217 = vadd.f32 %v4216, %v4154
    %v4218 = vadd.f32 %v4217, %v4155
    %v4219 = vadd.f32 %v4218, %v4156
    %v4220 = vadd.f32 %v4219, %v4157
    %v4221 = vadd.f32 %v4220, %v4158
    %v4222 = vadd.f32 %v4221, %v4159
    %v4223 = vadd.f32 %v4222, %v4160
    %v4224 = vadd.f32 %v4223, %v4161
    %v4225 = vadd.f32 %v4224, %v4162
    %v4226 = vadd.f32 %v4225, %v4163
    %v4227 = vadd.f32 %v4226, %v4164
    %v4228 = vadd.f32 %v4227, %v4165
    %v4229 = vadd.f32 %v4228, %v4166
    %v4230 = vadd.f32 %v4229, %v4167
    %v4231 = vadd.f32 %v4230, %v4168
    %v4232 = vadd.f32 %v4231, %v4169
    %v4233 = vadd.f32 %v4232, %v4170
    %v4234 = vadd.f32 %v4233, %v4171
    %v4235 = vadd.f32 %v4234, %v4172
    %v4236 = vadd.f32 %v4235, %v4173
    %v4237 = vadd.f32 %v4236, %v4174
    %v4238 = vadd.f32 %v4237, %v4175
    %v4239 = vadd.f32 %v4238, %v4176
    %v4240 = vadd.f32 %v4239, %v4177
    %v4241 = vadd.f32 %v4240, %v4178
    %v4242 = vadd.f32 %v4241, %v4179
    %v4243 = vadd.f32 %v4242, %v4180
    %v4244 = vadd.f32 %v4243, %v4181
    %v4245 = vadd.f32 %v4244, %v4182
    %v4246 = vadd.f32 %v4245, %v4183
    %v4247 = vadd.f32 %v4246, %v4184
    %v4248 = vadd.f32 %v4247, %v4185
    %v4249 = vrot.slane %v4248, 4
    %v4250 = vadd.f32 %v4248, %v4249
    %v4251 = vrot.slane %v4250, 2
    %v4252 = vadd.f32 %v4250, %v4251
    %v4253 = vrot.slane %v4252, 1
    %v4254 = vadd.f32 %v4252, %v4253
    %v4255 = vmul.f32 %v4254, 0.001953125
    %v4256 = vmul.f32 %v4121, %v4121
    %v4257 = vsub.f32 %v4255, %v4256
    %v4258 = vadd.f32 %v4257, 1e-05
    %v4259 = vrsqrt.pop %v4258
    %v4260 = vmul.f32 %v4259, %v4258
    %v4261 = vmul.f32 %v4260, %v4259
    %v4262 = vmul.f32 0.5, %v4261
    %v4263 = vsub.f32 1.5, %v4262
    %v4264 = vmul.f32 %v4259, %v4263
    %vm4265 = vweird.f32 %v4258
    %vm4266 = vweird.f32 %v4259
    %vm4267 = vmor %vm4265, %vm4266
    %v4268 = vsel %vm4267, %v4259, %v4264
    %v4269 = vmul.f32 %v4050, %v4268
    %v4270 = vmul.f32 %v4121, %v4269
    %v4271 = vsub.f32 %v4051, %v4270
    %v4273 = vperm.slane %v4269, 0
    %v4275 = vmul.f32 %v3859, %v4273
    %v4276 = vmul.f32 %v3862, %v4273
    %v4277 = vmul.f32 %v3865, %v4273
    %v4278 = vmul.f32 %v3868, %v4273
    %v4279 = vmul.f32 %v3871, %v4273
    %v4280 = vmul.f32 %v3874, %v4273
    %v4281 = vmul.f32 %v3877, %v4273
    %v4282 = vmul.f32 %v3880, %v4273
    %v4283 = vmul.f32 %v3883, %v4273
    %v4284 = vmul.f32 %v3886, %v4273
    %v4285 = vmul.f32 %v3889, %v4273
    %v4286 = vmul.f32 %v3892, %v4273
    %v4287 = vmul.f32 %v3895, %v4273
    %v4288 = vmul.f32 %v3898, %v4273
    %v4289 = vmul.f32 %v3901, %v4273
    %v4290 = vmul.f32 %v3904, %v4273
    %v4291 = vmul.f32 %v3907, %v4273
    %v4292 = vmul.f32 %v3910, %v4273
    %v4293 = vmul.f32 %v3913, %v4273
    %v4294 = vmul.f32 %v3916, %v4273
    %v4295 = vmul.f32 %v3919, %v4273
    %v4296 = vmul.f32 %v3922, %v4273
    %v4297 = vmul.f32 %v3925, %v4273
    %v4298 = vmul.f32 %v3928, %v4273
    %v4299 = vmul.f32 %v3931, %v4273
    %v4300 = vmul.f32 %v3934, %v4273
    %v4301 = vmul.f32 %v3937, %v4273
    %v4302 = vmul.f32 %v3940, %v4273
    %v4303 = vmul.f32 %v3943, %v4273
    %v4304 = vmul.f32 %v3946, %v4273
    %v4305 = vmul.f32 %v3949, %v4273
    %v4306 = vmul.f32 %v3952, %v4273
    %v4307 = vmul.f32 %v3955, %v4273
    %v4308 = vmul.f32 %v3958, %v4273
    %v4309 = vmul.f32 %v3961, %v4273
    %v4310 = vmul.f32 %v3964, %v4273
    %v4311 = vmul.f32 %v3967, %v4273
    %v4312 = vmul.f32 %v3970, %v4273
    %v4313 = vmul.f32 %v3973, %v4273
    %v4314 = vmul.f32 %v3976, %v4273
    %v4315 = vmul.f32 %v3979, %v4273
    %v4316 = vmul.f32 %v3982, %v4273
    %v4317 = vmul.f32 %v3985, %v4273
    %v4318 = vmul.f32 %v3988, %v4273
    %v4319 = vmul.f32 %v3991, %v4273
    %v4320 = vmul.f32 %v3994, %v4273
    %v4321 = vmul.f32 %v3997, %v4273
    %v4322 = vmul.f32 %v4000, %v4273
    %v4323 = vmul.f32 %v4003, %v4273
    %v4324 = vmul.f32 %v4006, %v4273
    %v4325 = vmul.f32 %v4009, %v4273
    %v4326 = vmul.f32 %v4012, %v4273
    %v4327 = vmul.f32 %v4015, %v4273
    %v4328 = vmul.f32 %v4018, %v4273
    %v4329 = vmul.f32 %v4021, %v4273
    %v4330 = vmul.f32 %v4024, %v4273
    %v4331 = vmul.f32 %v4027, %v4273
    %v4332 = vmul.f32 %v4030, %v4273
    %v4333 = vmul.f32 %v4033, %v4273
    %v4334 = vmul.f32 %v4036, %v4273
    %v4335 = vmul.f32 %v4039, %v4273
    %v4336 = vmul.f32 %v4042, %v4273
    %v4337 = vmul.f32 %v4045, %v4273
    %v4338 = vmul.f32 %v4048, %v4273
    %v4340 = vperm.slane %v4271, 0
    %v4342 = vadd.f32 %v4275, %v4340
    %v4343 = vadd.f32 %v4276, %v4340
    %v4344 = vadd.f32 %v4277, %v4340
    %v4345 = vadd.f32 %v4278, %v4340
    %v4346 = vadd.f32 %v4279, %v4340
    %v4347 = vadd.f32 %v4280, %v4340
    %v4348 = vadd.f32 %v4281, %v4340
    %v4349 = vadd.f32 %v4282, %v4340
    %v4350 = vadd.f32 %v4283, %v4340
    %v4351 = vadd.f32 %v4284, %v4340
    %v4352 = vadd.f32 %v4285, %v4340
    %v4353 = vadd.f32 %v4286, %v4340
    %v4354 = vadd.f32 %v4287, %v4340
    %v4355 = vadd.f32 %v4288, %v4340
    %v4356 = vadd.f32 %v4289, %v4340
    %v4357 = vadd.f32 %v4290, %v4340
    %v4358 = vadd.f32 %v4291, %v4340
    %v4359 = vadd.f32 %v4292, %v4340
    %v4360 = vadd.f32 %v4293, %v4340
    %v4361 = vadd.f32 %v4294, %v4340
    %v4362 = vadd.f32 %v4295, %v4340
    %v4363 = vadd.f32 %v4296, %v4340
    %v4364 = vadd.f32 %v4297, %v4340
    %v4365 = vadd.f32 %v4298, %v4340
    %v4366 = vadd.f32 %v4299, %v4340
    %v4367 = vadd.f32 %v4300, %v4340
    %v4368 = vadd.f32 %v4301, %v4340
    %v4369 = vadd.f32 %v4302, %v4340
    %v4370 = vadd.f32 %v4303, %v4340
    %v4371 = vadd.f32 %v4304, %v4340
    %v4372 = vadd.f32 %v4305, %v4340
    %v4373 = vadd.f32 %v4306, %v4340
    %v4374 = vadd.f32 %v4307, %v4340
    %v4375 = vadd.f32 %v4308, %v4340
    %v4376 = vadd.f32 %v4309, %v4340
    %v4377 = vadd.f32 %v4310, %v4340
    %v4378 = vadd.f32 %v4311, %v4340
    %v4379 = vadd.f32 %v4312, %v4340
    %v4380 = vadd.f32 %v4313, %v4340
    %v4381 = vadd.f32 %v4314, %v4340
    %v4382 = vadd.f32 %v4315, %v4340
    %v4383 = vadd.f32 %v4316, %v4340
    %v4384 = vadd.f32 %v4317, %v4340
    %v4385 = vadd.f32 %v4318, %v4340
    %v4386 = vadd.f32 %v4319, %v4340
    %v4387 = vadd.f32 %v4320, %v4340
    %v4388 = vadd.f32 %v4321, %v4340
    %v4389 = vadd.f32 %v4322, %v4340
    %v4390 = vadd.f32 %v4323, %v4340
    %v4391 = vadd.f32 %v4324, %v4340
    %v4392 = vadd.f32 %v4325, %v4340
    %v4393 = vadd.f32 %v4326, %v4340
    %v4394 = vadd.f32 %v4327, %v4340
    %v4395 = vadd.f32 %v4328, %v4340
    %v4396 = vadd.f32 %v4329, %v4340
    %v4397 = vadd.f32 %v4330, %v4340
    %v4398 = vadd.f32 %v4331, %v4340
    %v4399 = vadd.f32 %v4332, %v4340
    %v4400 = vadd.f32 %v4333, %v4340
    %v4401 = vadd.f32 %v4334, %v4340
    %v4402 = vadd.f32 %v4335, %v4340
    %v4403 = vadd.f32 %v4336, %v4340
    %v4404 = vadd.f32 %v4337, %v4340
    %v4405 = vadd.f32 %v4338, %v4340
    %v4406 = vmax.f32 %v4342, 0.0
    %v4407 = vmax.f32 %v4343, 0.0
    %v4408 = vmax.f32 %v4344, 0.0
    %v4409 = vmax.f32 %v4345, 0.0
    %v4410 = vmax.f32 %v4346, 0.0
    %v4411 = vmax.f32 %v4347, 0.0
    %v4412 = vmax.f32 %v4348, 0.0
    %v4413 = vmax.f32 %v4349, 0.0
    %v4414 = vmax.f32 %v4350, 0.0
    %v4415 = vmax.f32 %v4351, 0.0
    %v4416 = vmax.f32 %v4352, 0.0
    %v4417 = vmax.f32 %v4353, 0.0
    %v4418 = vmax.f32 %v4354, 0.0
    %v4419 = vmax.f32 %v4355, 0.0
    %v4420 = vmax.f32 %v4356, 0.0
    %v4421 = vmax.f32 %v4357, 0.0
    %v4422 = vmax.f32 %v4358, 0.0
    %v4423 = vmax.f32 %v4359, 0.0
    %v4424 = vmax.f32 %v4360, 0.0
    %v4425 = vmax.f32 %v4361, 0.0
    %v4426 = vmax.f32 %v4362, 0.0
    %v4427 = vmax.f32 %v4363, 0.0
    %v4428 = vmax.f32 %v4364, 0.0
    %v4429 = vmax.f32 %v4365, 0.0
    %v4430 = vmax.f32 %v4366, 0.0
    %v4431 = vmax.f32 %v4367, 0.0
    %v4432 = vmax.f32 %v4368, 0.0
    %v4433 = vmax.f32 %v4369, 0.0
    %v4434 = vmax.f32 %v4370, 0.0
    %v4435 = vmax.f32 %v4371, 0.0
    %v4436 = vmax.f32 %v4372, 0.0
    %v4437 = vmax.f32 %v4373, 0.0
    %v4438 = vmax.f32 %v4374, 0.0
    %v4439 = vmax.f32 %v4375, 0.0
    %v4440 = vmax.f32 %v4376, 0.0
    %v4441 = vmax.f32 %v4377, 0.0
    %v4442 = vmax.f32 %v4378, 0.0
    %v4443 = vmax.f32 %v4379, 0.0
    %v4444 = vmax.f32 %v4380, 0.0
    %v4445 = vmax.f32 %v4381, 0.0
    %v4446 = vmax.f32 %v4382, 0.0
    %v4447 = vmax.f32 %v4383, 0.0
    %v4448 = vmax.f32 %v4384, 0.0
    %v4449 = vmax.f32 %v4385, 0.0
    %v4450 = vmax.f32 %v4386, 0.0
    %v4451 = vmax.f32 %v4387, 0.0
    %v4452 = vmax.f32 %v4388, 0.0
    %v4453 = vmax.f32 %v4389, 0.0
    %v4454 = vmax.f32 %v4390, 0.0
    %v4455 = vmax.f32 %v4391, 0.0
    %v4456 = vmax.f32 %v4392, 0.0
    %v4457 = vmax.f32 %v4393, 0.0
    %v4458 = vmax.f32 %v4394, 0.0
    %v4459 = vmax.f32 %v4395, 0.0
    %v4460 = vmax.f32 %v4396, 0.0
    %v4461 = vmax.f32 %v4397, 0.0
    %v4462 = vmax.f32 %v4398, 0.0
    %v4463 = vmax.f32 %v4399, 0.0
    %v4464 = vmax.f32 %v4400, 0.0
    %v4465 = vmax.f32 %v4401, 0.0
    %v4466 = vmax.f32 %v4402, 0.0
    %v4467 = vmax.f32 %v4403, 0.0
    %v4468 = vmax.f32 %v4404, 0.0
    %v4469 = vmax.f32 %v4405, 0.0
    %4470 = vst [vmem:[#allocation3] sm:$0xff] 0.0
    %4471 = vst [vmem:[#allocation3 + $0x8] sm:$0xff] 0.0
    %4472 = vst [vmem:[#allocation3 + $0x10] sm:$0x3] 0.0
    %4473 = vst [vmem:[#allocation3 + $0x1b0] sm:$0xff] 0.0
    %4474 = vst [vmem:[#allocation3 + $0x1b8] sm:$0xff] 0.0
    %4475 = vst [vmem:[#allocation3 + $0x1c0] sm:$0x3] 0.0
    %s4476 = scalar_lea.vmem [#allocation3], 408
    %4477 = vst [vmem:[%s4476] sm:$0xff] 0.0
    %4478 = vst [vmem:[%s4476 + $0x8] sm:$0xff] 0.0
    %4479 = vst [vmem:[%s4476 + $0x10] sm:$0x3] 0.0
    %4480 = vst [vmem:[%s4476 + $0x1b0] sm:$0xff] 0.0
    %4481 = vst [vmem:[%s4476 + $0x1b8] sm:$0xff] 0.0
    %4482 = vst [vmem:[%s4476 + $0x1c0] sm:$0x3] 0.0
    %4483 = vst [vmem:[#allocation3] sm:$0x1] 0.0
    %4484 = vst [vmem:[#allocation3 + $0x18] sm:$0x1] 0.0
    %4485 = vst [vmem:[#allocation3 + $0x30] sm:$0x1] 0.0
    %4486 = vst [vmem:[#allocation3 + $0x48] sm:$0x1] 0.0
    %4487 = vst [vmem:[#allocation3 + $0x60] sm:$0x1] 0.0
    %4488 = vst [vmem:[#allocation3 + $0x78] sm:$0x1] 0.0
    %4489 = vst [vmem:[#allocation3 + $0x90] sm:$0x1] 0.0
    %4490 = vst [vmem:[#allocation3 + $0xa8] sm:$0x1] 0.0
    %4491 = vst [vmem:[#allocation3 + $0xc0] sm:$0x1] 0.0
    %4492 = vst [vmem:[#allocation3 + $0xd8] sm:$0x1] 0.0
    %4493 = vst [vmem:[#allocation3 + $0xf0] sm:$0x1] 0.0
    %4494 = vst [vmem:[#allocation3 + $0x108] sm:$0x1] 0.0
    %4495 = vst [vmem:[#allocation3 + $0x120] sm:$0x1] 0.0
    %4496 = vst [vmem:[#allocation3 + $0x138] sm:$0x1] 0.0
    %4497 = vst [vmem:[#allocation3 + $0x150] sm:$0x1] 0.0
    %4498 = vst [vmem:[#allocation3 + $0x168] sm:$0x1] 0.0
    %4499 = vst [vmem:[#allocation3 + $0x180] sm:$0x1] 0.0
    %4500 = vst [vmem:[#allocation3 + $0x198] sm:$0x1] 0.0
    %4501 = vst [vmem:[#allocation3 + $0x1b0] sm:$0x1] 0.0
    %4502 = vst [vmem:[#allocation3 + $0x1c8] sm:$0x1] 0.0
    %4503 = vst [vmem:[#allocation3 + $0x1e0] sm:$0x1] 0.0
    %4504 = vst [vmem:[#allocation3 + $0x1f8] sm:$0x1] 0.0
    %4505 = vst [vmem:[#allocation3 + $0x210] sm:$0x1] 0.0
    %4506 = vst [vmem:[#allocation3 + $0x228] sm:$0x1] 0.0
    %4507 = vst [vmem:[#allocation3 + $0x240] sm:$0x1] 0.0
    %4508 = vst [vmem:[#allocation3 + $0x258] sm:$0x1] 0.0
    %4509 = vst [vmem:[#allocation3 + $0x270] sm:$0x1] 0.0
    %4510 = vst [vmem:[#allocation3 + $0x288] sm:$0x1] 0.0
    %4511 = vst [vmem:[#allocation3 + $0x2a0] sm:$0x1] 0.0
    %4512 = vst [vmem:[#allocation3 + $0x2b8] sm:$0x1] 0.0
    %4513 = vst [vmem:[#allocation3 + $0x2d0] sm:$0x1] 0.0
    %4514 = vst [vmem:[#allocation3 + $0x2e8] sm:$0x1] 0.0
    %4515 = vst [vmem:[#allocation3 + $0x300] sm:$0x1] 0.0
    %4516 = vst [vmem:[#allocation3 + $0x318] sm:$0x1] 0.0
    %4517 = vst [vmem:[#allocation3 + $0x330] sm:$0x1] 0.0
    %4518 = vst [vmem:[#allocation3 + $0x348] sm:$0x1] 0.0
    %4519 = vst [vmem:[#allocation3 + $0x11] sm:$0x1] 0.0
    %4520 = vst [vmem:[#allocation3 + $0x29] sm:$0x1] 0.0
    %4521 = vst [vmem:[#allocation3 + $0x41] sm:$0x1] 0.0
    %4522 = vst [vmem:[#allocation3 + $0x59] sm:$0x1] 0.0
    %4523 = vst [vmem:[#allocation3 + $0x71] sm:$0x1] 0.0
    %4524 = vst [vmem:[#allocation3 + $0x89] sm:$0x1] 0.0
    %4525 = vst [vmem:[#allocation3 + $0xa1] sm:$0x1] 0.0
    %4526 = vst [vmem:[#allocation3 + $0xb9] sm:$0x1] 0.0
    %4527 = vst [vmem:[#allocation3 + $0xd1] sm:$0x1] 0.0
    %4528 = vst [vmem:[#allocation3 + $0xe9] sm:$0x1] 0.0
    %4529 = vst [vmem:[#allocation3 + $0x101] sm:$0x1] 0.0
    %4530 = vst [vmem:[#allocation3 + $0x119] sm:$0x1] 0.0
    %4531 = vst [vmem:[#allocation3 + $0x131] sm:$0x1] 0.0
    %4532 = vst [vmem:[#allocation3 + $0x149] sm:$0x1] 0.0
    %4533 = vst [vmem:[#allocation3 + $0x161] sm:$0x1] 0.0
    %4534 = vst [vmem:[#allocation3 + $0x179] sm:$0x1] 0.0
    %4535 = vst [vmem:[#allocation3 + $0x191] sm:$0x1] 0.0
    %4536 = vst [vmem:[#allocation3 + $0x1a9] sm:$0x1] 0.0
    %4537 = vst [vmem:[#allocation3 + $0x1c1] sm:$0x1] 0.0
    %4538 = vst [vmem:[#allocation3 + $0x1d9] sm:$0x1] 0.0
    %4539 = vst [vmem:[#allocation3 + $0x1f1] sm:$0x1] 0.0
    %4540 = vst [vmem:[#allocation3 + $0x209] sm:$0x1] 0.0
    %4541 = vst [vmem:[#allocation3 + $0x221] sm:$0x1] 0.0
    %4542 = vst [vmem:[#allocation3 + $0x239] sm:$0x1] 0.0
    %4543 = vst [vmem:[#allocation3 + $0x251] sm:$0x1] 0.0
    %4544 = vst [vmem:[#allocation3 + $0x269] sm:$0x1] 0.0
    %4545 = vst [vmem:[#allocation3 + $0x281] sm:$0x1] 0.0
    %4546 = vst [vmem:[#allocation3 + $0x299] sm:$0x1] 0.0
    %4547 = vst [vmem:[#allocation3 + $0x2b1] sm:$0x1] 0.0
    %4548 = vst [vmem:[#allocation3 + $0x2c9] sm:$0x1] 0.0
    %4549 = vst [vmem:[#allocation3 + $0x2e1] sm:$0x1] 0.0
    %4550 = vst [vmem:[#allocation3 + $0x2f9] sm:$0x1] 0.0
    %4551 = vst [vmem:[#allocation3 + $0x311] sm:$0x1] 0.0
    %4552 = vst [vmem:[#allocation3 + $0x329] sm:$0x1] 0.0
    %4553 = vst [vmem:[#allocation3 + $0x341] sm:$0x1] 0.0
    %4554 = vst [vmem:[#allocation3 + $0x359] sm:$0x1] 0.0
    %s4555 = scalar_lea.vmem [#allocation3], 24
    %4556 = vst [vmem:[%s4555 + $0x1] sm:$0xff] %v4406
    %4557 = vst [vmem:[%s4555 + $0x9] sm:$0xff] %v4407
    %4558 = vst [vmem:[%s4555 + $0x19] sm:$0xff] %v4408
    %4559 = vst [vmem:[%s4555 + $0x21] sm:$0xff] %v4409
    %4560 = vst [vmem:[%s4555 + $0x31] sm:$0xff] %v4410
    %4561 = vst [vmem:[%s4555 + $0x39] sm:$0xff] %v4411
    %4562 = vst [vmem:[%s4555 + $0x49] sm:$0xff] %v4412
    %4563 = vst [vmem:[%s4555 + $0x51] sm:$0xff] %v4413
    %4564 = vst [vmem:[%s4555 + $0x61] sm:$0xff] %v4414
    %4565 = vst [vmem:[%s4555 + $0x69] sm:$0xff] %v4415
    %4566 = vst [vmem:[%s4555 + $0x79] sm:$0xff] %v4416
    %4567 = vst [vmem:[%s4555 + $0x81] sm:$0xff] %v4417
    %4568 = vst [vmem:[%s4555 + $0x91] sm:$0xff] %v4418
    %4569 = vst [vmem:[%s4555 + $0x99] sm:$0xff] %v4419
    %4570 = vst [vmem:[%s4555 + $0xa9] sm:$0xff] %v4420
    %4571 = vst [vmem:[%s4555 + $0xb1] sm:$0xff] %v4421
    %4572 = vst [vmem:[%s4555 + $0xc1] sm:$0xff] %v4422
    %4573 = vst [vmem:[%s4555 + $0xc9] sm:$0xff] %v4423
    %4574 = vst [vmem:[%s4555 + $0xd9] sm:$0xff] %v4424
    %4575 = vst [vmem:[%s4555 + $0xe1] sm:$0xff] %v4425
    %4576 = vst [vmem:[%s4555 + $0xf1] sm:$0xff] %v4426
    %4577 = vst [vmem:[%s4555 + $0xf9] sm:$0xff] %v4427
    %4578 = vst [vmem:[%s4555 + $0x109] sm:$0xff] %v4428
    %4579 = vst [vmem:[%s4555 + $0x111] sm:$0xff] %v4429
    %4580 = vst [vmem:[%s4555 + $0x121] sm:$0xff] %v4430
    %4581 = vst [vmem:[%s4555 + $0x129] sm:$0xff] %v4431
    %4582 = vst [vmem:[%s4555 + $0x139] sm:$0xff] %v4432
    %4583 = vst [vmem:[%s4555 + $0x141] sm:$0xff] %v4433
    %4584 = vst [vmem:[%s4555 + $0x151] sm:$0xff] %v4434
    %4585 = vst [vmem:[%s4555 + $0x159] sm:$0xff] %v4435
    %4586 = vst [vmem:[%s4555 + $0x169] sm:$0xff] %v4436
    %4587 = vst [vmem:[%s4555 + $0x171] sm:$0xff] %v4437
    %4588 = vst [vmem:[%s4555 + $0x1b1] sm:$0xff] %v4438
    %4589 = vst [vmem:[%s4555 + $0x1b9] sm:$0xff] %v4439
    %4590 = vst [vmem:[%s4555 + $0x1c9] sm:$0xff] %v4440
    %4591 = vst [vmem:[%s4555 + $0x1d1] sm:$0xff] %v4441
    %4592 = vst [vmem:[%s4555 + $0x1e1] sm:$0xff] %v4442
    %4593 = vst [vmem:[%s4555 + $0x1e9] sm:$0xff] %v4443
    %4594 = vst [vmem:[%s4555 + $0x1f9] sm:$0xff] %v4444
    %4595 = vst [vmem:[%s4555 + $0x201] sm:$0xff] %v4445
    %4596 = vst [vmem:[%s4555 + $0x211] sm:$0xff] %v4446
    %4597 = vst [vmem:[%s4555 + $0x219] sm:$0xff] %v4447
    %4598 = vst [vmem:[%s4555 + $0x229] sm:$0xff] %v4448
    %4599 = vst [vmem:[%s4555 + $0x231] sm:$0xff] %v4449
    %4600 = vst [vmem:[%s4555 + $0x241] sm:$0xff] %v4450
    %4601 = vst [vmem:[%s4555 + $0x249] sm:$0xff] %v4451
    %4602 = vst [vmem:[%s4555 + $0x259] sm:$0xff] %v4452
    %4603 = vst [vmem:[%s4555 + $0x261] sm:$0xff] %v4453
    %4604 = vst [vmem:[%s4555 + $0x271] sm:$0xff] %v4454
    %4605 = vst [vmem:[%s4555 + $0x279] sm:$0xff] %v4455
    %4606 = vst [vmem:[%s4555 + $0x289] sm:$0xff] %v4456
    %4607 = vst [vmem:[%s4555 + $0x291] sm:$0xff] %v4457
    %4608 = vst [vmem:[%s4555 + $0x2a1] sm:$0xff] %v4458
    %4609 = vst [vmem:[%s4555 + $0x2a9] sm:$0xff] %v4459
    %4610 = vst [vmem:[%s4555 + $0x2b9] sm:$0xff] %v4460
    %4611 = vst [vmem:[%s4555 + $0x2c1] sm:$0xff] %v4461
    %4612 = vst [vmem:[%s4555 + $0x2d1] sm:$0xff] %v4462
    %4613 = vst [vmem:[%s4555 + $0x2d9] sm:$0xff] %v4463
    %4614 = vst [vmem:[%s4555 + $0x2e9] sm:$0xff] %v4464
    %4615 = vst [vmem:[%s4555 + $0x2f1] sm:$0xff] %v4465
    %4616 = vst [vmem:[%s4555 + $0x301] sm:$0xff] %v4466
    %4617 = vst [vmem:[%s4555 + $0x309] sm:$0xff] %v4467
    %4618 = vst [vmem:[%s4555 + $0x319] sm:$0xff] %v4468
    %4619 = vst [vmem:[%s4555 + $0x321] sm:$0xff] %v4469
    %v4620 = vld [vmem:[#allocation3] sm:$0xff]
    %v4621 = vld [vmem:[#allocation3 + $0x8] sm:$0xff]
    %v4622 = vld [vmem:[#allocation3 + $0x18] sm:$0xff]
    %v4623 = vld [vmem:[#allocation3 + $0x20] sm:$0xff]
    %v4624 = vld [vmem:[#allocation3 + $0x30] sm:$0xff]
    %v4625 = vld [vmem:[#allocation3 + $0x38] sm:$0xff]
    %v4626 = vld [vmem:[#allocation3 + $0x48] sm:$0xff]
    %v4627 = vld [vmem:[#allocation3 + $0x50] sm:$0xff]
    %v4628 = vld [vmem:[#allocation3 + $0x60] sm:$0xff]
    %v4629 = vld [vmem:[#allocation3 + $0x68] sm:$0xff]
    %v4630 = vld [vmem:[#allocation3 + $0x78] sm:$0xff]
    %v4631 = vld [vmem:[#allocation3 + $0x80] sm:$0xff]
    %v4632 = vld [vmem:[#allocation3 + $0x90] sm:$0xff]
    %v4633 = vld [vmem:[#allocation3 + $0x98] sm:$0xff]
    %v4634 = vld [vmem:[#allocation3 + $0xa8] sm:$0xff]
    %v4635 = vld [vmem:[#allocation3 + $0xb0] sm:$0xff]
    %v4636 = vld [vmem:[#allocation3 + $0xc0] sm:$0xff]
    %v4637 = vld [vmem:[#allocation3 + $0xc8] sm:$0xff]
    %v4638 = vld [vmem:[#allocation3 + $0xd8] sm:$0xff]
    %v4639 = vld [vmem:[#allocation3 + $0xe0] sm:$0xff]
    %v4640 = vld [vmem:[#allocation3 + $0xf0] sm:$0xff]
    %v4641 = vld [vmem:[#allocation3 + $0xf8] sm:$0xff]
    %v4642 = vld [vmem:[#allocation3 + $0x108] sm:$0xff]
    %v4643 = vld [vmem:[#allocation3 + $0x110] sm:$0xff]
    %v4644 = vld [vmem:[#allocation3 + $0x120] sm:$0xff]
    %v4645 = vld [vmem:[#allocation3 + $0x128] sm:$0xff]
    %v4646 = vld [vmem:[#allocation3 + $0x138] sm:$0xff]
    %v4647 = vld [vmem:[#allocation3 + $0x140] sm:$0xff]
    %v4648 = vld [vmem:[#allocation3 + $0x150] sm:$0xff]
    %v4649 = vld [vmem:[#allocation3 + $0x158] sm:$0xff]
    %v4650 = vld [vmem:[#allocation3 + $0x168] sm:$0xff]
    %v4651 = vld [vmem:[#allocation3 + $0x170] sm:$0xff]
    %v4652 = vld [vmem:[#allocation3 + $0x1b0] sm:$0xff]
    %v4653 = vld [vmem:[#allocation3 + $0x1b8] sm:$0xff]
    %v4654 = vld [vmem:[#allocation3 + $0x1c8] sm:$0xff]
    %v4655 = vld [vmem:[#allocation3 + $0x1d0] sm:$0xff]
    %v4656 = vld [vmem:[#allocation3 + $0x1e0] sm:$0xff]
    %v4657 = vld [vmem:[#allocation3 + $0x1e8] sm:$0xff]
    %v4658 = vld [vmem:[#allocation3 + $0x1f8] sm:$0xff]
    %v4659 = vld [vmem:[#allocation3 + $0x200] sm:$0xff]
    %v4660 = vld [vmem:[#allocation3 + $0x210] sm:$0xff]
    %v4661 = vld [vmem:[#allocation3 + $0x218] sm:$0xff]
    %v4662 = vld [vmem:[#allocation3 + $0x228] sm:$0xff]
    %v4663 = vld [vmem:[#allocation3 + $0x230] sm:$0xff]
    %v4664 = vld [vmem:[#allocation3 + $0x240] sm:$0xff]
    %v4665 = vld [vmem:[#allocation3 + $0x248] sm:$0xff]
    %v4666 = vld [vmem:[#allocation3 + $0x258] sm:$0xff]
    %v4667 = vld [vmem:[#allocation3 + $0x260] sm:$0xff]
    %v4668 = vld [vmem:[#allocation3 + $0x270] sm:$0xff]
    %v4669 = vld [vmem:[#allocation3 + $0x278] sm:$0xff]
    %v4670 = vld [vmem:[#allocation3 + $0x288] sm:$0xff]
    %v4671 = vld [vmem:[#allocation3 + $0x290] sm:$0xff]
    %v4672 = vld [vmem:[#allocation3 + $0x2a0] sm:$0xff]
    %v4673 = vld [vmem:[#allocation3 + $0x2a8] sm:$0xff]
    %v4674 = vld [vmem:[#allocation3 + $0x2b8] sm:$0xff]
    %v4675 = vld [vmem:[#allocation3 + $0x2c0] sm:$0xff]
    %v4676 = vld [vmem:[#allocation3 + $0x2d0] sm:$0xff]
    %v4677 = vld [vmem:[#allocation3 + $0x2d8] sm:$0xff]
    %v4678 = vld [vmem:[#allocation3 + $0x2e8] sm:$0xff]
    %v4679 = vld [vmem:[#allocation3 + $0x2f0] sm:$0xff]
    %v4680 = vld [vmem:[#allocation3 + $0x300] sm:$0xff]
    %v4681 = vld [vmem:[#allocation3 + $0x308] sm:$0xff]
    %v4682 = vld [vmem:[#allocation3 + $0x318] sm:$0xff]
    %v4683 = vld [vmem:[#allocation3 + $0x320] sm:$0xff]
    %4684 = vst [vmem:[#allocation4] sm:$0xff] %v4620
    %4685 = vst [vmem:[#allocation4 + $0x48] sm:$0xff] %v4621
    %4686 = vst [vmem:[#allocation4 + $0x90] sm:$0xff] %v4622
    %4687 = vst [vmem:[#allocation4 + $0xd8] sm:$0xff] %v4623
    %4688 = vst [vmem:[#allocation4 + $0x120] sm:$0xff] %v4624
    %4689 = vst [vmem:[#allocation4 + $0x168] sm:$0xff] %v4625
    %4690 = vst [vmem:[#allocation4 + $0x1b0] sm:$0xff] %v4626
    %4691 = vst [vmem:[#allocation4 + $0x1f8] sm:$0xff] %v4627
    %4692 = vst [vmem:[#allocation4 + $0x240] sm:$0xff] %v4628
    %4693 = vst [vmem:[#allocation4 + $0x288] sm:$0xff] %v4629
    %4694 = vst [vmem:[#allocation4 + $0x2d0] sm:$0xff] %v4630
    %4695 = vst [vmem:[#allocation4 + $0x318] sm:$0xff] %v4631
    %4696 = vst [vmem:[#allocation4 + $0x360] sm:$0xff] %v4632
    %4697 = vst [vmem:[#allocation4 + $0x3a8] sm:$0xff] %v4633
    %4698 = vst [vmem:[#allocation4 + $0x3f0] sm:$0xff] %v4634
    %4699 = vst [vmem:[#allocation4 + $0x438] sm:$0xff] %v4635
    %4700 = vst [vmem:[#allocation4 + $0x480] sm:$0xff] %v4636
    %4701 = vst [vmem:[#allocation4 + $0x4c8] sm:$0xff] %v4637
    %4702 = vst [vmem:[#allocation4 + $0x510] sm:$0xff] %v4638
    %4703 = vst [vmem:[#allocation4 + $0x558] sm:$0xff] %v4639
    %4704 = vst [vmem:[#allocation4 + $0x5a0] sm:$0xff] %v4640
    %4705 = vst [vmem:[#allocation4 + $0x5e8] sm:$0xff] %v4641
    %4706 = vst [vmem:[#allocation4 + $0x630] sm:$0xff] %v4642
    %4707 = vst [vmem:[#allocation4 + $0x678] sm:$0xff] %v4643
    %4708 = vst [vmem:[#allocation4 + $0x6c0] sm:$0xff] %v4644
    %4709 = vst [vmem:[#allocation4 + $0x708] sm:$0xff] %v4645
    %4710 = vst [vmem:[#allocation4 + $0x750] sm:$0xff] %v4646
    %4711 = vst [vmem:[#allocation4 + $0x798] sm:$0xff] %v4647
    %4712 = vst [vmem:[#allocation4 + $0x7e0] sm:$0xff] %v4648
    %4713 = vst [vmem:[#allocation4 + $0x828] sm:$0xff] %v4649
    %4714 = vst [vmem:[#allocation4 + $0x870] sm:$0xff] %v4650
    %4715 = vst [vmem:[#allocation4 + $0x8b8] sm:$0xff] %v4651
    %4716 = vst [vmem:[#allocation4 + $0x900] sm:$0xff] %v4652
    %4717 = vst [vmem:[#allocation4 + $0x948] sm:$0xff] %v4653
    %4718 = vst [vmem:[#allocation4 + $0x990] sm:$0xff] %v4654
    %4719 = vst [vmem:[#allocation4 + $0x9d8] sm:$0xff] %v4655
    %4720 = vst [vmem:[#allocation4 + $0xa20] sm:$0xff] %v4656
    %4721 = vst [vmem:[#allocation4 + $0xa68] sm:$0xff] %v4657
    %4722 = vst [vmem:[#allocation4 + $0xab0] sm:$0xff] %v4658
    %4723 = vst [vmem:[#allocation4 + $0xaf8] sm:$0xff] %v4659
    %4724 = vst [vmem:[#allocation4 + $0xb40] sm:$0xff] %v4660
    %4725 = vst [vmem:[#allocation4 + $0xb88] sm:$0xff] %v4661
    %4726 = vst [vmem:[#allocation4 + $0xbd0] sm:$0xff] %v4662
    %4727 = vst [vmem:[#allocation4 + $0xc18] sm:$0xff] %v4663
    %4728 = vst [vmem:[#allocation4 + $0xc60] sm:$0xff] %v4664
    %4729 = vst [vmem:[#allocation4 + $0xca8] sm:$0xff] %v4665
    %4730 = vst [vmem:[#allocation4 + $0xcf0] sm:$0xff] %v4666
    %4731 = vst [vmem:[#allocation4 + $0xd38] sm:$0xff] %v4667
    %4732 = vst [vmem:[#allocation4 + $0xd80] sm:$0xff] %v4668
    %4733 = vst [vmem:[#allocation4 + $0xdc8] sm:$0xff] %v4669
    %4734 = vst [vmem:[#allocation4 + $0xe10] sm:$0xff] %v4670
    %4735 = vst [vmem:[#allocation4 + $0xe58] sm:$0xff] %v4671
    %4736 = vst [vmem:[#allocation4 + $0xea0] sm:$0xff] %v4672
    %4737 = vst [vmem:[#allocation4 + $0xee8] sm:$0xff] %v4673
    %4738 = vst [vmem:[#allocation4 + $0xf30] sm:$0xff] %v4674
    %4739 = vst [vmem:[#allocation4 + $0xf78] sm:$0xff] %v4675
    %4740 = vst [vmem:[#allocation4 + $0xfc0] sm:$0xff] %v4676
    %4741 = vst [vmem:[#allocation4 + $0x1008] sm:$0xff] %v4677
    %4742 = vst [vmem:[#allocation4 + $0x1050] sm:$0xff] %v4678
    %4743 = vst [vmem:[#allocation4 + $0x1098] sm:$0xff] %v4679
    %4744 = vst [vmem:[#allocation4 + $0x10e0] sm:$0xff] %v4680
    %4745 = vst [vmem:[#allocation4 + $0x1128] sm:$0xff] %v4681
    %4746 = vst [vmem:[#allocation4 + $0x1170] sm:$0xff] %v4682
    %4747 = vst [vmem:[#allocation4 + $0x11b8] sm:$0xff] %v4683
    %v4748 = vld [vmem:[#allocation3 + $0x1] sm:$0xff]
    %v4749 = vld [vmem:[#allocation3 + $0x9] sm:$0xff]
    %v4750 = vld [vmem:[#allocation3 + $0x19] sm:$0xff]
    %v4751 = vld [vmem:[#allocation3 + $0x21] sm:$0xff]
    %v4752 = vld [vmem:[#allocation3 + $0x31] sm:$0xff]
    %v4753 = vld [vmem:[#allocation3 + $0x39] sm:$0xff]
    %v4754 = vld [vmem:[#allocation3 + $0x49] sm:$0xff]
    %v4755 = vld [vmem:[#allocation3 + $0x51] sm:$0xff]
    %v4756 = vld [vmem:[#allocation3 + $0x61] sm:$0xff]
    %v4757 = vld [vmem:[#allocation3 + $0x69] sm:$0xff]
    %v4758 = vld [vmem:[#allocation3 + $0x79] sm:$0xff]
    %v4759 = vld [vmem:[#allocation3 + $0x81] sm:$0xff]
    %v4760 = vld [vmem:[#allocation3 + $0x91] sm:$0xff]
    %v4761 = vld [vmem:[#allocation3 + $0x99] sm:$0xff]
    %v4762 = vld [vmem:[#allocation3 + $0xa9] sm:$0xff]
    %v4763 = vld [vmem:[#allocation3 + $0xb1] sm:$0xff]
    %v4764 = vld [vmem:[#allocation3 + $0xc1] sm:$0xff]
    %v4765 = vld [vmem:[#allocation3 + $0xc9] sm:$0xff]
    %v4766 = vld [vmem:[#allocation3 + $0xd9] sm:$0xff]
    %v4767 = vld [vmem:[#allocation3 + $0xe1] sm:$0xff]
    %v4768 = vld [vmem:[#allocation3 + $0xf1] sm:$0xff]
    %v4769 = vld [vmem:[#allocation3 + $0xf9] sm:$0xff]
    %v4770 = vld [vmem:[#allocation3 + $0x109] sm:$0xff]
    %v4771 = vld [vmem:[#allocation3 + $0x111] sm:$0xff]
    %v4772 = vld [vmem:[#allocation3 + $0x121] sm:$0xff]
    %v4773 = vld [vmem:[#allocation3 + $0x129] sm:$0xff]
    %v4774 = vld [vmem:[#allocation3 + $0x139] sm:$0xff]
    %v4775 = vld [vmem:[#allocation3 + $0x141] sm:$0xff]
    %v4776 = vld [vmem:[#allocation3 + $0x151] sm:$0xff]
    %v4777 = vld [vmem:[#allocation3 + $0x159] sm:$0xff]
    %v4778 = vld [vmem:[#allocation3 + $0x169] sm:$0xff]
    %v4779 = vld [vmem:[#allocation3 + $0x171] sm:$0xff]
    %v4780 = vld [vmem:[#allocation3 + $0x1b1] sm:$0xff]
    %v4781 = vld [vmem:[#allocation3 + $0x1b9] sm:$0xff]
    %v4782 = vld [vmem:[#allocation3 + $0x1c9] sm:$0xff]
    %v4783 = vld [vmem:[#allocation3 + $0x1d1] sm:$0xff]
    %v4784 = vld [vmem:[#allocation3 + $0x1e1] sm:$0xff]
    %v4785 = vld [vmem:[#allocation3 + $0x1e9] sm:$0xff]
    %v4786 = vld [vmem:[#allocation3 + $0x1f9] sm:$0xff]
    %v4787 = vld [vmem:[#allocation3 + $0x201] sm:$0xff]
    %v4788 = vld [vmem:[#allocation3 + $0x211] sm:$0xff]
    %v4789 = vld [vmem:[#allocation3 + $0x219] sm:$0xff]
    %v4790 = vld [vmem:[#allocation3 + $0x229] sm:$0xff]
    %v4791 = vld [vmem:[#allocation3 + $0x231] sm:$0xff]
    %v4792 = vld [vmem:[#allocation3 + $0x241] sm:$0xff]
    %v4793 = vld [vmem:[#allocation3 + $0x249] sm:$0xff]
    %v4794 = vld [vmem:[#allocation3 + $0x259] sm:$0xff]
    %v4795 = vld [vmem:[#allocation3 + $0x261] sm:$0xff]
    %v4796 = vld [vmem:[#allocation3 + $0x271] sm:$0xff]
    %v4797 = vld [vmem:[#allocation3 + $0x279] sm:$0xff]
    %v4798 = vld [vmem:[#allocation3 + $0x289] sm:$0xff]
    %v4799 = vld [vmem:[#allocation3 + $0x291] sm:$0xff]
    %v4800 = vld [vmem:[#allocation3 + $0x2a1] sm:$0xff]
    %v4801 = vld [vmem:[#allocation3 + $0x2a9] sm:$0xff]
    %v4802 = vld [vmem:[#allocation3 + $0x2b9] sm:$0xff]
    %v4803 = vld [vmem:[#allocation3 + $0x2c1] sm:$0xff]
    %v4804 = vld [vmem:[#allocation3 + $0x2d1] sm:$0xff]
    %v4805 = vld [vmem:[#allocation3 + $0x2d9] sm:$0xff]
    %v4806 = vld [vmem:[#allocation3 + $0x2e9] sm:$0xff]
    %v4807 = vld [vmem:[#allocation3 + $0x2f1] sm:$0xff]
    %v4808 = vld [vmem:[#allocation3 + $0x301] sm:$0xff]
    %v4809 = vld [vmem:[#allocation3 + $0x309] sm:$0xff]
    %v4810 = vld [vmem:[#allocation3 + $0x319] sm:$0xff]
    %v4811 = vld [vmem:[#allocation3 + $0x321] sm:$0xff]
    %4812 = vst [vmem:[#allocation4 + $0x8] sm:$0xff] %v4748
    %4813 = vst [vmem:[#allocation4 + $0x50] sm:$0xff] %v4749
    %4814 = vst [vmem:[#allocation4 + $0x98] sm:$0xff] %v4750
    %4815 = vst [vmem:[#allocation4 + $0xe0] sm:$0xff] %v4751
    %4816 = vst [vmem:[#allocation4 + $0x128] sm:$0xff] %v4752
    %4817 = vst [vmem:[#allocation4 + $0x170] sm:$0xff] %v4753
    %4818 = vst [vmem:[#allocation4 + $0x1b8] sm:$0xff] %v4754
    %4819 = vst [vmem:[#allocation4 + $0x200] sm:$0xff] %v4755
    %4820 = vst [vmem:[#allocation4 + $0x248] sm:$0xff] %v4756
    %4821 = vst [vmem:[#allocation4 + $0x290] sm:$0xff] %v4757
    %4822 = vst [vmem:[#allocation4 + $0x2d8] sm:$0xff] %v4758
    %4823 = vst [vmem:[#allocation4 + $0x320] sm:$0xff] %v4759
    %4824 = vst [vmem:[#allocation4 + $0x368] sm:$0xff] %v4760
    %4825 = vst [vmem:[#allocation4 + $0x3b0] sm:$0xff] %v4761
    %4826 = vst [vmem:[#allocation4 + $0x3f8] sm:$0xff] %v4762
    %4827 = vst [vmem:[#allocation4 + $0x440] sm:$0xff] %v4763
    %4828 = vst [vmem:[#allocation4 + $0x488] sm:$0xff] %v4764
    %4829 = vst [vmem:[#allocation4 + $0x4d0] sm:$0xff] %v4765
    %4830 = vst [vmem:[#allocation4 + $0x518] sm:$0xff] %v4766
    %4831 = vst [vmem:[#allocation4 + $0x560] sm:$0xff] %v4767
    %4832 = vst [vmem:[#allocation4 + $0x5a8] sm:$0xff] %v4768
    %4833 = vst [vmem:[#allocation4 + $0x5f0] sm:$0xff] %v4769
    %4834 = vst [vmem:[#allocation4 + $0x638] sm:$0xff] %v4770
    %4835 = vst [vmem:[#allocation4 + $0x680] sm:$0xff] %v4771
    %4836 = vst [vmem:[#allocation4 + $0x6c8] sm:$0xff] %v4772
    %4837 = vst [vmem:[#allocation4 + $0x710] sm:$0xff] %v4773
    %4838 = vst [vmem:[#allocation4 + $0x758] sm:$0xff] %v4774
    %4839 = vst [vmem:[#allocation4 + $0x7a0] sm:$0xff] %v4775
    %4840 = vst [vmem:[#allocation4 + $0x7e8] sm:$0xff] %v4776
    %4841 = vst [vmem:[#allocation4 + $0x830] sm:$0xff] %v4777
    %4842 = vst [vmem:[#allocation4 + $0x878] sm:$0xff] %v4778
    %4843 = vst [vmem:[#allocation4 + $0x8c0] sm:$0xff] %v4779
    %4844 = vst [vmem:[#allocation4 + $0x908] sm:$0xff] %v4780
    %4845 = vst [vmem:[#allocation4 + $0x950] sm:$0xff] %v4781
    %4846 = vst [vmem:[#allocation4 + $0x998] sm:$0xff] %v4782
    %4847 = vst [vmem:[#allocation4 + $0x9e0] sm:$0xff] %v4783
    %4848 = vst [vmem:[#allocation4 + $0xa28] sm:$0xff] %v4784
    %4849 = vst [vmem:[#allocation4 + $0xa70] sm:$0xff] %v4785
    %4850 = vst [vmem:[#allocation4 + $0xab8] sm:$0xff] %v4786
    %4851 = vst [vmem:[#allocation4 + $0xb00] sm:$0xff] %v4787
    %4852 = vst [vmem:[#allocation4 + $0xb48] sm:$0xff] %v4788
    %4853 = vst [vmem:[#allocation4 + $0xb90] sm:$0xff] %v4789
    %4854 = vst [vmem:[#allocation4 + $0xbd8] sm:$0xff] %v4790
    %4855 = vst [vmem:[#allocation4 + $0xc20] sm:$0xff] %v4791
    %4856 = vst [vmem:[#allocation4 + $0xc68] sm:$0xff] %v4792
    %4857 = vst [vmem:[#allocation4 + $0xcb0] sm:$0xff] %v4793
    %4858 = vst [vmem:[#allocation4 + $0xcf8] sm:$0xff] %v4794
    %4859 = vst [vmem:[#allocation4 + $0xd40] sm:$0xff] %v4795
    %4860 = vst [vmem:[#allocation4 + $0xd88] sm:$0xff] %v4796
    %4861 = vst [vmem:[#allocation4 + $0xdd0] sm:$0xff] %v4797
    %4862 = vst [vmem:[#allocation4 + $0xe18] sm:$0xff] %v4798
    %4863 = vst [vmem:[#allocation4 + $0xe60] sm:$0xff] %v4799
    %4864 = vst [vmem:[#allocation4 + $0xea8] sm:$0xff] %v4800
    %4865 = vst [vmem:[#allocation4 + $0xef0] sm:$0xff] %v4801
    %4866 = vst [vmem:[#allocation4 + $0xf38] sm:$0xff] %v4802
    %4867 = vst [vmem:[#allocation4 + $0xf80] sm:$0xff] %v4803
    %4868 = vst [vmem:[#allocation4 + $0xfc8] sm:$0xff] %v4804
    %4869 = vst [vmem:[#allocation4 + $0x1010] sm:$0xff] %v4805
    %4870 = vst [vmem:[#allocation4 + $0x1058] sm:$0xff] %v4806
    %4871 = vst [vmem:[#allocation4 + $0x10a0] sm:$0xff] %v4807
    %4872 = vst [vmem:[#allocation4 + $0x10e8] sm:$0xff] %v4808
    %4873 = vst [vmem:[#allocation4 + $0x1130] sm:$0xff] %v4809
    %4874 = vst [vmem:[#allocation4 + $0x1178] sm:$0xff] %v4810
    %4875 = vst [vmem:[#allocation4 + $0x11c0] sm:$0xff] %v4811
    %v4876 = vld [vmem:[#allocation3 + $0x2] sm:$0xff]
    %v4877 = vld [vmem:[#allocation3 + $0xa] sm:$0xff]
    %v4878 = vld [vmem:[#allocation3 + $0x1a] sm:$0xff]
    %v4879 = vld [vmem:[#allocation3 + $0x22] sm:$0xff]
    %v4880 = vld [vmem:[#allocation3 + $0x32] sm:$0xff]
    %v4881 = vld [vmem:[#allocation3 + $0x3a] sm:$0xff]
    %v4882 = vld [vmem:[#allocation3 + $0x4a] sm:$0xff]
    %v4883 = vld [vmem:[#allocation3 + $0x52] sm:$0xff]
    %v4884 = vld [vmem:[#allocation3 + $0x62] sm:$0xff]
    %v4885 = vld [vmem:[#allocation3 + $0x6a] sm:$0xff]
    %v4886 = vld [vmem:[#allocation3 + $0x7a] sm:$0xff]
    %v4887 = vld [vmem:[#allocation3 + $0x82] sm:$0xff]
    %v4888 = vld [vmem:[#allocation3 + $0x92] sm:$0xff]
    %v4889 = vld [vmem:[#allocation3 + $0x9a] sm:$0xff]
    %v4890 = vld [vmem:[#allocation3 + $0xaa] sm:$0xff]
    %v4891 = vld [vmem:[#allocation3 + $0xb2] sm:$0xff]
    %v4892 = vld [vmem:[#allocation3 + $0xc2] sm:$0xff]
    %v4893 = vld [vmem:[#allocation3 + $0xca] sm:$0xff]
    %v4894 = vld [vmem:[#allocation3 + $0xda] sm:$0xff]
    %v4895 = vld [vmem:[#allocation3 + $0xe2] sm:$0xff]
    %v4896 = vld [vmem:[#allocation3 + $0xf2] sm:$0xff]
    %v4897 = vld [vmem:[#allocation3 + $0xfa] sm:$0xff]
    %v4898 = vld [vmem:[#allocation3 + $0x10a] sm:$0xff]
    %v4899 = vld [vmem:[#allocation3 + $0x112] sm:$0xff]
    %v4900 = vld [vmem:[#allocation3 + $0x122] sm:$0xff]
    %v4901 = vld [vmem:[#allocation3 + $0x12a] sm:$0xff]
    %v4902 = vld [vmem:[#allocation3 + $0x13a] sm:$0xff]
    %v4903 = vld [vmem:[#allocation3 + $0x142] sm:$0xff]
    %v4904 = vld [vmem:[#allocation3 + $0x152] sm:$0xff]
    %v4905 = vld [vmem:[#allocation3 + $0x15a] sm:$0xff]
    %v4906 = vld [vmem:[#allocation3 + $0x16a] sm:$0xff]
    %v4907 = vld [vmem:[#allocation3 + $0x172] sm:$0xff]
    %v4908 = vld [vmem:[#allocation3 + $0x1b2] sm:$0xff]
    %v4909 = vld [vmem:[#allocation3 + $0x1ba] sm:$0xff]
    %v4910 = vld [vmem:[#allocation3 + $0x1ca] sm:$0xff]
    %v4911 = vld [vmem:[#allocation3 + $0x1d2] sm:$0xff]
    %v4912 = vld [vmem:[#allocation3 + $0x1e2] sm:$0xff]
    %v4913 = vld [vmem:[#allocation3 + $0x1ea] sm:$0xff]
    %v4914 = vld [vmem:[#allocation3 + $0x1fa] sm:$0xff]
    %v4915 = vld [vmem:[#allocation3 + $0x202] sm:$0xff]
    %v4916 = vld [vmem:[#allocation3 + $0x212] sm:$0xff]
    %v4917 = vld [vmem:[#allocation3 + $0x21a] sm:$0xff]
    %v4918 = vld [vmem:[#allocation3 + $0x22a] sm:$0xff]
    %v4919 = vld [vmem:[#allocation3 + $0x232] sm:$0xff]
    %v4920 = vld [vmem:[#allocation3 + $0x242] sm:$0xff]
    %v4921 = vld [vmem:[#allocation3 + $0x24a] sm:$0xff]
    %v4922 = vld [vmem:[#allocation3 + $0x25a] sm:$0xff]
    %v4923 = vld [vmem:[#allocation3 + $0x262] sm:$0xff]
    %v4924 = vld [vmem:[#allocation3 + $0x272] sm:$0xff]
    %v4925 = vld [vmem:[#allocation3 + $0x27a] sm:$0xff]
    %v4926 = vld [vmem:[#allocation3 + $0x28a] sm:$0xff]
    %v4927 = vld [vmem:[#allocation3 + $0x292] sm:$0xff]
    %v4928 = vld [vmem:[#allocation3 + $0x2a2] sm:$0xff]
    %v4929 = vld [vmem:[#allocation3 + $0x2aa] sm:$0xff]
    %v4930 = vld [vmem:[#allocation3 + $0x2ba] sm:$0xff]
    %v4931 = vld [vmem:[#allocation3 + $0x2c2] sm:$0xff]
    %v4932 = vld [vmem:[#allocation3 + $0x2d2] sm:$0xff]
    %v4933 = vld [vmem:[#allocation3 + $0x2da] sm:$0xff]
    %v4934 = vld [vmem:[#allocation3 + $0x2ea] sm:$0xff]
    %v4935 = vld [vmem:[#allocation3 + $0x2f2] sm:$0xff]
    %v4936 = vld [vmem:[#allocation3 + $0x302] sm:$0xff]
    %v4937 = vld [vmem:[#allocation3 + $0x30a] sm:$0xff]
    %v4938 = vld [vmem:[#allocation3 + $0x31a] sm:$0xff]
    %v4939 = vld [vmem:[#allocation3 + $0x322] sm:$0xff]
    %4940 = vst [vmem:[#allocation4 + $0x10] sm:$0xff] %v4876
    %4941 = vst [vmem:[#allocation4 + $0x58] sm:$0xff] %v4877
    %4942 = vst [vmem:[#allocation4 + $0xa0] sm:$0xff] %v4878
    %4943 = vst [vmem:[#allocation4 + $0xe8] sm:$0xff] %v4879
    %4944 = vst [vmem:[#allocation4 + $0x130] sm:$0xff] %v4880
    %4945 = vst [vmem:[#allocation4 + $0x178] sm:$0xff] %v4881
    %4946 = vst [vmem:[#allocation4 + $0x1c0] sm:$0xff] %v4882
    %4947 = vst [vmem:[#allocation4 + $0x208] sm:$0xff] %v4883
    %4948 = vst [vmem:[#allocation4 + $0x250] sm:$0xff] %v4884
    %4949 = vst [vmem:[#allocation4 + $0x298] sm:$0xff] %v4885
    %4950 = vst [vmem:[#allocation4 + $0x2e0] sm:$0xff] %v4886
    %4951 = vst [vmem:[#allocation4 + $0x328] sm:$0xff] %v4887
    %4952 = vst [vmem:[#allocation4 + $0x370] sm:$0xff] %v4888
    %4953 = vst [vmem:[#allocation4 + $0x3b8] sm:$0xff] %v4889
    %4954 = vst [vmem:[#allocation4 + $0x400] sm:$0xff] %v4890
    %4955 = vst [vmem:[#allocation4 + $0x448] sm:$0xff] %v4891
    %4956 = vst [vmem:[#allocation4 + $0x490] sm:$0xff] %v4892
    %4957 = vst [vmem:[#allocation4 + $0x4d8] sm:$0xff] %v4893
    %4958 = vst [vmem:[#allocation4 + $0x520] sm:$0xff] %v4894
    %4959 = vst [vmem:[#allocation4 + $0x568] sm:$0xff] %v4895
    %4960 = vst [vmem:[#allocation4 + $0x5b0] sm:$0xff] %v4896
    %4961 = vst [vmem:[#allocation4 + $0x5f8] sm:$0xff] %v4897
    %4962 = vst [vmem:[#allocation4 + $0x640] sm:$0xff] %v4898
    %4963 = vst [vmem:[#allocation4 + $0x688] sm:$0xff] %v4899
    %4964 = vst [vmem:[#allocation4 + $0x6d0] sm:$0xff] %v4900
    %4965 = vst [vmem:[#allocation4 + $0x718] sm:$0xff] %v4901
    %4966 = vst [vmem:[#allocation4 + $0x760] sm:$0xff] %v4902
    %4967 = vst [vmem:[#allocation4 + $0x7a8] sm:$0xff] %v4903
    %4968 = vst [vmem:[#allocation4 + $0x7f0] sm:$0xff] %v4904
    %4969 = vst [vmem:[#allocation4 + $0x838] sm:$0xff] %v4905
    %4970 = vst [vmem:[#allocation4 + $0x880] sm:$0xff] %v4906
    %4971 = vst [vmem:[#allocation4 + $0x8c8] sm:$0xff] %v4907
    %4972 = vst [vmem:[#allocation4 + $0x910] sm:$0xff] %v4908
    %4973 = vst [vmem:[#allocation4 + $0x958] sm:$0xff] %v4909
    %4974 = vst [vmem:[#allocation4 + $0x9a0] sm:$0xff] %v4910
    %4975 = vst [vmem:[#allocation4 + $0x9e8] sm:$0xff] %v4911
    %4976 = vst [vmem:[#allocation4 + $0xa30] sm:$0xff] %v4912
    %4977 = vst [vmem:[#allocation4 + $0xa78] sm:$0xff] %v4913
    %4978 = vst [vmem:[#allocation4 + $0xac0] sm:$0xff] %v4914
    %4979 = vst [vmem:[#allocation4 + $0xb08] sm:$0xff] %v4915
    %4980 = vst [vmem:[#allocation4 + $0xb50] sm:$0xff] %v4916
    %4981 = vst [vmem:[#allocation4 + $0xb98] sm:$0xff] %v4917
    %4982 = vst [vmem:[#allocation4 + $0xbe0] sm:$0xff] %v4918
    %4983 = vst [vmem:[#allocation4 + $0xc28] sm:$0xff] %v4919
    %4984 = vst [vmem:[#allocation4 + $0xc70] sm:$0xff] %v4920
    %4985 = vst [vmem:[#allocation4 + $0xcb8] sm:$0xff] %v4921
    %4986 = vst [vmem:[#allocation4 + $0xd00] sm:$0xff] %v4922
    %4987 = vst [vmem:[#allocation4 + $0xd48] sm:$0xff] %v4923
    %4988 = vst [vmem:[#allocation4 + $0xd90] sm:$0xff] %v4924
    %4989 = vst [vmem:[#allocation4 + $0xdd8] sm:$0xff] %v4925
    %4990 = vst [vmem:[#allocation4 + $0xe20] sm:$0xff] %v4926
    %4991 = vst [vmem:[#allocation4 + $0xe68] sm:$0xff] %v4927
    %4992 = vst [vmem:[#allocation4 + $0xeb0] sm:$0xff] %v4928
    %4993 = vst [vmem:[#allocation4 + $0xef8] sm:$0xff] %v4929
    %4994 = vst [vmem:[#allocation4 + $0xf40] sm:$0xff] %v4930
    %4995 = vst [vmem:[#allocation4 + $0xf88] sm:$0xff] %v4931
    %4996 = vst [vmem:[#allocation4 + $0xfd0] sm:$0xff] %v4932
    %4997 = vst [vmem:[#allocation4 + $0x1018] sm:$0xff] %v4933
    %4998 = vst [vmem:[#allocation4 + $0x1060] sm:$0xff] %v4934
    %4999 = vst [vmem:[#allocation4 + $0x10a8] sm:$0xff] %v4935
    %5000 = vst [vmem:[#allocation4 + $0x10f0] sm:$0xff] %v4936
    %5001 = vst [vmem:[#allocation4 + $0x1138] sm:$0xff] %v4937
    %5002 = vst [vmem:[#allocation4 + $0x1180] sm:$0xff] %v4938
    %5003 = vst [vmem:[#allocation4 + $0x11c8] sm:$0xff] %v4939
    %v5004 = vld [vmem:[%s4555] sm:$0xff]
    %v5005 = vld [vmem:[%s4555 + $0x8] sm:$0xff]
    %v5006 = vld [vmem:[%s4555 + $0x18] sm:$0xff]
    %v5007 = vld [vmem:[%s4555 + $0x20] sm:$0xff]
    %v5008 = vld [vmem:[%s4555 + $0x30] sm:$0xff]
    %v5009 = vld [vmem:[%s4555 + $0x38] sm:$0xff]
    %v5010 = vld [vmem:[%s4555 + $0x48] sm:$0xff]
    %v5011 = vld [vmem:[%s4555 + $0x50] sm:$0xff]
    %v5012 = vld [vmem:[%s4555 + $0x60] sm:$0xff]
    %v5013 = vld [vmem:[%s4555 + $0x68] sm:$0xff]
    %v5014 = vld [vmem:[%s4555 + $0x78] sm:$0xff]
    %v5015 = vld [vmem:[%s4555 + $0x80] sm:$0xff]
    %v5016 = vld [vmem:[%s4555 + $0x90] sm:$0xff]
    %v5017 = vld [vmem:[%s4555 + $0x98] sm:$0xff]
    %v5018 = vld [vmem:[%s4555 + $0xa8] sm:$0xff]
    %v5019 = vld [vmem:[%s4555 + $0xb0] sm:$0xff]
    %v5020 = vld [vmem:[%s4555 + $0xc0] sm:$0xff]
    %v5021 = vld [vmem:[%s4555 + $0xc8] sm:$0xff]
    %v5022 = vld [vmem:[%s4555 + $0xd8] sm:$0xff]
    %v5023 = vld [vmem:[%s4555 + $0xe0] sm:$0xff]
    %v5024 = vld [vmem:[%s4555 + $0xf0] sm:$0xff]
    %v5025 = vld [vmem:[%s4555 + $0xf8] sm:$0xff]
    %v5026 = vld [vmem:[%s4555 + $0x108] sm:$0xff]
    %v5027 = vld [vmem:[%s4555 + $0x110] sm:$0xff]
    %v5028 = vld [vmem:[%s4555 + $0x120] sm:$0xff]
    %v5029 = vld [vmem:[%s4555 + $0x128] sm:$0xff]
    %v5030 = vld [vmem:[%s4555 + $0x138] sm:$0xff]
    %v5031 = vld [vmem:[%s4555 + $0x140] sm:$0xff]
    %v5032 = vld [vmem:[%s4555 + $0x150] sm:$0xff]
    %v5033 = vld [vmem:[%s4555 + $0x158] sm:$0xff]
    %v5034 = vld [vmem:[%s4555 + $0x168] sm:$0xff]
    %v5035 = vld [vmem:[%s4555 + $0x170] sm:$0xff]
    %v5036 = vld [vmem:[%s4555 + $0x1b0] sm:$0xff]
    %v5037 = vld [vmem:[%s4555 + $0x1b8] sm:$0xff]
    %v5038 = vld [vmem:[%s4555 + $0x1c8] sm:$0xff]
    %v5039 = vld [vmem:[%s4555 + $0x1d0] sm:$0xff]
    %v5040 = vld [vmem:[%s4555 + $0x1e0] sm:$0xff]
    %v5041 = vld [vmem:[%s4555 + $0x1e8] sm:$0xff]
    %v5042 = vld [vmem:[%s4555 + $0x1f8] sm:$0xff]
    %v5043 = vld [vmem:[%s4555 + $0x200] sm:$0xff]
    %v5044 = vld [vmem:[%s4555 + $0x210] sm:$0xff]
    %v5045 = vld [vmem:[%s4555 + $0x218] sm:$0xff]
    %v5046 = vld [vmem:[%s4555 + $0x228] sm:$0xff]
    %v5047 = vld [vmem:[%s4555 + $0x230] sm:$0xff]
    %v5048 = vld [vmem:[%s4555 + $0x240] sm:$0xff]
    %v5049 = vld [vmem:[%s4555 + $0x248] sm:$0xff]
    %v5050 = vld [vmem:[%s4555 + $0x258] sm:$0xff]
    %v5051 = vld [vmem:[%s4555 + $0x260] sm:$0xff]
    %v5052 = vld [vmem:[%s4555 + $0x270] sm:$0xff]
    %v5053 = vld [vmem:[%s4555 + $0x278] sm:$0xff]
    %v5054 = vld [vmem:[%s4555 + $0x288] sm:$0xff]
    %v5055 = vld [vmem:[%s4555 + $0x290] sm:$0xff]
    %v5056 = vld [vmem:[%s4555 + $0x2a0] sm:$0xff]
    %v5057 = vld [vmem:[%s4555 + $0x2a8] sm:$0xff]
    %v5058 = vld [vmem:[%s4555 + $0x2b8] sm:$0xff]
    %v5059 = vld [vmem:[%s4555 + $0x2c0] sm:$0xff]
    %v5060 = vld [vmem:[%s4555 + $0x2d0] sm:$0xff]
    %v5061 = vld [vmem:[%s4555 + $0x2d8] sm:$0xff]
    %v5062 = vld [vmem:[%s4555 + $0x2e8] sm:$0xff]
    %v5063 = vld [vmem:[%s4555 + $0x2f0] sm:$0xff]
    %v5064 = vld [vmem:[%s4555 + $0x300] sm:$0xff]
    %v5065 = vld [vmem:[%s4555 + $0x308] sm:$0xff]
    %v5066 = vld [vmem:[%s4555 + $0x318] sm:$0xff]
    %v5067 = vld [vmem:[%s4555 + $0x320] sm:$0xff]
    %5068 = vst [vmem:[#allocation4 + $0x18] sm:$0xff] %v5004
    %5069 = vst [vmem:[#allocation4 + $0x60] sm:$0xff] %v5005
    %5070 = vst [vmem:[#allocation4 + $0xa8] sm:$0xff] %v5006
    %5071 = vst [vmem:[#allocation4 + $0xf0] sm:$0xff] %v5007
    %5072 = vst [vmem:[#allocation4 + $0x138] sm:$0xff] %v5008
    %5073 = vst [vmem:[#allocation4 + $0x180] sm:$0xff] %v5009
    %5074 = vst [vmem:[#allocation4 + $0x1c8] sm:$0xff] %v5010
    %5075 = vst [vmem:[#allocation4 + $0x210] sm:$0xff] %v5011
    %5076 = vst [vmem:[#allocation4 + $0x258] sm:$0xff] %v5012
    %5077 = vst [vmem:[#allocation4 + $0x2a0] sm:$0xff] %v5013
    %5078 = vst [vmem:[#allocation4 + $0x2e8] sm:$0xff] %v5014
    %5079 = vst [vmem:[#allocation4 + $0x330] sm:$0xff] %v5015
    %5080 = vst [vmem:[#allocation4 + $0x378] sm:$0xff] %v5016
    %5081 = vst [vmem:[#allocation4 + $0x3c0] sm:$0xff] %v5017
    %5082 = vst [vmem:[#allocation4 + $0x408] sm:$0xff] %v5018
    %5083 = vst [vmem:[#allocation4 + $0x450] sm:$0xff] %v5019
    %5084 = vst [vmem:[#allocation4 + $0x498] sm:$0xff] %v5020
    %5085 = vst [vmem:[#allocation4 + $0x4e0] sm:$0xff] %v5021
    %5086 = vst [vmem:[#allocation4 + $0x528] sm:$0xff] %v5022
    %5087 = vst [vmem:[#allocation4 + $0x570] sm:$0xff] %v5023
    %5088 = vst [vmem:[#allocation4 + $0x5b8] sm:$0xff] %v5024
    %5089 = vst [vmem:[#allocation4 + $0x600] sm:$0xff] %v5025
    %5090 = vst [vmem:[#allocation4 + $0x648] sm:$0xff] %v5026
    %5091 = vst [vmem:[#allocation4 + $0x690] sm:$0xff] %v5027
    %5092 = vst [vmem:[#allocation4 + $0x6d8] sm:$0xff] %v5028
    %5093 = vst [vmem:[#allocation4 + $0x720] sm:$0xff] %v5029
    %5094 = vst [vmem:[#allocation4 + $0x768] sm:$0xff] %v5030
    %5095 = vst [vmem:[#allocation4 + $0x7b0] sm:$0xff] %v5031
    %5096 = vst [vmem:[#allocation4 + $0x7f8] sm:$0xff] %v5032
    %5097 = vst [vmem:[#allocation4 + $0x840] sm:$0xff] %v5033
    %5098 = vst [vmem:[#allocation4 + $0x888] sm:$0xff] %v5034
    %5099 = vst [vmem:[#allocation4 + $0x8d0] sm:$0xff] %v5035
    %5100 = vst [vmem:[#allocation4 + $0x918] sm:$0xff] %v5036
    %5101 = vst [vmem:[#allocation4 + $0x960] sm:$0xff] %v5037
    %5102 = vst [vmem:[#allocation4 + $0x9a8] sm:$0xff] %v5038
    %5103 = vst [vmem:[#allocation4 + $0x9f0] sm:$0xff] %v5039
    %5104 = vst [vmem:[#allocation4 + $0xa38] sm:$0xff] %v5040
    %5105 = vst [vmem:[#allocation4 + $0xa80] sm:$0xff] %v5041
    %5106 = vst [vmem:[#allocation4 + $0xac8] sm:$0xff] %v5042
    %5107 = vst [vmem:[#allocation4 + $0xb10] sm:$0xff] %v5043
    %5108 = vst [vmem:[#allocation4 + $0xb58] sm:$0xff] %v5044
    %5109 = vst [vmem:[#allocation4 + $0xba0] sm:$0xff] %v5045
    %5110 = vst [vmem:[#allocation4 + $0xbe8] sm:$0xff] %v5046
    %5111 = vst [vmem:[#allocation4 + $0xc30] sm:$0xff] %v5047
    %5112 = vst [vmem:[#allocation4 + $0xc78] sm:$0xff] %v5048
    %5113 = vst [vmem:[#allocation4 + $0xcc0] sm:$0xff] %v5049
    %5114 = vst [vmem:[#allocation4 + $0xd08] sm:$0xff] %v5050
    %5115 = vst [vmem:[#allocation4 + $0xd50] sm:$0xff] %v5051
    %5116 = vst [vmem:[#allocation4 + $0xd98] sm:$0xff] %v5052
    %5117 = vst [vmem:[#allocation4 + $0xde0] sm:$0xff] %v5053
    %5118 = vst [vmem:[#allocation4 + $0xe28] sm:$0xff] %v5054
    %5119 = vst [vmem:[#allocation4 + $0xe70] sm:$0xff] %v5055
    %5120 = vst [vmem:[#allocation4 + $0xeb8] sm:$0xff] %v5056
    %5121 = vst [vmem:[#allocation4 + $0xf00] sm:$0xff] %v5057
    %5122 = vst [vmem:[#allocation4 + $0xf48] sm:$0xff] %v5058
    %5123 = vst [vmem:[#allocation4 + $0xf90] sm:$0xff] %v5059
    %5124 = vst [vmem:[#allocation4 + $0xfd8] sm:$0xff] %v5060
    %5125 = vst [vmem:[#allocation4 + $0x1020] sm:$0xff] %v5061
    %5126 = vst [vmem:[#allocation4 + $0x1068] sm:$0xff] %v5062
    %5127 = vst [vmem:[#allocation4 + $0x10b0] sm:$0xff] %v5063
    %5128 = vst [vmem:[#allocation4 + $0x10f8] sm:$0xff] %v5064
    %5129 = vst [vmem:[#allocation4 + $0x1140] sm:$0xff] %v5065
    %5130 = vst [vmem:[#allocation4 + $0x1188] sm:$0xff] %v5066
    %5131 = vst [vmem:[#allocation4 + $0x11d0] sm:$0xff] %v5067
    %v5132 = vld [vmem:[%s4555 + $0x1] sm:$0xff]
    %v5133 = vld [vmem:[%s4555 + $0x9] sm:$0xff]
    %v5134 = vld [vmem:[%s4555 + $0x19] sm:$0xff]
    %v5135 = vld [vmem:[%s4555 + $0x21] sm:$0xff]
    %v5136 = vld [vmem:[%s4555 + $0x31] sm:$0xff]
    %v5137 = vld [vmem:[%s4555 + $0x39] sm:$0xff]
    %v5138 = vld [vmem:[%s4555 + $0x49] sm:$0xff]
    %v5139 = vld [vmem:[%s4555 + $0x51] sm:$0xff]
    %v5140 = vld [vmem:[%s4555 + $0x61] sm:$0xff]
    %v5141 = vld [vmem:[%s4555 + $0x69] sm:$0xff]
    %v5142 = vld [vmem:[%s4555 + $0x79] sm:$0xff]
    %v5143 = vld [vmem:[%s4555 + $0x81] sm:$0xff]
    %v5144 = vld [vmem:[%s4555 + $0x91] sm:$0xff]
    %v5145 = vld [vmem:[%s4555 + $0x99] sm:$0xff]
    %v5146 = vld [vmem:[%s4555 + $0xa9] sm:$0xff]
    %v5147 = vld [vmem:[%s4555 + $0xb1] sm:$0xff]
    %v5148 = vld [vmem:[%s4555 + $0xc1] sm:$0xff]
    %v5149 = vld [vmem:[%s4555 + $0xc9] sm:$0xff]
    %v5150 = vld [vmem:[%s4555 + $0xd9] sm:$0xff]
    %v5151 = vld [vmem:[%s4555 + $0xe1] sm:$0xff]
    %v5152 = vld [vmem:[%s4555 + $0xf1] sm:$0xff]
    %v5153 = vld [vmem:[%s4555 + $0xf9] sm:$0xff]
    %v5154 = vld [vmem:[%s4555 + $0x109] sm:$0xff]
    %v5155 = vld [vmem:[%s4555 + $0x111] sm:$0xff]
    %v5156 = vld [vmem:[%s4555 + $0x121] sm:$0xff]
    %v5157 = vld [vmem:[%s4555 + $0x129] sm:$0xff]
    %v5158 = vld [vmem:[%s4555 + $0x139] sm:$0xff]
    %v5159 = vld [vmem:[%s4555 + $0x141] sm:$0xff]
    %v5160 = vld [vmem:[%s4555 + $0x151] sm:$0xff]
    %v5161 = vld [vmem:[%s4555 + $0x159] sm:$0xff]
    %v5162 = vld [vmem:[%s4555 + $0x169] sm:$0xff]
    %v5163 = vld [vmem:[%s4555 + $0x171] sm:$0xff]
    %v5164 = vld [vmem:[%s4555 + $0x1b1] sm:$0xff]
    %v5165 = vld [vmem:[%s4555 + $0x1b9] sm:$0xff]
    %v5166 = vld [vmem:[%s4555 + $0x1c9] sm:$0xff]
    %v5167 = vld [vmem:[%s4555 + $0x1d1] sm:$0xff]
    %v5168 = vld [vmem:[%s4555 + $0x1e1] sm:$0xff]
    %v5169 = vld [vmem:[%s4555 + $0x1e9] sm:$0xff]
    %v5170 = vld [vmem:[%s4555 + $0x1f9] sm:$0xff]
    %v5171 = vld [vmem:[%s4555 + $0x201] sm:$0xff]
    %v5172 = vld [vmem:[%s4555 + $0x211] sm:$0xff]
    %v5173 = vld [vmem:[%s4555 + $0x219] sm:$0xff]
    %v5174 = vld [vmem:[%s4555 + $0x229] sm:$0xff]
    %v5175 = vld [vmem:[%s4555 + $0x231] sm:$0xff]
    %v5176 = vld [vmem:[%s4555 + $0x241] sm:$0xff]
    %v5177 = vld [vmem:[%s4555 + $0x249] sm:$0xff]
    %v5178 = vld [vmem:[%s4555 + $0x259] sm:$0xff]
    %v5179 = vld [vmem:[%s4555 + $0x261] sm:$0xff]
    %v5180 = vld [vmem:[%s4555 + $0x271] sm:$0xff]
    %v5181 = vld [vmem:[%s4555 + $0x279] sm:$0xff]
    %v5182 = vld [vmem:[%s4555 + $0x289] sm:$0xff]
    %v5183 = vld [vmem:[%s4555 + $0x291] sm:$0xff]
    %v5184 = vld [vmem:[%s4555 + $0x2a1] sm:$0xff]
    %v5185 = vld [vmem:[%s4555 + $0x2a9] sm:$0xff]
    %v5186 = vld [vmem:[%s4555 + $0x2b9] sm:$0xff]
    %v5187 = vld [vmem:[%s4555 + $0x2c1] sm:$0xff]
    %v5188 = vld [vmem:[%s4555 + $0x2d1] sm:$0xff]
    %v5189 = vld [vmem:[%s4555 + $0x2d9] sm:$0xff]
    %v5190 = vld [vmem:[%s4555 + $0x2e9] sm:$0xff]
    %v5191 = vld [vmem:[%s4555 + $0x2f1] sm:$0xff]
    %v5192 = vld [vmem:[%s4555 + $0x301] sm:$0xff]
    %v5193 = vld [vmem:[%s4555 + $0x309] sm:$0xff]
    %v5194 = vld [vmem:[%s4555 + $0x319] sm:$0xff]
    %v5195 = vld [vmem:[%s4555 + $0x321] sm:$0xff]
    %5196 = vst [vmem:[#allocation4 + $0x20] sm:$0xff] %v5132
    %5197 = vst [vmem:[#allocation4 + $0x68] sm:$0xff] %v5133
    %5198 = vst [vmem:[#allocation4 + $0xb0] sm:$0xff] %v5134
    %5199 = vst [vmem:[#allocation4 + $0xf8] sm:$0xff] %v5135
    %5200 = vst [vmem:[#allocation4 + $0x140] sm:$0xff] %v5136
    %5201 = vst [vmem:[#allocation4 + $0x188] sm:$0xff] %v5137
    %5202 = vst [vmem:[#allocation4 + $0x1d0] sm:$0xff] %v5138
    %5203 = vst [vmem:[#allocation4 + $0x218] sm:$0xff] %v5139
    %5204 = vst [vmem:[#allocation4 + $0x260] sm:$0xff] %v5140
    %5205 = vst [vmem:[#allocation4 + $0x2a8] sm:$0xff] %v5141
    %5206 = vst [vmem:[#allocation4 + $0x2f0] sm:$0xff] %v5142
    %5207 = vst [vmem:[#allocation4 + $0x338] sm:$0xff] %v5143
    %5208 = vst [vmem:[#allocation4 + $0x380] sm:$0xff] %v5144
    %5209 = vst [vmem:[#allocation4 + $0x3c8] sm:$0xff] %v5145
    %5210 = vst [vmem:[#allocation4 + $0x410] sm:$0xff] %v5146
    %5211 = vst [vmem:[#allocation4 + $0x458] sm:$0xff] %v5147
    %5212 = vst [vmem:[#allocation4 + $0x4a0] sm:$0xff] %v5148
    %5213 = vst [vmem:[#allocation4 + $0x4e8] sm:$0xff] %v5149
    %5214 = vst [vmem:[#allocation4 + $0x530] sm:$0xff] %v5150
    %5215 = vst [vmem:[#allocation4 + $0x578] sm:$0xff] %v5151
    %5216 = vst [vmem:[#allocation4 + $0x5c0] sm:$0xff] %v5152
    %5217 = vst [vmem:[#allocation4 + $0x608] sm:$0xff] %v5153
    %5218 = vst [vmem:[#allocation4 + $0x650] sm:$0xff] %v5154
    %5219 = vst [vmem:[#allocation4 + $0x698] sm:$0xff] %v5155
    %5220 = vst [vmem:[#allocation4 + $0x6e0] sm:$0xff] %v5156
    %5221 = vst [vmem:[#allocation4 + $0x728] sm:$0xff] %v5157
    %5222 = vst [vmem:[#allocation4 + $0x770] sm:$0xff] %v5158
    %5223 = vst [vmem:[#allocation4 + $0x7b8] sm:$0xff] %v5159
    %5224 = vst [vmem:[#allocation4 + $0x800] sm:$0xff] %v5160
    %5225 = vst [vmem:[#allocation4 + $0x848] sm:$0xff] %v5161
    %5226 = vst [vmem:[#allocation4 + $0x890] sm:$0xff] %v5162
    %5227 = vst [vmem:[#allocation4 + $0x8d8] sm:$0xff] %v5163
    %5228 = vst [vmem:[#allocation4 + $0x920] sm:$0xff] %v5164
    %5229 = vst [vmem:[#allocation4 + $0x968] sm:$0xff] %v5165
    %5230 = vst [vmem:[#allocation4 + $0x9b0] sm:$0xff] %v5166
    %5231 = vst [vmem:[#allocation4 + $0x9f8] sm:$0xff] %v5167
    %5232 = vst [vmem:[#allocation4 + $0xa40] sm:$0xff] %v5168
    %5233 = vst [vmem:[#allocation4 + $0xa88] sm:$0xff] %v5169
    %5234 = vst [vmem:[#allocation4 + $0xad0] sm:$0xff] %v5170
    %5235 = vst [vmem:[#allocation4 + $0xb18] sm:$0xff] %v5171
    %5236 = vst [vmem:[#allocation4 + $0xb60] sm:$0xff] %v5172
    %5237 = vst [vmem:[#allocation4 + $0xba8] sm:$0xff] %v5173
    %5238 = vst [vmem:[#allocation4 + $0xbf0] sm:$0xff] %v5174
    %5239 = vst [vmem:[#allocation4 + $0xc38] sm:$0xff] %v5175
    %5240 = vst [vmem:[#allocation4 + $0xc80] sm:$0xff] %v5176
    %5241 = vst [vmem:[#allocation4 + $0xcc8] sm:$0xff] %v5177
    %5242 = vst [vmem:[#allocation4 + $0xd10] sm:$0xff] %v5178
    %5243 = vst [vmem:[#allocation4 + $0xd58] sm:$0xff] %v5179
    %5244 = vst [vmem:[#allocation4 + $0xda0] sm:$0xff] %v5180
    %5245 = vst [vmem:[#allocation4 + $0xde8] sm:$0xff] %v5181
    %5246 = vst [vmem:[#allocation4 + $0xe30] sm:$0xff] %v5182
    %5247 = vst [vmem:[#allocation4 + $0xe78] sm:$0xff] %v5183
    %5248 = vst [vmem:[#allocation4 + $0xec0] sm:$0xff] %v5184
    %5249 = vst [vmem:[#allocation4 + $0xf08] sm:$0xff] %v5185
    %5250 = vst [vmem:[#allocation4 + $0xf50] sm:$0xff] %v5186
    %5251 = vst [vmem:[#allocation4 + $0xf98] sm:$0xff] %v5187
    %5252 = vst [vmem:[#allocation4 + $0xfe0] sm:$0xff] %v5188
    %5253 = vst [vmem:[#allocation4 + $0x1028] sm:$0xff] %v5189
    %5254 = vst [vmem:[#allocation4 + $0x1070] sm:$0xff] %v5190
    %5255 = vst [vmem:[#allocation4 + $0x10b8] sm:$0xff] %v5191
    %5256 = vst [vmem:[#allocation4 + $0x1100] sm:$0xff] %v5192
    %5257 = vst [vmem:[#allocation4 + $0x1148] sm:$0xff] %v5193
    %5258 = vst [vmem:[#allocation4 + $0x1190] sm:$0xff] %v5194
    %5259 = vst [vmem:[#allocation4 + $0x11d8] sm:$0xff] %v5195
    %v5260 = vld [vmem:[%s4555 + $0x2] sm:$0xff]
    %v5261 = vld [vmem:[%s4555 + $0xa] sm:$0xff]
    %v5262 = vld [vmem:[%s4555 + $0x1a] sm:$0xff]
    %v5263 = vld [vmem:[%s4555 + $0x22] sm:$0xff]
    %v5264 = vld [vmem:[%s4555 + $0x32] sm:$0xff]
    %v5265 = vld [vmem:[%s4555 + $0x3a] sm:$0xff]
    %v5266 = vld [vmem:[%s4555 + $0x4a] sm:$0xff]
    %v5267 = vld [vmem:[%s4555 + $0x52] sm:$0xff]
    %v5268 = vld [vmem:[%s4555 + $0x62] sm:$0xff]
    %v5269 = vld [vmem:[%s4555 + $0x6a] sm:$0xff]
    %v5270 = vld [vmem:[%s4555 + $0x7a] sm:$0xff]
    %v5271 = vld [vmem:[%s4555 + $0x82] sm:$0xff]
    %v5272 = vld [vmem:[%s4555 + $0x92] sm:$0xff]
    %v5273 = vld [vmem:[%s4555 + $0x9a] sm:$0xff]
    %v5274 = vld [vmem:[%s4555 + $0xaa] sm:$0xff]
    %v5275 = vld [vmem:[%s4555 + $0xb2] sm:$0xff]
    %v5276 = vld [vmem:[%s4555 + $0xc2] sm:$0xff]
    %v5277 = vld [vmem:[%s4555 + $0xca] sm:$0xff]
    %v5278 = vld [vmem:[%s4555 + $0xda] sm:$0xff]
    %v5279 = vld [vmem:[%s4555 + $0xe2] sm:$0xff]
    %v5280 = vld [vmem:[%s4555 + $0xf2] sm:$0xff]
    %v5281 = vld [vmem:[%s4555 + $0xfa] sm:$0xff]
    %v5282 = vld [vmem:[%s4555 + $0x10a] sm:$0xff]
    %v5283 = vld [vmem:[%s4555 + $0x112] sm:$0xff]
    %v5284 = vld [vmem:[%s4555 + $0x122] sm:$0xff]
    %v5285 = vld [vmem:[%s4555 + $0x12a] sm:$0xff]
    %v5286 = vld [vmem:[%s4555 + $0x13a] sm:$0xff]
    %v5287 = vld [vmem:[%s4555 + $0x142] sm:$0xff]
    %v5288 = vld [vmem:[%s4555 + $0x152] sm:$0xff]
    %v5289 = vld [vmem:[%s4555 + $0x15a] sm:$0xff]
    %v5290 = vld [vmem:[%s4555 + $0x16a] sm:$0xff]
    %v5291 = vld [vmem:[%s4555 + $0x172] sm:$0xff]
    %v5292 = vld [vmem:[%s4555 + $0x1b2] sm:$0xff]
    %v5293 = vld [vmem:[%s4555 + $0x1ba] sm:$0xff]
    %v5294 = vld [vmem:[%s4555 + $0x1ca] sm:$0xff]
    %v5295 = vld [vmem:[%s4555 + $0x1d2] sm:$0xff]
    %v5296 = vld [vmem:[%s4555 + $0x1e2] sm:$0xff]
    %v5297 = vld [vmem:[%s4555 + $0x1ea] sm:$0xff]
    %v5298 = vld [vmem:[%s4555 + $0x1fa] sm:$0xff]
    %v5299 = vld [vmem:[%s4555 + $0x202] sm:$0xff]
    %v5300 = vld [vmem:[%s4555 + $0x212] sm:$0xff]
    %v5301 = vld [vmem:[%s4555 + $0x21a] sm:$0xff]
    %v5302 = vld [vmem:[%s4555 + $0x22a] sm:$0xff]
    %v5303 = vld [vmem:[%s4555 + $0x232] sm:$0xff]
    %v5304 = vld [vmem:[%s4555 + $0x242] sm:$0xff]
    %v5305 = vld [vmem:[%s4555 + $0x24a] sm:$0xff]
    %v5306 = vld [vmem:[%s4555 + $0x25a] sm:$0xff]
    %v5307 = vld [vmem:[%s4555 + $0x262] sm:$0xff]
    %v5308 = vld [vmem:[%s4555 + $0x272] sm:$0xff]
    %v5309 = vld [vmem:[%s4555 + $0x27a] sm:$0xff]
    %v5310 = vld [vmem:[%s4555 + $0x28a] sm:$0xff]
    %v5311 = vld [vmem:[%s4555 + $0x292] sm:$0xff]
    %v5312 = vld [vmem:[%s4555 + $0x2a2] sm:$0xff]
    %v5313 = vld [vmem:[%s4555 + $0x2aa] sm:$0xff]
    %v5314 = vld [vmem:[%s4555 + $0x2ba] sm:$0xff]
    %v5315 = vld [vmem:[%s4555 + $0x2c2] sm:$0xff]
    %v5316 = vld [vmem:[%s4555 + $0x2d2] sm:$0xff]
    %v5317 = vld [vmem:[%s4555 + $0x2da] sm:$0xff]
    %v5318 = vld [vmem:[%s4555 + $0x2ea] sm:$0xff]
    %v5319 = vld [vmem:[%s4555 + $0x2f2] sm:$0xff]
    %v5320 = vld [vmem:[%s4555 + $0x302] sm:$0xff]
    %v5321 = vld [vmem:[%s4555 + $0x30a] sm:$0xff]
    %v5322 = vld [vmem:[%s4555 + $0x31a] sm:$0xff]
    %v5323 = vld [vmem:[%s4555 + $0x322] sm:$0xff]
    %5324 = vst [vmem:[#allocation4 + $0x28] sm:$0xff] %v5260
    %5325 = vst [vmem:[#allocation4 + $0x70] sm:$0xff] %v5261
    %5326 = vst [vmem:[#allocation4 + $0xb8] sm:$0xff] %v5262
    %5327 = vst [vmem:[#allocation4 + $0x100] sm:$0xff] %v5263
    %5328 = vst [vmem:[#allocation4 + $0x148] sm:$0xff] %v5264
    %5329 = vst [vmem:[#allocation4 + $0x190] sm:$0xff] %v5265
    %5330 = vst [vmem:[#allocation4 + $0x1d8] sm:$0xff] %v5266
    %5331 = vst [vmem:[#allocation4 + $0x220] sm:$0xff] %v5267
    %5332 = vst [vmem:[#allocation4 + $0x268] sm:$0xff] %v5268
    %5333 = vst [vmem:[#allocation4 + $0x2b0] sm:$0xff] %v5269
    %5334 = vst [vmem:[#allocation4 + $0x2f8] sm:$0xff] %v5270
    %5335 = vst [vmem:[#allocation4 + $0x340] sm:$0xff] %v5271
    %5336 = vst [vmem:[#allocation4 + $0x388] sm:$0xff] %v5272
    %5337 = vst [vmem:[#allocation4 + $0x3d0] sm:$0xff] %v5273
    %5338 = vst [vmem:[#allocation4 + $0x418] sm:$0xff] %v5274
    %5339 = vst [vmem:[#allocation4 + $0x460] sm:$0xff] %v5275
    %5340 = vst [vmem:[#allocation4 + $0x4a8] sm:$0xff] %v5276
    %5341 = vst [vmem:[#allocation4 + $0x4f0] sm:$0xff] %v5277
    %5342 = vst [vmem:[#allocation4 + $0x538] sm:$0xff] %v5278
    %5343 = vst [vmem:[#allocation4 + $0x580] sm:$0xff] %v5279
    %5344 = vst [vmem:[#allocation4 + $0x5c8] sm:$0xff] %v5280
    %5345 = vst [vmem:[#allocation4 + $0x610] sm:$0xff] %v5281
    %5346 = vst [vmem:[#allocation4 + $0x658] sm:$0xff] %v5282
    %5347 = vst [vmem:[#allocation4 + $0x6a0] sm:$0xff] %v5283
    %5348 = vst [vmem:[#allocation4 + $0x6e8] sm:$0xff] %v5284
    %5349 = vst [vmem:[#allocation4 + $0x730] sm:$0xff] %v5285
    %5350 = vst [vmem:[#allocation4 + $0x778] sm:$0xff] %v5286
    %5351 = vst [vmem:[#allocation4 + $0x7c0] sm:$0xff] %v5287
    %5352 = vst [vmem:[#allocation4 + $0x808] sm:$0xff] %v5288
    %5353 = vst [vmem:[#allocation4 + $0x850] sm:$0xff] %v5289
    %5354 = vst [vmem:[#allocation4 + $0x898] sm:$0xff] %v5290
    %5355 = vst [vmem:[#allocation4 + $0x8e0] sm:$0xff] %v5291
    %5356 = vst [vmem:[#allocation4 + $0x928] sm:$0xff] %v5292
    %5357 = vst [vmem:[#allocation4 + $0x970] sm:$0xff] %v5293
    %5358 = vst [vmem:[#allocation4 + $0x9b8] sm:$0xff] %v5294
    %5359 = vst [vmem:[#allocation4 + $0xa00] sm:$0xff] %v5295
    %5360 = vst [vmem:[#allocation4 + $0xa48] sm:$0xff] %v5296
    %5361 = vst [vmem:[#allocation4 + $0xa90] sm:$0xff] %v5297
    %5362 = vst [vmem:[#allocation4 + $0xad8] sm:$0xff] %v5298
    %5363 = vst [vmem:[#allocation4 + $0xb20] sm:$0xff] %v5299
    %5364 = vst [vmem:[#allocation4 + $0xb68] sm:$0xff] %v5300
    %5365 = vst [vmem:[#allocation4 + $0xbb0] sm:$0xff] %v5301
    %5366 = vst [vmem:[#allocation4 + $0xbf8] sm:$0xff] %v5302
    %5367 = vst [vmem:[#allocation4 + $0xc40] sm:$0xff] %v5303
    %5368 = vst [vmem:[#allocation4 + $0xc88] sm:$0xff] %v5304
    %5369 = vst [vmem:[#allocation4 + $0xcd0] sm:$0xff] %v5305
    %5370 = vst [vmem:[#allocation4 + $0xd18] sm:$0xff] %v5306
    %5371 = vst [vmem:[#allocation4 + $0xd60] sm:$0xff] %v5307
    %5372 = vst [vmem:[#allocation4 + $0xda8] sm:$0xff] %v5308
    %5373 = vst [vmem:[#allocation4 + $0xdf0] sm:$0xff] %v5309
    %5374 = vst [vmem:[#allocation4 + $0xe38] sm:$0xff] %v5310
    %5375 = vst [vmem:[#allocation4 + $0xe80] sm:$0xff] %v5311
    %5376 = vst [vmem:[#allocation4 + $0xec8] sm:$0xff] %v5312
    %5377 = vst [vmem:[#allocation4 + $0xf10] sm:$0xff] %v5313
    %5378 = vst [vmem:[#allocation4 + $0xf58] sm:$0xff] %v5314
    %5379 = vst [vmem:[#allocation4 + $0xfa0] sm:$0xff] %v5315
    %5380 = vst [vmem:[#allocation4 + $0xfe8] sm:$0xff] %v5316
    %5381 = vst [vmem:[#allocation4 + $0x1030] sm:$0xff] %v5317
    %5382 = vst [vmem:[#allocation4 + $0x1078] sm:$0xff] %v5318
    %5383 = vst [vmem:[#allocation4 + $0x10c0] sm:$0xff] %v5319
    %5384 = vst [vmem:[#allocation4 + $0x1108] sm:$0xff] %v5320
    %5385 = vst [vmem:[#allocation4 + $0x1150] sm:$0xff] %v5321
    %5386 = vst [vmem:[#allocation4 + $0x1198] sm:$0xff] %v5322
    %5387 = vst [vmem:[#allocation4 + $0x11e0] sm:$0xff] %v5323
    %s5388 = scalar_lea.vmem [#allocation3], 48
    %v5389 = vld [vmem:[%s5388] sm:$0xff]
    %v5390 = vld [vmem:[%s5388 + $0x8] sm:$0xff]
    %v5391 = vld [vmem:[%s5388 + $0x18] sm:$0xff]
    %v5392 = vld [vmem:[%s5388 + $0x20] sm:$0xff]
    %v5393 = vld [vmem:[%s5388 + $0x30] sm:$0xff]
    %v5394 = vld [vmem:[%s5388 + $0x38] sm:$0xff]
    %v5395 = vld [vmem:[%s5388 + $0x48] sm:$0xff]
    %v5396 = vld [vmem:[%s5388 + $0x50] sm:$0xff]
    %v5397 = vld [vmem:[%s5388 + $0x60] sm:$0xff]
    %v5398 = vld [vmem:[%s5388 + $0x68] sm:$0xff]
    %v5399 = vld [vmem:[%s5388 + $0x78] sm:$0xff]
    %v5400 = vld [vmem:[%s5388 + $0x80] sm:$0xff]
    %v5401 = vld [vmem:[%s5388 + $0x90] sm:$0xff]
    %v5402 = vld [vmem:[%s5388 + $0x98] sm:$0xff]
    %v5403 = vld [vmem:[%s5388 + $0xa8] sm:$0xff]
    %v5404 = vld [vmem:[%s5388 + $0xb0] sm:$0xff]
    %v5405 = vld [vmem:[%s5388 + $0xc0] sm:$0xff]
    %v5406 = vld [vmem:[%s5388 + $0xc8] sm:$0xff]
    %v5407 = vld [vmem:[%s5388 + $0xd8] sm:$0xff]
    %v5408 = vld [vmem:[%s5388 + $0xe0] sm:$0xff]
    %v5409 = vld [vmem:[%s5388 + $0xf0] sm:$0xff]
    %v5410 = vld [vmem:[%s5388 + $0xf8] sm:$0xff]
    %v5411 = vld [vmem:[%s5388 + $0x108] sm:$0xff]
    %v5412 = vld [vmem:[%s5388 + $0x110] sm:$0xff]
    %v5413 = vld [vmem:[%s5388 + $0x120] sm:$0xff]
    %v5414 = vld [vmem:[%s5388 + $0x128] sm:$0xff]
    %v5415 = vld [vmem:[%s5388 + $0x138] sm:$0xff]
    %v5416 = vld [vmem:[%s5388 + $0x140] sm:$0xff]
    %v5417 = vld [vmem:[%s5388 + $0x150] sm:$0xff]
    %v5418 = vld [vmem:[%s5388 + $0x158] sm:$0xff]
    %v5419 = vld [vmem:[%s5388 + $0x168] sm:$0xff]
    %v5420 = vld [vmem:[%s5388 + $0x170] sm:$0xff]
    %v5421 = vld [vmem:[%s5388 + $0x1b0] sm:$0xff]
    %v5422 = vld [vmem:[%s5388 + $0x1b8] sm:$0xff]
    %v5423 = vld [vmem:[%s5388 + $0x1c8] sm:$0xff]
    %v5424 = vld [vmem:[%s5388 + $0x1d0] sm:$0xff]
    %v5425 = vld [vmem:[%s5388 + $0x1e0] sm:$0xff]
    %v5426 = vld [vmem:[%s5388 + $0x1e8] sm:$0xff]
    %v5427 = vld [vmem:[%s5388 + $0x1f8] sm:$0xff]
    %v5428 = vld [vmem:[%s5388 + $0x200] sm:$0xff]
    %v5429 = vld [vmem:[%s5388 + $0x210] sm:$0xff]
    %v5430 = vld [vmem:[%s5388 + $0x218] sm:$0xff]
    %v5431 = vld [vmem:[%s5388 + $0x228] sm:$0xff]
    %v5432 = vld [vmem:[%s5388 + $0x230] sm:$0xff]
    %v5433 = vld [vmem:[%s5388 + $0x240] sm:$0xff]
    %v5434 = vld [vmem:[%s5388 + $0x248] sm:$0xff]
    %v5435 = vld [vmem:[%s5388 + $0x258] sm:$0xff]
    %v5436 = vld [vmem:[%s5388 + $0x260] sm:$0xff]
    %v5437 = vld [vmem:[%s5388 + $0x270] sm:$0xff]
    %v5438 = vld [vmem:[%s5388 + $0x278] sm:$0xff]
    %v5439 = vld [vmem:[%s5388 + $0x288] sm:$0xff]
    %v5440 = vld [vmem:[%s5388 + $0x290] sm:$0xff]
    %v5441 = vld [vmem:[%s5388 + $0x2a0] sm:$0xff]
    %v5442 = vld [vmem:[%s5388 + $0x2a8] sm:$0xff]
    %v5443 = vld [vmem:[%s5388 + $0x2b8] sm:$0xff]
    %v5444 = vld [vmem:[%s5388 + $0x2c0] sm:$0xff]
    %v5445 = vld [vmem:[%s5388 + $0x2d0] sm:$0xff]
    %v5446 = vld [vmem:[%s5388 + $0x2d8] sm:$0xff]
    %v5447 = vld [vmem:[%s5388 + $0x2e8] sm:$0xff]
    %v5448 = vld [vmem:[%s5388 + $0x2f0] sm:$0xff]
    %v5449 = vld [vmem:[%s5388 + $0x300] sm:$0xff]
    %v5450 = vld [vmem:[%s5388 + $0x308] sm:$0xff]
    %v5451 = vld [vmem:[%s5388 + $0x318] sm:$0xff]
    %v5452 = vld [vmem:[%s5388 + $0x320] sm:$0xff]
    %5453 = vst [vmem:[#allocation4 + $0x30] sm:$0xff] %v5389
    %5454 = vst [vmem:[#allocation4 + $0x78] sm:$0xff] %v5390
    %5455 = vst [vmem:[#allocation4 + $0xc0] sm:$0xff] %v5391
    %5456 = vst [vmem:[#allocation4 + $0x108] sm:$0xff] %v5392
    %5457 = vst [vmem:[#allocation4 + $0x150] sm:$0xff] %v5393
    %5458 = vst [vmem:[#allocation4 + $0x198] sm:$0xff] %v5394
    %5459 = vst [vmem:[#allocation4 + $0x1e0] sm:$0xff] %v5395
    %5460 = vst [vmem:[#allocation4 + $0x228] sm:$0xff] %v5396
    %5461 = vst [vmem:[#allocation4 + $0x270] sm:$0xff] %v5397
    %5462 = vst [vmem:[#allocation4 + $0x2b8] sm:$0xff] %v5398
    %5463 = vst [vmem:[#allocation4 + $0x300] sm:$0xff] %v5399
    %5464 = vst [vmem:[#allocation4 + $0x348] sm:$0xff] %v5400
    %5465 = vst [vmem:[#allocation4 + $0x390] sm:$0xff] %v5401
    %5466 = vst [vmem:[#allocation4 + $0x3d8] sm:$0xff] %v5402
    %5467 = vst [vmem:[#allocation4 + $0x420] sm:$0xff] %v5403
    %5468 = vst [vmem:[#allocation4 + $0x468] sm:$0xff] %v5404
    %5469 = vst [vmem:[#allocation4 + $0x4b0] sm:$0xff] %v5405
    %5470 = vst [vmem:[#allocation4 + $0x4f8] sm:$0xff] %v5406
    %5471 = vst [vmem:[#allocation4 + $0x540] sm:$0xff] %v5407
    %5472 = vst [vmem:[#allocation4 + $0x588] sm:$0xff] %v5408
    %5473 = vst [vmem:[#allocation4 + $0x5d0] sm:$0xff] %v5409
    %5474 = vst [vmem:[#allocation4 + $0x618] sm:$0xff] %v5410
    %5475 = vst [vmem:[#allocation4 + $0x660] sm:$0xff] %v5411
    %5476 = vst [vmem:[#allocation4 + $0x6a8] sm:$0xff] %v5412
    %5477 = vst [vmem:[#allocation4 + $0x6f0] sm:$0xff] %v5413
    %5478 = vst [vmem:[#allocation4 + $0x738] sm:$0xff] %v5414
    %5479 = vst [vmem:[#allocation4 + $0x780] sm:$0xff] %v5415
    %5480 = vst [vmem:[#allocation4 + $0x7c8] sm:$0xff] %v5416
    %5481 = vst [vmem:[#allocation4 + $0x810] sm:$0xff] %v5417
    %5482 = vst [vmem:[#allocation4 + $0x858] sm:$0xff] %v5418
    %5483 = vst [vmem:[#allocation4 + $0x8a0] sm:$0xff] %v5419
    %5484 = vst [vmem:[#allocation4 + $0x8e8] sm:$0xff] %v5420
    %5485 = vst [vmem:[#allocation4 + $0x930] sm:$0xff] %v5421
    %5486 = vst [vmem:[#allocation4 + $0x978] sm:$0xff] %v5422
    %5487 = vst [vmem:[#allocation4 + $0x9c0] sm:$0xff] %v5423
    %5488 = vst [vmem:[#allocation4 + $0xa08] sm:$0xff] %v5424
    %5489 = vst [vmem:[#allocation4 + $0xa50] sm:$0xff] %v5425
    %5490 = vst [vmem:[#allocation4 + $0xa98] sm:$0xff] %v5426
    %5491 = vst [vmem:[#allocation4 + $0xae0] sm:$0xff] %v5427
    %5492 = vst [vmem:[#allocation4 + $0xb28] sm:$0xff] %v5428
    %5493 = vst [vmem:[#allocation4 + $0xb70] sm:$0xff] %v5429
    %5494 = vst [vmem:[#allocation4 + $0xbb8] sm:$0xff] %v5430
    %5495 = vst [vmem:[#allocation4 + $0xc00] sm:$0xff] %v5431
    %5496 = vst [vmem:[#allocation4 + $0xc48] sm:$0xff] %v5432
    %5497 = vst [vmem:[#allocation4 + $0xc90] sm:$0xff] %v5433
    %5498 = vst [vmem:[#allocation4 + $0xcd8] sm:$0xff] %v5434
    %5499 = vst [vmem:[#allocation4 + $0xd20] sm:$0xff] %v5435
    %5500 = vst [vmem:[#allocation4 + $0xd68] sm:$0xff] %v5436
    %5501 = vst [vmem:[#allocation4 + $0xdb0] sm:$0xff] %v5437
    %5502 = vst [vmem:[#allocation4 + $0xdf8] sm:$0xff] %v5438
    %5503 = vst [vmem:[#allocation4 + $0xe40] sm:$0xff] %v5439
    %5504 = vst [vmem:[#allocation4 + $0xe88] sm:$0xff] %v5440
    %5505 = vst [vmem:[#allocation4 + $0xed0] sm:$0xff] %v5441
    %5506 = vst [vmem:[#allocation4 + $0xf18] sm:$0xff] %v5442
    %5507 = vst [vmem:[#allocation4 + $0xf60] sm:$0xff] %v5443
    %5508 = vst [vmem:[#allocation4 + $0xfa8] sm:$0xff] %v5444
    %5509 = vst [vmem:[#allocation4 + $0xff0] sm:$0xff] %v5445
    %5510 = vst [vmem:[#allocation4 + $0x1038] sm:$0xff] %v5446
    %5511 = vst [vmem:[#allocation4 + $0x1080] sm:$0xff] %v5447
    %5512 = vst [vmem:[#allocation4 + $0x10c8] sm:$0xff] %v5448
    %5513 = vst [vmem:[#allocation4 + $0x1110] sm:$0xff] %v5449
    %5514 = vst [vmem:[#allocation4 + $0x1158] sm:$0xff] %v5450
    %5515 = vst [vmem:[#allocation4 + $0x11a0] sm:$0xff] %v5451
    %5516 = vst [vmem:[#allocation4 + $0x11e8] sm:$0xff] %v5452
    %v5517 = vld [vmem:[%s5388 + $0x1] sm:$0xff]
    %v5518 = vld [vmem:[%s5388 + $0x9] sm:$0xff]
    %v5519 = vld [vmem:[%s5388 + $0x19] sm:$0xff]
    %v5520 = vld [vmem:[%s5388 + $0x21] sm:$0xff]
    %v5521 = vld [vmem:[%s5388 + $0x31] sm:$0xff]
    %v5522 = vld [vmem:[%s5388 + $0x39] sm:$0xff]
    %v5523 = vld [vmem:[%s5388 + $0x49] sm:$0xff]
    %v5524 = vld [vmem:[%s5388 + $0x51] sm:$0xff]
    %v5525 = vld [vmem:[%s5388 + $0x61] sm:$0xff]
    %v5526 = vld [vmem:[%s5388 + $0x69] sm:$0xff]
    %v5527 = vld [vmem:[%s5388 + $0x79] sm:$0xff]
    %v5528 = vld [vmem:[%s5388 + $0x81] sm:$0xff]
    %v5529 = vld [vmem:[%s5388 + $0x91] sm:$0xff]
    %v5530 = vld [vmem:[%s5388 + $0x99] sm:$0xff]
    %v5531 = vld [vmem:[%s5388 + $0xa9] sm:$0xff]
    %v5532 = vld [vmem:[%s5388 + $0xb1] sm:$0xff]
    %v5533 = vld [vmem:[%s5388 + $0xc1] sm:$0xff]
    %v5534 = vld [vmem:[%s5388 + $0xc9] sm:$0xff]
    %v5535 = vld [vmem:[%s5388 + $0xd9] sm:$0xff]
    %v5536 = vld [vmem:[%s5388 + $0xe1] sm:$0xff]
    %v5537 = vld [vmem:[%s5388 + $0xf1] sm:$0xff]
    %v5538 = vld [vmem:[%s5388 + $0xf9] sm:$0xff]
    %v5539 = vld [vmem:[%s5388 + $0x109] sm:$0xff]
    %v5540 = vld [vmem:[%s5388 + $0x111] sm:$0xff]
    %v5541 = vld [vmem:[%s5388 + $0x121] sm:$0xff]
    %v5542 = vld [vmem:[%s5388 + $0x129] sm:$0xff]
    %v5543 = vld [vmem:[%s5388 + $0x139] sm:$0xff]
    %v5544 = vld [vmem:[%s5388 + $0x141] sm:$0xff]
    %v5545 = vld [vmem:[%s5388 + $0x151] sm:$0xff]
    %v5546 = vld [vmem:[%s5388 + $0x159] sm:$0xff]
    %v5547 = vld [vmem:[%s5388 + $0x169] sm:$0xff]
    %v5548 = vld [vmem:[%s5388 + $0x171] sm:$0xff]
    %v5549 = vld [vmem:[%s5388 + $0x1b1] sm:$0xff]
    %v5550 = vld [vmem:[%s5388 + $0x1b9] sm:$0xff]
    %v5551 = vld [vmem:[%s5388 + $0x1c9] sm:$0xff]
    %v5552 = vld [vmem:[%s5388 + $0x1d1] sm:$0xff]
    %v5553 = vld [vmem:[%s5388 + $0x1e1] sm:$0xff]
    %v5554 = vld [vmem:[%s5388 + $0x1e9] sm:$0xff]
    %v5555 = vld [vmem:[%s5388 + $0x1f9] sm:$0xff]
    %v5556 = vld [vmem:[%s5388 + $0x201] sm:$0xff]
    %v5557 = vld [vmem:[%s5388 + $0x211] sm:$0xff]
    %v5558 = vld [vmem:[%s5388 + $0x219] sm:$0xff]
    %v5559 = vld [vmem:[%s5388 + $0x229] sm:$0xff]
    %v5560 = vld [vmem:[%s5388 + $0x231] sm:$0xff]
    %v5561 = vld [vmem:[%s5388 + $0x241] sm:$0xff]
    %v5562 = vld [vmem:[%s5388 + $0x249] sm:$0xff]
    %v5563 = vld [vmem:[%s5388 + $0x259] sm:$0xff]
    %v5564 = vld [vmem:[%s5388 + $0x261] sm:$0xff]
    %v5565 = vld [vmem:[%s5388 + $0x271] sm:$0xff]
    %v5566 = vld [vmem:[%s5388 + $0x279] sm:$0xff]
    %v5567 = vld [vmem:[%s5388 + $0x289] sm:$0xff]
    %v5568 = vld [vmem:[%s5388 + $0x291] sm:$0xff]
    %v5569 = vld [vmem:[%s5388 + $0x2a1] sm:$0xff]
    %v5570 = vld [vmem:[%s5388 + $0x2a9] sm:$0xff]
    %v5571 = vld [vmem:[%s5388 + $0x2b9] sm:$0xff]
    %v5572 = vld [vmem:[%s5388 + $0x2c1] sm:$0xff]
    %v5573 = vld [vmem:[%s5388 + $0x2d1] sm:$0xff]
    %v5574 = vld [vmem:[%s5388 + $0x2d9] sm:$0xff]
    %v5575 = vld [vmem:[%s5388 + $0x2e9] sm:$0xff]
    %v5576 = vld [vmem:[%s5388 + $0x2f1] sm:$0xff]
    %v5577 = vld [vmem:[%s5388 + $0x301] sm:$0xff]
    %v5578 = vld [vmem:[%s5388 + $0x309] sm:$0xff]
    %v5579 = vld [vmem:[%s5388 + $0x319] sm:$0xff]
    %v5580 = vld [vmem:[%s5388 + $0x321] sm:$0xff]
    %5581 = vst [vmem:[#allocation4 + $0x38] sm:$0xff] %v5517
    %5582 = vst [vmem:[#allocation4 + $0x80] sm:$0xff] %v5518
    %5583 = vst [vmem:[#allocation4 + $0xc8] sm:$0xff] %v5519
    %5584 = vst [vmem:[#allocation4 + $0x110] sm:$0xff] %v5520
    %5585 = vst [vmem:[#allocation4 + $0x158] sm:$0xff] %v5521
    %5586 = vst [vmem:[#allocation4 + $0x1a0] sm:$0xff] %v5522
    %5587 = vst [vmem:[#allocation4 + $0x1e8] sm:$0xff] %v5523
    %5588 = vst [vmem:[#allocation4 + $0x230] sm:$0xff] %v5524
    %5589 = vst [vmem:[#allocation4 + $0x278] sm:$0xff] %v5525
    %5590 = vst [vmem:[#allocation4 + $0x2c0] sm:$0xff] %v5526
    %5591 = vst [vmem:[#allocation4 + $0x308] sm:$0xff] %v5527
    %5592 = vst [vmem:[#allocation4 + $0x350] sm:$0xff] %v5528
    %5593 = vst [vmem:[#allocation4 + $0x398] sm:$0xff] %v5529
    %5594 = vst [vmem:[#allocation4 + $0x3e0] sm:$0xff] %v5530
    %5595 = vst [vmem:[#allocation4 + $0x428] sm:$0xff] %v5531
    %5596 = vst [vmem:[#allocation4 + $0x470] sm:$0xff] %v5532
    %5597 = vst [vmem:[#allocation4 + $0x4b8] sm:$0xff] %v5533
    %5598 = vst [vmem:[#allocation4 + $0x500] sm:$0xff] %v5534
    %5599 = vst [vmem:[#allocation4 + $0x548] sm:$0xff] %v5535
    %5600 = vst [vmem:[#allocation4 + $0x590] sm:$0xff] %v5536
    %5601 = vst [vmem:[#allocation4 + $0x5d8] sm:$0xff] %v5537
    %5602 = vst [vmem:[#allocation4 + $0x620] sm:$0xff] %v5538
    %5603 = vst [vmem:[#allocation4 + $0x668] sm:$0xff] %v5539
    %5604 = vst [vmem:[#allocation4 + $0x6b0] sm:$0xff] %v5540
    %5605 = vst [vmem:[#allocation4 + $0x6f8] sm:$0xff] %v5541
    %5606 = vst [vmem:[#allocation4 + $0x740] sm:$0xff] %v5542
    %5607 = vst [vmem:[#allocation4 + $0x788] sm:$0xff] %v5543
    %5608 = vst [vmem:[#allocation4 + $0x7d0] sm:$0xff] %v5544
    %5609 = vst [vmem:[#allocation4 + $0x818] sm:$0xff] %v5545
    %5610 = vst [vmem:[#allocation4 + $0x860] sm:$0xff] %v5546
    %5611 = vst [vmem:[#allocation4 + $0x8a8] sm:$0xff] %v5547
    %5612 = vst [vmem:[#allocation4 + $0x8f0] sm:$0xff] %v5548
    %5613 = vst [vmem:[#allocation4 + $0x938] sm:$0xff] %v5549
    %5614 = vst [vmem:[#allocation4 + $0x980] sm:$0xff] %v5550
    %5615 = vst [vmem:[#allocation4 + $0x9c8] sm:$0xff] %v5551
    %5616 = vst [vmem:[#allocation4 + $0xa10] sm:$0xff] %v5552
    %5617 = vst [vmem:[#allocation4 + $0xa58] sm:$0xff] %v5553
    %5618 = vst [vmem:[#allocation4 + $0xaa0] sm:$0xff] %v5554
    %5619 = vst [vmem:[#allocation4 + $0xae8] sm:$0xff] %v5555
    %5620 = vst [vmem:[#allocation4 + $0xb30] sm:$0xff] %v5556
    %5621 = vst [vmem:[#allocation4 + $0xb78] sm:$0xff] %v5557
    %5622 = vst [vmem:[#allocation4 + $0xbc0] sm:$0xff] %v5558
    %5623 = vst [vmem:[#allocation4 + $0xc08] sm:$0xff] %v5559
    %5624 = vst [vmem:[#allocation4 + $0xc50] sm:$0xff] %v5560
    %5625 = vst [vmem:[#allocation4 + $0xc98] sm:$0xff] %v5561
    %5626 = vst [vmem:[#allocation4 + $0xce0] sm:$0xff] %v5562
    %5627 = vst [vmem:[#allocation4 + $0xd28] sm:$0xff] %v5563
    %5628 = vst [vmem:[#allocation4 + $0xd70] sm:$0xff] %v5564
    %5629 = vst [vmem:[#allocation4 + $0xdb8] sm:$0xff] %v5565
    %5630 = vst [vmem:[#allocation4 + $0xe00] sm:$0xff] %v5566
    %5631 = vst [vmem:[#allocation4 + $0xe48] sm:$0xff] %v5567
    %5632 = vst [vmem:[#allocation4 + $0xe90] sm:$0xff] %v5568
    %5633 = vst [vmem:[#allocation4 + $0xed8] sm:$0xff] %v5569
    %5634 = vst [vmem:[#allocation4 + $0xf20] sm:$0xff] %v5570
    %5635 = vst [vmem:[#allocation4 + $0xf68] sm:$0xff] %v5571
    %5636 = vst [vmem:[#allocation4 + $0xfb0] sm:$0xff] %v5572
    %5637 = vst [vmem:[#allocation4 + $0xff8] sm:$0xff] %v5573
    %5638 = vst [vmem:[#allocation4 + $0x1040] sm:$0xff] %v5574
    %5639 = vst [vmem:[#allocation4 + $0x1088] sm:$0xff] %v5575
    %5640 = vst [vmem:[#allocation4 + $0x10d0] sm:$0xff] %v5576
    %5641 = vst [vmem:[#allocation4 + $0x1118] sm:$0xff] %v5577
    %5642 = vst [vmem:[#allocation4 + $0x1160] sm:$0xff] %v5578
    %5643 = vst [vmem:[#allocation4 + $0x11a8] sm:$0xff] %v5579
    %5644 = vst [vmem:[#allocation4 + $0x11f0] sm:$0xff] %v5580
    %v5645 = vld [vmem:[%s5388 + $0x2] sm:$0xff]
    %v5646 = vld [vmem:[%s5388 + $0xa] sm:$0xff]
    %v5647 = vld [vmem:[%s5388 + $0x1a] sm:$0xff]
    %v5648 = vld [vmem:[%s5388 + $0x22] sm:$0xff]
    %v5649 = vld [vmem:[%s5388 + $0x32] sm:$0xff]
    %v5650 = vld [vmem:[%s5388 + $0x3a] sm:$0xff]
    %v5651 = vld [vmem:[%s5388 + $0x4a] sm:$0xff]
    %v5652 = vld [vmem:[%s5388 + $0x52] sm:$0xff]
    %v5653 = vld [vmem:[%s5388 + $0x62] sm:$0xff]
    %v5654 = vld [vmem:[%s5388 + $0x6a] sm:$0xff]
    %v5655 = vld [vmem:[%s5388 + $0x7a] sm:$0xff]
    %v5656 = vld [vmem:[%s5388 + $0x82] sm:$0xff]
    %v5657 = vld [vmem:[%s5388 + $0x92] sm:$0xff]
    %v5658 = vld [vmem:[%s5388 + $0x9a] sm:$0xff]
    %v5659 = vld [vmem:[%s5388 + $0xaa] sm:$0xff]
    %v5660 = vld [vmem:[%s5388 + $0xb2] sm:$0xff]
    %v5661 = vld [vmem:[%s5388 + $0xc2] sm:$0xff]
    %v5662 = vld [vmem:[%s5388 + $0xca] sm:$0xff]
    %v5663 = vld [vmem:[%s5388 + $0xda] sm:$0xff]
    %v5664 = vld [vmem:[%s5388 + $0xe2] sm:$0xff]
    %v5665 = vld [vmem:[%s5388 + $0xf2] sm:$0xff]
    %v5666 = vld [vmem:[%s5388 + $0xfa] sm:$0xff]
    %v5667 = vld [vmem:[%s5388 + $0x10a] sm:$0xff]
    %v5668 = vld [vmem:[%s5388 + $0x112] sm:$0xff]
    %v5669 = vld [vmem:[%s5388 + $0x122] sm:$0xff]
    %v5670 = vld [vmem:[%s5388 + $0x12a] sm:$0xff]
    %v5671 = vld [vmem:[%s5388 + $0x13a] sm:$0xff]
    %v5672 = vld [vmem:[%s5388 + $0x142] sm:$0xff]
    %v5673 = vld [vmem:[%s5388 + $0x152] sm:$0xff]
    %v5674 = vld [vmem:[%s5388 + $0x15a] sm:$0xff]
    %v5675 = vld [vmem:[%s5388 + $0x16a] sm:$0xff]
    %v5676 = vld [vmem:[%s5388 + $0x172] sm:$0xff]
    %v5677 = vld [vmem:[%s5388 + $0x1b2] sm:$0xff]
    %v5678 = vld [vmem:[%s5388 + $0x1ba] sm:$0xff]
    %v5679 = vld [vmem:[%s5388 + $0x1ca] sm:$0xff]
    %v5680 = vld [vmem:[%s5388 + $0x1d2] sm:$0xff]
    %v5681 = vld [vmem:[%s5388 + $0x1e2] sm:$0xff]
    %v5682 = vld [vmem:[%s5388 + $0x1ea] sm:$0xff]
    %v5683 = vld [vmem:[%s5388 + $0x1fa] sm:$0xff]
    %v5684 = vld [vmem:[%s5388 + $0x202] sm:$0xff]
    %v5685 = vld [vmem:[%s5388 + $0x212] sm:$0xff]
    %v5686 = vld [vmem:[%s5388 + $0x21a] sm:$0xff]
    %v5687 = vld [vmem:[%s5388 + $0x22a] sm:$0xff]
    %v5688 = vld [vmem:[%s5388 + $0x232] sm:$0xff]
    %v5689 = vld [vmem:[%s5388 + $0x242] sm:$0xff]
    %v5690 = vld [vmem:[%s5388 + $0x24a] sm:$0xff]
    %v5691 = vld [vmem:[%s5388 + $0x25a] sm:$0xff]
    %v5692 = vld [vmem:[%s5388 + $0x262] sm:$0xff]
    %v5693 = vld [vmem:[%s5388 + $0x272] sm:$0xff]
    %v5694 = vld [vmem:[%s5388 + $0x27a] sm:$0xff]
    %v5695 = vld [vmem:[%s5388 + $0x28a] sm:$0xff]
    %v5696 = vld [vmem:[%s5388 + $0x292] sm:$0xff]
    %v5697 = vld [vmem:[%s5388 + $0x2a2] sm:$0xff]
    %v5698 = vld [vmem:[%s5388 + $0x2aa] sm:$0xff]
    %v5699 = vld [vmem:[%s5388 + $0x2ba] sm:$0xff]
    %v5700 = vld [vmem:[%s5388 + $0x2c2] sm:$0xff]
    %v5701 = vld [vmem:[%s5388 + $0x2d2] sm:$0xff]
    %v5702 = vld [vmem:[%s5388 + $0x2da] sm:$0xff]
    %v5703 = vld [vmem:[%s5388 + $0x2ea] sm:$0xff]
    %v5704 = vld [vmem:[%s5388 + $0x2f2] sm:$0xff]
    %v5705 = vld [vmem:[%s5388 + $0x302] sm:$0xff]
    %v5706 = vld [vmem:[%s5388 + $0x30a] sm:$0xff]
    %v5707 = vld [vmem:[%s5388 + $0x31a] sm:$0xff]
    %v5708 = vld [vmem:[%s5388 + $0x322] sm:$0xff]
    %5709 = vst [vmem:[#allocation4 + $0x40] sm:$0xff] %v5645
    %5710 = vst [vmem:[#allocation4 + $0x88] sm:$0xff] %v5646
    %5711 = vst [vmem:[#allocation4 + $0xd0] sm:$0xff] %v5647
    %5712 = vst [vmem:[#allocation4 + $0x118] sm:$0xff] %v5648
    %5713 = vst [vmem:[#allocation4 + $0x160] sm:$0xff] %v5649
    %5714 = vst [vmem:[#allocation4 + $0x1a8] sm:$0xff] %v5650
    %5715 = vst [vmem:[#allocation4 + $0x1f0] sm:$0xff] %v5651
    %5716 = vst [vmem:[#allocation4 + $0x238] sm:$0xff] %v5652
    %5717 = vst [vmem:[#allocation4 + $0x280] sm:$0xff] %v5653
    %5718 = vst [vmem:[#allocation4 + $0x2c8] sm:$0xff] %v5654
    %5719 = vst [vmem:[#allocation4 + $0x310] sm:$0xff] %v5655
    %5720 = vst [vmem:[#allocation4 + $0x358] sm:$0xff] %v5656
    %5721 = vst [vmem:[#allocation4 + $0x3a0] sm:$0xff] %v5657
    %5722 = vst [vmem:[#allocation4 + $0x3e8] sm:$0xff] %v5658
    %5723 = vst [vmem:[#allocation4 + $0x430] sm:$0xff] %v5659
    %5724 = vst [vmem:[#allocation4 + $0x478] sm:$0xff] %v5660
    %5725 = vst [vmem:[#allocation4 + $0x4c0] sm:$0xff] %v5661
    %5726 = vst [vmem:[#allocation4 + $0x508] sm:$0xff] %v5662
    %5727 = vst [vmem:[#allocation4 + $0x550] sm:$0xff] %v5663
    %5728 = vst [vmem:[#allocation4 + $0x598] sm:$0xff] %v5664
    %5729 = vst [vmem:[#allocation4 + $0x5e0] sm:$0xff] %v5665
    %5730 = vst [vmem:[#allocation4 + $0x628] sm:$0xff] %v5666
    %5731 = vst [vmem:[#allocation4 + $0x670] sm:$0xff] %v5667
    %5732 = vst [vmem:[#allocation4 + $0x6b8] sm:$0xff] %v5668
    %5733 = vst [vmem:[#allocation4 + $0x700] sm:$0xff] %v5669
    %5734 = vst [vmem:[#allocation4 + $0x748] sm:$0xff] %v5670
    %5735 = vst [vmem:[#allocation4 + $0x790] sm:$0xff] %v5671
    %5736 = vst [vmem:[#allocation4 + $0x7d8] sm:$0xff] %v5672
    %5737 = vst [vmem:[#allocation4 + $0x820] sm:$0xff] %v5673
    %5738 = vst [vmem:[#allocation4 + $0x868] sm:$0xff] %v5674
    %5739 = vst [vmem:[#allocation4 + $0x8b0] sm:$0xff] %v5675
    %5740 = vst [vmem:[#allocation4 + $0x8f8] sm:$0xff] %v5676
    %5741 = vst [vmem:[#allocation4 + $0x940] sm:$0xff] %v5677
    %5742 = vst [vmem:[#allocation4 + $0x988] sm:$0xff] %v5678
    %5743 = vst [vmem:[#allocation4 + $0x9d0] sm:$0xff] %v5679
    %5744 = vst [vmem:[#allocation4 + $0xa18] sm:$0xff] %v5680
    %5745 = vst [vmem:[#allocation4 + $0xa60] sm:$0xff] %v5681
    %5746 = vst [vmem:[#allocation4 + $0xaa8] sm:$0xff] %v5682
    %5747 = vst [vmem:[#allocation4 + $0xaf0] sm:$0xff] %v5683
    %5748 = vst [vmem:[#allocation4 + $0xb38] sm:$0xff] %v5684
    %5749 = vst [vmem:[#allocation4 + $0xb80] sm:$0xff] %v5685
    %5750 = vst [vmem:[#allocation4 + $0xbc8] sm:$0xff] %v5686
    %5751 = vst [vmem:[#allocation4 + $0xc10] sm:$0xff] %v5687
    %5752 = vst [vmem:[#allocation4 + $0xc58] sm:$0xff] %v5688
    %5753 = vst [vmem:[#allocation4 + $0xca0] sm:$0xff] %v5689
    %5754 = vst [vmem:[#allocation4 + $0xce8] sm:$0xff] %v5690
    %5755 = vst [vmem:[#allocation4 + $0xd30] sm:$0xff] %v5691
    %5756 = vst [vmem:[#allocation4 + $0xd78] sm:$0xff] %v5692
    %5757 = vst [vmem:[#allocation4 + $0xdc0] sm:$0xff] %v5693
    %5758 = vst [vmem:[#allocation4 + $0xe08] sm:$0xff] %v5694
    %5759 = vst [vmem:[#allocation4 + $0xe50] sm:$0xff] %v5695
    %5760 = vst [vmem:[#allocation4 + $0xe98] sm:$0xff] %v5696
    %5761 = vst [vmem:[#allocation4 + $0xee0] sm:$0xff] %v5697
    %5762 = vst [vmem:[#allocation4 + $0xf28] sm:$0xff] %v5698
    %5763 = vst [vmem:[#allocation4 + $0xf70] sm:$0xff] %v5699
    %5764 = vst [vmem:[#allocation4 + $0xfb8] sm:$0xff] %v5700
    %5765 = vst [vmem:[#allocation4 + $0x1000] sm:$0xff] %v5701
    %5766 = vst [vmem:[#allocation4 + $0x1048] sm:$0xff] %v5702
    %5767 = vst [vmem:[#allocation4 + $0x1090] sm:$0xff] %v5703
    %5768 = vst [vmem:[#allocation4 + $0x10d8] sm:$0xff] %v5704
    %5769 = vst [vmem:[#allocation4 + $0x1120] sm:$0xff] %v5705
    %5770 = vst [vmem:[#allocation4 + $0x1168] sm:$0xff] %v5706
    %5771 = vst [vmem:[#allocation4 + $0x11b0] sm:$0xff] %v5707
    %5772 = vst [vmem:[#allocation4 + $0x11f8] sm:$0xff] %v5708
    %v5773 = vld [vmem:[#allocation4] sm:$0xff]
    %v5774 = vld [vmem:[#allocation4 + $0x8] sm:$0xff]
    %v5775 = vld [vmem:[#allocation4 + $0x10] sm:$0xff]
    %v5776 = vld [vmem:[#allocation4 + $0x18] sm:$0xff]
    %v5777 = vld [vmem:[#allocation4 + $0x20] sm:$0xff]
    %v5778 = vld [vmem:[#allocation4 + $0x28] sm:$0xff]
    %v5779 = vld [vmem:[#allocation4 + $0x30] sm:$0xff]
    %v5780 = vld [vmem:[#allocation4 + $0x38] sm:$0xff]
    %v5781 = vld [vmem:[#allocation4 + $0x40] sm:$0xff]
    %v5782 = vld [vmem:[#allocation4 + $0x48] sm:$0xff]
    %v5783 = vld [vmem:[#allocation4 + $0x50] sm:$0xff]
    %v5784 = vld [vmem:[#allocation4 + $0x58] sm:$0xff]
    %v5785 = vld [vmem:[#allocation4 + $0x60] sm:$0xff]
    %v5786 = vld [vmem:[#allocation4 + $0x68] sm:$0xff]
    %v5787 = vld [vmem:[#allocation4 + $0x70] sm:$0xff]
    %v5788 = vld [vmem:[#allocation4 + $0x78] sm:$0xff]
    %v5789 = vld [vmem:[#allocation4 + $0x80] sm:$0xff]
    %v5790 = vld [vmem:[#allocation4 + $0x88] sm:$0xff]
    %v5791 = vld [vmem:[#allocation4 + $0x90] sm:$0xff]
    %v5792 = vld [vmem:[#allocation4 + $0x98] sm:$0xff]
    %v5793 = vld [vmem:[#allocation4 + $0xa0] sm:$0xff]
    %v5794 = vld [vmem:[#allocation4 + $0xa8] sm:$0xff]
    %v5795 = vld [vmem:[#allocation4 + $0xb0] sm:$0xff]
    %v5796 = vld [vmem:[#allocation4 + $0xb8] sm:$0xff]
    %v5797 = vld [vmem:[#allocation4 + $0xc0] sm:$0xff]
    %v5798 = vld [vmem:[#allocation4 + $0xc8] sm:$0xff]
    %v5799 = vld [vmem:[#allocation4 + $0xd0] sm:$0xff]
    %v5800 = vld [vmem:[#allocation4 + $0xd8] sm:$0xff]
    %v5801 = vld [vmem:[#allocation4 + $0xe0] sm:$0xff]
    %v5802 = vld [vmem:[#allocation4 + $0xe8] sm:$0xff]
    %v5803 = vld [vmem:[#allocation4 + $0xf0] sm:$0xff]
    %v5804 = vld [vmem:[#allocation4 + $0xf8] sm:$0xff]
    %v5805 = vld [vmem:[#allocation4 + $0x100] sm:$0xff]
    %v5806 = vld [vmem:[#allocation4 + $0x108] sm:$0xff]
    %v5807 = vld [vmem:[#allocation4 + $0x110] sm:$0xff]
    %v5808 = vld [vmem:[#allocation4 + $0x118] sm:$0xff]
    %v5809 = vld [vmem:[#allocation4 + $0x120] sm:$0xff]
    %v5810 = vld [vmem:[#allocation4 + $0x128] sm:$0xff]
    %v5811 = vld [vmem:[#allocation4 + $0x130] sm:$0xff]
    %v5812 = vld [vmem:[#allocation4 + $0x138] sm:$0xff]
    %v5813 = vld [vmem:[#allocation4 + $0x140] sm:$0xff]
    %v5814 = vld [vmem:[#allocation4 + $0x148] sm:$0xff]
    %v5815 = vld [vmem:[#allocation4 + $0x150] sm:$0xff]
    %v5816 = vld [vmem:[#allocation4 + $0x158] sm:$0xff]
    %v5817 = vld [vmem:[#allocation4 + $0x160] sm:$0xff]
    %v5818 = vld [vmem:[#allocation4 + $0x168] sm:$0xff]
    %v5819 = vld [vmem:[#allocation4 + $0x170] sm:$0xff]
    %v5820 = vld [vmem:[#allocation4 + $0x178] sm:$0xff]
    %v5821 = vld [vmem:[#allocation4 + $0x180] sm:$0xff]
    %v5822 = vld [vmem:[#allocation4 + $0x188] sm:$0xff]
    %v5823 = vld [vmem:[#allocation4 + $0x190] sm:$0xff]
    %v5824 = vld [vmem:[#allocation4 + $0x198] sm:$0xff]
    %v5825 = vld [vmem:[#allocation4 + $0x1a0] sm:$0xff]
    %v5826 = vld [vmem:[#allocation4 + $0x1a8] sm:$0xff]
    %v5827 = vld [vmem:[#allocation4 + $0x1b0] sm:$0xff]
    %v5828 = vld [vmem:[#allocation4 + $0x1b8] sm:$0xff]
    %v5829 = vld [vmem:[#allocation4 + $0x1c0] sm:$0xff]
    %v5830 = vld [vmem:[#allocation4 + $0x1c8] sm:$0xff]
    %v5831 = vld [vmem:[#allocation4 + $0x1d0] sm:$0xff]
    %v5832 = vld [vmem:[#allocation4 + $0x1d8] sm:$0xff]
    %v5833 = vld [vmem:[#allocation4 + $0x1e0] sm:$0xff]
    %v5834 = vld [vmem:[#allocation4 + $0x1e8] sm:$0xff]
    %v5835 = vld [vmem:[#allocation4 + $0x1f0] sm:$0xff]
    %v5836 = vld [vmem:[#allocation4 + $0x1f8] sm:$0xff]
    %v5837 = vld [vmem:[#allocation4 + $0x200] sm:$0xff]
    %v5838 = vld [vmem:[#allocation4 + $0x208] sm:$0xff]
    %v5839 = vld [vmem:[#allocation4 + $0x210] sm:$0xff]
    %v5840 = vld [vmem:[#allocation4 + $0x218] sm:$0xff]
    %v5841 = vld [vmem:[#allocation4 + $0x220] sm:$0xff]
    %v5842 = vld [vmem:[#allocation4 + $0x228] sm:$0xff]
    %v5843 = vld [vmem:[#allocation4 + $0x230] sm:$0xff]
    %v5844 = vld [vmem:[#allocation4 + $0x238] sm:$0xff]
    %v5845 = vld [vmem:[#allocation4 + $0x240] sm:$0xff]
    %v5846 = vld [vmem:[#allocation4 + $0x248] sm:$0xff]
    %v5847 = vld [vmem:[#allocation4 + $0x250] sm:$0xff]
    %v5848 = vld [vmem:[#allocation4 + $0x258] sm:$0xff]
    %v5849 = vld [vmem:[#allocation4 + $0x260] sm:$0xff]
    %v5850 = vld [vmem:[#allocation4 + $0x268] sm:$0xff]
    %v5851 = vld [vmem:[#allocation4 + $0x270] sm:$0xff]
    %v5852 = vld [vmem:[#allocation4 + $0x278] sm:$0xff]
    %v5853 = vld [vmem:[#allocation4 + $0x280] sm:$0xff]
    %v5854 = vld [vmem:[#allocation4 + $0x288] sm:$0xff]
    %v5855 = vld [vmem:[#allocation4 + $0x290] sm:$0xff]
    %v5856 = vld [vmem:[#allocation4 + $0x298] sm:$0xff]
    %v5857 = vld [vmem:[#allocation4 + $0x2a0] sm:$0xff]
    %v5858 = vld [vmem:[#allocation4 + $0x2a8] sm:$0xff]
    %v5859 = vld [vmem:[#allocation4 + $0x2b0] sm:$0xff]
    %v5860 = vld [vmem:[#allocation4 + $0x2b8] sm:$0xff]
    %v5861 = vld [vmem:[#allocation4 + $0x2c0] sm:$0xff]
    %v5862 = vld [vmem:[#allocation4 + $0x2c8] sm:$0xff]
    %v5863 = vld [vmem:[#allocation4 + $0x2d0] sm:$0xff]
    %v5864 = vld [vmem:[#allocation4 + $0x2d8] sm:$0xff]
    %v5865 = vld [vmem:[#allocation4 + $0x2e0] sm:$0xff]
    %v5866 = vld [vmem:[#allocation4 + $0x2e8] sm:$0xff]
    %v5867 = vld [vmem:[#allocation4 + $0x2f0] sm:$0xff]
    %v5868 = vld [vmem:[#allocation4 + $0x2f8] sm:$0xff]
    %v5869 = vld [vmem:[#allocation4 + $0x300] sm:$0xff]
    %v5870 = vld [vmem:[#allocation4 + $0x308] sm:$0xff]
    %v5871 = vld [vmem:[#allocation4 + $0x310] sm:$0xff]
    %v5872 = vld [vmem:[#allocation4 + $0x318] sm:$0xff]
    %v5873 = vld [vmem:[#allocation4 + $0x320] sm:$0xff]
    %v5874 = vld [vmem:[#allocation4 + $0x328] sm:$0xff]
    %v5875 = vld [vmem:[#allocation4 + $0x330] sm:$0xff]
    %v5876 = vld [vmem:[#allocation4 + $0x338] sm:$0xff]
    %v5877 = vld [vmem:[#allocation4 + $0x340] sm:$0xff]
    %v5878 = vld [vmem:[#allocation4 + $0x348] sm:$0xff]
    %v5879 = vld [vmem:[#allocation4 + $0x350] sm:$0xff]
    %v5880 = vld [vmem:[#allocation4 + $0x358] sm:$0xff]
    %v5881 = vld [vmem:[#allocation4 + $0x360] sm:$0xff]
    %v5882 = vld [vmem:[#allocation4 + $0x368] sm:$0xff]
    %v5883 = vld [vmem:[#allocation4 + $0x370] sm:$0xff]
    %v5884 = vld [vmem:[#allocation4 + $0x378] sm:$0xff]
    %v5885 = vld [vmem:[#allocation4 + $0x380] sm:$0xff]
    %v5886 = vld [vmem:[#allocation4 + $0x388] sm:$0xff]
    %v5887 = vld [vmem:[#allocation4 + $0x390] sm:$0xff]
    %v5888 = vld [vmem:[#allocation4 + $0x398] sm:$0xff]
    %v5889 = vld [vmem:[#allocation4 + $0x3a0] sm:$0xff]
    %v5890 = vld [vmem:[#allocation4 + $0x3a8] sm:$0xff]
    %v5891 = vld [vmem:[#allocation4 + $0x3b0] sm:$0xff]
    %v5892 = vld [vmem:[#allocation4 + $0x3b8] sm:$0xff]
    %v5893 = vld [vmem:[#allocation4 + $0x3c0] sm:$0xff]
    %v5894 = vld [vmem:[#allocation4 + $0x3c8] sm:$0xff]
    %v5895 = vld [vmem:[#allocation4 + $0x3d0] sm:$0xff]
    %v5896 = vld [vmem:[#allocation4 + $0x3d8] sm:$0xff]
    %v5897 = vld [vmem:[#allocation4 + $0x3e0] sm:$0xff]
    %v5898 = vld [vmem:[#allocation4 + $0x3e8] sm:$0xff]
    %v5899 = vld [vmem:[#allocation4 + $0x3f0] sm:$0xff]
    %v5900 = vld [vmem:[#allocation4 + $0x3f8] sm:$0xff]
    %v5901 = vld [vmem:[#allocation4 + $0x400] sm:$0xff]
    %v5902 = vld [vmem:[#allocation4 + $0x408] sm:$0xff]
    %v5903 = vld [vmem:[#allocation4 + $0x410] sm:$0xff]
    %v5904 = vld [vmem:[#allocation4 + $0x418] sm:$0xff]
    %v5905 = vld [vmem:[#allocation4 + $0x420] sm:$0xff]
    %v5906 = vld [vmem:[#allocation4 + $0x428] sm:$0xff]
    %v5907 = vld [vmem:[#allocation4 + $0x430] sm:$0xff]
    %v5908 = vld [vmem:[#allocation4 + $0x438] sm:$0xff]
    %v5909 = vld [vmem:[#allocation4 + $0x440] sm:$0xff]
    %v5910 = vld [vmem:[#allocation4 + $0x448] sm:$0xff]
    %v5911 = vld [vmem:[#allocation4 + $0x450] sm:$0xff]
    %v5912 = vld [vmem:[#allocation4 + $0x458] sm:$0xff]
    %v5913 = vld [vmem:[#allocation4 + $0x460] sm:$0xff]
    %v5914 = vld [vmem:[#allocation4 + $0x468] sm:$0xff]
    %v5915 = vld [vmem:[#allocation4 + $0x470] sm:$0xff]
    %v5916 = vld [vmem:[#allocation4 + $0x478] sm:$0xff]
    %v5917 = vld [vmem:[#allocation4 + $0x480] sm:$0xff]
    %v5918 = vld [vmem:[#allocation4 + $0x488] sm:$0xff]
    %v5919 = vld [vmem:[#allocation4 + $0x490] sm:$0xff]
    %v5920 = vld [vmem:[#allocation4 + $0x498] sm:$0xff]
    %v5921 = vld [vmem:[#allocation4 + $0x4a0] sm:$0xff]
    %v5922 = vld [vmem:[#allocation4 + $0x4a8] sm:$0xff]
    %v5923 = vld [vmem:[#allocation4 + $0x4b0] sm:$0xff]
    %v5924 = vld [vmem:[#allocation4 + $0x4b8] sm:$0xff]
    %v5925 = vld [vmem:[#allocation4 + $0x4c0] sm:$0xff]
    %v5926 = vld [vmem:[#allocation4 + $0x4c8] sm:$0xff]
    %v5927 = vld [vmem:[#allocation4 + $0x4d0] sm:$0xff]
    %v5928 = vld [vmem:[#allocation4 + $0x4d8] sm:$0xff]
    %v5929 = vld [vmem:[#allocation4 + $0x4e0] sm:$0xff]
    %v5930 = vld [vmem:[#allocation4 + $0x4e8] sm:$0xff]
    %v5931 = vld [vmem:[#allocation4 + $0x4f0] sm:$0xff]
    %v5932 = vld [vmem:[#allocation4 + $0x4f8] sm:$0xff]
    %v5933 = vld [vmem:[#allocation4 + $0x500] sm:$0xff]
    %v5934 = vld [vmem:[#allocation4 + $0x508] sm:$0xff]
    %v5935 = vld [vmem:[#allocation4 + $0x510] sm:$0xff]
    %v5936 = vld [vmem:[#allocation4 + $0x518] sm:$0xff]
    %v5937 = vld [vmem:[#allocation4 + $0x520] sm:$0xff]
    %v5938 = vld [vmem:[#allocation4 + $0x528] sm:$0xff]
    %v5939 = vld [vmem:[#allocation4 + $0x530] sm:$0xff]
    %v5940 = vld [vmem:[#allocation4 + $0x538] sm:$0xff]
    %v5941 = vld [vmem:[#allocation4 + $0x540] sm:$0xff]
    %v5942 = vld [vmem:[#allocation4 + $0x548] sm:$0xff]
    %v5943 = vld [vmem:[#allocation4 + $0x550] sm:$0xff]
    %v5944 = vld [vmem:[#allocation4 + $0x558] sm:$0xff]
    %v5945 = vld [vmem:[#allocation4 + $0x560] sm:$0xff]
    %v5946 = vld [vmem:[#allocation4 + $0x568] sm:$0xff]
    %v5947 = vld [vmem:[#allocation4 + $0x570] sm:$0xff]
    %v5948 = vld [vmem:[#allocation4 + $0x578] sm:$0xff]
    %v5949 = vld [vmem:[#allocation4 + $0x580] sm:$0xff]
    %v5950 = vld [vmem:[#allocation4 + $0x588] sm:$0xff]
    %v5951 = vld [vmem:[#allocation4 + $0x590] sm:$0xff]
    %v5952 = vld [vmem:[#allocation4 + $0x598] sm:$0xff]
    %v5953 = vld [vmem:[#allocation4 + $0x5a0] sm:$0xff]
    %v5954 = vld [vmem:[#allocation4 + $0x5a8] sm:$0xff]
    %v5955 = vld [vmem:[#allocation4 + $0x5b0] sm:$0xff]
    %v5956 = vld [vmem:[#allocation4 + $0x5b8] sm:$0xff]
    %v5957 = vld [vmem:[#allocation4 + $0x5c0] sm:$0xff]
    %v5958 = vld [vmem:[#allocation4 + $0x5c8] sm:$0xff]
    %v5959 = vld [vmem:[#allocation4 + $0x5d0] sm:$0xff]
    %v5960 = vld [vmem:[#allocation4 + $0x5d8] sm:$0xff]
    %v5961 = vld [vmem:[#allocation4 + $0x5e0] sm:$0xff]
    %v5962 = vld [vmem:[#allocation4 + $0x5e8] sm:$0xff]
    %v5963 = vld [vmem:[#allocation4 + $0x5f0] sm:$0xff]
    %v5964 = vld [vmem:[#allocation4 + $0x5f8] sm:$0xff]
    %v5965 = vld [vmem:[#allocation4 + $0x600] sm:$0xff]
    %v5966 = vld [vmem:[#allocation4 + $0x608] sm:$0xff]
    %v5967 = vld [vmem:[#allocation4 + $0x610] sm:$0xff]
    %v5968 = vld [vmem:[#allocation4 + $0x618] sm:$0xff]
    %v5969 = vld [vmem:[#allocation4 + $0x620] sm:$0xff]
    %v5970 = vld [vmem:[#allocation4 + $0x628] sm:$0xff]
    %v5971 = vld [vmem:[#allocation4 + $0x630] sm:$0xff]
    %v5972 = vld [vmem:[#allocation4 + $0x638] sm:$0xff]
    %v5973 = vld [vmem:[#allocation4 + $0x640] sm:$0xff]
    %v5974 = vld [vmem:[#allocation4 + $0x648] sm:$0xff]
    %v5975 = vld [vmem:[#allocation4 + $0x650] sm:$0xff]
    %v5976 = vld [vmem:[#allocation4 + $0x658] sm:$0xff]
    %v5977 = vld [vmem:[#allocation4 + $0x660] sm:$0xff]
    %v5978 = vld [vmem:[#allocation4 + $0x668] sm:$0xff]
    %v5979 = vld [vmem:[#allocation4 + $0x670] sm:$0xff]
    %v5980 = vld [vmem:[#allocation4 + $0x678] sm:$0xff]
    %v5981 = vld [vmem:[#allocation4 + $0x680] sm:$0xff]
    %v5982 = vld [vmem:[#allocation4 + $0x688] sm:$0xff]
    %v5983 = vld [vmem:[#allocation4 + $0x690] sm:$0xff]
    %v5984 = vld [vmem:[#allocation4 + $0x698] sm:$0xff]
    %v5985 = vld [vmem:[#allocation4 + $0x6a0] sm:$0xff]
    %v5986 = vld [vmem:[#allocation4 + $0x6a8] sm:$0xff]
    %v5987 = vld [vmem:[#allocation4 + $0x6b0] sm:$0xff]
    %v5988 = vld [vmem:[#allocation4 + $0x6b8] sm:$0xff]
    %v5989 = vld [vmem:[#allocation4 + $0x6c0] sm:$0xff]
    %v5990 = vld [vmem:[#allocation4 + $0x6c8] sm:$0xff]
    %v5991 = vld [vmem:[#allocation4 + $0x6d0] sm:$0xff]
    %v5992 = vld [vmem:[#allocation4 + $0x6d8] sm:$0xff]
    %v5993 = vld [vmem:[#allocation4 + $0x6e0] sm:$0xff]
    %v5994 = vld [vmem:[#allocation4 + $0x6e8] sm:$0xff]
    %v5995 = vld [vmem:[#allocation4 + $0x6f0] sm:$0xff]
    %v5996 = vld [vmem:[#allocation4 + $0x6f8] sm:$0xff]
    %v5997 = vld [vmem:[#allocation4 + $0x700] sm:$0xff]
    %v5998 = vld [vmem:[#allocation4 + $0x708] sm:$0xff]
    %v5999 = vld [vmem:[#allocation4 + $0x710] sm:$0xff]
    %v6000 = vld [vmem:[#allocation4 + $0x718] sm:$0xff]
    %v6001 = vld [vmem:[#allocation4 + $0x720] sm:$0xff]
    %v6002 = vld [vmem:[#allocation4 + $0x728] sm:$0xff]
    %v6003 = vld [vmem:[#allocation4 + $0x730] sm:$0xff]
    %v6004 = vld [vmem:[#allocation4 + $0x738] sm:$0xff]
    %v6005 = vld [vmem:[#allocation4 + $0x740] sm:$0xff]
    %v6006 = vld [vmem:[#allocation4 + $0x748] sm:$0xff]
    %v6007 = vld [vmem:[#allocation4 + $0x750] sm:$0xff]
    %v6008 = vld [vmem:[#allocation4 + $0x758] sm:$0xff]
    %v6009 = vld [vmem:[#allocation4 + $0x760] sm:$0xff]
    %v6010 = vld [vmem:[#allocation4 + $0x768] sm:$0xff]
    %v6011 = vld [vmem:[#allocation4 + $0x770] sm:$0xff]
    %v6012 = vld [vmem:[#allocation4 + $0x778] sm:$0xff]
    %v6013 = vld [vmem:[#allocation4 + $0x780] sm:$0xff]
    %v6014 = vld [vmem:[#allocation4 + $0x788] sm:$0xff]
    %v6015 = vld [vmem:[#allocation4 + $0x790] sm:$0xff]
    %v6016 = vld [vmem:[#allocation4 + $0x798] sm:$0xff]
    %v6017 = vld [vmem:[#allocation4 + $0x7a0] sm:$0xff]
    %v6018 = vld [vmem:[#allocation4 + $0x7a8] sm:$0xff]
    %v6019 = vld [vmem:[#allocation4 + $0x7b0] sm:$0xff]
    %v6020 = vld [vmem:[#allocation4 + $0x7b8] sm:$0xff]
    %v6021 = vld [vmem:[#allocation4 + $0x7c0] sm:$0xff]
    %v6022 = vld [vmem:[#allocation4 + $0x7c8] sm:$0xff]
    %v6023 = vld [vmem:[#allocation4 + $0x7d0] sm:$0xff]
    %v6024 = vld [vmem:[#allocation4 + $0x7d8] sm:$0xff]
    %v6025 = vld [vmem:[#allocation4 + $0x7e0] sm:$0xff]
    %v6026 = vld [vmem:[#allocation4 + $0x7e8] sm:$0xff]
    %v6027 = vld [vmem:[#allocation4 + $0x7f0] sm:$0xff]
    %v6028 = vld [vmem:[#allocation4 + $0x7f8] sm:$0xff]
    %v6029 = vld [vmem:[#allocation4 + $0x800] sm:$0xff]
    %v6030 = vld [vmem:[#allocation4 + $0x808] sm:$0xff]
    %v6031 = vld [vmem:[#allocation4 + $0x810] sm:$0xff]
    %v6032 = vld [vmem:[#allocation4 + $0x818] sm:$0xff]
    %v6033 = vld [vmem:[#allocation4 + $0x820] sm:$0xff]
    %v6034 = vld [vmem:[#allocation4 + $0x828] sm:$0xff]
    %v6035 = vld [vmem:[#allocation4 + $0x830] sm:$0xff]
    %v6036 = vld [vmem:[#allocation4 + $0x838] sm:$0xff]
    %v6037 = vld [vmem:[#allocation4 + $0x840] sm:$0xff]
    %v6038 = vld [vmem:[#allocation4 + $0x848] sm:$0xff]
    %v6039 = vld [vmem:[#allocation4 + $0x850] sm:$0xff]
    %v6040 = vld [vmem:[#allocation4 + $0x858] sm:$0xff]
    %v6041 = vld [vmem:[#allocation4 + $0x860] sm:$0xff]
    %v6042 = vld [vmem:[#allocation4 + $0x868] sm:$0xff]
    %v6043 = vld [vmem:[#allocation4 + $0x870] sm:$0xff]
    %v6044 = vld [vmem:[#allocation4 + $0x878] sm:$0xff]
    %v6045 = vld [vmem:[#allocation4 + $0x880] sm:$0xff]
    %v6046 = vld [vmem:[#allocation4 + $0x888] sm:$0xff]
    %v6047 = vld [vmem:[#allocation4 + $0x890] sm:$0xff]
    %v6048 = vld [vmem:[#allocation4 + $0x898] sm:$0xff]
    %v6049 = vld [vmem:[#allocation4 + $0x8a0] sm:$0xff]
    %v6050 = vld [vmem:[#allocation4 + $0x8a8] sm:$0xff]
    %v6051 = vld [vmem:[#allocation4 + $0x8b0] sm:$0xff]
    %v6052 = vld [vmem:[#allocation4 + $0x8b8] sm:$0xff]
    %v6053 = vld [vmem:[#allocation4 + $0x8c0] sm:$0xff]
    %v6054 = vld [vmem:[#allocation4 + $0x8c8] sm:$0xff]
    %v6055 = vld [vmem:[#allocation4 + $0x8d0] sm:$0xff]
    %v6056 = vld [vmem:[#allocation4 + $0x8d8] sm:$0xff]
    %v6057 = vld [vmem:[#allocation4 + $0x8e0] sm:$0xff]
    %v6058 = vld [vmem:[#allocation4 + $0x8e8] sm:$0xff]
    %v6059 = vld [vmem:[#allocation4 + $0x8f0] sm:$0xff]
    %v6060 = vld [vmem:[#allocation4 + $0x8f8] sm:$0xff]
    %v6061 = vld [vmem:[#allocation4 + $0x900] sm:$0xff]
    %v6062 = vld [vmem:[#allocation4 + $0x908] sm:$0xff]
    %v6063 = vld [vmem:[#allocation4 + $0x910] sm:$0xff]
    %v6064 = vld [vmem:[#allocation4 + $0x918] sm:$0xff]
    %v6065 = vld [vmem:[#allocation4 + $0x920] sm:$0xff]
    %v6066 = vld [vmem:[#allocation4 + $0x928] sm:$0xff]
    %v6067 = vld [vmem:[#allocation4 + $0x930] sm:$0xff]
    %v6068 = vld [vmem:[#allocation4 + $0x938] sm:$0xff]
    %v6069 = vld [vmem:[#allocation4 + $0x940] sm:$0xff]
    %v6070 = vld [vmem:[#allocation4 + $0x948] sm:$0xff]
    %v6071 = vld [vmem:[#allocation4 + $0x950] sm:$0xff]
    %v6072 = vld [vmem:[#allocation4 + $0x958] sm:$0xff]
    %v6073 = vld [vmem:[#allocation4 + $0x960] sm:$0xff]
    %v6074 = vld [vmem:[#allocation4 + $0x968] sm:$0xff]
    %v6075 = vld [vmem:[#allocation4 + $0x970] sm:$0xff]
    %v6076 = vld [vmem:[#allocation4 + $0x978] sm:$0xff]
    %v6077 = vld [vmem:[#allocation4 + $0x980] sm:$0xff]
    %v6078 = vld [vmem:[#allocation4 + $0x988] sm:$0xff]
    %v6079 = vld [vmem:[#allocation4 + $0x990] sm:$0xff]
    %v6080 = vld [vmem:[#allocation4 + $0x998] sm:$0xff]
    %v6081 = vld [vmem:[#allocation4 + $0x9a0] sm:$0xff]
    %v6082 = vld [vmem:[#allocation4 + $0x9a8] sm:$0xff]
    %v6083 = vld [vmem:[#allocation4 + $0x9b0] sm:$0xff]
    %v6084 = vld [vmem:[#allocation4 + $0x9b8] sm:$0xff]
    %v6085 = vld [vmem:[#allocation4 + $0x9c0] sm:$0xff]
    %v6086 = vld [vmem:[#allocation4 + $0x9c8] sm:$0xff]
    %v6087 = vld [vmem:[#allocation4 + $0x9d0] sm:$0xff]
    %v6088 = vld [vmem:[#allocation4 + $0x9d8] sm:$0xff]
    %v6089 = vld [vmem:[#allocation4 + $0x9e0] sm:$0xff]
    %v6090 = vld [vmem:[#allocation4 + $0x9e8] sm:$0xff]
    %v6091 = vld [vmem:[#allocation4 + $0x9f0] sm:$0xff]
    %v6092 = vld [vmem:[#allocation4 + $0x9f8] sm:$0xff]
    %v6093 = vld [vmem:[#allocation4 + $0xa00] sm:$0xff]
    %v6094 = vld [vmem:[#allocation4 + $0xa08] sm:$0xff]
    %v6095 = vld [vmem:[#allocation4 + $0xa10] sm:$0xff]
    %v6096 = vld [vmem:[#allocation4 + $0xa18] sm:$0xff]
    %v6097 = vld [vmem:[#allocation4 + $0xa20] sm:$0xff]
    %v6098 = vld [vmem:[#allocation4 + $0xa28] sm:$0xff]
    %v6099 = vld [vmem:[#allocation4 + $0xa30] sm:$0xff]
    %v6100 = vld [vmem:[#allocation4 + $0xa38] sm:$0xff]
    %v6101 = vld [vmem:[#allocation4 + $0xa40] sm:$0xff]
    %v6102 = vld [vmem:[#allocation4 + $0xa48] sm:$0xff]
    %v6103 = vld [vmem:[#allocation4 + $0xa50] sm:$0xff]
    %v6104 = vld [vmem:[#allocation4 + $0xa58] sm:$0xff]
    %v6105 = vld [vmem:[#allocation4 + $0xa60] sm:$0xff]
    %v6106 = vld [vmem:[#allocation4 + $0xa68] sm:$0xff]
    %v6107 = vld [vmem:[#allocation4 + $0xa70] sm:$0xff]
    %v6108 = vld [vmem:[#allocation4 + $0xa78] sm:$0xff]
    %v6109 = vld [vmem:[#allocation4 + $0xa80] sm:$0xff]
    %v6110 = vld [vmem:[#allocation4 + $0xa88] sm:$0xff]
    %v6111 = vld [vmem:[#allocation4 + $0xa90] sm:$0xff]
    %v6112 = vld [vmem:[#allocation4 + $0xa98] sm:$0xff]
    %v6113 = vld [vmem:[#allocation4 + $0xaa0] sm:$0xff]
    %v6114 = vld [vmem:[#allocation4 + $0xaa8] sm:$0xff]
    %v6115 = vld [vmem:[#allocation4 + $0xab0] sm:$0xff]
    %v6116 = vld [vmem:[#allocation4 + $0xab8] sm:$0xff]
    %v6117 = vld [vmem:[#allocation4 + $0xac0] sm:$0xff]
    %v6118 = vld [vmem:[#allocation4 + $0xac8] sm:$0xff]
    %v6119 = vld [vmem:[#allocation4 + $0xad0] sm:$0xff]
    %v6120 = vld [vmem:[#allocation4 + $0xad8] sm:$0xff]
    %v6121 = vld [vmem:[#allocation4 + $0xae0] sm:$0xff]
    %v6122 = vld [vmem:[#allocation4 + $0xae8] sm:$0xff]
    %v6123 = vld [vmem:[#allocation4 + $0xaf0] sm:$0xff]
    %v6124 = vld [vmem:[#allocation4 + $0xaf8] sm:$0xff]
    %v6125 = vld [vmem:[#allocation4 + $0xb00] sm:$0xff]
    %v6126 = vld [vmem:[#allocation4 + $0xb08] sm:$0xff]
    %v6127 = vld [vmem:[#allocation4 + $0xb10] sm:$0xff]
    %v6128 = vld [vmem:[#allocation4 + $0xb18] sm:$0xff]
    %v6129 = vld [vmem:[#allocation4 + $0xb20] sm:$0xff]
    %v6130 = vld [vmem:[#allocation4 + $0xb28] sm:$0xff]
    %v6131 = vld [vmem:[#allocation4 + $0xb30] sm:$0xff]
    %v6132 = vld [vmem:[#allocation4 + $0xb38] sm:$0xff]
    %v6133 = vld [vmem:[#allocation4 + $0xb40] sm:$0xff]
    %v6134 = vld [vmem:[#allocation4 + $0xb48] sm:$0xff]
    %v6135 = vld [vmem:[#allocation4 + $0xb50] sm:$0xff]
    %v6136 = vld [vmem:[#allocation4 + $0xb58] sm:$0xff]
    %v6137 = vld [vmem:[#allocation4 + $0xb60] sm:$0xff]
    %v6138 = vld [vmem:[#allocation4 + $0xb68] sm:$0xff]
    %v6139 = vld [vmem:[#allocation4 + $0xb70] sm:$0xff]
    %v6140 = vld [vmem:[#allocation4 + $0xb78] sm:$0xff]
    %v6141 = vld [vmem:[#allocation4 + $0xb80] sm:$0xff]
    %v6142 = vld [vmem:[#allocation4 + $0xb88] sm:$0xff]
    %v6143 = vld [vmem:[#allocation4 + $0xb90] sm:$0xff]
    %v6144 = vld [vmem:[#allocation4 + $0xb98] sm:$0xff]
    %v6145 = vld [vmem:[#allocation4 + $0xba0] sm:$0xff]
    %v6146 = vld [vmem:[#allocation4 + $0xba8] sm:$0xff]
    %v6147 = vld [vmem:[#allocation4 + $0xbb0] sm:$0xff]
    %v6148 = vld [vmem:[#allocation4 + $0xbb8] sm:$0xff]
    %v6149 = vld [vmem:[#allocation4 + $0xbc0] sm:$0xff]
    %v6150 = vld [vmem:[#allocation4 + $0xbc8] sm:$0xff]
    %v6151 = vld [vmem:[#allocation4 + $0xbd0] sm:$0xff]
    %v6152 = vld [vmem:[#allocation4 + $0xbd8] sm:$0xff]
    %v6153 = vld [vmem:[#allocation4 + $0xbe0] sm:$0xff]
    %v6154 = vld [vmem:[#allocation4 + $0xbe8] sm:$0xff]
    %v6155 = vld [vmem:[#allocation4 + $0xbf0] sm:$0xff]
    %v6156 = vld [vmem:[#allocation4 + $0xbf8] sm:$0xff]
    %v6157 = vld [vmem:[#allocation4 + $0xc00] sm:$0xff]
    %v6158 = vld [vmem:[#allocation4 + $0xc08] sm:$0xff]
    %v6159 = vld [vmem:[#allocation4 + $0xc10] sm:$0xff]
    %v6160 = vld [vmem:[#allocation4 + $0xc18] sm:$0xff]
    %v6161 = vld [vmem:[#allocation4 + $0xc20] sm:$0xff]
    %v6162 = vld [vmem:[#allocation4 + $0xc28] sm:$0xff]
    %v6163 = vld [vmem:[#allocation4 + $0xc30] sm:$0xff]
    %v6164 = vld [vmem:[#allocation4 + $0xc38] sm:$0xff]
    %v6165 = vld [vmem:[#allocation4 + $0xc40] sm:$0xff]
    %v6166 = vld [vmem:[#allocation4 + $0xc48] sm:$0xff]
    %v6167 = vld [vmem:[#allocation4 + $0xc50] sm:$0xff]
    %v6168 = vld [vmem:[#allocation4 + $0xc58] sm:$0xff]
    %v6169 = vld [vmem:[#allocation4 + $0xc60] sm:$0xff]
    %v6170 = vld [vmem:[#allocation4 + $0xc68] sm:$0xff]
    %v6171 = vld [vmem:[#allocation4 + $0xc70] sm:$0xff]
    %v6172 = vld [vmem:[#allocation4 + $0xc78] sm:$0xff]
    %v6173 = vld [vmem:[#allocation4 + $0xc80] sm:$0xff]
    %v6174 = vld [vmem:[#allocation4 + $0xc88] sm:$0xff]
    %v6175 = vld [vmem:[#allocation4 + $0xc90] sm:$0xff]
    %v6176 = vld [vmem:[#allocation4 + $0xc98] sm:$0xff]
    %v6177 = vld [vmem:[#allocation4 + $0xca0] sm:$0xff]
    %v6178 = vld [vmem:[#allocation4 + $0xca8] sm:$0xff]
    %v6179 = vld [vmem:[#allocation4 + $0xcb0] sm:$0xff]
    %v6180 = vld [vmem:[#allocation4 + $0xcb8] sm:$0xff]
    %v6181 = vld [vmem:[#allocation4 + $0xcc0] sm:$0xff]
    %v6182 = vld [vmem:[#allocation4 + $0xcc8] sm:$0xff]
    %v6183 = vld [vmem:[#allocation4 + $0xcd0] sm:$0xff]
    %v6184 = vld [vmem:[#allocation4 + $0xcd8] sm:$0xff]
    %v6185 = vld [vmem:[#allocation4 + $0xce0] sm:$0xff]
    %v6186 = vld [vmem:[#allocation4 + $0xce8] sm:$0xff]
    %v6187 = vld [vmem:[#allocation4 + $0xcf0] sm:$0xff]
    %v6188 = vld [vmem:[#allocation4 + $0xcf8] sm:$0xff]
    %v6189 = vld [vmem:[#allocation4 + $0xd00] sm:$0xff]
    %v6190 = vld [vmem:[#allocation4 + $0xd08] sm:$0xff]
    %v6191 = vld [vmem:[#allocation4 + $0xd10] sm:$0xff]
    %v6192 = vld [vmem:[#allocation4 + $0xd18] sm:$0xff]
    %v6193 = vld [vmem:[#allocation4 + $0xd20] sm:$0xff]
    %v6194 = vld [vmem:[#allocation4 + $0xd28] sm:$0xff]
    %v6195 = vld [vmem:[#allocation4 + $0xd30] sm:$0xff]
    %v6196 = vld [vmem:[#allocation4 + $0xd38] sm:$0xff]
    %v6197 = vld [vmem:[#allocation4 + $0xd40] sm:$0xff]
    %v6198 = vld [vmem:[#allocation4 + $0xd48] sm:$0xff]
    %v6199 = vld [vmem:[#allocation4 + $0xd50] sm:$0xff]
    %v6200 = vld [vmem:[#allocation4 + $0xd58] sm:$0xff]
    %v6201 = vld [vmem:[#allocation4 + $0xd60] sm:$0xff]
    %v6202 = vld [vmem:[#allocation4 + $0xd68] sm:$0xff]
    %v6203 = vld [vmem:[#allocation4 + $0xd70] sm:$0xff]
    %v6204 = vld [vmem:[#allocation4 + $0xd78] sm:$0xff]
    %v6205 = vld [vmem:[#allocation4 + $0xd80] sm:$0xff]
    %v6206 = vld [vmem:[#allocation4 + $0xd88] sm:$0xff]
    %v6207 = vld [vmem:[#allocation4 + $0xd90] sm:$0xff]
    %v6208 = vld [vmem:[#allocation4 + $0xd98] sm:$0xff]
    %v6209 = vld [vmem:[#allocation4 + $0xda0] sm:$0xff]
    %v6210 = vld [vmem:[#allocation4 + $0xda8] sm:$0xff]
    %v6211 = vld [vmem:[#allocation4 + $0xdb0] sm:$0xff]
    %v6212 = vld [vmem:[#allocation4 + $0xdb8] sm:$0xff]
    %v6213 = vld [vmem:[#allocation4 + $0xdc0] sm:$0xff]
    %v6214 = vld [vmem:[#allocation4 + $0xdc8] sm:$0xff]
    %v6215 = vld [vmem:[#allocation4 + $0xdd0] sm:$0xff]
    %v6216 = vld [vmem:[#allocation4 + $0xdd8] sm:$0xff]
    %v6217 = vld [vmem:[#allocation4 + $0xde0] sm:$0xff]
    %v6218 = vld [vmem:[#allocation4 + $0xde8] sm:$0xff]
    %v6219 = vld [vmem:[#allocation4 + $0xdf0] sm:$0xff]
    %v6220 = vld [vmem:[#allocation4 + $0xdf8] sm:$0xff]
    %v6221 = vld [vmem:[#allocation4 + $0xe00] sm:$0xff]
    %v6222 = vld [vmem:[#allocation4 + $0xe08] sm:$0xff]
    %v6223 = vld [vmem:[#allocation4 + $0xe10] sm:$0xff]
    %v6224 = vld [vmem:[#allocation4 + $0xe18] sm:$0xff]
    %v6225 = vld [vmem:[#allocation4 + $0xe20] sm:$0xff]
    %v6226 = vld [vmem:[#allocation4 + $0xe28] sm:$0xff]
    %v6227 = vld [vmem:[#allocation4 + $0xe30] sm:$0xff]
    %v6228 = vld [vmem:[#allocation4 + $0xe38] sm:$0xff]
    %v6229 = vld [vmem:[#allocation4 + $0xe40] sm:$0xff]
    %v6230 = vld [vmem:[#allocation4 + $0xe48] sm:$0xff]
    %v6231 = vld [vmem:[#allocation4 + $0xe50] sm:$0xff]
    %v6232 = vld [vmem:[#allocation4 + $0xe58] sm:$0xff]
    %v6233 = vld [vmem:[#allocation4 + $0xe60] sm:$0xff]
    %v6234 = vld [vmem:[#allocation4 + $0xe68] sm:$0xff]
    %v6235 = vld [vmem:[#allocation4 + $0xe70] sm:$0xff]
    %v6236 = vld [vmem:[#allocation4 + $0xe78] sm:$0xff]
    %v6237 = vld [vmem:[#allocation4 + $0xe80] sm:$0xff]
    %v6238 = vld [vmem:[#allocation4 + $0xe88] sm:$0xff]
    %v6239 = vld [vmem:[#allocation4 + $0xe90] sm:$0xff]
    %v6240 = vld [vmem:[#allocation4 + $0xe98] sm:$0xff]
    %v6241 = vld [vmem:[#allocation4 + $0xea0] sm:$0xff]
    %v6242 = vld [vmem:[#allocation4 + $0xea8] sm:$0xff]
    %v6243 = vld [vmem:[#allocation4 + $0xeb0] sm:$0xff]
    %v6244 = vld [vmem:[#allocation4 + $0xeb8] sm:$0xff]
    %v6245 = vld [vmem:[#allocation4 + $0xec0] sm:$0xff]
    %v6246 = vld [vmem:[#allocation4 + $0xec8] sm:$0xff]
    %v6247 = vld [vmem:[#allocation4 + $0xed0] sm:$0xff]
    %v6248 = vld [vmem:[#allocation4 + $0xed8] sm:$0xff]
    %v6249 = vld [vmem:[#allocation4 + $0xee0] sm:$0xff]
    %v6250 = vld [vmem:[#allocation4 + $0xee8] sm:$0xff]
    %v6251 = vld [vmem:[#allocation4 + $0xef0] sm:$0xff]
    %v6252 = vld [vmem:[#allocation4 + $0xef8] sm:$0xff]
    %v6253 = vld [vmem:[#allocation4 + $0xf00] sm:$0xff]
    %v6254 = vld [vmem:[#allocation4 + $0xf08] sm:$0xff]
    %v6255 = vld [vmem:[#allocation4 + $0xf10] sm:$0xff]
    %v6256 = vld [vmem:[#allocation4 + $0xf18] sm:$0xff]
    %v6257 = vld [vmem:[#allocation4 + $0xf20] sm:$0xff]
    %v6258 = vld [vmem:[#allocation4 + $0xf28] sm:$0xff]
    %v6259 = vld [vmem:[#allocation4 + $0xf30] sm:$0xff]
    %v6260 = vld [vmem:[#allocation4 + $0xf38] sm:$0xff]
    %v6261 = vld [vmem:[#allocation4 + $0xf40] sm:$0xff]
    %v6262 = vld [vmem:[#allocation4 + $0xf48] sm:$0xff]
    %v6263 = vld [vmem:[#allocation4 + $0xf50] sm:$0xff]
    %v6264 = vld [vmem:[#allocation4 + $0xf58] sm:$0xff]
    %v6265 = vld [vmem:[#allocation4 + $0xf60] sm:$0xff]
    %v6266 = vld [vmem:[#allocation4 + $0xf68] sm:$0xff]
    %v6267 = vld [vmem:[#allocation4 + $0xf70] sm:$0xff]
    %v6268 = vld [vmem:[#allocation4 + $0xf78] sm:$0xff]
    %v6269 = vld [vmem:[#allocation4 + $0xf80] sm:$0xff]
    %v6270 = vld [vmem:[#allocation4 + $0xf88] sm:$0xff]
    %v6271 = vld [vmem:[#allocation4 + $0xf90] sm:$0xff]
    %v6272 = vld [vmem:[#allocation4 + $0xf98] sm:$0xff]
    %v6273 = vld [vmem:[#allocation4 + $0xfa0] sm:$0xff]
    %v6274 = vld [vmem:[#allocation4 + $0xfa8] sm:$0xff]
    %v6275 = vld [vmem:[#allocation4 + $0xfb0] sm:$0xff]
    %v6276 = vld [vmem:[#allocation4 + $0xfb8] sm:$0xff]
    %v6277 = vld [vmem:[#allocation4 + $0xfc0] sm:$0xff]
    %v6278 = vld [vmem:[#allocation4 + $0xfc8] sm:$0xff]
    %v6279 = vld [vmem:[#allocation4 + $0xfd0] sm:$0xff]
    %v6280 = vld [vmem:[#allocation4 + $0xfd8] sm:$0xff]
    %v6281 = vld [vmem:[#allocation4 + $0xfe0] sm:$0xff]
    %v6282 = vld [vmem:[#allocation4 + $0xfe8] sm:$0xff]
    %v6283 = vld [vmem:[#allocation4 + $0xff0] sm:$0xff]
    %v6284 = vld [vmem:[#allocation4 + $0xff8] sm:$0xff]
    %v6285 = vld [vmem:[#allocation4 + $0x1000] sm:$0xff]
    %v6286 = vld [vmem:[#allocation4 + $0x1008] sm:$0xff]
    %v6287 = vld [vmem:[#allocation4 + $0x1010] sm:$0xff]
    %v6288 = vld [vmem:[#allocation4 + $0x1018] sm:$0xff]
    %v6289 = vld [vmem:[#allocation4 + $0x1020] sm:$0xff]
    %v6290 = vld [vmem:[#allocation4 + $0x1028] sm:$0xff]
    %v6291 = vld [vmem:[#allocation4 + $0x1030] sm:$0xff]
    %v6292 = vld [vmem:[#allocation4 + $0x1038] sm:$0xff]
    %v6293 = vld [vmem:[#allocation4 + $0x1040] sm:$0xff]
    %v6294 = vld [vmem:[#allocation4 + $0x1048] sm:$0xff]
    %v6295 = vld [vmem:[#allocation4 + $0x1050] sm:$0xff]
    %v6296 = vld [vmem:[#allocation4 + $0x1058] sm:$0xff]
    %v6297 = vld [vmem:[#allocation4 + $0x1060] sm:$0xff]
    %v6298 = vld [vmem:[#allocation4 + $0x1068] sm:$0xff]
    %v6299 = vld [vmem:[#allocation4 + $0x1070] sm:$0xff]
    %v6300 = vld [vmem:[#allocation4 + $0x1078] sm:$0xff]
    %v6301 = vld [vmem:[#allocation4 + $0x1080] sm:$0xff]
    %v6302 = vld [vmem:[#allocation4 + $0x1088] sm:$0xff]
    %v6303 = vld [vmem:[#allocation4 + $0x1090] sm:$0xff]
    %v6304 = vld [vmem:[#allocation4 + $0x1098] sm:$0xff]
    %v6305 = vld [vmem:[#allocation4 + $0x10a0] sm:$0xff]
    %v6306 = vld [vmem:[#allocation4 + $0x10a8] sm:$0xff]
    %v6307 = vld [vmem:[#allocation4 + $0x10b0] sm:$0xff]
    %v6308 = vld [vmem:[#allocation4 + $0x10b8] sm:$0xff]
    %v6309 = vld [vmem:[#allocation4 + $0x10c0] sm:$0xff]
    %v6310 = vld [vmem:[#allocation4 + $0x10c8] sm:$0xff]
    %v6311 = vld [vmem:[#allocation4 + $0x10d0] sm:$0xff]
    %v6312 = vld [vmem:[#allocation4 + $0x10d8] sm:$0xff]
    %v6313 = vld [vmem:[#allocation4 + $0x10e0] sm:$0xff]
    %v6314 = vld [vmem:[#allocation4 + $0x10e8] sm:$0xff]
    %v6315 = vld [vmem:[#allocation4 + $0x10f0] sm:$0xff]
    %v6316 = vld [vmem:[#allocation4 + $0x10f8] sm:$0xff]
    %v6317 = vld [vmem:[#allocation4 + $0x1100] sm:$0xff]
    %v6318 = vld [vmem:[#allocation4 + $0x1108] sm:$0xff]
    %v6319 = vld [vmem:[#allocation4 + $0x1110] sm:$0xff]
    %v6320 = vld [vmem:[#allocation4 + $0x1118] sm:$0xff]
    %v6321 = vld [vmem:[#allocation4 + $0x1120] sm:$0xff]
    %v6322 = vld [vmem:[#allocation4 + $0x1128] sm:$0xff]
    %v6323 = vld [vmem:[#allocation4 + $0x1130] sm:$0xff]
    %v6324 = vld [vmem:[#allocation4 + $0x1138] sm:$0xff]
    %v6325 = vld [vmem:[#allocation4 + $0x1140] sm:$0xff]
    %v6326 = vld [vmem:[#allocation4 + $0x1148] sm:$0xff]
    %v6327 = vld [vmem:[#allocation4 + $0x1150] sm:$0xff]
    %v6328 = vld [vmem:[#allocation4 + $0x1158] sm:$0xff]
    %v6329 = vld [vmem:[#allocation4 + $0x1160] sm:$0xff]
    %v6330 = vld [vmem:[#allocation4 + $0x1168] sm:$0xff]
    %v6331 = vld [vmem:[#allocation4 + $0x1170] sm:$0xff]
    %v6332 = vld [vmem:[#allocation4 + $0x1178] sm:$0xff]
    %v6333 = vld [vmem:[#allocation4 + $0x1180] sm:$0xff]
    %v6334 = vld [vmem:[#allocation4 + $0x1188] sm:$0xff]
    %v6335 = vld [vmem:[#allocation4 + $0x1190] sm:$0xff]
    %v6336 = vld [vmem:[#allocation4 + $0x1198] sm:$0xff]
    %v6337 = vld [vmem:[#allocation4 + $0x11a0] sm:$0xff]
    %v6338 = vld [vmem:[#allocation4 + $0x11a8] sm:$0xff]
    %v6339 = vld [vmem:[#allocation4 + $0x11b0] sm:$0xff]
    %v6340 = vld [vmem:[#allocation4 + $0x11b8] sm:$0xff]
    %v6341 = vld [vmem:[#allocation4 + $0x11c0] sm:$0xff]
    %v6342 = vld [vmem:[#allocation4 + $0x11c8] sm:$0xff]
    %v6343 = vld [vmem:[#allocation4 + $0x11d0] sm:$0xff]
    %v6344 = vld [vmem:[#allocation4 + $0x11d8] sm:$0xff]
    %v6345 = vld [vmem:[#allocation4 + $0x11e0] sm:$0xff]
    %v6346 = vld [vmem:[#allocation4 + $0x11e8] sm:$0xff]
    %v6347 = vld [vmem:[#allocation4 + $0x11f0] sm:$0xff]
    %v6348 = vld [vmem:[#allocation4 + $0x11f8] sm:$0xff]
    %v6349 = vld [vmem:[#allocation7] sm:$0xff]
    %v6350 = vld [vmem:[#allocation7 + $0x8] sm:$0xff]
    %v6351 = vld [vmem:[#allocation7 + $0x10] sm:$0xff]
    %v6352 = vld [vmem:[#allocation7 + $0x18] sm:$0xff]
    %v6353 = vld [vmem:[#allocation7 + $0x20] sm:$0xff]
    %v6354 = vld [vmem:[#allocation7 + $0x28] sm:$0xff]
    %v6355 = vld [vmem:[#allocation7 + $0x30] sm:$0xff]
    %v6356 = vld [vmem:[#allocation7 + $0x38] sm:$0xff]
    %v6357 = vld [vmem:[#allocation7 + $0x40] sm:$0xff]
    %v6358 = vld [vmem:[#allocation7 + $0x48] sm:$0xff]
    %v6359 = vld [vmem:[#allocation7 + $0x50] sm:$0xff]
    %v6360 = vld [vmem:[#allocation7 + $0x58] sm:$0xff]
    %v6361 = vld [vmem:[#allocation7 + $0x60] sm:$0xff]
    %v6362 = vld [vmem:[#allocation7 + $0x68] sm:$0xff]
    %v6363 = vld [vmem:[#allocation7 + $0x70] sm:$0xff]
    %v6364 = vld [vmem:[#allocation7 + $0x78] sm:$0xff]
    %v6365 = vld [vmem:[#allocation7 + $0x80] sm:$0xff]
    %v6366 = vld [vmem:[#allocation7 + $0x88] sm:$0xff]
    %v6367 = vld [vmem:[#allocation7 + $0x90] sm:$0xff]
    %v6368 = vld [vmem:[#allocation7 + $0x98] sm:$0xff]
    %v6369 = vld [vmem:[#allocation7 + $0xa0] sm:$0xff]
    %v6370 = vld [vmem:[#allocation7 + $0xa8] sm:$0xff]
    %v6371 = vld [vmem:[#allocation7 + $0xb0] sm:$0xff]
    %v6372 = vld [vmem:[#allocation7 + $0xb8] sm:$0xff]
    %v6373 = vld [vmem:[#allocation7 + $0xc0] sm:$0xff]
    %v6374 = vld [vmem:[#allocation7 + $0xc8] sm:$0xff]
    %v6375 = vld [vmem:[#allocation7 + $0xd0] sm:$0xff]
    %v6376 = vld [vmem:[#allocation7 + $0xd8] sm:$0xff]
    %v6377 = vld [vmem:[#allocation7 + $0xe0] sm:$0xff]
    %v6378 = vld [vmem:[#allocation7 + $0xe8] sm:$0xff]
    %v6379 = vld [vmem:[#allocation7 + $0xf0] sm:$0xff]
    %v6380 = vld [vmem:[#allocation7 + $0xf8] sm:$0xff]
    %v6381 = vld [vmem:[#allocation7 + $0x100] sm:$0xff]
    %v6382 = vld [vmem:[#allocation7 + $0x108] sm:$0xff]
    %v6383 = vld [vmem:[#allocation7 + $0x110] sm:$0xff]
    %v6384 = vld [vmem:[#allocation7 + $0x118] sm:$0xff]
    %v6385 = vld [vmem:[#allocation7 + $0x120] sm:$0xff]
    %v6386 = vld [vmem:[#allocation7 + $0x128] sm:$0xff]
    %v6387 = vld [vmem:[#allocation7 + $0x130] sm:$0xff]
    %v6388 = vld [vmem:[#allocation7 + $0x138] sm:$0xff]
    %v6389 = vld [vmem:[#allocation7 + $0x140] sm:$0xff]
    %v6390 = vld [vmem:[#allocation7 + $0x148] sm:$0xff]
    %v6391 = vld [vmem:[#allocation7 + $0x150] sm:$0xff]
    %v6392 = vld [vmem:[#allocation7 + $0x158] sm:$0xff]
    %v6393 = vld [vmem:[#allocation7 + $0x160] sm:$0xff]
    %v6394 = vld [vmem:[#allocation7 + $0x168] sm:$0xff]
    %v6395 = vld [vmem:[#allocation7 + $0x170] sm:$0xff]
    %v6396 = vld [vmem:[#allocation7 + $0x178] sm:$0xff]
    %v6397 = vld [vmem:[#allocation7 + $0x180] sm:$0xff]
    %v6398 = vld [vmem:[#allocation7 + $0x188] sm:$0xff]
    %v6399 = vld [vmem:[#allocation7 + $0x190] sm:$0xff]
    %v6400 = vld [vmem:[#allocation7 + $0x198] sm:$0xff]
    %v6401 = vld [vmem:[#allocation7 + $0x1a0] sm:$0xff]
    %v6402 = vld [vmem:[#allocation7 + $0x1a8] sm:$0xff]
    %v6403 = vld [vmem:[#allocation7 + $0x1b0] sm:$0xff]
    %v6404 = vld [vmem:[#allocation7 + $0x1b8] sm:$0xff]
    %v6405 = vld [vmem:[#allocation7 + $0x1c0] sm:$0xff]
    %v6406 = vld [vmem:[#allocation7 + $0x1c8] sm:$0xff]
    %v6407 = vld [vmem:[#allocation7 + $0x1d0] sm:$0xff]
    %v6408 = vld [vmem:[#allocation7 + $0x1d8] sm:$0xff]
    %v6409 = vld [vmem:[#allocation7 + $0x1e0] sm:$0xff]
    %v6410 = vld [vmem:[#allocation7 + $0x1e8] sm:$0xff]
    %v6411 = vld [vmem:[#allocation7 + $0x1f0] sm:$0xff]
    %v6412 = vld [vmem:[#allocation7 + $0x1f8] sm:$0xff]
    %v6413 = vld [vmem:[#allocation7 + $0x200] sm:$0xff]
    %v6414 = vld [vmem:[#allocation7 + $0x208] sm:$0xff]
    %v6415 = vld [vmem:[#allocation7 + $0x210] sm:$0xff]
    %v6416 = vld [vmem:[#allocation7 + $0x218] sm:$0xff]
    %v6417 = vld [vmem:[#allocation7 + $0x220] sm:$0xff]
    %v6418 = vld [vmem:[#allocation7 + $0x228] sm:$0xff]
    %v6419 = vld [vmem:[#allocation7 + $0x230] sm:$0xff]
    %v6420 = vld [vmem:[#allocation7 + $0x238] sm:$0xff]
    %v6421 = vld [vmem:[#allocation7 + $0x240] sm:$0xff]
    %v6422 = vld [vmem:[#allocation7 + $0x248] sm:$0xff]
    %v6423 = vld [vmem:[#allocation7 + $0x250] sm:$0xff]
    %v6424 = vld [vmem:[#allocation7 + $0x258] sm:$0xff]
    %v6425 = vld [vmem:[#allocation7 + $0x260] sm:$0xff]
    %v6426 = vld [vmem:[#allocation7 + $0x268] sm:$0xff]
    %v6427 = vld [vmem:[#allocation7 + $0x270] sm:$0xff]
    %v6428 = vld [vmem:[#allocation7 + $0x278] sm:$0xff]
    %v6429 = vld [vmem:[#allocation7 + $0x280] sm:$0xff]
    %v6430 = vld [vmem:[#allocation7 + $0x288] sm:$0xff]
    %v6431 = vld [vmem:[#allocation7 + $0x290] sm:$0xff]
    %v6432 = vld [vmem:[#allocation7 + $0x298] sm:$0xff]
    %v6433 = vld [vmem:[#allocation7 + $0x2a0] sm:$0xff]
    %v6434 = vld [vmem:[#allocation7 + $0x2a8] sm:$0xff]
    %v6435 = vld [vmem:[#allocation7 + $0x2b0] sm:$0xff]
    %v6436 = vld [vmem:[#allocation7 + $0x2b8] sm:$0xff]
    %v6437 = vld [vmem:[#allocation7 + $0x2c0] sm:$0xff]
    %v6438 = vld [vmem:[#allocation7 + $0x2c8] sm:$0xff]
    %v6439 = vld [vmem:[#allocation7 + $0x2d0] sm:$0xff]
    %v6440 = vld [vmem:[#allocation7 + $0x2d8] sm:$0xff]
    %v6441 = vld [vmem:[#allocation7 + $0x2e0] sm:$0xff]
    %v6442 = vld [vmem:[#allocation7 + $0x2e8] sm:$0xff]
    %v6443 = vld [vmem:[#allocation7 + $0x2f0] sm:$0xff]
    %v6444 = vld [vmem:[#allocation7 + $0x2f8] sm:$0xff]
    %v6445 = vld [vmem:[#allocation7 + $0x300] sm:$0xff]
    %v6446 = vld [vmem:[#allocation7 + $0x308] sm:$0xff]
    %v6447 = vld [vmem:[#allocation7 + $0x310] sm:$0xff]
    %v6448 = vld [vmem:[#allocation7 + $0x318] sm:$0xff]
    %v6449 = vld [vmem:[#allocation7 + $0x320] sm:$0xff]
    %v6450 = vld [vmem:[#allocation7 + $0x328] sm:$0xff]
    %v6451 = vld [vmem:[#allocation7 + $0x330] sm:$0xff]
    %v6452 = vld [vmem:[#allocation7 + $0x338] sm:$0xff]
    %v6453 = vld [vmem:[#allocation7 + $0x340] sm:$0xff]
    %v6454 = vld [vmem:[#allocation7 + $0x348] sm:$0xff]
    %v6455 = vld [vmem:[#allocation7 + $0x350] sm:$0xff]
    %v6456 = vld [vmem:[#allocation7 + $0x358] sm:$0xff]
    %v6457 = vld [vmem:[#allocation7 + $0x360] sm:$0xff]
    %v6458 = vld [vmem:[#allocation7 + $0x368] sm:$0xff]
    %v6459 = vld [vmem:[#allocation7 + $0x370] sm:$0xff]
    %v6460 = vld [vmem:[#allocation7 + $0x378] sm:$0xff]
    %v6461 = vld [vmem:[#allocation7 + $0x380] sm:$0xff]
    %v6462 = vld [vmem:[#allocation7 + $0x388] sm:$0xff]
    %v6463 = vld [vmem:[#allocation7 + $0x390] sm:$0xff]
    %v6464 = vld [vmem:[#allocation7 + $0x398] sm:$0xff]
    %v6465 = vld [vmem:[#allocation7 + $0x3a0] sm:$0xff]
    %v6466 = vld [vmem:[#allocation7 + $0x3a8] sm:$0xff]
    %v6467 = vld [vmem:[#allocation7 + $0x3b0] sm:$0xff]
    %v6468 = vld [vmem:[#allocation7 + $0x3b8] sm:$0xff]
    %v6469 = vld [vmem:[#allocation7 + $0x3c0] sm:$0xff]
    %v6470 = vld [vmem:[#allocation7 + $0x3c8] sm:$0xff]
    %v6471 = vld [vmem:[#allocation7 + $0x3d0] sm:$0xff]
    %v6472 = vld [vmem:[#allocation7 + $0x3d8] sm:$0xff]
    %v6473 = vld [vmem:[#allocation7 + $0x3e0] sm:$0xff]
    %v6474 = vld [vmem:[#allocation7 + $0x3e8] sm:$0xff]
    %v6475 = vld [vmem:[#allocation7 + $0x3f0] sm:$0xff]
    %v6476 = vld [vmem:[#allocation7 + $0x3f8] sm:$0xff]
    %v6477 = vld [vmem:[#allocation7 + $0x400] sm:$0xff]
    %v6478 = vld [vmem:[#allocation7 + $0x408] sm:$0xff]
    %v6479 = vld [vmem:[#allocation7 + $0x410] sm:$0xff]
    %v6480 = vld [vmem:[#allocation7 + $0x418] sm:$0xff]
    %v6481 = vld [vmem:[#allocation7 + $0x420] sm:$0xff]
    %v6482 = vld [vmem:[#allocation7 + $0x428] sm:$0xff]
    %v6483 = vld [vmem:[#allocation7 + $0x430] sm:$0xff]
    %v6484 = vld [vmem:[#allocation7 + $0x438] sm:$0xff]
    %v6485 = vld [vmem:[#allocation7 + $0x440] sm:$0xff]
    %v6486 = vld [vmem:[#allocation7 + $0x448] sm:$0xff]
    %v6487 = vld [vmem:[#allocation7 + $0x450] sm:$0xff]
    %v6488 = vld [vmem:[#allocation7 + $0x458] sm:$0xff]
    %v6489 = vld [vmem:[#allocation7 + $0x460] sm:$0xff]
    %v6490 = vld [vmem:[#allocation7 + $0x468] sm:$0xff]
    %v6491 = vld [vmem:[#allocation7 + $0x470] sm:$0xff]
    %v6492 = vld [vmem:[#allocation7 + $0x478] sm:$0xff]
    %6493 = vmatpush.msra.mxu0 %v6364
    %6494 = vmatpush.msra.mxu0 %v6363
    %6495 = vmatpush.msra.mxu0 %v6362
    %6496 = vmatpush.msra.mxu0 %v6361
    %6497 = vmatpush.msra.mxu0 %v6360
    %6498 = vmatpush.msra.mxu0 %v6359
    %6499 = vmatpush.msra.mxu0 %v6358
    %6500 = vmatpush.msra.mxu0 %v6357
    %6501 = vmatpush.msra.mxu0 %v6356
    %6502 = vmatpush.msra.mxu0 %v6355
    %6503 = vmatpush.msra.mxu0 %v6354
    %6504 = vmatpush.msra.mxu0 %v6353
    %6505 = vmatpush.msra.mxu0 %v6352
    %6506 = vmatpush.msra.mxu0 %v6351
    %6507 = vmatpush.msra.mxu0 %v6350
    %6508 = vmatpush.msra.mxu0 %v6349
    %6509 = vmatmul.f32.gmra.mxu0 %v5773
    %v6510 = vpop.f32.mrf.mxu0
    %v6511 = vadd.f32 0.0, %v6510
    %6512 = vmatmul.f32.gmra.mxu0 %v5782
    %v6513 = vpop.f32.mrf.mxu0
    %v6514 = vadd.f32 0.0, %v6513
    %6515 = vmatmul.f32.gmra.mxu0 %v5791
    %v6516 = vpop.f32.mrf.mxu0
    %v6517 = vadd.f32 0.0, %v6516
    %6518 = vmatmul.f32.gmra.mxu0 %v5800
    %v6519 = vpop.f32.mrf.mxu0
    %v6520 = vadd.f32 0.0, %v6519
    %6521 = vmatmul.f32.gmra.mxu0 %v5809
    %v6522 = vpop.f32.mrf.mxu0
    %v6523 = vadd.f32 0.0, %v6522
    %6524 = vmatmul.f32.gmra.mxu0 %v5818
    %v6525 = vpop.f32.mrf.mxu0
    %v6526 = vadd.f32 0.0, %v6525
    %6527 = vmatmul.f32.gmra.mxu0 %v5827
    %v6528 = vpop.f32.mrf.mxu0
    %v6529 = vadd.f32 0.0, %v6528
    %6530 = vmatmul.f32.gmra.mxu0 %v5836
    %v6531 = vpop.f32.mrf.mxu0
    %v6532 = vadd.f32 0.0, %v6531
    %6533 = vmatmul.f32.gmra.mxu0 %v5845
    %v6534 = vpop.f32.mrf.mxu0
    %v6535 = vadd.f32 0.0, %v6534
    %6536 = vmatmul.f32.gmra.mxu0 %v5854
    %v6537 = vpop.f32.mrf.mxu0
    %v6538 = vadd.f32 0.0, %v6537
    %6539 = vmatmul.f32.gmra.mxu0 %v5863
    %v6540 = vpop.f32.mrf.mxu0
    %v6541 = vadd.f32 0.0, %v6540
    %6542 = vmatmul.f32.gmra.mxu0 %v5872
    %v6543 = vpop.f32.mrf.mxu0
    %v6544 = vadd.f32 0.0, %v6543
    %6545 = vmatmul.f32.gmra.mxu0 %v5881
    %v6546 = vpop.f32.mrf.mxu0
    %v6547 = vadd.f32 0.0, %v6546
    %6548 = vmatmul.f32.gmra.mxu0 %v5890
    %v6549 = vpop.f32.mrf.mxu0
    %v6550 = vadd.f32 0.0, %v6549
    %6551 = vmatmul.f32.gmra.mxu0 %v5899
    %v6552 = vpop.f32.mrf.mxu0
    %v6553 = vadd.f32 0.0, %v6552
    %6554 = vmatmul.f32.gmra.mxu0 %v5908
    %v6555 = vpop.f32.mrf.mxu0
    %v6556 = vadd.f32 0.0, %v6555
    %6557 = vmatmul.f32.gmra.mxu0 %v5917
    %v6558 = vpop.f32.mrf.mxu0
    %v6559 = vadd.f32 0.0, %v6558
    %6560 = vmatmul.f32.gmra.mxu0 %v5926
    %v6561 = vpop.f32.mrf.mxu0
    %v6562 = vadd.f32 0.0, %v6561
    %6563 = vmatmul.f32.gmra.mxu0 %v5935
    %v6564 = vpop.f32.mrf.mxu0
    %v6565 = vadd.f32 0.0, %v6564
    %6566 = vmatmul.f32.gmra.mxu0 %v5944
    %v6567 = vpop.f32.mrf.mxu0
    %v6568 = vadd.f32 0.0, %v6567
    %6569 = vmatmul.f32.gmra.mxu0 %v5953
    %v6570 = vpop.f32.mrf.mxu0
    %v6571 = vadd.f32 0.0, %v6570
    %6572 = vmatmul.f32.gmra.mxu0 %v5962
    %v6573 = vpop.f32.mrf.mxu0
    %v6574 = vadd.f32 0.0, %v6573
    %6575 = vmatmul.f32.gmra.mxu0 %v5971
    %v6576 = vpop.f32.mrf.mxu0
    %v6577 = vadd.f32 0.0, %v6576
    %6578 = vmatmul.f32.gmra.mxu0 %v5980
    %v6579 = vpop.f32.mrf.mxu0
    %v6580 = vadd.f32 0.0, %v6579
    %6581 = vmatmul.f32.gmra.mxu0 %v5989
    %v6582 = vpop.f32.mrf.mxu0
    %v6583 = vadd.f32 0.0, %v6582
    %6584 = vmatmul.f32.gmra.mxu0 %v5998
    %v6585 = vpop.f32.mrf.mxu0
    %v6586 = vadd.f32 0.0, %v6585
    %6587 = vmatmul.f32.gmra.mxu0 %v6007
    %v6588 = vpop.f32.mrf.mxu0
    %v6589 = vadd.f32 0.0, %v6588
    %6590 = vmatmul.f32.gmra.mxu0 %v6016
    %v6591 = vpop.f32.mrf.mxu0
    %v6592 = vadd.f32 0.0, %v6591
    %6593 = vmatmul.f32.gmra.mxu0 %v6025
    %v6594 = vpop.f32.mrf.mxu0
    %v6595 = vadd.f32 0.0, %v6594
    %6596 = vmatmul.f32.gmra.mxu0 %v6034
    %v6597 = vpop.f32.mrf.mxu0
    %v6598 = vadd.f32 0.0, %v6597
    %6599 = vmatmul.f32.gmra.mxu0 %v6043
    %v6600 = vpop.f32.mrf.mxu0
    %v6601 = vadd.f32 0.0, %v6600
    %6602 = vmatmul.f32.gmra.mxu0 %v6052
    %v6603 = vpop.f32.mrf.mxu0
    %v6604 = vadd.f32 0.0, %v6603
    %6605 = vmatmul.f32.gmra.mxu0 %v6061
    %v6606 = vpop.f32.mrf.mxu0
    %v6607 = vadd.f32 0.0, %v6606
    %6608 = vmatmul.f32.gmra.mxu0 %v6070
    %v6609 = vpop.f32.mrf.mxu0
    %v6610 = vadd.f32 0.0, %v6609
    %6611 = vmatmul.f32.gmra.mxu0 %v6079
    %v6612 = vpop.f32.mrf.mxu0
    %v6613 = vadd.f32 0.0, %v6612
    %6614 = vmatmul.f32.gmra.mxu0 %v6088
    %v6615 = vpop.f32.mrf.mxu0
    %v6616 = vadd.f32 0.0, %v6615
    %6617 = vmatmul.f32.gmra.mxu0 %v6097
    %v6618 = vpop.f32.mrf.mxu0
    %v6619 = vadd.f32 0.0, %v6618
    %6620 = vmatmul.f32.gmra.mxu0 %v6106
    %v6621 = vpop.f32.mrf.mxu0
    %v6622 = vadd.f32 0.0, %v6621
    %6623 = vmatmul.f32.gmra.mxu0 %v6115
    %v6624 = vpop.f32.mrf.mxu0
    %v6625 = vadd.f32 0.0, %v6624
    %6626 = vmatmul.f32.gmra.mxu0 %v6124
    %v6627 = vpop.f32.mrf.mxu0
    %v6628 = vadd.f32 0.0, %v6627
    %6629 = vmatmul.f32.gmra.mxu0 %v6133
    %v6630 = vpop.f32.mrf.mxu0
    %v6631 = vadd.f32 0.0, %v6630
    %6632 = vmatmul.f32.gmra.mxu0 %v6142
    %v6633 = vpop.f32.mrf.mxu0
    %v6634 = vadd.f32 0.0, %v6633
    %6635 = vmatmul.f32.gmra.mxu0 %v6151
    %v6636 = vpop.f32.mrf.mxu0
    %v6637 = vadd.f32 0.0, %v6636
    %6638 = vmatmul.f32.gmra.mxu0 %v6160
    %v6639 = vpop.f32.mrf.mxu0
    %v6640 = vadd.f32 0.0, %v6639
    %6641 = vmatmul.f32.gmra.mxu0 %v6169
    %v6642 = vpop.f32.mrf.mxu0
    %v6643 = vadd.f32 0.0, %v6642
    %6644 = vmatmul.f32.gmra.mxu0 %v6178
    %v6645 = vpop.f32.mrf.mxu0
    %v6646 = vadd.f32 0.0, %v6645
    %6647 = vmatmul.f32.gmra.mxu0 %v6187
    %v6648 = vpop.f32.mrf.mxu0
    %v6649 = vadd.f32 0.0, %v6648
    %6650 = vmatmul.f32.gmra.mxu0 %v6196
    %v6651 = vpop.f32.mrf.mxu0
    %v6652 = vadd.f32 0.0, %v6651
    %6653 = vmatmul.f32.gmra.mxu0 %v6205
    %v6654 = vpop.f32.mrf.mxu0
    %v6655 = vadd.f32 0.0, %v6654
    %6656 = vmatmul.f32.gmra.mxu0 %v6214
    %v6657 = vpop.f32.mrf.mxu0
    %v6658 = vadd.f32 0.0, %v6657
    %6659 = vmatmul.f32.gmra.mxu0 %v6223
    %v6660 = vpop.f32.mrf.mxu0
    %v6661 = vadd.f32 0.0, %v6660
    %6662 = vmatmul.f32.gmra.mxu0 %v6232
    %v6663 = vpop.f32.mrf.mxu0
    %v6664 = vadd.f32 0.0, %v6663
    %6665 = vmatmul.f32.gmra.mxu0 %v6241
    %v6666 = vpop.f32.mrf.mxu0
    %v6667 = vadd.f32 0.0, %v6666
    %6668 = vmatmul.f32.gmra.mxu0 %v6250
    %v6669 = vpop.f32.mrf.mxu0
    %v6670 = vadd.f32 0.0, %v6669
    %6671 = vmatmul.f32.gmra.mxu0 %v6259
    %v6672 = vpop.f32.mrf.mxu0
    %v6673 = vadd.f32 0.0, %v6672
    %6674 = vmatmul.f32.gmra.mxu0 %v6268
    %v6675 = vpop.f32.mrf.mxu0
    %v6676 = vadd.f32 0.0, %v6675
    %6677 = vmatmul.f32.gmra.mxu0 %v6277
    %v6678 = vpop.f32.mrf.mxu0
    %v6679 = vadd.f32 0.0, %v6678
    %6680 = vmatmul.f32.gmra.mxu0 %v6286
    %v6681 = vpop.f32.mrf.mxu0
    %v6682 = vadd.f32 0.0, %v6681
    %6683 = vmatmul.f32.gmra.mxu0 %v6295
    %v6684 = vpop.f32.mrf.mxu0
    %v6685 = vadd.f32 0.0, %v6684
    %6686 = vmatmul.f32.gmra.mxu0 %v6304
    %v6687 = vpop.f32.mrf.mxu0
    %v6688 = vadd.f32 0.0, %v6687
    %6689 = vmatmul.f32.gmra.mxu0 %v6313
    %v6690 = vpop.f32.mrf.mxu0
    %v6691 = vadd.f32 0.0, %v6690
    %6692 = vmatmul.f32.gmra.mxu0 %v6322
    %v6693 = vpop.f32.mrf.mxu0
    %v6694 = vadd.f32 0.0, %v6693
    %6695 = vmatmul.f32.gmra.mxu0 %v6331
    %v6696 = vpop.f32.mrf.mxu0
    %v6697 = vadd.f32 0.0, %v6696
    %6698 = vmatmul.f32.gmra.mxu0 %v6340
    %v6699 = vpop.f32.mrf.mxu0
    %v6700 = vadd.f32 0.0, %v6699
    %6701 = vdwg.mxu0
    %6702 = vmatpush.msra.mxu0 %v6380
    %6703 = vmatpush.msra.mxu0 %v6379
    %6704 = vmatpush.msra.mxu0 %v6378
    %6705 = vmatpush.msra.mxu0 %v6377
    %6706 = vmatpush.msra.mxu0 %v6376
    %6707 = vmatpush.msra.mxu0 %v6375
    %6708 = vmatpush.msra.mxu0 %v6374
    %6709 = vmatpush.msra.mxu0 %v6373
    %6710 = vmatpush.msra.mxu0 %v6372
    %6711 = vmatpush.msra.mxu0 %v6371
    %6712 = vmatpush.msra.mxu0 %v6370
    %6713 = vmatpush.msra.mxu0 %v6369
    %6714 = vmatpush.msra.mxu0 %v6368
    %6715 = vmatpush.msra.mxu0 %v6367
    %6716 = vmatpush.msra.mxu0 %v6366
    %6717 = vmatpush.msra.mxu0 %v6365
    %6718 = vmatmul.f32.gmra.mxu0 %v5774
    %v6719 = vpop.f32.mrf.mxu0
    %v6720 = vadd.f32 %v6511, %v6719
    %6721 = vmatmul.f32.gmra.mxu0 %v5783
    %v6722 = vpop.f32.mrf.mxu0
    %v6723 = vadd.f32 %v6514, %v6722
    %6724 = vmatmul.f32.gmra.mxu0 %v5792
    %v6725 = vpop.f32.mrf.mxu0
    %v6726 = vadd.f32 %v6517, %v6725
    %6727 = vmatmul.f32.gmra.mxu0 %v5801
    %v6728 = vpop.f32.mrf.mxu0
    %v6729 = vadd.f32 %v6520, %v6728
    %6730 = vmatmul.f32.gmra.mxu0 %v5810
    %v6731 = vpop.f32.mrf.mxu0
    %v6732 = vadd.f32 %v6523, %v6731
    %6733 = vmatmul.f32.gmra.mxu0 %v5819
    %v6734 = vpop.f32.mrf.mxu0
    %v6735 = vadd.f32 %v6526, %v6734
    %6736 = vmatmul.f32.gmra.mxu0 %v5828
    %v6737 = vpop.f32.mrf.mxu0
    %v6738 = vadd.f32 %v6529, %v6737
    %6739 = vmatmul.f32.gmra.mxu0 %v5837
    %v6740 = vpop.f32.mrf.mxu0
    %v6741 = vadd.f32 %v6532, %v6740
    %6742 = vmatmul.f32.gmra.mxu0 %v5846
    %v6743 = vpop.f32.mrf.mxu0
    %v6744 = vadd.f32 %v6535, %v6743
    %6745 = vmatmul.f32.gmra.mxu0 %v5855
    %v6746 = vpop.f32.mrf.mxu0
    %v6747 = vadd.f32 %v6538, %v6746
    %6748 = vmatmul.f32.gmra.mxu0 %v5864
    %v6749 = vpop.f32.mrf.mxu0
    %v6750 = vadd.f32 %v6541, %v6749
    %6751 = vmatmul.f32.gmra.mxu0 %v5873
    %v6752 = vpop.f32.mrf.mxu0
    %v6753 = vadd.f32 %v6544, %v6752
    %6754 = vmatmul.f32.gmra.mxu0 %v5882
    %v6755 = vpop.f32.mrf.mxu0
    %v6756 = vadd.f32 %v6547, %v6755
    %6757 = vmatmul.f32.gmra.mxu0 %v5891
    %v6758 = vpop.f32.mrf.mxu0
    %v6759 = vadd.f32 %v6550, %v6758
    %6760 = vmatmul.f32.gmra.mxu0 %v5900
    %v6761 = vpop.f32.mrf.mxu0
    %v6762 = vadd.f32 %v6553, %v6761
    %6763 = vmatmul.f32.gmra.mxu0 %v5909
    %v6764 = vpop.f32.mrf.mxu0
    %v6765 = vadd.f32 %v6556, %v6764
    %6766 = vmatmul.f32.gmra.mxu0 %v5918
    %v6767 = vpop.f32.mrf.mxu0
    %v6768 = vadd.f32 %v6559, %v6767
    %6769 = vmatmul.f32.gmra.mxu0 %v5927
    %v6770 = vpop.f32.mrf.mxu0
    %v6771 = vadd.f32 %v6562, %v6770
    %6772 = vmatmul.f32.gmra.mxu0 %v5936
    %v6773 = vpop.f32.mrf.mxu0
    %v6774 = vadd.f32 %v6565, %v6773
    %6775 = vmatmul.f32.gmra.mxu0 %v5945
    %v6776 = vpop.f32.mrf.mxu0
    %v6777 = vadd.f32 %v6568, %v6776
    %6778 = vmatmul.f32.gmra.mxu0 %v5954
    %v6779 = vpop.f32.mrf.mxu0
    %v6780 = vadd.f32 %v6571, %v6779
    %6781 = vmatmul.f32.gmra.mxu0 %v5963
    %v6782 = vpop.f32.mrf.mxu0
    %v6783 = vadd.f32 %v6574, %v6782
    %6784 = vmatmul.f32.gmra.mxu0 %v5972
    %v6785 = vpop.f32.mrf.mxu0
    %v6786 = vadd.f32 %v6577, %v6785
    %6787 = vmatmul.f32.gmra.mxu0 %v5981
    %v6788 = vpop.f32.mrf.mxu0
    %v6789 = vadd.f32 %v6580, %v6788
    %6790 = vmatmul.f32.gmra.mxu0 %v5990
    %v6791 = vpop.f32.mrf.mxu0
    %v6792 = vadd.f32 %v6583, %v6791
    %6793 = vmatmul.f32.gmra.mxu0 %v5999
    %v6794 = vpop.f32.mrf.mxu0
    %v6795 = vadd.f32 %v6586, %v6794
    %6796 = vmatmul.f32.gmra.mxu0 %v6008
    %v6797 = vpop.f32.mrf.mxu0
    %v6798 = vadd.f32 %v6589, %v6797
    %6799 = vmatmul.f32.gmra.mxu0 %v6017
    %v6800 = vpop.f32.mrf.mxu0
    %v6801 = vadd.f32 %v6592, %v6800
    %6802 = vmatmul.f32.gmra.mxu0 %v6026
    %v6803 = vpop.f32.mrf.mxu0
    %v6804 = vadd.f32 %v6595, %v6803
    %6805 = vmatmul.f32.gmra.mxu0 %v6035
    %v6806 = vpop.f32.mrf.mxu0
    %v6807 = vadd.f32 %v6598, %v6806
    %6808 = vmatmul.f32.gmra.mxu0 %v6044
    %v6809 = vpop.f32.mrf.mxu0
    %v6810 = vadd.f32 %v6601, %v6809
    %6811 = vmatmul.f32.gmra.mxu0 %v6053
    %v6812 = vpop.f32.mrf.mxu0
    %v6813 = vadd.f32 %v6604, %v6812
    %6814 = vmatmul.f32.gmra.mxu0 %v6062
    %v6815 = vpop.f32.mrf.mxu0
    %v6816 = vadd.f32 %v6607, %v6815
    %6817 = vmatmul.f32.gmra.mxu0 %v6071
    %v6818 = vpop.f32.mrf.mxu0
    %v6819 = vadd.f32 %v6610, %v6818
    %6820 = vmatmul.f32.gmra.mxu0 %v6080
    %v6821 = vpop.f32.mrf.mxu0
    %v6822 = vadd.f32 %v6613, %v6821
    %6823 = vmatmul.f32.gmra.mxu0 %v6089
    %v6824 = vpop.f32.mrf.mxu0
    %v6825 = vadd.f32 %v6616, %v6824
    %6826 = vmatmul.f32.gmra.mxu0 %v6098
    %v6827 = vpop.f32.mrf.mxu0
    %v6828 = vadd.f32 %v6619, %v6827
    %6829 = vmatmul.f32.gmra.mxu0 %v6107
    %v6830 = vpop.f32.mrf.mxu0
    %v6831 = vadd.f32 %v6622, %v6830
    %6832 = vmatmul.f32.gmra.mxu0 %v6116
    %v6833 = vpop.f32.mrf.mxu0
    %v6834 = vadd.f32 %v6625, %v6833
    %6835 = vmatmul.f32.gmra.mxu0 %v6125
    %v6836 = vpop.f32.mrf.mxu0
    %v6837 = vadd.f32 %v6628, %v6836
    %6838 = vmatmul.f32.gmra.mxu0 %v6134
    %v6839 = vpop.f32.mrf.mxu0
    %v6840 = vadd.f32 %v6631, %v6839
    %6841 = vmatmul.f32.gmra.mxu0 %v6143
    %v6842 = vpop.f32.mrf.mxu0
    %v6843 = vadd.f32 %v6634, %v6842
    %6844 = vmatmul.f32.gmra.mxu0 %v6152
    %v6845 = vpop.f32.mrf.mxu0
    %v6846 = vadd.f32 %v6637, %v6845
    %6847 = vmatmul.f32.gmra.mxu0 %v6161
    %v6848 = vpop.f32.mrf.mxu0
    %v6849 = vadd.f32 %v6640, %v6848
    %6850 = vmatmul.f32.gmra.mxu0 %v6170
    %v6851 = vpop.f32.mrf.mxu0
    %v6852 = vadd.f32 %v6643, %v6851
    %6853 = vmatmul.f32.gmra.mxu0 %v6179
    %v6854 = vpop.f32.mrf.mxu0
    %v6855 = vadd.f32 %v6646, %v6854
    %6856 = vmatmul.f32.gmra.mxu0 %v6188
    %v6857 = vpop.f32.mrf.mxu0
    %v6858 = vadd.f32 %v6649, %v6857
    %6859 = vmatmul.f32.gmra.mxu0 %v6197
    %v6860 = vpop.f32.mrf.mxu0
    %v6861 = vadd.f32 %v6652, %v6860
    %6862 = vmatmul.f32.gmra.mxu0 %v6206
    %v6863 = vpop.f32.mrf.mxu0
    %v6864 = vadd.f32 %v6655, %v6863
    %6865 = vmatmul.f32.gmra.mxu0 %v6215
    %v6866 = vpop.f32.mrf.mxu0
    %v6867 = vadd.f32 %v6658, %v6866
    %6868 = vmatmul.f32.gmra.mxu0 %v6224
    %v6869 = vpop.f32.mrf.mxu0
    %v6870 = vadd.f32 %v6661, %v6869
    %6871 = vmatmul.f32.gmra.mxu0 %v6233
    %v6872 = vpop.f32.mrf.mxu0
    %v6873 = vadd.f32 %v6664, %v6872
    %6874 = vmatmul.f32.gmra.mxu0 %v6242
    %v6875 = vpop.f32.mrf.mxu0
    %v6876 = vadd.f32 %v6667, %v6875
    %6877 = vmatmul.f32.gmra.mxu0 %v6251
    %v6878 = vpop.f32.mrf.mxu0
    %v6879 = vadd.f32 %v6670, %v6878
    %6880 = vmatmul.f32.gmra.mxu0 %v6260
    %v6881 = vpop.f32.mrf.mxu0
    %v6882 = vadd.f32 %v6673, %v6881
    %6883 = vmatmul.f32.gmra.mxu0 %v6269
    %v6884 = vpop.f32.mrf.mxu0
    %v6885 = vadd.f32 %v6676, %v6884
    %6886 = vmatmul.f32.gmra.mxu0 %v6278
    %v6887 = vpop.f32.mrf.mxu0
    %v6888 = vadd.f32 %v6679, %v6887
    %6889 = vmatmul.f32.gmra.mxu0 %v6287
    %v6890 = vpop.f32.mrf.mxu0
    %v6891 = vadd.f32 %v6682, %v6890
    %6892 = vmatmul.f32.gmra.mxu0 %v6296
    %v6893 = vpop.f32.mrf.mxu0
    %v6894 = vadd.f32 %v6685, %v6893
    %6895 = vmatmul.f32.gmra.mxu0 %v6305
    %v6896 = vpop.f32.mrf.mxu0
    %v6897 = vadd.f32 %v6688, %v6896
    %6898 = vmatmul.f32.gmra.mxu0 %v6314
    %v6899 = vpop.f32.mrf.mxu0
    %v6900 = vadd.f32 %v6691, %v6899
    %6901 = vmatmul.f32.gmra.mxu0 %v6323
    %v6902 = vpop.f32.mrf.mxu0
    %v6903 = vadd.f32 %v6694, %v6902
    %6904 = vmatmul.f32.gmra.mxu0 %v6332
    %v6905 = vpop.f32.mrf.mxu0
    %v6906 = vadd.f32 %v6697, %v6905
    %6907 = vmatmul.f32.gmra.mxu0 %v6341
    %v6908 = vpop.f32.mrf.mxu0
    %v6909 = vadd.f32 %v6700, %v6908
    %6910 = vdwg.mxu0
    %6911 = vmatpush.msra.mxu0 %v6396
    %6912 = vmatpush.msra.mxu0 %v6395
    %6913 = vmatpush.msra.mxu0 %v6394
    %6914 = vmatpush.msra.mxu0 %v6393
    %6915 = vmatpush.msra.mxu0 %v6392
    %6916 = vmatpush.msra.mxu0 %v6391
    %6917 = vmatpush.msra.mxu0 %v6390
    %6918 = vmatpush.msra.mxu0 %v6389
    %6919 = vmatpush.msra.mxu0 %v6388
    %6920 = vmatpush.msra.mxu0 %v6387
    %6921 = vmatpush.msra.mxu0 %v6386
    %6922 = vmatpush.msra.mxu0 %v6385
    %6923 = vmatpush.msra.mxu0 %v6384
    %6924 = vmatpush.msra.mxu0 %v6383
    %6925 = vmatpush.msra.mxu0 %v6382
    %6926 = vmatpush.msra.mxu0 %v6381
    %6927 = vmatmul.f32.gmra.mxu0 %v5775
    %v6928 = vpop.f32.mrf.mxu0
    %v6929 = vadd.f32 %v6720, %v6928
    %6930 = vmatmul.f32.gmra.mxu0 %v5784
    %v6931 = vpop.f32.mrf.mxu0
    %v6932 = vadd.f32 %v6723, %v6931
    %6933 = vmatmul.f32.gmra.mxu0 %v5793
    %v6934 = vpop.f32.mrf.mxu0
    %v6935 = vadd.f32 %v6726, %v6934
    %6936 = vmatmul.f32.gmra.mxu0 %v5802
    %v6937 = vpop.f32.mrf.mxu0
    %v6938 = vadd.f32 %v6729, %v6937
    %6939 = vmatmul.f32.gmra.mxu0 %v5811
    %v6940 = vpop.f32.mrf.mxu0
    %v6941 = vadd.f32 %v6732, %v6940
    %6942 = vmatmul.f32.gmra.mxu0 %v5820
    %v6943 = vpop.f32.mrf.mxu0
    %v6944 = vadd.f32 %v6735, %v6943
    %6945 = vmatmul.f32.gmra.mxu0 %v5829
    %v6946 = vpop.f32.mrf.mxu0
    %v6947 = vadd.f32 %v6738, %v6946
    %6948 = vmatmul.f32.gmra.mxu0 %v5838
    %v6949 = vpop.f32.mrf.mxu0
    %v6950 = vadd.f32 %v6741, %v6949
    %6951 = vmatmul.f32.gmra.mxu0 %v5847
    %v6952 = vpop.f32.mrf.mxu0
    %v6953 = vadd.f32 %v6744, %v6952
    %6954 = vmatmul.f32.gmra.mxu0 %v5856
    %v6955 = vpop.f32.mrf.mxu0
    %v6956 = vadd.f32 %v6747, %v6955
    %6957 = vmatmul.f32.gmra.mxu0 %v5865
    %v6958 = vpop.f32.mrf.mxu0
    %v6959 = vadd.f32 %v6750, %v6958
    %6960 = vmatmul.f32.gmra.mxu0 %v5874
    %v6961 = vpop.f32.mrf.mxu0
    %v6962 = vadd.f32 %v6753, %v6961
    %6963 = vmatmul.f32.gmra.mxu0 %v5883
    %v6964 = vpop.f32.mrf.mxu0
    %v6965 = vadd.f32 %v6756, %v6964
    %6966 = vmatmul.f32.gmra.mxu0 %v5892
    %v6967 = vpop.f32.mrf.mxu0
    %v6968 = vadd.f32 %v6759, %v6967
    %6969 = vmatmul.f32.gmra.mxu0 %v5901
    %v6970 = vpop.f32.mrf.mxu0
    %v6971 = vadd.f32 %v6762, %v6970
    %6972 = vmatmul.f32.gmra.mxu0 %v5910
    %v6973 = vpop.f32.mrf.mxu0
    %v6974 = vadd.f32 %v6765, %v6973
    %6975 = vmatmul.f32.gmra.mxu0 %v5919
    %v6976 = vpop.f32.mrf.mxu0
    %v6977 = vadd.f32 %v6768, %v6976
    %6978 = vmatmul.f32.gmra.mxu0 %v5928
    %v6979 = vpop.f32.mrf.mxu0
    %v6980 = vadd.f32 %v6771, %v6979
    %6981 = vmatmul.f32.gmra.mxu0 %v5937
    %v6982 = vpop.f32.mrf.mxu0
    %v6983 = vadd.f32 %v6774, %v6982
    %6984 = vmatmul.f32.gmra.mxu0 %v5946
    %v6985 = vpop.f32.mrf.mxu0
    %v6986 = vadd.f32 %v6777, %v6985
    %6987 = vmatmul.f32.gmra.mxu0 %v5955
    %v6988 = vpop.f32.mrf.mxu0
    %v6989 = vadd.f32 %v6780, %v6988
    %6990 = vmatmul.f32.gmra.mxu0 %v5964
    %v6991 = vpop.f32.mrf.mxu0
    %v6992 = vadd.f32 %v6783, %v6991
    %6993 = vmatmul.f32.gmra.mxu0 %v5973
    %v6994 = vpop.f32.mrf.mxu0
    %v6995 = vadd.f32 %v6786, %v6994
    %6996 = vmatmul.f32.gmra.mxu0 %v5982
    %v6997 = vpop.f32.mrf.mxu0
    %v6998 = vadd.f32 %v6789, %v6997
    %6999 = vmatmul.f32.gmra.mxu0 %v5991
    %v7000 = vpop.f32.mrf.mxu0
    %v7001 = vadd.f32 %v6792, %v7000
    %7002 = vmatmul.f32.gmra.mxu0 %v6000
    %v7003 = vpop.f32.mrf.mxu0
    %v7004 = vadd.f32 %v6795, %v7003
    %7005 = vmatmul.f32.gmra.mxu0 %v6009
    %v7006 = vpop.f32.mrf.mxu0
    %v7007 = vadd.f32 %v6798, %v7006
    %7008 = vmatmul.f32.gmra.mxu0 %v6018
    %v7009 = vpop.f32.mrf.mxu0
    %v7010 = vadd.f32 %v6801, %v7009
    %7011 = vmatmul.f32.gmra.mxu0 %v6027
    %v7012 = vpop.f32.mrf.mxu0
    %v7013 = vadd.f32 %v6804, %v7012
    %7014 = vmatmul.f32.gmra.mxu0 %v6036
    %v7015 = vpop.f32.mrf.mxu0
    %v7016 = vadd.f32 %v6807, %v7015
    %7017 = vmatmul.f32.gmra.mxu0 %v6045
    %v7018 = vpop.f32.mrf.mxu0
    %v7019 = vadd.f32 %v6810, %v7018
    %7020 = vmatmul.f32.gmra.mxu0 %v6054
    %v7021 = vpop.f32.mrf.mxu0
    %v7022 = vadd.f32 %v6813, %v7021
    %7023 = vmatmul.f32.gmra.mxu0 %v6063
    %v7024 = vpop.f32.mrf.mxu0
    %v7025 = vadd.f32 %v6816, %v7024
    %7026 = vmatmul.f32.gmra.mxu0 %v6072
    %v7027 = vpop.f32.mrf.mxu0
    %v7028 = vadd.f32 %v6819, %v7027
    %7029 = vmatmul.f32.gmra.mxu0 %v6081
    %v7030 = vpop.f32.mrf.mxu0
    %v7031 = vadd.f32 %v6822, %v7030
    %7032 = vmatmul.f32.gmra.mxu0 %v6090
    %v7033 = vpop.f32.mrf.mxu0
    %v7034 = vadd.f32 %v6825, %v7033
    %7035 = vmatmul.f32.gmra.mxu0 %v6099
    %v7036 = vpop.f32.mrf.mxu0
    %v7037 = vadd.f32 %v6828, %v7036
    %7038 = vmatmul.f32.gmra.mxu0 %v6108
    %v7039 = vpop.f32.mrf.mxu0
    %v7040 = vadd.f32 %v6831, %v7039
    %7041 = vmatmul.f32.gmra.mxu0 %v6117
    %v7042 = vpop.f32.mrf.mxu0
    %v7043 = vadd.f32 %v6834, %v7042
    %7044 = vmatmul.f32.gmra.mxu0 %v6126
    %v7045 = vpop.f32.mrf.mxu0
    %v7046 = vadd.f32 %v6837, %v7045
    %7047 = vmatmul.f32.gmra.mxu0 %v6135
    %v7048 = vpop.f32.mrf.mxu0
    %v7049 = vadd.f32 %v6840, %v7048
    %7050 = vmatmul.f32.gmra.mxu0 %v6144
    %v7051 = vpop.f32.mrf.mxu0
    %v7052 = vadd.f32 %v6843, %v7051
    %7053 = vmatmul.f32.gmra.mxu0 %v6153
    %v7054 = vpop.f32.mrf.mxu0
    %v7055 = vadd.f32 %v6846, %v7054
    %7056 = vmatmul.f32.gmra.mxu0 %v6162
    %v7057 = vpop.f32.mrf.mxu0
    %v7058 = vadd.f32 %v6849, %v7057
    %7059 = vmatmul.f32.gmra.mxu0 %v6171
    %v7060 = vpop.f32.mrf.mxu0
    %v7061 = vadd.f32 %v6852, %v7060
    %7062 = vmatmul.f32.gmra.mxu0 %v6180
    %v7063 = vpop.f32.mrf.mxu0
    %v7064 = vadd.f32 %v6855, %v7063
    %7065 = vmatmul.f32.gmra.mxu0 %v6189
    %v7066 = vpop.f32.mrf.mxu0
    %v7067 = vadd.f32 %v6858, %v7066
    %7068 = vmatmul.f32.gmra.mxu0 %v6198
    %v7069 = vpop.f32.mrf.mxu0
    %v7070 = vadd.f32 %v6861, %v7069
    %7071 = vmatmul.f32.gmra.mxu0 %v6207
    %v7072 = vpop.f32.mrf.mxu0
    %v7073 = vadd.f32 %v6864, %v7072
    %7074 = vmatmul.f32.gmra.mxu0 %v6216
    %v7075 = vpop.f32.mrf.mxu0
    %v7076 = vadd.f32 %v6867, %v7075
    %7077 = vmatmul.f32.gmra.mxu0 %v6225
    %v7078 = vpop.f32.mrf.mxu0
    %v7079 = vadd.f32 %v6870, %v7078
    %7080 = vmatmul.f32.gmra.mxu0 %v6234
    %v7081 = vpop.f32.mrf.mxu0
    %v7082 = vadd.f32 %v6873, %v7081
    %7083 = vmatmul.f32.gmra.mxu0 %v6243
    %v7084 = vpop.f32.mrf.mxu0
    %v7085 = vadd.f32 %v6876, %v7084
    %7086 = vmatmul.f32.gmra.mxu0 %v6252
    %v7087 = vpop.f32.mrf.mxu0
    %v7088 = vadd.f32 %v6879, %v7087
    %7089 = vmatmul.f32.gmra.mxu0 %v6261
    %v7090 = vpop.f32.mrf.mxu0
    %v7091 = vadd.f32 %v6882, %v7090
    %7092 = vmatmul.f32.gmra.mxu0 %v6270
    %v7093 = vpop.f32.mrf.mxu0
    %v7094 = vadd.f32 %v6885, %v7093
    %7095 = vmatmul.f32.gmra.mxu0 %v6279
    %v7096 = vpop.f32.mrf.mxu0
    %v7097 = vadd.f32 %v6888, %v7096
    %7098 = vmatmul.f32.gmra.mxu0 %v6288
    %v7099 = vpop.f32.mrf.mxu0
    %v7100 = vadd.f32 %v6891, %v7099
    %7101 = vmatmul.f32.gmra.mxu0 %v6297
    %v7102 = vpop.f32.mrf.mxu0
    %v7103 = vadd.f32 %v6894, %v7102
    %7104 = vmatmul.f32.gmra.mxu0 %v6306
    %v7105 = vpop.f32.mrf.mxu0
    %v7106 = vadd.f32 %v6897, %v7105
    %7107 = vmatmul.f32.gmra.mxu0 %v6315
    %v7108 = vpop.f32.mrf.mxu0
    %v7109 = vadd.f32 %v6900, %v7108
    %7110 = vmatmul.f32.gmra.mxu0 %v6324
    %v7111 = vpop.f32.mrf.mxu0
    %v7112 = vadd.f32 %v6903, %v7111
    %7113 = vmatmul.f32.gmra.mxu0 %v6333
    %v7114 = vpop.f32.mrf.mxu0
    %v7115 = vadd.f32 %v6906, %v7114
    %7116 = vmatmul.f32.gmra.mxu0 %v6342
    %v7117 = vpop.f32.mrf.mxu0
    %v7118 = vadd.f32 %v6909, %v7117
    %7119 = vdwg.mxu0
    %7120 = vmatpush.msra.mxu0 %v6412
    %7121 = vmatpush.msra.mxu0 %v6411
    %7122 = vmatpush.msra.mxu0 %v6410
    %7123 = vmatpush.msra.mxu0 %v6409
    %7124 = vmatpush.msra.mxu0 %v6408
    %7125 = vmatpush.msra.mxu0 %v6407
    %7126 = vmatpush.msra.mxu0 %v6406
    %7127 = vmatpush.msra.mxu0 %v6405
    %7128 = vmatpush.msra.mxu0 %v6404
    %7129 = vmatpush.msra.mxu0 %v6403
    %7130 = vmatpush.msra.mxu0 %v6402
    %7131 = vmatpush.msra.mxu0 %v6401
    %7132 = vmatpush.msra.mxu0 %v6400
    %7133 = vmatpush.msra.mxu0 %v6399
    %7134 = vmatpush.msra.mxu0 %v6398
    %7135 = vmatpush.msra.mxu0 %v6397
    %7136 = vmatmul.f32.gmra.mxu0 %v5776
    %v7137 = vpop.f32.mrf.mxu0
    %v7138 = vadd.f32 %v6929, %v7137
    %7139 = vmatmul.f32.gmra.mxu0 %v5785
    %v7140 = vpop.f32.mrf.mxu0
    %v7141 = vadd.f32 %v6932, %v7140
    %7142 = vmatmul.f32.gmra.mxu0 %v5794
    %v7143 = vpop.f32.mrf.mxu0
    %v7144 = vadd.f32 %v6935, %v7143
    %7145 = vmatmul.f32.gmra.mxu0 %v5803
    %v7146 = vpop.f32.mrf.mxu0
    %v7147 = vadd.f32 %v6938, %v7146
    %7148 = vmatmul.f32.gmra.mxu0 %v5812
    %v7149 = vpop.f32.mrf.mxu0
    %v7150 = vadd.f32 %v6941, %v7149
    %7151 = vmatmul.f32.gmra.mxu0 %v5821
    %v7152 = vpop.f32.mrf.mxu0
    %v7153 = vadd.f32 %v6944, %v7152
    %7154 = vmatmul.f32.gmra.mxu0 %v5830
    %v7155 = vpop.f32.mrf.mxu0
    %v7156 = vadd.f32 %v6947, %v7155
    %7157 = vmatmul.f32.gmra.mxu0 %v5839
    %v7158 = vpop.f32.mrf.mxu0
    %v7159 = vadd.f32 %v6950, %v7158
    %7160 = vmatmul.f32.gmra.mxu0 %v5848
    %v7161 = vpop.f32.mrf.mxu0
    %v7162 = vadd.f32 %v6953, %v7161
    %7163 = vmatmul.f32.gmra.mxu0 %v5857
    %v7164 = vpop.f32.mrf.mxu0
    %v7165 = vadd.f32 %v6956, %v7164
    %7166 = vmatmul.f32.gmra.mxu0 %v5866
    %v7167 = vpop.f32.mrf.mxu0
    %v7168 = vadd.f32 %v6959, %v7167
    %7169 = vmatmul.f32.gmra.mxu0 %v5875
    %v7170 = vpop.f32.mrf.mxu0
    %v7171 = vadd.f32 %v6962, %v7170
    %7172 = vmatmul.f32.gmra.mxu0 %v5884
    %v7173 = vpop.f32.mrf.mxu0
    %v7174 = vadd.f32 %v6965, %v7173
    %7175 = vmatmul.f32.gmra.mxu0 %v5893
    %v7176 = vpop.f32.mrf.mxu0
    %v7177 = vadd.f32 %v6968, %v7176
    %7178 = vmatmul.f32.gmra.mxu0 %v5902
    %v7179 = vpop.f32.mrf.mxu0
    %v7180 = vadd.f32 %v6971, %v7179
    %7181 = vmatmul.f32.gmra.mxu0 %v5911
    %v7182 = vpop.f32.mrf.mxu0
    %v7183 = vadd.f32 %v6974, %v7182
    %7184 = vmatmul.f32.gmra.mxu0 %v5920
    %v7185 = vpop.f32.mrf.mxu0
    %v7186 = vadd.f32 %v6977, %v7185
    %7187 = vmatmul.f32.gmra.mxu0 %v5929
    %v7188 = vpop.f32.mrf.mxu0
    %v7189 = vadd.f32 %v6980, %v7188
    %7190 = vmatmul.f32.gmra.mxu0 %v5938
    %v7191 = vpop.f32.mrf.mxu0
    %v7192 = vadd.f32 %v6983, %v7191
    %7193 = vmatmul.f32.gmra.mxu0 %v5947
    %v7194 = vpop.f32.mrf.mxu0
    %v7195 = vadd.f32 %v6986, %v7194
    %7196 = vmatmul.f32.gmra.mxu0 %v5956
    %v7197 = vpop.f32.mrf.mxu0
    %v7198 = vadd.f32 %v6989, %v7197
    %7199 = vmatmul.f32.gmra.mxu0 %v5965
    %v7200 = vpop.f32.mrf.mxu0
    %v7201 = vadd.f32 %v6992, %v7200
    %7202 = vmatmul.f32.gmra.mxu0 %v5974
    %v7203 = vpop.f32.mrf.mxu0
    %v7204 = vadd.f32 %v6995, %v7203
    %7205 = vmatmul.f32.gmra.mxu0 %v5983
    %v7206 = vpop.f32.mrf.mxu0
    %v7207 = vadd.f32 %v6998, %v7206
    %7208 = vmatmul.f32.gmra.mxu0 %v5992
    %v7209 = vpop.f32.mrf.mxu0
    %v7210 = vadd.f32 %v7001, %v7209
    %7211 = vmatmul.f32.gmra.mxu0 %v6001
    %v7212 = vpop.f32.mrf.mxu0
    %v7213 = vadd.f32 %v7004, %v7212
    %7214 = vmatmul.f32.gmra.mxu0 %v6010
    %v7215 = vpop.f32.mrf.mxu0
    %v7216 = vadd.f32 %v7007, %v7215
    %7217 = vmatmul.f32.gmra.mxu0 %v6019
    %v7218 = vpop.f32.mrf.mxu0
    %v7219 = vadd.f32 %v7010, %v7218
    %7220 = vmatmul.f32.gmra.mxu0 %v6028
    %v7221 = vpop.f32.mrf.mxu0
    %v7222 = vadd.f32 %v7013, %v7221
    %7223 = vmatmul.f32.gmra.mxu0 %v6037
    %v7224 = vpop.f32.mrf.mxu0
    %v7225 = vadd.f32 %v7016, %v7224
    %7226 = vmatmul.f32.gmra.mxu0 %v6046
    %v7227 = vpop.f32.mrf.mxu0
    %v7228 = vadd.f32 %v7019, %v7227
    %7229 = vmatmul.f32.gmra.mxu0 %v6055
    %v7230 = vpop.f32.mrf.mxu0
    %v7231 = vadd.f32 %v7022, %v7230
    %7232 = vmatmul.f32.gmra.mxu0 %v6064
    %v7233 = vpop.f32.mrf.mxu0
    %v7234 = vadd.f32 %v7025, %v7233
    %7235 = vmatmul.f32.gmra.mxu0 %v6073
    %v7236 = vpop.f32.mrf.mxu0
    %v7237 = vadd.f32 %v7028, %v7236
    %7238 = vmatmul.f32.gmra.mxu0 %v6082
    %v7239 = vpop.f32.mrf.mxu0
    %v7240 = vadd.f32 %v7031, %v7239
    %7241 = vmatmul.f32.gmra.mxu0 %v6091
    %v7242 = vpop.f32.mrf.mxu0
    %v7243 = vadd.f32 %v7034, %v7242
    %7244 = vmatmul.f32.gmra.mxu0 %v6100
    %v7245 = vpop.f32.mrf.mxu0
    %v7246 = vadd.f32 %v7037, %v7245
    %7247 = vmatmul.f32.gmra.mxu0 %v6109
    %v7248 = vpop.f32.mrf.mxu0
    %v7249 = vadd.f32 %v7040, %v7248
    %7250 = vmatmul.f32.gmra.mxu0 %v6118
    %v7251 = vpop.f32.mrf.mxu0
    %v7252 = vadd.f32 %v7043, %v7251
    %7253 = vmatmul.f32.gmra.mxu0 %v6127
    %v7254 = vpop.f32.mrf.mxu0
    %v7255 = vadd.f32 %v7046, %v7254
    %7256 = vmatmul.f32.gmra.mxu0 %v6136
    %v7257 = vpop.f32.mrf.mxu0
    %v7258 = vadd.f32 %v7049, %v7257
    %7259 = vmatmul.f32.gmra.mxu0 %v6145
    %v7260 = vpop.f32.mrf.mxu0
    %v7261 = vadd.f32 %v7052, %v7260
    %7262 = vmatmul.f32.gmra.mxu0 %v6154
    %v7263 = vpop.f32.mrf.mxu0
    %v7264 = vadd.f32 %v7055, %v7263
    %7265 = vmatmul.f32.gmra.mxu0 %v6163
    %v7266 = vpop.f32.mrf.mxu0
    %v7267 = vadd.f32 %v7058, %v7266
    %7268 = vmatmul.f32.gmra.mxu0 %v6172
    %v7269 = vpop.f32.mrf.mxu0
    %v7270 = vadd.f32 %v7061, %v7269
    %7271 = vmatmul.f32.gmra.mxu0 %v6181
    %v7272 = vpop.f32.mrf.mxu0
    %v7273 = vadd.f32 %v7064, %v7272
    %7274 = vmatmul.f32.gmra.mxu0 %v6190
    %v7275 = vpop.f32.mrf.mxu0
    %v7276 = vadd.f32 %v7067, %v7275
    %7277 = vmatmul.f32.gmra.mxu0 %v6199
    %v7278 = vpop.f32.mrf.mxu0
    %v7279 = vadd.f32 %v7070, %v7278
    %7280 = vmatmul.f32.gmra.mxu0 %v6208
    %v7281 = vpop.f32.mrf.mxu0
    %v7282 = vadd.f32 %v7073, %v7281
    %7283 = vmatmul.f32.gmra.mxu0 %v6217
    %v7284 = vpop.f32.mrf.mxu0
    %v7285 = vadd.f32 %v7076, %v7284
    %7286 = vmatmul.f32.gmra.mxu0 %v6226
    %v7287 = vpop.f32.mrf.mxu0
    %v7288 = vadd.f32 %v7079, %v7287
    %7289 = vmatmul.f32.gmra.mxu0 %v6235
    %v7290 = vpop.f32.mrf.mxu0
    %v7291 = vadd.f32 %v7082, %v7290
    %7292 = vmatmul.f32.gmra.mxu0 %v6244
    %v7293 = vpop.f32.mrf.mxu0
    %v7294 = vadd.f32 %v7085, %v7293
    %7295 = vmatmul.f32.gmra.mxu0 %v6253
    %v7296 = vpop.f32.mrf.mxu0
    %v7297 = vadd.f32 %v7088, %v7296
    %7298 = vmatmul.f32.gmra.mxu0 %v6262
    %v7299 = vpop.f32.mrf.mxu0
    %v7300 = vadd.f32 %v7091, %v7299
    %7301 = vmatmul.f32.gmra.mxu0 %v6271
    %v7302 = vpop.f32.mrf.mxu0
    %v7303 = vadd.f32 %v7094, %v7302
    %7304 = vmatmul.f32.gmra.mxu0 %v6280
    %v7305 = vpop.f32.mrf.mxu0
    %v7306 = vadd.f32 %v7097, %v7305
    %7307 = vmatmul.f32.gmra.mxu0 %v6289
    %v7308 = vpop.f32.mrf.mxu0
    %v7309 = vadd.f32 %v7100, %v7308
    %7310 = vmatmul.f32.gmra.mxu0 %v6298
    %v7311 = vpop.f32.mrf.mxu0
    %v7312 = vadd.f32 %v7103, %v7311
    %7313 = vmatmul.f32.gmra.mxu0 %v6307
    %v7314 = vpop.f32.mrf.mxu0
    %v7315 = vadd.f32 %v7106, %v7314
    %7316 = vmatmul.f32.gmra.mxu0 %v6316
    %v7317 = vpop.f32.mrf.mxu0
    %v7318 = vadd.f32 %v7109, %v7317
    %7319 = vmatmul.f32.gmra.mxu0 %v6325
    %v7320 = vpop.f32.mrf.mxu0
    %v7321 = vadd.f32 %v7112, %v7320
    %7322 = vmatmul.f32.gmra.mxu0 %v6334
    %v7323 = vpop.f32.mrf.mxu0
    %v7324 = vadd.f32 %v7115, %v7323
    %7325 = vmatmul.f32.gmra.mxu0 %v6343
    %v7326 = vpop.f32.mrf.mxu0
    %v7327 = vadd.f32 %v7118, %v7326
    %7328 = vdwg.mxu0
    %7329 = vmatpush.msra.mxu0 %v6428
    %7330 = vmatpush.msra.mxu0 %v6427
    %7331 = vmatpush.msra.mxu0 %v6426
    %7332 = vmatpush.msra.mxu0 %v6425
    %7333 = vmatpush.msra.mxu0 %v6424
    %7334 = vmatpush.msra.mxu0 %v6423
    %7335 = vmatpush.msra.mxu0 %v6422
    %7336 = vmatpush.msra.mxu0 %v6421
    %7337 = vmatpush.msra.mxu0 %v6420
    %7338 = vmatpush.msra.mxu0 %v6419
    %7339 = vmatpush.msra.mxu0 %v6418
    %7340 = vmatpush.msra.mxu0 %v6417
    %7341 = vmatpush.msra.mxu0 %v6416
    %7342 = vmatpush.msra.mxu0 %v6415
    %7343 = vmatpush.msra.mxu0 %v6414
    %7344 = vmatpush.msra.mxu0 %v6413
    %7345 = vmatmul.f32.gmra.mxu0 %v5777
    %v7346 = vpop.f32.mrf.mxu0
    %v7347 = vadd.f32 %v7138, %v7346
    %7348 = vmatmul.f32.gmra.mxu0 %v5786
    %v7349 = vpop.f32.mrf.mxu0
    %v7350 = vadd.f32 %v7141, %v7349
    %7351 = vmatmul.f32.gmra.mxu0 %v5795
    %v7352 = vpop.f32.mrf.mxu0
    %v7353 = vadd.f32 %v7144, %v7352
    %7354 = vmatmul.f32.gmra.mxu0 %v5804
    %v7355 = vpop.f32.mrf.mxu0
    %v7356 = vadd.f32 %v7147, %v7355
    %7357 = vmatmul.f32.gmra.mxu0 %v5813
    %v7358 = vpop.f32.mrf.mxu0
    %v7359 = vadd.f32 %v7150, %v7358
    %7360 = vmatmul.f32.gmra.mxu0 %v5822
    %v7361 = vpop.f32.mrf.mxu0
    %v7362 = vadd.f32 %v7153, %v7361
    %7363 = vmatmul.f32.gmra.mxu0 %v5831
    %v7364 = vpop.f32.mrf.mxu0
    %v7365 = vadd.f32 %v7156, %v7364
    %7366 = vmatmul.f32.gmra.mxu0 %v5840
    %v7367 = vpop.f32.mrf.mxu0
    %v7368 = vadd.f32 %v7159, %v7367
    %7369 = vmatmul.f32.gmra.mxu0 %v5849
    %v7370 = vpop.f32.mrf.mxu0
    %v7371 = vadd.f32 %v7162, %v7370
    %7372 = vmatmul.f32.gmra.mxu0 %v5858
    %v7373 = vpop.f32.mrf.mxu0
    %v7374 = vadd.f32 %v7165, %v7373
    %7375 = vmatmul.f32.gmra.mxu0 %v5867
    %v7376 = vpop.f32.mrf.mxu0
    %v7377 = vadd.f32 %v7168, %v7376
    %7378 = vmatmul.f32.gmra.mxu0 %v5876
    %v7379 = vpop.f32.mrf.mxu0
    %v7380 = vadd.f32 %v7171, %v7379
    %7381 = vmatmul.f32.gmra.mxu0 %v5885
    %v7382 = vpop.f32.mrf.mxu0
    %v7383 = vadd.f32 %v7174, %v7382
    %7384 = vmatmul.f32.gmra.mxu0 %v5894
    %v7385 = vpop.f32.mrf.mxu0
    %v7386 = vadd.f32 %v7177, %v7385
    %7387 = vmatmul.f32.gmra.mxu0 %v5903
    %v7388 = vpop.f32.mrf.mxu0
    %v7389 = vadd.f32 %v7180, %v7388
    %7390 = vmatmul.f32.gmra.mxu0 %v5912
    %v7391 = vpop.f32.mrf.mxu0
    %v7392 = vadd.f32 %v7183, %v7391
    %7393 = vmatmul.f32.gmra.mxu0 %v5921
    %v7394 = vpop.f32.mrf.mxu0
    %v7395 = vadd.f32 %v7186, %v7394
    %7396 = vmatmul.f32.gmra.mxu0 %v5930
    %v7397 = vpop.f32.mrf.mxu0
    %v7398 = vadd.f32 %v7189, %v7397
    %7399 = vmatmul.f32.gmra.mxu0 %v5939
    %v7400 = vpop.f32.mrf.mxu0
    %v7401 = vadd.f32 %v7192, %v7400
    %7402 = vmatmul.f32.gmra.mxu0 %v5948
    %v7403 = vpop.f32.mrf.mxu0
    %v7404 = vadd.f32 %v7195, %v7403
    %7405 = vmatmul.f32.gmra.mxu0 %v5957
    %v7406 = vpop.f32.mrf.mxu0
    %v7407 = vadd.f32 %v7198, %v7406
    %7408 = vmatmul.f32.gmra.mxu0 %v5966
    %v7409 = vpop.f32.mrf.mxu0
    %v7410 = vadd.f32 %v7201, %v7409
    %7411 = vmatmul.f32.gmra.mxu0 %v5975
    %v7412 = vpop.f32.mrf.mxu0
    %v7413 = vadd.f32 %v7204, %v7412
    %7414 = vmatmul.f32.gmra.mxu0 %v5984
    %v7415 = vpop.f32.mrf.mxu0
    %v7416 = vadd.f32 %v7207, %v7415
    %7417 = vmatmul.f32.gmra.mxu0 %v5993
    %v7418 = vpop.f32.mrf.mxu0
    %v7419 = vadd.f32 %v7210, %v7418
    %7420 = vmatmul.f32.gmra.mxu0 %v6002
    %v7421 = vpop.f32.mrf.mxu0
    %v7422 = vadd.f32 %v7213, %v7421
    %7423 = vmatmul.f32.gmra.mxu0 %v6011
    %v7424 = vpop.f32.mrf.mxu0
    %v7425 = vadd.f32 %v7216, %v7424
    %7426 = vmatmul.f32.gmra.mxu0 %v6020
    %v7427 = vpop.f32.mrf.mxu0
    %v7428 = vadd.f32 %v7219, %v7427
    %7429 = vmatmul.f32.gmra.mxu0 %v6029
    %v7430 = vpop.f32.mrf.mxu0
    %v7431 = vadd.f32 %v7222, %v7430
    %7432 = vmatmul.f32.gmra.mxu0 %v6038
    %v7433 = vpop.f32.mrf.mxu0
    %v7434 = vadd.f32 %v7225, %v7433
    %7435 = vmatmul.f32.gmra.mxu0 %v6047
    %v7436 = vpop.f32.mrf.mxu0
    %v7437 = vadd.f32 %v7228, %v7436
    %7438 = vmatmul.f32.gmra.mxu0 %v6056
    %v7439 = vpop.f32.mrf.mxu0
    %v7440 = vadd.f32 %v7231, %v7439
    %7441 = vmatmul.f32.gmra.mxu0 %v6065
    %v7442 = vpop.f32.mrf.mxu0
    %v7443 = vadd.f32 %v7234, %v7442
    %7444 = vmatmul.f32.gmra.mxu0 %v6074
    %v7445 = vpop.f32.mrf.mxu0
    %v7446 = vadd.f32 %v7237, %v7445
    %7447 = vmatmul.f32.gmra.mxu0 %v6083
    %v7448 = vpop.f32.mrf.mxu0
    %v7449 = vadd.f32 %v7240, %v7448
    %7450 = vmatmul.f32.gmra.mxu0 %v6092
    %v7451 = vpop.f32.mrf.mxu0
    %v7452 = vadd.f32 %v7243, %v7451
    %7453 = vmatmul.f32.gmra.mxu0 %v6101
    %v7454 = vpop.f32.mrf.mxu0
    %v7455 = vadd.f32 %v7246, %v7454
    %7456 = vmatmul.f32.gmra.mxu0 %v6110
    %v7457 = vpop.f32.mrf.mxu0
    %v7458 = vadd.f32 %v7249, %v7457
    %7459 = vmatmul.f32.gmra.mxu0 %v6119
    %v7460 = vpop.f32.mrf.mxu0
    %v7461 = vadd.f32 %v7252, %v7460
    %7462 = vmatmul.f32.gmra.mxu0 %v6128
    %v7463 = vpop.f32.mrf.mxu0
    %v7464 = vadd.f32 %v7255, %v7463
    %7465 = vmatmul.f32.gmra.mxu0 %v6137
    %v7466 = vpop.f32.mrf.mxu0
    %v7467 = vadd.f32 %v7258, %v7466
    %7468 = vmatmul.f32.gmra.mxu0 %v6146
    %v7469 = vpop.f32.mrf.mxu0
    %v7470 = vadd.f32 %v7261, %v7469
    %7471 = vmatmul.f32.gmra.mxu0 %v6155
    %v7472 = vpop.f32.mrf.mxu0
    %v7473 = vadd.f32 %v7264, %v7472
    %7474 = vmatmul.f32.gmra.mxu0 %v6164
    %v7475 = vpop.f32.mrf.mxu0
    %v7476 = vadd.f32 %v7267, %v7475
    %7477 = vmatmul.f32.gmra.mxu0 %v6173
    %v7478 = vpop.f32.mrf.mxu0
    %v7479 = vadd.f32 %v7270, %v7478
    %7480 = vmatmul.f32.gmra.mxu0 %v6182
    %v7481 = vpop.f32.mrf.mxu0
    %v7482 = vadd.f32 %v7273, %v7481
    %7483 = vmatmul.f32.gmra.mxu0 %v6191
    %v7484 = vpop.f32.mrf.mxu0
    %v7485 = vadd.f32 %v7276, %v7484
    %7486 = vmatmul.f32.gmra.mxu0 %v6200
    %v7487 = vpop.f32.mrf.mxu0
    %v7488 = vadd.f32 %v7279, %v7487
    %7489 = vmatmul.f32.gmra.mxu0 %v6209
    %v7490 = vpop.f32.mrf.mxu0
    %v7491 = vadd.f32 %v7282, %v7490
    %7492 = vmatmul.f32.gmra.mxu0 %v6218
    %v7493 = vpop.f32.mrf.mxu0
    %v7494 = vadd.f32 %v7285, %v7493
    %7495 = vmatmul.f32.gmra.mxu0 %v6227
    %v7496 = vpop.f32.mrf.mxu0
    %v7497 = vadd.f32 %v7288, %v7496
    %7498 = vmatmul.f32.gmra.mxu0 %v6236
    %v7499 = vpop.f32.mrf.mxu0
    %v7500 = vadd.f32 %v7291, %v7499
    %7501 = vmatmul.f32.gmra.mxu0 %v6245
    %v7502 = vpop.f32.mrf.mxu0
    %v7503 = vadd.f32 %v7294, %v7502
    %7504 = vmatmul.f32.gmra.mxu0 %v6254
    %v7505 = vpop.f32.mrf.mxu0
    %v7506 = vadd.f32 %v7297, %v7505
    %7507 = vmatmul.f32.gmra.mxu0 %v6263
    %v7508 = vpop.f32.mrf.mxu0
    %v7509 = vadd.f32 %v7300, %v7508
    %7510 = vmatmul.f32.gmra.mxu0 %v6272
    %v7511 = vpop.f32.mrf.mxu0
    %v7512 = vadd.f32 %v7303, %v7511
    %7513 = vmatmul.f32.gmra.mxu0 %v6281
    %v7514 = vpop.f32.mrf.mxu0
    %v7515 = vadd.f32 %v7306, %v7514
    %7516 = vmatmul.f32.gmra.mxu0 %v6290
    %v7517 = vpop.f32.mrf.mxu0
    %v7518 = vadd.f32 %v7309, %v7517
    %7519 = vmatmul.f32.gmra.mxu0 %v6299
    %v7520 = vpop.f32.mrf.mxu0
    %v7521 = vadd.f32 %v7312, %v7520
    %7522 = vmatmul.f32.gmra.mxu0 %v6308
    %v7523 = vpop.f32.mrf.mxu0
    %v7524 = vadd.f32 %v7315, %v7523
    %7525 = vmatmul.f32.gmra.mxu0 %v6317
    %v7526 = vpop.f32.mrf.mxu0
    %v7527 = vadd.f32 %v7318, %v7526
    %7528 = vmatmul.f32.gmra.mxu0 %v6326
    %v7529 = vpop.f32.mrf.mxu0
    %v7530 = vadd.f32 %v7321, %v7529
    %7531 = vmatmul.f32.gmra.mxu0 %v6335
    %v7532 = vpop.f32.mrf.mxu0
    %v7533 = vadd.f32 %v7324, %v7532
    %7534 = vmatmul.f32.gmra.mxu0 %v6344
    %v7535 = vpop.f32.mrf.mxu0
    %v7536 = vadd.f32 %v7327, %v7535
    %7537 = vdwg.mxu0
    %7538 = vmatpush.msra.mxu0 %v6444
    %7539 = vmatpush.msra.mxu0 %v6443
    %7540 = vmatpush.msra.mxu0 %v6442
    %7541 = vmatpush.msra.mxu0 %v6441
    %7542 = vmatpush.msra.mxu0 %v6440
    %7543 = vmatpush.msra.mxu0 %v6439
    %7544 = vmatpush.msra.mxu0 %v6438
    %7545 = vmatpush.msra.mxu0 %v6437
    %7546 = vmatpush.msra.mxu0 %v6436
    %7547 = vmatpush.msra.mxu0 %v6435
    %7548 = vmatpush.msra.mxu0 %v6434
    %7549 = vmatpush.msra.mxu0 %v6433
    %7550 = vmatpush.msra.mxu0 %v6432
    %7551 = vmatpush.msra.mxu0 %v6431
    %7552 = vmatpush.msra.mxu0 %v6430
    %7553 = vmatpush.msra.mxu0 %v6429
    %7554 = vmatmul.f32.gmra.mxu0 %v5778
    %v7555 = vpop.f32.mrf.mxu0
    %v7556 = vadd.f32 %v7347, %v7555
    %7557 = vmatmul.f32.gmra.mxu0 %v5787
    %v7558 = vpop.f32.mrf.mxu0
    %v7559 = vadd.f32 %v7350, %v7558
    %7560 = vmatmul.f32.gmra.mxu0 %v5796
    %v7561 = vpop.f32.mrf.mxu0
    %v7562 = vadd.f32 %v7353, %v7561
    %7563 = vmatmul.f32.gmra.mxu0 %v5805
    %v7564 = vpop.f32.mrf.mxu0
    %v7565 = vadd.f32 %v7356, %v7564
    %7566 = vmatmul.f32.gmra.mxu0 %v5814
    %v7567 = vpop.f32.mrf.mxu0
    %v7568 = vadd.f32 %v7359, %v7567
    %7569 = vmatmul.f32.gmra.mxu0 %v5823
    %v7570 = vpop.f32.mrf.mxu0
    %v7571 = vadd.f32 %v7362, %v7570
    %7572 = vmatmul.f32.gmra.mxu0 %v5832
    %v7573 = vpop.f32.mrf.mxu0
    %v7574 = vadd.f32 %v7365, %v7573
    %7575 = vmatmul.f32.gmra.mxu0 %v5841
    %v7576 = vpop.f32.mrf.mxu0
    %v7577 = vadd.f32 %v7368, %v7576
    %7578 = vmatmul.f32.gmra.mxu0 %v5850
    %v7579 = vpop.f32.mrf.mxu0
    %v7580 = vadd.f32 %v7371, %v7579
    %7581 = vmatmul.f32.gmra.mxu0 %v5859
    %v7582 = vpop.f32.mrf.mxu0
    %v7583 = vadd.f32 %v7374, %v7582
    %7584 = vmatmul.f32.gmra.mxu0 %v5868
    %v7585 = vpop.f32.mrf.mxu0
    %v7586 = vadd.f32 %v7377, %v7585
    %7587 = vmatmul.f32.gmra.mxu0 %v5877
    %v7588 = vpop.f32.mrf.mxu0
    %v7589 = vadd.f32 %v7380, %v7588
    %7590 = vmatmul.f32.gmra.mxu0 %v5886
    %v7591 = vpop.f32.mrf.mxu0
    %v7592 = vadd.f32 %v7383, %v7591
    %7593 = vmatmul.f32.gmra.mxu0 %v5895
    %v7594 = vpop.f32.mrf.mxu0
    %v7595 = vadd.f32 %v7386, %v7594
    %7596 = vmatmul.f32.gmra.mxu0 %v5904
    %v7597 = vpop.f32.mrf.mxu0
    %v7598 = vadd.f32 %v7389, %v7597
    %7599 = vmatmul.f32.gmra.mxu0 %v5913
    %v7600 = vpop.f32.mrf.mxu0
    %v7601 = vadd.f32 %v7392, %v7600
    %7602 = vmatmul.f32.gmra.mxu0 %v5922
    %v7603 = vpop.f32.mrf.mxu0
    %v7604 = vadd.f32 %v7395, %v7603
    %7605 = vmatmul.f32.gmra.mxu0 %v5931
    %v7606 = vpop.f32.mrf.mxu0
    %v7607 = vadd.f32 %v7398, %v7606
    %7608 = vmatmul.f32.gmra.mxu0 %v5940
    %v7609 = vpop.f32.mrf.mxu0
    %v7610 = vadd.f32 %v7401, %v7609
    %7611 = vmatmul.f32.gmra.mxu0 %v5949
    %v7612 = vpop.f32.mrf.mxu0
    %v7613 = vadd.f32 %v7404, %v7612
    %7614 = vmatmul.f32.gmra.mxu0 %v5958
    %v7615 = vpop.f32.mrf.mxu0
    %v7616 = vadd.f32 %v7407, %v7615
    %7617 = vmatmul.f32.gmra.mxu0 %v5967
    %v7618 = vpop.f32.mrf.mxu0
    %v7619 = vadd.f32 %v7410, %v7618
    %7620 = vmatmul.f32.gmra.mxu0 %v5976
    %v7621 = vpop.f32.mrf.mxu0
    %v7622 = vadd.f32 %v7413, %v7621
    %7623 = vmatmul.f32.gmra.mxu0 %v5985
    %v7624 = vpop.f32.mrf.mxu0
    %v7625 = vadd.f32 %v7416, %v7624
    %7626 = vmatmul.f32.gmra.mxu0 %v5994
    %v7627 = vpop.f32.mrf.mxu0
    %v7628 = vadd.f32 %v7419, %v7627
    %7629 = vmatmul.f32.gmra.mxu0 %v6003
    %v7630 = vpop.f32.mrf.mxu0
    %v7631 = vadd.f32 %v7422, %v7630
    %7632 = vmatmul.f32.gmra.mxu0 %v6012
    %v7633 = vpop.f32.mrf.mxu0
    %v7634 = vadd.f32 %v7425, %v7633
    %7635 = vmatmul.f32.gmra.mxu0 %v6021
    %v7636 = vpop.f32.mrf.mxu0
    %v7637 = vadd.f32 %v7428, %v7636
    %7638 = vmatmul.f32.gmra.mxu0 %v6030
    %v7639 = vpop.f32.mrf.mxu0
    %v7640 = vadd.f32 %v7431, %v7639
    %7641 = vmatmul.f32.gmra.mxu0 %v6039
    %v7642 = vpop.f32.mrf.mxu0
    %v7643 = vadd.f32 %v7434, %v7642
    %7644 = vmatmul.f32.gmra.mxu0 %v6048
    %v7645 = vpop.f32.mrf.mxu0
    %v7646 = vadd.f32 %v7437, %v7645
    %7647 = vmatmul.f32.gmra.mxu0 %v6057
    %v7648 = vpop.f32.mrf.mxu0
    %v7649 = vadd.f32 %v7440, %v7648
    %7650 = vmatmul.f32.gmra.mxu0 %v6066
    %v7651 = vpop.f32.mrf.mxu0
    %v7652 = vadd.f32 %v7443, %v7651
    %7653 = vmatmul.f32.gmra.mxu0 %v6075
    %v7654 = vpop.f32.mrf.mxu0
    %v7655 = vadd.f32 %v7446, %v7654
    %7656 = vmatmul.f32.gmra.mxu0 %v6084
    %v7657 = vpop.f32.mrf.mxu0
    %v7658 = vadd.f32 %v7449, %v7657
    %7659 = vmatmul.f32.gmra.mxu0 %v6093
    %v7660 = vpop.f32.mrf.mxu0
    %v7661 = vadd.f32 %v7452, %v7660
    %7662 = vmatmul.f32.gmra.mxu0 %v6102
    %v7663 = vpop.f32.mrf.mxu0
    %v7664 = vadd.f32 %v7455, %v7663
    %7665 = vmatmul.f32.gmra.mxu0 %v6111
    %v7666 = vpop.f32.mrf.mxu0
    %v7667 = vadd.f32 %v7458, %v7666
    %7668 = vmatmul.f32.gmra.mxu0 %v6120
    %v7669 = vpop.f32.mrf.mxu0
    %v7670 = vadd.f32 %v7461, %v7669
    %7671 = vmatmul.f32.gmra.mxu0 %v6129
    %v7672 = vpop.f32.mrf.mxu0
    %v7673 = vadd.f32 %v7464, %v7672
    %7674 = vmatmul.f32.gmra.mxu0 %v6138
    %v7675 = vpop.f32.mrf.mxu0
    %v7676 = vadd.f32 %v7467, %v7675
    %7677 = vmatmul.f32.gmra.mxu0 %v6147
    %v7678 = vpop.f32.mrf.mxu0
    %v7679 = vadd.f32 %v7470, %v7678
    %7680 = vmatmul.f32.gmra.mxu0 %v6156
    %v7681 = vpop.f32.mrf.mxu0
    %v7682 = vadd.f32 %v7473, %v7681
    %7683 = vmatmul.f32.gmra.mxu0 %v6165
    %v7684 = vpop.f32.mrf.mxu0
    %v7685 = vadd.f32 %v7476, %v7684
    %7686 = vmatmul.f32.gmra.mxu0 %v6174
    %v7687 = vpop.f32.mrf.mxu0
    %v7688 = vadd.f32 %v7479, %v7687
    %7689 = vmatmul.f32.gmra.mxu0 %v6183
    %v7690 = vpop.f32.mrf.mxu0
    %v7691 = vadd.f32 %v7482, %v7690
    %7692 = vmatmul.f32.gmra.mxu0 %v6192
    %v7693 = vpop.f32.mrf.mxu0
    %v7694 = vadd.f32 %v7485, %v7693
    %7695 = vmatmul.f32.gmra.mxu0 %v6201
    %v7696 = vpop.f32.mrf.mxu0
    %v7697 = vadd.f32 %v7488, %v7696
    %7698 = vmatmul.f32.gmra.mxu0 %v6210
    %v7699 = vpop.f32.mrf.mxu0
    %v7700 = vadd.f32 %v7491, %v7699
    %7701 = vmatmul.f32.gmra.mxu0 %v6219
    %v7702 = vpop.f32.mrf.mxu0
    %v7703 = vadd.f32 %v7494, %v7702
    %7704 = vmatmul.f32.gmra.mxu0 %v6228
    %v7705 = vpop.f32.mrf.mxu0
    %v7706 = vadd.f32 %v7497, %v7705
    %7707 = vmatmul.f32.gmra.mxu0 %v6237
    %v7708 = vpop.f32.mrf.mxu0
    %v7709 = vadd.f32 %v7500, %v7708
    %7710 = vmatmul.f32.gmra.mxu0 %v6246
    %v7711 = vpop.f32.mrf.mxu0
    %v7712 = vadd.f32 %v7503, %v7711
    %7713 = vmatmul.f32.gmra.mxu0 %v6255
    %v7714 = vpop.f32.mrf.mxu0
    %v7715 = vadd.f32 %v7506, %v7714
    %7716 = vmatmul.f32.gmra.mxu0 %v6264
    %v7717 = vpop.f32.mrf.mxu0
    %v7718 = vadd.f32 %v7509, %v7717
    %7719 = vmatmul.f32.gmra.mxu0 %v6273
    %v7720 = vpop.f32.mrf.mxu0
    %v7721 = vadd.f32 %v7512, %v7720
    %7722 = vmatmul.f32.gmra.mxu0 %v6282
    %v7723 = vpop.f32.mrf.mxu0
    %v7724 = vadd.f32 %v7515, %v7723
    %7725 = vmatmul.f32.gmra.mxu0 %v6291
    %v7726 = vpop.f32.mrf.mxu0
    %v7727 = vadd.f32 %v7518, %v7726
    %7728 = vmatmul.f32.gmra.mxu0 %v6300
    %v7729 = vpop.f32.mrf.mxu0
    %v7730 = vadd.f32 %v7521, %v7729
    %7731 = vmatmul.f32.gmra.mxu0 %v6309
    %v7732 = vpop.f32.mrf.mxu0
    %v7733 = vadd.f32 %v7524, %v7732
    %7734 = vmatmul.f32.gmra.mxu0 %v6318
    %v7735 = vpop.f32.mrf.mxu0
    %v7736 = vadd.f32 %v7527, %v7735
    %7737 = vmatmul.f32.gmra.mxu0 %v6327
    %v7738 = vpop.f32.mrf.mxu0
    %v7739 = vadd.f32 %v7530, %v7738
    %7740 = vmatmul.f32.gmra.mxu0 %v6336
    %v7741 = vpop.f32.mrf.mxu0
    %v7742 = vadd.f32 %v7533, %v7741
    %7743 = vmatmul.f32.gmra.mxu0 %v6345
    %v7744 = vpop.f32.mrf.mxu0
    %v7745 = vadd.f32 %v7536, %v7744
    %7746 = vdwg.mxu0
    %7747 = vmatpush.msra.mxu0 %v6460
    %7748 = vmatpush.msra.mxu0 %v6459
    %7749 = vmatpush.msra.mxu0 %v6458
    %7750 = vmatpush.msra.mxu0 %v6457
    %7751 = vmatpush.msra.mxu0 %v6456
    %7752 = vmatpush.msra.mxu0 %v6455
    %7753 = vmatpush.msra.mxu0 %v6454
    %7754 = vmatpush.msra.mxu0 %v6453
    %7755 = vmatpush.msra.mxu0 %v6452
    %7756 = vmatpush.msra.mxu0 %v6451
    %7757 = vmatpush.msra.mxu0 %v6450
    %7758 = vmatpush.msra.mxu0 %v6449
    %7759 = vmatpush.msra.mxu0 %v6448
    %7760 = vmatpush.msra.mxu0 %v6447
    %7761 = vmatpush.msra.mxu0 %v6446
    %7762 = vmatpush.msra.mxu0 %v6445
    %7763 = vmatmul.f32.gmra.mxu0 %v5779
    %v7764 = vpop.f32.mrf.mxu0
    %v7765 = vadd.f32 %v7556, %v7764
    %7766 = vmatmul.f32.gmra.mxu0 %v5788
    %v7767 = vpop.f32.mrf.mxu0
    %v7768 = vadd.f32 %v7559, %v7767
    %7769 = vmatmul.f32.gmra.mxu0 %v5797
    %v7770 = vpop.f32.mrf.mxu0
    %v7771 = vadd.f32 %v7562, %v7770
    %7772 = vmatmul.f32.gmra.mxu0 %v5806
    %v7773 = vpop.f32.mrf.mxu0
    %v7774 = vadd.f32 %v7565, %v7773
    %7775 = vmatmul.f32.gmra.mxu0 %v5815
    %v7776 = vpop.f32.mrf.mxu0
    %v7777 = vadd.f32 %v7568, %v7776
    %7778 = vmatmul.f32.gmra.mxu0 %v5824
    %v7779 = vpop.f32.mrf.mxu0
    %v7780 = vadd.f32 %v7571, %v7779
    %7781 = vmatmul.f32.gmra.mxu0 %v5833
    %v7782 = vpop.f32.mrf.mxu0
    %v7783 = vadd.f32 %v7574, %v7782
    %7784 = vmatmul.f32.gmra.mxu0 %v5842
    %v7785 = vpop.f32.mrf.mxu0
    %v7786 = vadd.f32 %v7577, %v7785
    %7787 = vmatmul.f32.gmra.mxu0 %v5851
    %v7788 = vpop.f32.mrf.mxu0
    %v7789 = vadd.f32 %v7580, %v7788
    %7790 = vmatmul.f32.gmra.mxu0 %v5860
    %v7791 = vpop.f32.mrf.mxu0
    %v7792 = vadd.f32 %v7583, %v7791
    %7793 = vmatmul.f32.gmra.mxu0 %v5869
    %v7794 = vpop.f32.mrf.mxu0
    %v7795 = vadd.f32 %v7586, %v7794
    %7796 = vmatmul.f32.gmra.mxu0 %v5878
    %v7797 = vpop.f32.mrf.mxu0
    %v7798 = vadd.f32 %v7589, %v7797
    %7799 = vmatmul.f32.gmra.mxu0 %v5887
    %v7800 = vpop.f32.mrf.mxu0
    %v7801 = vadd.f32 %v7592, %v7800
    %7802 = vmatmul.f32.gmra.mxu0 %v5896
    %v7803 = vpop.f32.mrf.mxu0
    %v7804 = vadd.f32 %v7595, %v7803
    %7805 = vmatmul.f32.gmra.mxu0 %v5905
    %v7806 = vpop.f32.mrf.mxu0
    %v7807 = vadd.f32 %v7598, %v7806
    %7808 = vmatmul.f32.gmra.mxu0 %v5914
    %v7809 = vpop.f32.mrf.mxu0
    %v7810 = vadd.f32 %v7601, %v7809
    %7811 = vmatmul.f32.gmra.mxu0 %v5923
    %v7812 = vpop.f32.mrf.mxu0
    %v7813 = vadd.f32 %v7604, %v7812
    %7814 = vmatmul.f32.gmra.mxu0 %v5932
    %v7815 = vpop.f32.mrf.mxu0
    %v7816 = vadd.f32 %v7607, %v7815
    %7817 = vmatmul.f32.gmra.mxu0 %v5941
    %v7818 = vpop.f32.mrf.mxu0
    %v7819 = vadd.f32 %v7610, %v7818
    %7820 = vmatmul.f32.gmra.mxu0 %v5950
    %v7821 = vpop.f32.mrf.mxu0
    %v7822 = vadd.f32 %v7613, %v7821
    %7823 = vmatmul.f32.gmra.mxu0 %v5959
    %v7824 = vpop.f32.mrf.mxu0
    %v7825 = vadd.f32 %v7616, %v7824
    %7826 = vmatmul.f32.gmra.mxu0 %v5968
    %v7827 = vpop.f32.mrf.mxu0
    %v7828 = vadd.f32 %v7619, %v7827
    %7829 = vmatmul.f32.gmra.mxu0 %v5977
    %v7830 = vpop.f32.mrf.mxu0
    %v7831 = vadd.f32 %v7622, %v7830
    %7832 = vmatmul.f32.gmra.mxu0 %v5986
    %v7833 = vpop.f32.mrf.mxu0
    %v7834 = vadd.f32 %v7625, %v7833
    %7835 = vmatmul.f32.gmra.mxu0 %v5995
    %v7836 = vpop.f32.mrf.mxu0
    %v7837 = vadd.f32 %v7628, %v7836
    %7838 = vmatmul.f32.gmra.mxu0 %v6004
    %v7839 = vpop.f32.mrf.mxu0
    %v7840 = vadd.f32 %v7631, %v7839
    %7841 = vmatmul.f32.gmra.mxu0 %v6013
    %v7842 = vpop.f32.mrf.mxu0
    %v7843 = vadd.f32 %v7634, %v7842
    %7844 = vmatmul.f32.gmra.mxu0 %v6022
    %v7845 = vpop.f32.mrf.mxu0
    %v7846 = vadd.f32 %v7637, %v7845
    %7847 = vmatmul.f32.gmra.mxu0 %v6031
    %v7848 = vpop.f32.mrf.mxu0
    %v7849 = vadd.f32 %v7640, %v7848
    %7850 = vmatmul.f32.gmra.mxu0 %v6040
    %v7851 = vpop.f32.mrf.mxu0
    %v7852 = vadd.f32 %v7643, %v7851
    %7853 = vmatmul.f32.gmra.mxu0 %v6049
    %v7854 = vpop.f32.mrf.mxu0
    %v7855 = vadd.f32 %v7646, %v7854
    %7856 = vmatmul.f32.gmra.mxu0 %v6058
    %v7857 = vpop.f32.mrf.mxu0
    %v7858 = vadd.f32 %v7649, %v7857
    %7859 = vmatmul.f32.gmra.mxu0 %v6067
    %v7860 = vpop.f32.mrf.mxu0
    %v7861 = vadd.f32 %v7652, %v7860
    %7862 = vmatmul.f32.gmra.mxu0 %v6076
    %v7863 = vpop.f32.mrf.mxu0
    %v7864 = vadd.f32 %v7655, %v7863
    %7865 = vmatmul.f32.gmra.mxu0 %v6085
    %v7866 = vpop.f32.mrf.mxu0
    %v7867 = vadd.f32 %v7658, %v7866
    %7868 = vmatmul.f32.gmra.mxu0 %v6094
    %v7869 = vpop.f32.mrf.mxu0
    %v7870 = vadd.f32 %v7661, %v7869
    %7871 = vmatmul.f32.gmra.mxu0 %v6103
    %v7872 = vpop.f32.mrf.mxu0
    %v7873 = vadd.f32 %v7664, %v7872
    %7874 = vmatmul.f32.gmra.mxu0 %v6112
    %v7875 = vpop.f32.mrf.mxu0
    %v7876 = vadd.f32 %v7667, %v7875
    %7877 = vmatmul.f32.gmra.mxu0 %v6121
    %v7878 = vpop.f32.mrf.mxu0
    %v7879 = vadd.f32 %v7670, %v7878
    %7880 = vmatmul.f32.gmra.mxu0 %v6130
    %v7881 = vpop.f32.mrf.mxu0
    %v7882 = vadd.f32 %v7673, %v7881
    %7883 = vmatmul.f32.gmra.mxu0 %v6139
    %v7884 = vpop.f32.mrf.mxu0
    %v7885 = vadd.f32 %v7676, %v7884
    %7886 = vmatmul.f32.gmra.mxu0 %v6148
    %v7887 = vpop.f32.mrf.mxu0
    %v7888 = vadd.f32 %v7679, %v7887
    %7889 = vmatmul.f32.gmra.mxu0 %v6157
    %v7890 = vpop.f32.mrf.mxu0
    %v7891 = vadd.f32 %v7682, %v7890
    %7892 = vmatmul.f32.gmra.mxu0 %v6166
    %v7893 = vpop.f32.mrf.mxu0
    %v7894 = vadd.f32 %v7685, %v7893
    %7895 = vmatmul.f32.gmra.mxu0 %v6175
    %v7896 = vpop.f32.mrf.mxu0
    %v7897 = vadd.f32 %v7688, %v7896
    %7898 = vmatmul.f32.gmra.mxu0 %v6184
    %v7899 = vpop.f32.mrf.mxu0
    %v7900 = vadd.f32 %v7691, %v7899
    %7901 = vmatmul.f32.gmra.mxu0 %v6193
    %v7902 = vpop.f32.mrf.mxu0
    %v7903 = vadd.f32 %v7694, %v7902
    %7904 = vmatmul.f32.gmra.mxu0 %v6202
    %v7905 = vpop.f32.mrf.mxu0
    %v7906 = vadd.f32 %v7697, %v7905
    %7907 = vmatmul.f32.gmra.mxu0 %v6211
    %v7908 = vpop.f32.mrf.mxu0
    %v7909 = vadd.f32 %v7700, %v7908
    %7910 = vmatmul.f32.gmra.mxu0 %v6220
    %v7911 = vpop.f32.mrf.mxu0
    %v7912 = vadd.f32 %v7703, %v7911
    %7913 = vmatmul.f32.gmra.mxu0 %v6229
    %v7914 = vpop.f32.mrf.mxu0
    %v7915 = vadd.f32 %v7706, %v7914
    %7916 = vmatmul.f32.gmra.mxu0 %v6238
    %v7917 = vpop.f32.mrf.mxu0
    %v7918 = vadd.f32 %v7709, %v7917
    %7919 = vmatmul.f32.gmra.mxu0 %v6247
    %v7920 = vpop.f32.mrf.mxu0
    %v7921 = vadd.f32 %v7712, %v7920
    %7922 = vmatmul.f32.gmra.mxu0 %v6256
    %v7923 = vpop.f32.mrf.mxu0
    %v7924 = vadd.f32 %v7715, %v7923
    %7925 = vmatmul.f32.gmra.mxu0 %v6265
    %v7926 = vpop.f32.mrf.mxu0
    %v7927 = vadd.f32 %v7718, %v7926
    %7928 = vmatmul.f32.gmra.mxu0 %v6274
    %v7929 = vpop.f32.mrf.mxu0
    %v7930 = vadd.f32 %v7721, %v7929
    %7931 = vmatmul.f32.gmra.mxu0 %v6283
    %v7932 = vpop.f32.mrf.mxu0
    %v7933 = vadd.f32 %v7724, %v7932
    %7934 = vmatmul.f32.gmra.mxu0 %v6292
    %v7935 = vpop.f32.mrf.mxu0
    %v7936 = vadd.f32 %v7727, %v7935
    %7937 = vmatmul.f32.gmra.mxu0 %v6301
    %v7938 = vpop.f32.mrf.mxu0
    %v7939 = vadd.f32 %v7730, %v7938
    %7940 = vmatmul.f32.gmra.mxu0 %v6310
    %v7941 = vpop.f32.mrf.mxu0
    %v7942 = vadd.f32 %v7733, %v7941
    %7943 = vmatmul.f32.gmra.mxu0 %v6319
    %v7944 = vpop.f32.mrf.mxu0
    %v7945 = vadd.f32 %v7736, %v7944
    %7946 = vmatmul.f32.gmra.mxu0 %v6328
    %v7947 = vpop.f32.mrf.mxu0
    %v7948 = vadd.f32 %v7739, %v7947
    %7949 = vmatmul.f32.gmra.mxu0 %v6337
    %v7950 = vpop.f32.mrf.mxu0
    %v7951 = vadd.f32 %v7742, %v7950
    %7952 = vmatmul.f32.gmra.mxu0 %v6346
    %v7953 = vpop.f32.mrf.mxu0
    %v7954 = vadd.f32 %v7745, %v7953
    %7955 = vdwg.mxu0
    %7956 = vmatpush.msra.mxu0 %v6476
    %7957 = vmatpush.msra.mxu0 %v6475
    %7958 = vmatpush.msra.mxu0 %v6474
    %7959 = vmatpush.msra.mxu0 %v6473
    %7960 = vmatpush.msra.mxu0 %v6472
    %7961 = vmatpush.msra.mxu0 %v6471
    %7962 = vmatpush.msra.mxu0 %v6470
    %7963 = vmatpush.msra.mxu0 %v6469
    %7964 = vmatpush.msra.mxu0 %v6468
    %7965 = vmatpush.msra.mxu0 %v6467
    %7966 = vmatpush.msra.mxu0 %v6466
    %7967 = vmatpush.msra.mxu0 %v6465
    %7968 = vmatpush.msra.mxu0 %v6464
    %7969 = vmatpush.msra.mxu0 %v6463
    %7970 = vmatpush.msra.mxu0 %v6462
    %7971 = vmatpush.msra.mxu0 %v6461
    %7972 = vmatmul.f32.gmra.mxu0 %v5780
    %v7973 = vpop.f32.mrf.mxu0
    %v7974 = vadd.f32 %v7765, %v7973
    %7975 = vmatmul.f32.gmra.mxu0 %v5789
    %v7976 = vpop.f32.mrf.mxu0
    %v7977 = vadd.f32 %v7768, %v7976
    %7978 = vmatmul.f32.gmra.mxu0 %v5798
    %v7979 = vpop.f32.mrf.mxu0
    %v7980 = vadd.f32 %v7771, %v7979
    %7981 = vmatmul.f32.gmra.mxu0 %v5807
    %v7982 = vpop.f32.mrf.mxu0
    %v7983 = vadd.f32 %v7774, %v7982
    %7984 = vmatmul.f32.gmra.mxu0 %v5816
    %v7985 = vpop.f32.mrf.mxu0
    %v7986 = vadd.f32 %v7777, %v7985
    %7987 = vmatmul.f32.gmra.mxu0 %v5825
    %v7988 = vpop.f32.mrf.mxu0
    %v7989 = vadd.f32 %v7780, %v7988
    %7990 = vmatmul.f32.gmra.mxu0 %v5834
    %v7991 = vpop.f32.mrf.mxu0
    %v7992 = vadd.f32 %v7783, %v7991
    %7993 = vmatmul.f32.gmra.mxu0 %v5843
    %v7994 = vpop.f32.mrf.mxu0
    %v7995 = vadd.f32 %v7786, %v7994
    %7996 = vmatmul.f32.gmra.mxu0 %v5852
    %v7997 = vpop.f32.mrf.mxu0
    %v7998 = vadd.f32 %v7789, %v7997
    %7999 = vmatmul.f32.gmra.mxu0 %v5861
    %v8000 = vpop.f32.mrf.mxu0
    %v8001 = vadd.f32 %v7792, %v8000
    %8002 = vmatmul.f32.gmra.mxu0 %v5870
    %v8003 = vpop.f32.mrf.mxu0
    %v8004 = vadd.f32 %v7795, %v8003
    %8005 = vmatmul.f32.gmra.mxu0 %v5879
    %v8006 = vpop.f32.mrf.mxu0
    %v8007 = vadd.f32 %v7798, %v8006
    %8008 = vmatmul.f32.gmra.mxu0 %v5888
    %v8009 = vpop.f32.mrf.mxu0
    %v8010 = vadd.f32 %v7801, %v8009
    %8011 = vmatmul.f32.gmra.mxu0 %v5897
    %v8012 = vpop.f32.mrf.mxu0
    %v8013 = vadd.f32 %v7804, %v8012
    %8014 = vmatmul.f32.gmra.mxu0 %v5906
    %v8015 = vpop.f32.mrf.mxu0
    %v8016 = vadd.f32 %v7807, %v8015
    %8017 = vmatmul.f32.gmra.mxu0 %v5915
    %v8018 = vpop.f32.mrf.mxu0
    %v8019 = vadd.f32 %v7810, %v8018
    %8020 = vmatmul.f32.gmra.mxu0 %v5924
    %v8021 = vpop.f32.mrf.mxu0
    %v8022 = vadd.f32 %v7813, %v8021
    %8023 = vmatmul.f32.gmra.mxu0 %v5933
    %v8024 = vpop.f32.mrf.mxu0
    %v8025 = vadd.f32 %v7816, %v8024
    %8026 = vmatmul.f32.gmra.mxu0 %v5942
    %v8027 = vpop.f32.mrf.mxu0
    %v8028 = vadd.f32 %v7819, %v8027
    %8029 = vmatmul.f32.gmra.mxu0 %v5951
    %v8030 = vpop.f32.mrf.mxu0
    %v8031 = vadd.f32 %v7822, %v8030
    %8032 = vmatmul.f32.gmra.mxu0 %v5960
    %v8033 = vpop.f32.mrf.mxu0
    %v8034 = vadd.f32 %v7825, %v8033
    %8035 = vmatmul.f32.gmra.mxu0 %v5969
    %v8036 = vpop.f32.mrf.mxu0
    %v8037 = vadd.f32 %v7828, %v8036
    %8038 = vmatmul.f32.gmra.mxu0 %v5978
    %v8039 = vpop.f32.mrf.mxu0
    %v8040 = vadd.f32 %v7831, %v8039
    %8041 = vmatmul.f32.gmra.mxu0 %v5987
    %v8042 = vpop.f32.mrf.mxu0
    %v8043 = vadd.f32 %v7834, %v8042
    %8044 = vmatmul.f32.gmra.mxu0 %v5996
    %v8045 = vpop.f32.mrf.mxu0
    %v8046 = vadd.f32 %v7837, %v8045
    %8047 = vmatmul.f32.gmra.mxu0 %v6005
    %v8048 = vpop.f32.mrf.mxu0
    %v8049 = vadd.f32 %v7840, %v8048
    %8050 = vmatmul.f32.gmra.mxu0 %v6014
    %v8051 = vpop.f32.mrf.mxu0
    %v8052 = vadd.f32 %v7843, %v8051
    %8053 = vmatmul.f32.gmra.mxu0 %v6023
    %v8054 = vpop.f32.mrf.mxu0
    %v8055 = vadd.f32 %v7846, %v8054
    %8056 = vmatmul.f32.gmra.mxu0 %v6032
    %v8057 = vpop.f32.mrf.mxu0
    %v8058 = vadd.f32 %v7849, %v8057
    %8059 = vmatmul.f32.gmra.mxu0 %v6041
    %v8060 = vpop.f32.mrf.mxu0
    %v8061 = vadd.f32 %v7852, %v8060
    %8062 = vmatmul.f32.gmra.mxu0 %v6050
    %v8063 = vpop.f32.mrf.mxu0
    %v8064 = vadd.f32 %v7855, %v8063
    %8065 = vmatmul.f32.gmra.mxu0 %v6059
    %v8066 = vpop.f32.mrf.mxu0
    %v8067 = vadd.f32 %v7858, %v8066
    %8068 = vmatmul.f32.gmra.mxu0 %v6068
    %v8069 = vpop.f32.mrf.mxu0
    %v8070 = vadd.f32 %v7861, %v8069
    %8071 = vmatmul.f32.gmra.mxu0 %v6077
    %v8072 = vpop.f32.mrf.mxu0
    %v8073 = vadd.f32 %v7864, %v8072
    %8074 = vmatmul.f32.gmra.mxu0 %v6086
    %v8075 = vpop.f32.mrf.mxu0
    %v8076 = vadd.f32 %v7867, %v8075
    %8077 = vmatmul.f32.gmra.mxu0 %v6095
    %v8078 = vpop.f32.mrf.mxu0
    %v8079 = vadd.f32 %v7870, %v8078
    %8080 = vmatmul.f32.gmra.mxu0 %v6104
    %v8081 = vpop.f32.mrf.mxu0
    %v8082 = vadd.f32 %v7873, %v8081
    %8083 = vmatmul.f32.gmra.mxu0 %v6113
    %v8084 = vpop.f32.mrf.mxu0
    %v8085 = vadd.f32 %v7876, %v8084
    %8086 = vmatmul.f32.gmra.mxu0 %v6122
    %v8087 = vpop.f32.mrf.mxu0
    %v8088 = vadd.f32 %v7879, %v8087
    %8089 = vmatmul.f32.gmra.mxu0 %v6131
    %v8090 = vpop.f32.mrf.mxu0
    %v8091 = vadd.f32 %v7882, %v8090
    %8092 = vmatmul.f32.gmra.mxu0 %v6140
    %v8093 = vpop.f32.mrf.mxu0
    %v8094 = vadd.f32 %v7885, %v8093
    %8095 = vmatmul.f32.gmra.mxu0 %v6149
    %v8096 = vpop.f32.mrf.mxu0
    %v8097 = vadd.f32 %v7888, %v8096
    %8098 = vmatmul.f32.gmra.mxu0 %v6158
    %v8099 = vpop.f32.mrf.mxu0
    %v8100 = vadd.f32 %v7891, %v8099
    %8101 = vmatmul.f32.gmra.mxu0 %v6167
    %v8102 = vpop.f32.mrf.mxu0
    %v8103 = vadd.f32 %v7894, %v8102
    %8104 = vmatmul.f32.gmra.mxu0 %v6176
    %v8105 = vpop.f32.mrf.mxu0
    %v8106 = vadd.f32 %v7897, %v8105
    %8107 = vmatmul.f32.gmra.mxu0 %v6185
    %v8108 = vpop.f32.mrf.mxu0
    %v8109 = vadd.f32 %v7900, %v8108
    %8110 = vmatmul.f32.gmra.mxu0 %v6194
    %v8111 = vpop.f32.mrf.mxu0
    %v8112 = vadd.f32 %v7903, %v8111
    %8113 = vmatmul.f32.gmra.mxu0 %v6203
    %v8114 = vpop.f32.mrf.mxu0
    %v8115 = vadd.f32 %v7906, %v8114
    %8116 = vmatmul.f32.gmra.mxu0 %v6212
    %v8117 = vpop.f32.mrf.mxu0
    %v8118 = vadd.f32 %v7909, %v8117
    %8119 = vmatmul.f32.gmra.mxu0 %v6221
    %v8120 = vpop.f32.mrf.mxu0
    %v8121 = vadd.f32 %v7912, %v8120
    %8122 = vmatmul.f32.gmra.mxu0 %v6230
    %v8123 = vpop.f32.mrf.mxu0
    %v8124 = vadd.f32 %v7915, %v8123
    %8125 = vmatmul.f32.gmra.mxu0 %v6239
    %v8126 = vpop.f32.mrf.mxu0
    %v8127 = vadd.f32 %v7918, %v8126
    %8128 = vmatmul.f32.gmra.mxu0 %v6248
    %v8129 = vpop.f32.mrf.mxu0
    %v8130 = vadd.f32 %v7921, %v8129
    %8131 = vmatmul.f32.gmra.mxu0 %v6257
    %v8132 = vpop.f32.mrf.mxu0
    %v8133 = vadd.f32 %v7924, %v8132
    %8134 = vmatmul.f32.gmra.mxu0 %v6266
    %v8135 = vpop.f32.mrf.mxu0
    %v8136 = vadd.f32 %v7927, %v8135
    %8137 = vmatmul.f32.gmra.mxu0 %v6275
    %v8138 = vpop.f32.mrf.mxu0
    %v8139 = vadd.f32 %v7930, %v8138
    %8140 = vmatmul.f32.gmra.mxu0 %v6284
    %v8141 = vpop.f32.mrf.mxu0
    %v8142 = vadd.f32 %v7933, %v8141
    %8143 = vmatmul.f32.gmra.mxu0 %v6293
    %v8144 = vpop.f32.mrf.mxu0
    %v8145 = vadd.f32 %v7936, %v8144
    %8146 = vmatmul.f32.gmra.mxu0 %v6302
    %v8147 = vpop.f32.mrf.mxu0
    %v8148 = vadd.f32 %v7939, %v8147
    %8149 = vmatmul.f32.gmra.mxu0 %v6311
    %v8150 = vpop.f32.mrf.mxu0
    %v8151 = vadd.f32 %v7942, %v8150
    %8152 = vmatmul.f32.gmra.mxu0 %v6320
    %v8153 = vpop.f32.mrf.mxu0
    %v8154 = vadd.f32 %v7945, %v8153
    %8155 = vmatmul.f32.gmra.mxu0 %v6329
    %v8156 = vpop.f32.mrf.mxu0
    %v8157 = vadd.f32 %v7948, %v8156
    %8158 = vmatmul.f32.gmra.mxu0 %v6338
    %v8159 = vpop.f32.mrf.mxu0
    %v8160 = vadd.f32 %v7951, %v8159
    %8161 = vmatmul.f32.gmra.mxu0 %v6347
    %v8162 = vpop.f32.mrf.mxu0
    %v8163 = vadd.f32 %v7954, %v8162
    %8164 = vdwg.mxu0
    %8165 = vmatpush.msra.mxu0 %v6492
    %8166 = vmatpush.msra.mxu0 %v6491
    %8167 = vmatpush.msra.mxu0 %v6490
    %8168 = vmatpush.msra.mxu0 %v6489
    %8169 = vmatpush.msra.mxu0 %v6488
    %8170 = vmatpush.msra.mxu0 %v6487
    %8171 = vmatpush.msra.mxu0 %v6486
    %8172 = vmatpush.msra.mxu0 %v6485
    %8173 = vmatpush.msra.mxu0 %v6484
    %8174 = vmatpush.msra.mxu0 %v6483
    %8175 = vmatpush.msra.mxu0 %v6482
    %8176 = vmatpush.msra.mxu0 %v6481
    %8177 = vmatpush.msra.mxu0 %v6480
    %8178 = vmatpush.msra.mxu0 %v6479
    %8179 = vmatpush.msra.mxu0 %v6478
    %8180 = vmatpush.msra.mxu0 %v6477
    %8181 = vmatmul.f32.gmra.mxu0 %v5781
    %v8182 = vpop.f32.mrf.mxu0
    %v8183 = vadd.f32 %v7974, %v8182
    %8184 = vmatmul.f32.gmra.mxu0 %v5790
    %v8185 = vpop.f32.mrf.mxu0
    %v8186 = vadd.f32 %v7977, %v8185
    %8187 = vmatmul.f32.gmra.mxu0 %v5799
    %v8188 = vpop.f32.mrf.mxu0
    %v8189 = vadd.f32 %v7980, %v8188
    %8190 = vmatmul.f32.gmra.mxu0 %v5808
    %v8191 = vpop.f32.mrf.mxu0
    %v8192 = vadd.f32 %v7983, %v8191
    %8193 = vmatmul.f32.gmra.mxu0 %v5817
    %v8194 = vpop.f32.mrf.mxu0
    %v8195 = vadd.f32 %v7986, %v8194
    %8196 = vmatmul.f32.gmra.mxu0 %v5826
    %v8197 = vpop.f32.mrf.mxu0
    %v8198 = vadd.f32 %v7989, %v8197
    %8199 = vmatmul.f32.gmra.mxu0 %v5835
    %v8200 = vpop.f32.mrf.mxu0
    %v8201 = vadd.f32 %v7992, %v8200
    %8202 = vmatmul.f32.gmra.mxu0 %v5844
    %v8203 = vpop.f32.mrf.mxu0
    %v8204 = vadd.f32 %v7995, %v8203
    %8205 = vmatmul.f32.gmra.mxu0 %v5853
    %v8206 = vpop.f32.mrf.mxu0
    %v8207 = vadd.f32 %v7998, %v8206
    %8208 = vmatmul.f32.gmra.mxu0 %v5862
    %v8209 = vpop.f32.mrf.mxu0
    %v8210 = vadd.f32 %v8001, %v8209
    %8211 = vmatmul.f32.gmra.mxu0 %v5871
    %v8212 = vpop.f32.mrf.mxu0
    %v8213 = vadd.f32 %v8004, %v8212
    %8214 = vmatmul.f32.gmra.mxu0 %v5880
    %v8215 = vpop.f32.mrf.mxu0
    %v8216 = vadd.f32 %v8007, %v8215
    %8217 = vmatmul.f32.gmra.mxu0 %v5889
    %v8218 = vpop.f32.mrf.mxu0
    %v8219 = vadd.f32 %v8010, %v8218
    %8220 = vmatmul.f32.gmra.mxu0 %v5898
    %v8221 = vpop.f32.mrf.mxu0
    %v8222 = vadd.f32 %v8013, %v8221
    %8223 = vmatmul.f32.gmra.mxu0 %v5907
    %v8224 = vpop.f32.mrf.mxu0
    %v8225 = vadd.f32 %v8016, %v8224
    %8226 = vmatmul.f32.gmra.mxu0 %v5916
    %v8227 = vpop.f32.mrf.mxu0
    %v8228 = vadd.f32 %v8019, %v8227
    %8229 = vmatmul.f32.gmra.mxu0 %v5925
    %v8230 = vpop.f32.mrf.mxu0
    %v8231 = vadd.f32 %v8022, %v8230
    %8232 = vmatmul.f32.gmra.mxu0 %v5934
    %v8233 = vpop.f32.mrf.mxu0
    %v8234 = vadd.f32 %v8025, %v8233
    %8235 = vmatmul.f32.gmra.mxu0 %v5943
    %v8236 = vpop.f32.mrf.mxu0
    %v8237 = vadd.f32 %v8028, %v8236
    %8238 = vmatmul.f32.gmra.mxu0 %v5952
    %v8239 = vpop.f32.mrf.mxu0
    %v8240 = vadd.f32 %v8031, %v8239
    %8241 = vmatmul.f32.gmra.mxu0 %v5961
    %v8242 = vpop.f32.mrf.mxu0
    %v8243 = vadd.f32 %v8034, %v8242
    %8244 = vmatmul.f32.gmra.mxu0 %v5970
    %v8245 = vpop.f32.mrf.mxu0
    %v8246 = vadd.f32 %v8037, %v8245
    %8247 = vmatmul.f32.gmra.mxu0 %v5979
    %v8248 = vpop.f32.mrf.mxu0
    %v8249 = vadd.f32 %v8040, %v8248
    %8250 = vmatmul.f32.gmra.mxu0 %v5988
    %v8251 = vpop.f32.mrf.mxu0
    %v8252 = vadd.f32 %v8043, %v8251
    %8253 = vmatmul.f32.gmra.mxu0 %v5997
    %v8254 = vpop.f32.mrf.mxu0
    %v8255 = vadd.f32 %v8046, %v8254
    %8256 = vmatmul.f32.gmra.mxu0 %v6006
    %v8257 = vpop.f32.mrf.mxu0
    %v8258 = vadd.f32 %v8049, %v8257
    %8259 = vmatmul.f32.gmra.mxu0 %v6015
    %v8260 = vpop.f32.mrf.mxu0
    %v8261 = vadd.f32 %v8052, %v8260
    %8262 = vmatmul.f32.gmra.mxu0 %v6024
    %v8263 = vpop.f32.mrf.mxu0
    %v8264 = vadd.f32 %v8055, %v8263
    %8265 = vmatmul.f32.gmra.mxu0 %v6033
    %v8266 = vpop.f32.mrf.mxu0
    %v8267 = vadd.f32 %v8058, %v8266
    %8268 = vmatmul.f32.gmra.mxu0 %v6042
    %v8269 = vpop.f32.mrf.mxu0
    %v8270 = vadd.f32 %v8061, %v8269
    %8271 = vmatmul.f32.gmra.mxu0 %v6051
    %v8272 = vpop.f32.mrf.mxu0
    %v8273 = vadd.f32 %v8064, %v8272
    %8274 = vmatmul.f32.gmra.mxu0 %v6060
    %v8275 = vpop.f32.mrf.mxu0
    %v8276 = vadd.f32 %v8067, %v8275
    %8277 = vmatmul.f32.gmra.mxu0 %v6069
    %v8278 = vpop.f32.mrf.mxu0
    %v8279 = vadd.f32 %v8070, %v8278
    %8280 = vmatmul.f32.gmra.mxu0 %v6078
    %v8281 = vpop.f32.mrf.mxu0
    %v8282 = vadd.f32 %v8073, %v8281
    %8283 = vmatmul.f32.gmra.mxu0 %v6087
    %v8284 = vpop.f32.mrf.mxu0
    %v8285 = vadd.f32 %v8076, %v8284
    %8286 = vmatmul.f32.gmra.mxu0 %v6096
    %v8287 = vpop.f32.mrf.mxu0
    %v8288 = vadd.f32 %v8079, %v8287
    %8289 = vmatmul.f32.gmra.mxu0 %v6105
    %v8290 = vpop.f32.mrf.mxu0
    %v8291 = vadd.f32 %v8082, %v8290
    %8292 = vmatmul.f32.gmra.mxu0 %v6114
    %v8293 = vpop.f32.mrf.mxu0
    %v8294 = vadd.f32 %v8085, %v8293
    %8295 = vmatmul.f32.gmra.mxu0 %v6123
    %v8296 = vpop.f32.mrf.mxu0
    %v8297 = vadd.f32 %v8088, %v8296
    %8298 = vmatmul.f32.gmra.mxu0 %v6132
    %v8299 = vpop.f32.mrf.mxu0
    %v8300 = vadd.f32 %v8091, %v8299
    %8301 = vmatmul.f32.gmra.mxu0 %v6141
    %v8302 = vpop.f32.mrf.mxu0
    %v8303 = vadd.f32 %v8094, %v8302
    %8304 = vmatmul.f32.gmra.mxu0 %v6150
    %v8305 = vpop.f32.mrf.mxu0
    %v8306 = vadd.f32 %v8097, %v8305
    %8307 = vmatmul.f32.gmra.mxu0 %v6159
    %v8308 = vpop.f32.mrf.mxu0
    %v8309 = vadd.f32 %v8100, %v8308
    %8310 = vmatmul.f32.gmra.mxu0 %v6168
    %v8311 = vpop.f32.mrf.mxu0
    %v8312 = vadd.f32 %v8103, %v8311
    %8313 = vmatmul.f32.gmra.mxu0 %v6177
    %v8314 = vpop.f32.mrf.mxu0
    %v8315 = vadd.f32 %v8106, %v8314
    %8316 = vmatmul.f32.gmra.mxu0 %v6186
    %v8317 = vpop.f32.mrf.mxu0
    %v8318 = vadd.f32 %v8109, %v8317
    %8319 = vmatmul.f32.gmra.mxu0 %v6195
    %v8320 = vpop.f32.mrf.mxu0
    %v8321 = vadd.f32 %v8112, %v8320
    %8322 = vmatmul.f32.gmra.mxu0 %v6204
    %v8323 = vpop.f32.mrf.mxu0
    %v8324 = vadd.f32 %v8115, %v8323
    %8325 = vmatmul.f32.gmra.mxu0 %v6213
    %v8326 = vpop.f32.mrf.mxu0
    %v8327 = vadd.f32 %v8118, %v8326
    %8328 = vmatmul.f32.gmra.mxu0 %v6222
    %v8329 = vpop.f32.mrf.mxu0
    %v8330 = vadd.f32 %v8121, %v8329
    %8331 = vmatmul.f32.gmra.mxu0 %v6231
    %v8332 = vpop.f32.mrf.mxu0
    %v8333 = vadd.f32 %v8124, %v8332
    %8334 = vmatmul.f32.gmra.mxu0 %v6240
    %v8335 = vpop.f32.mrf.mxu0
    %v8336 = vadd.f32 %v8127, %v8335
    %8337 = vmatmul.f32.gmra.mxu0 %v6249
    %v8338 = vpop.f32.mrf.mxu0
    %v8339 = vadd.f32 %v8130, %v8338
    %8340 = vmatmul.f32.gmra.mxu0 %v6258
    %v8341 = vpop.f32.mrf.mxu0
    %v8342 = vadd.f32 %v8133, %v8341
    %8343 = vmatmul.f32.gmra.mxu0 %v6267
    %v8344 = vpop.f32.mrf.mxu0
    %v8345 = vadd.f32 %v8136, %v8344
    %8346 = vmatmul.f32.gmra.mxu0 %v6276
    %v8347 = vpop.f32.mrf.mxu0
    %v8348 = vadd.f32 %v8139, %v8347
    %8349 = vmatmul.f32.gmra.mxu0 %v6285
    %v8350 = vpop.f32.mrf.mxu0
    %v8351 = vadd.f32 %v8142, %v8350
    %8352 = vmatmul.f32.gmra.mxu0 %v6294
    %v8353 = vpop.f32.mrf.mxu0
    %v8354 = vadd.f32 %v8145, %v8353
    %8355 = vmatmul.f32.gmra.mxu0 %v6303
    %v8356 = vpop.f32.mrf.mxu0
    %v8357 = vadd.f32 %v8148, %v8356
    %8358 = vmatmul.f32.gmra.mxu0 %v6312
    %v8359 = vpop.f32.mrf.mxu0
    %v8360 = vadd.f32 %v8151, %v8359
    %8361 = vmatmul.f32.gmra.mxu0 %v6321
    %v8362 = vpop.f32.mrf.mxu0
    %v8363 = vadd.f32 %v8154, %v8362
    %8364 = vmatmul.f32.gmra.mxu0 %v6330
    %v8365 = vpop.f32.mrf.mxu0
    %v8366 = vadd.f32 %v8157, %v8365
    %8367 = vmatmul.f32.gmra.mxu0 %v6339
    %v8368 = vpop.f32.mrf.mxu0
    %v8369 = vadd.f32 %v8160, %v8368
    %8370 = vmatmul.f32.gmra.mxu0 %v6348
    %v8371 = vpop.f32.mrf.mxu0
    %v8372 = vadd.f32 %v8163, %v8371
    %8373 = vdwg.mxu0
    %v8374 = vld [vmem:[%s230 + $0x1] sm:$0xff]
    %v8375 = vld [vmem:[%s230 + $0x9] sm:$0xff]
    %v8376 = vld [vmem:[%s230 + $0x19] sm:$0xff]
    %v8377 = vld [vmem:[%s230 + $0x21] sm:$0xff]
    %v8378 = vld [vmem:[%s230 + $0x31] sm:$0xff]
    %v8379 = vld [vmem:[%s230 + $0x39] sm:$0xff]
    %v8380 = vld [vmem:[%s230 + $0x49] sm:$0xff]
    %v8381 = vld [vmem:[%s230 + $0x51] sm:$0xff]
    %v8382 = vld [vmem:[%s230 + $0x61] sm:$0xff]
    %v8383 = vld [vmem:[%s230 + $0x69] sm:$0xff]
    %v8384 = vld [vmem:[%s230 + $0x79] sm:$0xff]
    %v8385 = vld [vmem:[%s230 + $0x81] sm:$0xff]
    %v8386 = vld [vmem:[%s230 + $0x91] sm:$0xff]
    %v8387 = vld [vmem:[%s230 + $0x99] sm:$0xff]
    %v8388 = vld [vmem:[%s230 + $0xa9] sm:$0xff]
    %v8389 = vld [vmem:[%s230 + $0xb1] sm:$0xff]
    %v8390 = vld [vmem:[%s230 + $0xc1] sm:$0xff]
    %v8391 = vld [vmem:[%s230 + $0xc9] sm:$0xff]
    %v8392 = vld [vmem:[%s230 + $0xd9] sm:$0xff]
    %v8393 = vld [vmem:[%s230 + $0xe1] sm:$0xff]
    %v8394 = vld [vmem:[%s230 + $0xf1] sm:$0xff]
    %v8395 = vld [vmem:[%s230 + $0xf9] sm:$0xff]
    %v8396 = vld [vmem:[%s230 + $0x109] sm:$0xff]
    %v8397 = vld [vmem:[%s230 + $0x111] sm:$0xff]
    %v8398 = vld [vmem:[%s230 + $0x121] sm:$0xff]
    %v8399 = vld [vmem:[%s230 + $0x129] sm:$0xff]
    %v8400 = vld [vmem:[%s230 + $0x139] sm:$0xff]
    %v8401 = vld [vmem:[%s230 + $0x141] sm:$0xff]
    %v8402 = vld [vmem:[%s230 + $0x151] sm:$0xff]
    %v8403 = vld [vmem:[%s230 + $0x159] sm:$0xff]
    %v8404 = vld [vmem:[%s230 + $0x169] sm:$0xff]
    %v8405 = vld [vmem:[%s230 + $0x171] sm:$0xff]
    %v8406 = vld [vmem:[%s230 + $0x1b1] sm:$0xff]
    %v8407 = vld [vmem:[%s230 + $0x1b9] sm:$0xff]
    %v8408 = vld [vmem:[%s230 + $0x1c9] sm:$0xff]
    %v8409 = vld [vmem:[%s230 + $0x1d1] sm:$0xff]
    %v8410 = vld [vmem:[%s230 + $0x1e1] sm:$0xff]
    %v8411 = vld [vmem:[%s230 + $0x1e9] sm:$0xff]
    %v8412 = vld [vmem:[%s230 + $0x1f9] sm:$0xff]
    %v8413 = vld [vmem:[%s230 + $0x201] sm:$0xff]
    %v8414 = vld [vmem:[%s230 + $0x211] sm:$0xff]
    %v8415 = vld [vmem:[%s230 + $0x219] sm:$0xff]
    %v8416 = vld [vmem:[%s230 + $0x229] sm:$0xff]
    %v8417 = vld [vmem:[%s230 + $0x231] sm:$0xff]
    %v8418 = vld [vmem:[%s230 + $0x241] sm:$0xff]
    %v8419 = vld [vmem:[%s230 + $0x249] sm:$0xff]
    %v8420 = vld [vmem:[%s230 + $0x259] sm:$0xff]
    %v8421 = vld [vmem:[%s230 + $0x261] sm:$0xff]
    %v8422 = vld [vmem:[%s230 + $0x271] sm:$0xff]
    %v8423 = vld [vmem:[%s230 + $0x279] sm:$0xff]
    %v8424 = vld [vmem:[%s230 + $0x289] sm:$0xff]
    %v8425 = vld [vmem:[%s230 + $0x291] sm:$0xff]
    %v8426 = vld [vmem:[%s230 + $0x2a1] sm:$0xff]
    %v8427 = vld [vmem:[%s230 + $0x2a9] sm:$0xff]
    %v8428 = vld [vmem:[%s230 + $0x2b9] sm:$0xff]
    %v8429 = vld [vmem:[%s230 + $0x2c1] sm:$0xff]
    %v8430 = vld [vmem:[%s230 + $0x2d1] sm:$0xff]
    %v8431 = vld [vmem:[%s230 + $0x2d9] sm:$0xff]
    %v8432 = vld [vmem:[%s230 + $0x2e9] sm:$0xff]
    %v8433 = vld [vmem:[%s230 + $0x2f1] sm:$0xff]
    %v8434 = vld [vmem:[%s230 + $0x301] sm:$0xff]
    %v8435 = vld [vmem:[%s230 + $0x309] sm:$0xff]
    %v8436 = vld [vmem:[%s230 + $0x319] sm:$0xff]
    %v8437 = vld [vmem:[%s230 + $0x321] sm:$0xff]
    %v8438 = vld [vmem:[%s5] sm:$0x1]
    %v8439 = vld [vmem:[%s6] sm:$0x1]
    %v8440 = vadd.f32 %v8183, %v8186
    %v8441 = vadd.f32 %v8440, %v8189
    %v8442 = vadd.f32 %v8441, %v8192
    %v8443 = vadd.f32 %v8442, %v8195
    %v8444 = vadd.f32 %v8443, %v8198
    %v8445 = vadd.f32 %v8444, %v8201
    %v8446 = vadd.f32 %v8445, %v8204
    %v8447 = vadd.f32 %v8446, %v8207
    %v8448 = vadd.f32 %v8447, %v8210
    %v8449 = vadd.f32 %v8448, %v8213
    %v8450 = vadd.f32 %v8449, %v8216
    %v8451 = vadd.f32 %v8450, %v8219
    %v8452 = vadd.f32 %v8451, %v8222
    %v8453 = vadd.f32 %v8452, %v8225
    %v8454 = vadd.f32 %v8453, %v8228
    %v8455 = vadd.f32 %v8454, %v8231
    %v8456 = vadd.f32 %v8455, %v8234
    %v8457 = vadd.f32 %v8456, %v8237
    %v8458 = vadd.f32 %v8457, %v8240
    %v8459 = vadd.f32 %v8458, %v8243
    %v8460 = vadd.f32 %v8459, %v8246
    %v8461 = vadd.f32 %v8460, %v8249
    %v8462 = vadd.f32 %v8461, %v8252
    %v8463 = vadd.f32 %v8462, %v8255
    %v8464 = vadd.f32 %v8463, %v8258
    %v8465 = vadd.f32 %v8464, %v8261
    %v8466 = vadd.f32 %v8465, %v8264
    %v8467 = vadd.f32 %v8466, %v8267
    %v8468 = vadd.f32 %v8467, %v8270
    %v8469 = vadd.f32 %v8468, %v8273
    %v8470 = vadd.f32 %v8469, %v8276
    %v8471 = vadd.f32 %v8470, %v8279
    %v8472 = vadd.f32 %v8471, %v8282
    %v8473 = vadd.f32 %v8472, %v8285
    %v8474 = vadd.f32 %v8473, %v8288
    %v8475 = vadd.f32 %v8474, %v8291
    %v8476 = vadd.f32 %v8475, %v8294
    %v8477 = vadd.f32 %v8476, %v8297
    %v8478 = vadd.f32 %v8477, %v8300
    %v8479 = vadd.f32 %v8478, %v8303
    %v8480 = vadd.f32 %v8479, %v8306
    %v8481 = vadd.f32 %v8480, %v8309
    %v8482 = vadd.f32 %v8481, %v8312
    %v8483 = vadd.f32 %v8482, %v8315
    %v8484 = vadd.f32 %v8483, %v8318
    %v8485 = vadd.f32 %v8484, %v8321
    %v8486 = vadd.f32 %v8485, %v8324
    %v8487 = vadd.f32 %v8486, %v8327
    %v8488 = vadd.f32 %v8487, %v8330
    %v8489 = vadd.f32 %v8488, %v8333
    %v8490 = vadd.f32 %v8489, %v8336
    %v8491 = vadd.f32 %v8490, %v8339
    %v8492 = vadd.f32 %v8491, %v8342
    %v8493 = vadd.f32 %v8492, %v8345
    %v8494 = vadd.f32 %v8493, %v8348
    %v8495 = vadd.f32 %v8494, %v8351
    %v8496 = vadd.f32 %v8495, %v8354
    %v8497 = vadd.f32 %v8496, %v8357
    %v8498 = vadd.f32 %v8497, %v8360
    %v8499 = vadd.f32 %v8498, %v8363
    %v8500 = vadd.f32 %v8499, %v8366
    %v8501 = vadd.f32 %v8500, %v8369
    %v8502 = vadd.f32 %v8501, %v8372
    %v8503 = vrot.slane %v8502, 4
    %v8504 = vadd.f32 %v8502, %v8503
    %v8505 = vrot.slane %v8504, 2
    %v8506 = vadd.f32 %v8504, %v8505
    %v8507 = vrot.slane %v8506, 1
    %v8508 = vadd.f32 %v8506, %v8507
    %v8509 = vmul.f32 %v8508, 0.001953125
    %v8510 = vmul.f32 %v8183, %v8183
    %v8511 = vmul.f32 %v8186, %v8186
    %v8512 = vmul.f32 %v8189, %v8189
    %v8513 = vmul.f32 %v8192, %v8192
    %v8514 = vmul.f32 %v8195, %v8195
    %v8515 = vmul.f32 %v8198, %v8198
    %v8516 = vmul.f32 %v8201, %v8201
    %v8517 = vmul.f32 %v8204, %v8204
    %v8518 = vmul.f32 %v8207, %v8207
    %v8519 = vmul.f32 %v8210, %v8210
    %v8520 = vmul.f32 %v8213, %v8213
    %v8521 = vmul.f32 %v8216, %v8216
    %v8522 = vmul.f32 %v8219, %v8219
    %v8523 = vmul.f32 %v8222, %v8222
    %v8524 = vmul.f32 %v8225, %v8225
    %v8525 = vmul.f32 %v8228, %v8228
    %v8526 = vmul.f32 %v8231, %v8231
    %v8527 = vmul.f32 %v8234, %v8234
    %v8528 = vmul.f32 %v8237, %v8237
    %v8529 = vmul.f32 %v8240, %v8240
    %v8530 = vmul.f32 %v8243, %v8243
    %v8531 = vmul.f32 %v8246, %v8246
    %v8532 = vmul.f32 %v8249, %v8249
    %v8533 = vmul.f32 %v8252, %v8252
    %v8534 = vmul.f32 %v8255, %v8255
    %v8535 = vmul.f32 %v8258, %v8258
    %v8536 = vmul.f32 %v8261, %v8261
    %v8537 = vmul.f32 %v8264, %v8264
    %v8538 = vmul.f32 %v8267, %v8267
    %v8539 = vmul.f32 %v8270, %v8270
    %v8540 = vmul.f32 %v8273, %v8273
    %v8541 = vmul.f32 %v8276, %v8276
    %v8542 = vmul.f32 %v8279, %v8279
    %v8543 = vmul.f32 %v8282, %v8282
    %v8544 = vmul.f32 %v8285, %v8285
    %v8545 = vmul.f32 %v8288, %v8288
    %v8546 = vmul.f32 %v8291, %v8291
    %v8547 = vmul.f32 %v8294, %v8294
    %v8548 = vmul.f32 %v8297, %v8297
    %v8549 = vmul.f32 %v8300, %v8300
    %v8550 = vmul.f32 %v8303, %v8303
    %v8551 = vmul.f32 %v8306, %v8306
    %v8552 = vmul.f32 %v8309, %v8309
    %v8553 = vmul.f32 %v8312, %v8312
    %v8554 = vmul.f32 %v8315, %v8315
    %v8555 = vmul.f32 %v8318, %v8318
    %v8556 = vmul.f32 %v8321, %v8321
    %v8557 = vmul.f32 %v8324, %v8324
    %v8558 = vmul.f32 %v8327, %v8327
    %v8559 = vmul.f32 %v8330, %v8330
    %v8560 = vmul.f32 %v8333, %v8333
    %v8561 = vmul.f32 %v8336, %v8336
    %v8562 = vmul.f32 %v8339, %v8339
    %v8563 = vmul.f32 %v8342, %v8342
    %v8564 = vmul.f32 %v8345, %v8345
    %v8565 = vmul.f32 %v8348, %v8348
    %v8566 = vmul.f32 %v8351, %v8351
    %v8567 = vmul.f32 %v8354, %v8354
    %v8568 = vmul.f32 %v8357, %v8357
    %v8569 = vmul.f32 %v8360, %v8360
    %v8570 = vmul.f32 %v8363, %v8363
    %v8571 = vmul.f32 %v8366, %v8366
    %v8572 = vmul.f32 %v8369, %v8369
    %v8573 = vmul.f32 %v8372, %v8372
    %v8574 = vadd.f32 %v8510, %v8511
    %v8575 = vadd.f32 %v8574, %v8512
    %v8576 = vadd.f32 %v8575, %v8513
    %v8577 = vadd.f32 %v8576, %v8514
    %v8578 = vadd.f32 %v8577, %v8515
    %v8579 = vadd.f32 %v8578, %v8516
    %v8580 = vadd.f32 %v8579, %v8517
    %v8581 = vadd.f32 %v8580, %v8518
    %v8582 = vadd.f32 %v8581, %v8519
    %v8583 = vadd.f32 %v8582, %v8520
    %v8584 = vadd.f32 %v8583, %v8521
    %v8585 = vadd.f32 %v8584, %v8522
    %v8586 = vadd.f32 %v8585, %v8523
    %v8587 = vadd.f32 %v8586, %v8524
    %v8588 = vadd.f32 %v8587, %v8525
    %v8589 = vadd.f32 %v8588, %v8526
    %v8590 = vadd.f32 %v8589, %v8527
    %v8591 = vadd.f32 %v8590, %v8528
    %v8592 = vadd.f32 %v8591, %v8529
    %v8593 = vadd.f32 %v8592, %v8530
    %v8594 = vadd.f32 %v8593, %v8531
    %v8595 = vadd.f32 %v8594, %v8532
    %v8596 = vadd.f32 %v8595, %v8533
    %v8597 = vadd.f32 %v8596, %v8534
    %v8598 = vadd.f32 %v8597, %v8535
    %v8599 = vadd.f32 %v8598, %v8536
    %v8600 = vadd.f32 %v8599, %v8537
    %v8601 = vadd.f32 %v8600, %v8538
    %v8602 = vadd.f32 %v8601, %v8539
    %v8603 = vadd.f32 %v8602, %v8540
    %v8604 = vadd.f32 %v8603, %v8541
    %v8605 = vadd.f32 %v8604, %v8542
    %v8606 = vadd.f32 %v8605, %v8543
    %v8607 = vadd.f32 %v8606, %v8544
    %v8608 = vadd.f32 %v8607, %v8545
    %v8609 = vadd.f32 %v8608, %v8546
    %v8610 = vadd.f32 %v8609, %v8547
    %v8611 = vadd.f32 %v8610, %v8548
    %v8612 = vadd.f32 %v8611, %v8549
    %v8613 = vadd.f32 %v8612, %v8550
    %v8614 = vadd.f32 %v8613, %v8551
    %v8615 = vadd.f32 %v8614, %v8552
    %v8616 = vadd.f32 %v8615, %v8553
    %v8617 = vadd.f32 %v8616, %v8554
    %v8618 = vadd.f32 %v8617, %v8555
    %v8619 = vadd.f32 %v8618, %v8556
    %v8620 = vadd.f32 %v8619, %v8557
    %v8621 = vadd.f32 %v8620, %v8558
    %v8622 = vadd.f32 %v8621, %v8559
    %v8623 = vadd.f32 %v8622, %v8560
    %v8624 = vadd.f32 %v8623, %v8561
    %v8625 = vadd.f32 %v8624, %v8562
    %v8626 = vadd.f32 %v8625, %v8563
    %v8627 = vadd.f32 %v8626, %v8564
    %v8628 = vadd.f32 %v8627, %v8565
    %v8629 = vadd.f32 %v8628, %v8566
    %v8630 = vadd.f32 %v8629, %v8567
    %v8631 = vadd.f32 %v8630, %v8568
    %v8632 = vadd.f32 %v8631, %v8569
    %v8633 = vadd.f32 %v8632, %v8570
    %v8634 = vadd.f32 %v8633, %v8571
    %v8635 = vadd.f32 %v8634, %v8572
    %v8636 = vadd.f32 %v8635, %v8573
    %v8637 = vrot.slane %v8636, 4
    %v8638 = vadd.f32 %v8636, %v8637
    %v8639 = vrot.slane %v8638, 2
    %v8640 = vadd.f32 %v8638, %v8639
    %v8641 = vrot.slane %v8640, 1
    %v8642 = vadd.f32 %v8640, %v8641
    %v8643 = vmul.f32 %v8642, 0.001953125
    %v8644 = vmul.f32 %v8509, %v8509
    %v8645 = vsub.f32 %v8643, %v8644
    %v8646 = vadd.f32 %v8645, 1e-05
    %v8647 = vrsqrt.pop %v8646
    %v8648 = vmul.f32 %v8647, %v8646
    %v8649 = vmul.f32 %v8648, %v8647
    %v8650 = vmul.f32 0.5, %v8649
    %v8651 = vsub.f32 1.5, %v8650
    %v8652 = vmul.f32 %v8647, %v8651
    %vm8653 = vweird.f32 %v8646
    %vm8654 = vweird.f32 %v8647
    %vm8655 = vmor %vm8653, %vm8654
    %v8656 = vsel %vm8655, %v8647, %v8652
    %v8657 = vmul.f32 %v8438, %v8656
    %v8658 = vmul.f32 %v8509, %v8657
    %v8659 = vsub.f32 %v8439, %v8658
    %v8661 = vperm.slane %v8657, 0
    %v8663 = vmul.f32 %v8183, %v8661
    %v8664 = vmul.f32 %v8186, %v8661
    %v8665 = vmul.f32 %v8189, %v8661
    %v8666 = vmul.f32 %v8192, %v8661
    %v8667 = vmul.f32 %v8195, %v8661
    %v8668 = vmul.f32 %v8198, %v8661
    %v8669 = vmul.f32 %v8201, %v8661
    %v8670 = vmul.f32 %v8204, %v8661
    %v8671 = vmul.f32 %v8207, %v8661
    %v8672 = vmul.f32 %v8210, %v8661
    %v8673 = vmul.f32 %v8213, %v8661
    %v8674 = vmul.f32 %v8216, %v8661
    %v8675 = vmul.f32 %v8219, %v8661
    %v8676 = vmul.f32 %v8222, %v8661
    %v8677 = vmul.f32 %v8225, %v8661
    %v8678 = vmul.f32 %v8228, %v8661
    %v8679 = vmul.f32 %v8231, %v8661
    %v8680 = vmul.f32 %v8234, %v8661
    %v8681 = vmul.f32 %v8237, %v8661
    %v8682 = vmul.f32 %v8240, %v8661
    %v8683 = vmul.f32 %v8243, %v8661
    %v8684 = vmul.f32 %v8246, %v8661
    %v8685 = vmul.f32 %v8249, %v8661
    %v8686 = vmul.f32 %v8252, %v8661
    %v8687 = vmul.f32 %v8255, %v8661
    %v8688 = vmul.f32 %v8258, %v8661
    %v8689 = vmul.f32 %v8261, %v8661
    %v8690 = vmul.f32 %v8264, %v8661
    %v8691 = vmul.f32 %v8267, %v8661
    %v8692 = vmul.f32 %v8270, %v8661
    %v8693 = vmul.f32 %v8273, %v8661
    %v8694 = vmul.f32 %v8276, %v8661
    %v8695 = vmul.f32 %v8279, %v8661
    %v8696 = vmul.f32 %v8282, %v8661
    %v8697 = vmul.f32 %v8285, %v8661
    %v8698 = vmul.f32 %v8288, %v8661
    %v8699 = vmul.f32 %v8291, %v8661
    %v8700 = vmul.f32 %v8294, %v8661
    %v8701 = vmul.f32 %v8297, %v8661
    %v8702 = vmul.f32 %v8300, %v8661
    %v8703 = vmul.f32 %v8303, %v8661
    %v8704 = vmul.f32 %v8306, %v8661
    %v8705 = vmul.f32 %v8309, %v8661
    %v8706 = vmul.f32 %v8312, %v8661
    %v8707 = vmul.f32 %v8315, %v8661
    %v8708 = vmul.f32 %v8318, %v8661
    %v8709 = vmul.f32 %v8321, %v8661
    %v8710 = vmul.f32 %v8324, %v8661
    %v8711 = vmul.f32 %v8327, %v8661
    %v8712 = vmul.f32 %v8330, %v8661
    %v8713 = vmul.f32 %v8333, %v8661
    %v8714 = vmul.f32 %v8336, %v8661
    %v8715 = vmul.f32 %v8339, %v8661
    %v8716 = vmul.f32 %v8342, %v8661
    %v8717 = vmul.f32 %v8345, %v8661
    %v8718 = vmul.f32 %v8348, %v8661
    %v8719 = vmul.f32 %v8351, %v8661
    %v8720 = vmul.f32 %v8354, %v8661
    %v8721 = vmul.f32 %v8357, %v8661
    %v8722 = vmul.f32 %v8360, %v8661
    %v8723 = vmul.f32 %v8363, %v8661
    %v8724 = vmul.f32 %v8366, %v8661
    %v8725 = vmul.f32 %v8369, %v8661
    %v8726 = vmul.f32 %v8372, %v8661
    %v8728 = vperm.slane %v8659, 0
    %v8730 = vadd.f32 %v8663, %v8728
    %v8731 = vadd.f32 %v8664, %v8728
    %v8732 = vadd.f32 %v8665, %v8728
    %v8733 = vadd.f32 %v8666, %v8728
    %v8734 = vadd.f32 %v8667, %v8728
    %v8735 = vadd.f32 %v8668, %v8728
    %v8736 = vadd.f32 %v8669, %v8728
    %v8737 = vadd.f32 %v8670, %v8728
    %v8738 = vadd.f32 %v8671, %v8728
    %v8739 = vadd.f32 %v8672, %v8728
    %v8740 = vadd.f32 %v8673, %v8728
    %v8741 = vadd.f32 %v8674, %v8728
    %v8742 = vadd.f32 %v8675, %v8728
    %v8743 = vadd.f32 %v8676, %v8728
    %v8744 = vadd.f32 %v8677, %v8728
    %v8745 = vadd.f32 %v8678, %v8728
    %v8746 = vadd.f32 %v8679, %v8728
    %v8747 = vadd.f32 %v8680, %v8728
    %v8748 = vadd.f32 %v8681, %v8728
    %v8749 = vadd.f32 %v8682, %v8728
    %v8750 = vadd.f32 %v8683, %v8728
    %v8751 = vadd.f32 %v8684, %v8728
    %v8752 = vadd.f32 %v8685, %v8728
    %v8753 = vadd.f32 %v8686, %v8728
    %v8754 = vadd.f32 %v8687, %v8728
    %v8755 = vadd.f32 %v8688, %v8728
    %v8756 = vadd.f32 %v8689, %v8728
    %v8757 = vadd.f32 %v8690, %v8728
    %v8758 = vadd.f32 %v8691, %v8728
    %v8759 = vadd.f32 %v8692, %v8728
    %v8760 = vadd.f32 %v8693, %v8728
    %v8761 = vadd.f32 %v8694, %v8728
    %v8762 = vadd.f32 %v8695, %v8728
    %v8763 = vadd.f32 %v8696, %v8728
    %v8764 = vadd.f32 %v8697, %v8728
    %v8765 = vadd.f32 %v8698, %v8728
    %v8766 = vadd.f32 %v8699, %v8728
    %v8767 = vadd.f32 %v8700, %v8728
    %v8768 = vadd.f32 %v8701, %v8728
    %v8769 = vadd.f32 %v8702, %v8728
    %v8770 = vadd.f32 %v8703, %v8728
    %v8771 = vadd.f32 %v8704, %v8728
    %v8772 = vadd.f32 %v8705, %v8728
    %v8773 = vadd.f32 %v8706, %v8728
    %v8774 = vadd.f32 %v8707, %v8728
    %v8775 = vadd.f32 %v8708, %v8728
    %v8776 = vadd.f32 %v8709, %v8728
    %v8777 = vadd.f32 %v8710, %v8728
    %v8778 = vadd.f32 %v8711, %v8728
    %v8779 = vadd.f32 %v8712, %v8728
    %v8780 = vadd.f32 %v8713, %v8728
    %v8781 = vadd.f32 %v8714, %v8728
    %v8782 = vadd.f32 %v8715, %v8728
    %v8783 = vadd.f32 %v8716, %v8728
    %v8784 = vadd.f32 %v8717, %v8728
    %v8785 = vadd.f32 %v8718, %v8728
    %v8786 = vadd.f32 %v8719, %v8728
    %v8787 = vadd.f32 %v8720, %v8728
    %v8788 = vadd.f32 %v8721, %v8728
    %v8789 = vadd.f32 %v8722, %v8728
    %v8790 = vadd.f32 %v8723, %v8728
    %v8791 = vadd.f32 %v8724, %v8728
    %v8792 = vadd.f32 %v8725, %v8728
    %v8793 = vadd.f32 %v8726, %v8728
    %v8794 = vmax.f32 %v8730, 0.0
    %v8795 = vmax.f32 %v8731, 0.0
    %v8796 = vmax.f32 %v8732, 0.0
    %v8797 = vmax.f32 %v8733, 0.0
    %v8798 = vmax.f32 %v8734, 0.0
    %v8799 = vmax.f32 %v8735, 0.0
    %v8800 = vmax.f32 %v8736, 0.0
    %v8801 = vmax.f32 %v8737, 0.0
    %v8802 = vmax.f32 %v8738, 0.0
    %v8803 = vmax.f32 %v8739, 0.0
    %v8804 = vmax.f32 %v8740, 0.0
    %v8805 = vmax.f32 %v8741, 0.0
    %v8806 = vmax.f32 %v8742, 0.0
    %v8807 = vmax.f32 %v8743, 0.0
    %v8808 = vmax.f32 %v8744, 0.0
    %v8809 = vmax.f32 %v8745, 0.0
    %v8810 = vmax.f32 %v8746, 0.0
    %v8811 = vmax.f32 %v8747, 0.0
    %v8812 = vmax.f32 %v8748, 0.0
    %v8813 = vmax.f32 %v8749, 0.0
    %v8814 = vmax.f32 %v8750, 0.0
    %v8815 = vmax.f32 %v8751, 0.0
    %v8816 = vmax.f32 %v8752, 0.0
    %v8817 = vmax.f32 %v8753, 0.0
    %v8818 = vmax.f32 %v8754, 0.0
    %v8819 = vmax.f32 %v8755, 0.0
    %v8820 = vmax.f32 %v8756, 0.0
    %v8821 = vmax.f32 %v8757, 0.0
    %v8822 = vmax.f32 %v8758, 0.0
    %v8823 = vmax.f32 %v8759, 0.0
    %v8824 = vmax.f32 %v8760, 0.0
    %v8825 = vmax.f32 %v8761, 0.0
    %v8826 = vmax.f32 %v8762, 0.0
    %v8827 = vmax.f32 %v8763, 0.0
    %v8828 = vmax.f32 %v8764, 0.0
    %v8829 = vmax.f32 %v8765, 0.0
    %v8830 = vmax.f32 %v8766, 0.0
    %v8831 = vmax.f32 %v8767, 0.0
    %v8832 = vmax.f32 %v8768, 0.0
    %v8833 = vmax.f32 %v8769, 0.0
    %v8834 = vmax.f32 %v8770, 0.0
    %v8835 = vmax.f32 %v8771, 0.0
    %v8836 = vmax.f32 %v8772, 0.0
    %v8837 = vmax.f32 %v8773, 0.0
    %v8838 = vmax.f32 %v8774, 0.0
    %v8839 = vmax.f32 %v8775, 0.0
    %v8840 = vmax.f32 %v8776, 0.0
    %v8841 = vmax.f32 %v8777, 0.0
    %v8842 = vmax.f32 %v8778, 0.0
    %v8843 = vmax.f32 %v8779, 0.0
    %v8844 = vmax.f32 %v8780, 0.0
    %v8845 = vmax.f32 %v8781, 0.0
    %v8846 = vmax.f32 %v8782, 0.0
    %v8847 = vmax.f32 %v8783, 0.0
    %v8848 = vmax.f32 %v8784, 0.0
    %v8849 = vmax.f32 %v8785, 0.0
    %v8850 = vmax.f32 %v8786, 0.0
    %v8851 = vmax.f32 %v8787, 0.0
    %v8852 = vmax.f32 %v8788, 0.0
    %v8853 = vmax.f32 %v8789, 0.0
    %v8854 = vmax.f32 %v8790, 0.0
    %v8855 = vmax.f32 %v8791, 0.0
    %v8856 = vmax.f32 %v8792, 0.0
    %v8857 = vmax.f32 %v8793, 0.0
    %v8858 = vadd.f32 %v8794, %v8374
    %v8859 = vadd.f32 %v8795, %v8375
    %v8860 = vadd.f32 %v8796, %v8376
    %v8861 = vadd.f32 %v8797, %v8377
    %v8862 = vadd.f32 %v8798, %v8378
    %v8863 = vadd.f32 %v8799, %v8379
    %v8864 = vadd.f32 %v8800, %v8380
    %v8865 = vadd.f32 %v8801, %v8381
    %v8866 = vadd.f32 %v8802, %v8382
    %v8867 = vadd.f32 %v8803, %v8383
    %v8868 = vadd.f32 %v8804, %v8384
    %v8869 = vadd.f32 %v8805, %v8385
    %v8870 = vadd.f32 %v8806, %v8386
    %v8871 = vadd.f32 %v8807, %v8387
    %v8872 = vadd.f32 %v8808, %v8388
    %v8873 = vadd.f32 %v8809, %v8389
    %v8874 = vadd.f32 %v8810, %v8390
    %v8875 = vadd.f32 %v8811, %v8391
    %v8876 = vadd.f32 %v8812, %v8392
    %v8877 = vadd.f32 %v8813, %v8393
    %v8878 = vadd.f32 %v8814, %v8394
    %v8879 = vadd.f32 %v8815, %v8395
    %v8880 = vadd.f32 %v8816, %v8396
    %v8881 = vadd.f32 %v8817, %v8397
    %v8882 = vadd.f32 %v8818, %v8398
    %v8883 = vadd.f32 %v8819, %v8399
    %v8884 = vadd.f32 %v8820, %v8400
    %v8885 = vadd.f32 %v8821, %v8401
    %v8886 = vadd.f32 %v8822, %v8402
    %v8887 = vadd.f32 %v8823, %v8403
    %v8888 = vadd.f32 %v8824, %v8404
    %v8889 = vadd.f32 %v8825, %v8405
    %v8890 = vadd.f32 %v8826, %v8406
    %v8891 = vadd.f32 %v8827, %v8407
    %v8892 = vadd.f32 %v8828, %v8408
    %v8893 = vadd.f32 %v8829, %v8409
    %v8894 = vadd.f32 %v8830, %v8410
    %v8895 = vadd.f32 %v8831, %v8411
    %v8896 = vadd.f32 %v8832, %v8412
    %v8897 = vadd.f32 %v8833, %v8413
    %v8898 = vadd.f32 %v8834, %v8414
    %v8899 = vadd.f32 %v8835, %v8415
    %v8900 = vadd.f32 %v8836, %v8416
    %v8901 = vadd.f32 %v8837, %v8417
    %v8902 = vadd.f32 %v8838, %v8418
    %v8903 = vadd.f32 %v8839, %v8419
    %v8904 = vadd.f32 %v8840, %v8420
    %v8905 = vadd.f32 %v8841, %v8421
    %v8906 = vadd.f32 %v8842, %v8422
    %v8907 = vadd.f32 %v8843, %v8423
    %v8908 = vadd.f32 %v8844, %v8424
    %v8909 = vadd.f32 %v8845, %v8425
    %v8910 = vadd.f32 %v8846, %v8426
    %v8911 = vadd.f32 %v8847, %v8427
    %v8912 = vadd.f32 %v8848, %v8428
    %v8913 = vadd.f32 %v8849, %v8429
    %v8914 = vadd.f32 %v8850, %v8430
    %v8915 = vadd.f32 %v8851, %v8431
    %v8916 = vadd.f32 %v8852, %v8432
    %v8917 = vadd.f32 %v8853, %v8433
    %v8918 = vadd.f32 %v8854, %v8434
    %v8919 = vadd.f32 %v8855, %v8435
    %v8920 = vadd.f32 %v8856, %v8436
    %v8921 = vadd.f32 %v8857, %v8437
    %8922 = vst.msk [vmem:[%s7] sm:$0xff] %vm231, %v8858
    %8923 = vst.msk [vmem:[%s7 + $0x8] sm:$0xff] %vm231, %v8859
    %8924 = vst.msk [vmem:[%s7 + $0x10] sm:$0xff] %vm231, %v8860
    %8925 = vst.msk [vmem:[%s7 + $0x18] sm:$0xff] %vm231, %v8861
    %8926 = vst.msk [vmem:[%s7 + $0x20] sm:$0xff] %vm231, %v8862
    %8927 = vst.msk [vmem:[%s7 + $0x28] sm:$0xff] %vm231, %v8863
    %8928 = vst.msk [vmem:[%s7 + $0x30] sm:$0xff] %vm231, %v8864
    %8929 = vst.msk [vmem:[%s7 + $0x38] sm:$0xff] %vm231, %v8865
    %8930 = vst.msk [vmem:[%s7 + $0x40] sm:$0xff] %vm231, %v8866
    %8931 = vst.msk [vmem:[%s7 + $0x48] sm:$0xff] %vm231, %v8867
    %8932 = vst.msk [vmem:[%s7 + $0x50] sm:$0xff] %vm231, %v8868
    %8933 = vst.msk [vmem:[%s7 + $0x58] sm:$0xff] %vm231, %v8869
    %8934 = vst.msk [vmem:[%s7 + $0x60] sm:$0xff] %vm231, %v8870
    %8935 = vst.msk [vmem:[%s7 + $0x68] sm:$0xff] %vm231, %v8871
    %8936 = vst.msk [vmem:[%s7 + $0x70] sm:$0xff] %vm231, %v8872
    %8937 = vst.msk [vmem:[%s7 + $0x78] sm:$0xff] %vm231, %v8873
    %8938 = vst.msk [vmem:[%s7 + $0x80] sm:$0xff] %vm231, %v8874
    %8939 = vst.msk [vmem:[%s7 + $0x88] sm:$0xff] %vm231, %v8875
    %8940 = vst.msk [vmem:[%s7 + $0x90] sm:$0xff] %vm231, %v8876
    %8941 = vst.msk [vmem:[%s7 + $0x98] sm:$0xff] %vm231, %v8877
    %8942 = vst.msk [vmem:[%s7 + $0xa0] sm:$0xff] %vm231, %v8878
    %8943 = vst.msk [vmem:[%s7 + $0xa8] sm:$0xff] %vm231, %v8879
    %8944 = vst.msk [vmem:[%s7 + $0xb0] sm:$0xff] %vm231, %v8880
    %8945 = vst.msk [vmem:[%s7 + $0xb8] sm:$0xff] %vm231, %v8881
    %8946 = vst.msk [vmem:[%s7 + $0xc0] sm:$0xff] %vm231, %v8882
    %8947 = vst.msk [vmem:[%s7 + $0xc8] sm:$0xff] %vm231, %v8883
    %8948 = vst.msk [vmem:[%s7 + $0xd0] sm:$0xff] %vm231, %v8884
    %8949 = vst.msk [vmem:[%s7 + $0xd8] sm:$0xff] %vm231, %v8885
    %8950 = vst.msk [vmem:[%s7 + $0xe0] sm:$0xff] %vm231, %v8886
    %8951 = vst.msk [vmem:[%s7 + $0xe8] sm:$0xff] %vm231, %v8887
    %8952 = vst.msk [vmem:[%s7 + $0xf0] sm:$0xff] %vm231, %v8888
    %8953 = vst.msk [vmem:[%s7 + $0xf8] sm:$0xff] %vm231, %v8889
    %8954 = vst.msk [vmem:[%s7 + $0x100] sm:$0xff] %vm231, %v8890
    %8955 = vst.msk [vmem:[%s7 + $0x108] sm:$0xff] %vm231, %v8891
    %8956 = vst.msk [vmem:[%s7 + $0x110] sm:$0xff] %vm231, %v8892
    %8957 = vst.msk [vmem:[%s7 + $0x118] sm:$0xff] %vm231, %v8893
    %8958 = vst.msk [vmem:[%s7 + $0x120] sm:$0xff] %vm231, %v8894
    %8959 = vst.msk [vmem:[%s7 + $0x128] sm:$0xff] %vm231, %v8895
    %8960 = vst.msk [vmem:[%s7 + $0x130] sm:$0xff] %vm231, %v8896
    %8961 = vst.msk [vmem:[%s7 + $0x138] sm:$0xff] %vm231, %v8897
    %8962 = vst.msk [vmem:[%s7 + $0x140] sm:$0xff] %vm231, %v8898
    %8963 = vst.msk [vmem:[%s7 + $0x148] sm:$0xff] %vm231, %v8899
    %8964 = vst.msk [vmem:[%s7 + $0x150] sm:$0xff] %vm231, %v8900
    %8965 = vst.msk [vmem:[%s7 + $0x158] sm:$0xff] %vm231, %v8901
    %8966 = vst.msk [vmem:[%s7 + $0x160] sm:$0xff] %vm231, %v8902
    %8967 = vst.msk [vmem:[%s7 + $0x168] sm:$0xff] %vm231, %v8903
    %8968 = vst.msk [vmem:[%s7 + $0x170] sm:$0xff] %vm231, %v8904
    %8969 = vst.msk [vmem:[%s7 + $0x178] sm:$0xff] %vm231, %v8905
    %8970 = vst.msk [vmem:[%s7 + $0x180] sm:$0xff] %vm231, %v8906
    %8971 = vst.msk [vmem:[%s7 + $0x188] sm:$0xff] %vm231, %v8907
    %8972 = vst.msk [vmem:[%s7 + $0x190] sm:$0xff] %vm231, %v8908
    %8973 = vst.msk [vmem:[%s7 + $0x198] sm:$0xff] %vm231, %v8909
    %8974 = vst.msk [vmem:[%s7 + $0x1a0] sm:$0xff] %vm231, %v8910
    %8975 = vst.msk [vmem:[%s7 + $0x1a8] sm:$0xff] %vm231, %v8911
    %8976 = vst.msk [vmem:[%s7 + $0x1b0] sm:$0xff] %vm231, %v8912
    %8977 = vst.msk [vmem:[%s7 + $0x1b8] sm:$0xff] %vm231, %v8913
    %8978 = vst.msk [vmem:[%s7 + $0x1c0] sm:$0xff] %vm231, %v8914
    %8979 = vst.msk [vmem:[%s7 + $0x1c8] sm:$0xff] %vm231, %v8915
    %8980 = vst.msk [vmem:[%s7 + $0x1d0] sm:$0xff] %vm231, %v8916
    %8981 = vst.msk [vmem:[%s7 + $0x1d8] sm:$0xff] %vm231, %v8917
    %8982 = vst.msk [vmem:[%s7 + $0x1e0] sm:$0xff] %vm231, %v8918
    %8983 = vst.msk [vmem:[%s7 + $0x1e8] sm:$0xff] %vm231, %v8919
    %8984 = vst.msk [vmem:[%s7 + $0x1f0] sm:$0xff] %vm231, %v8920
    %8985 = vst.msk [vmem:[%s7 + $0x1f8] sm:$0xff] %vm231, %v8921
    // Predicated region
    $region38: #{tpu_custom_call.1} parent=1 // pred_check
      _
    $region39: #{tpu_custom_call.1} parent=1 // pred_check_branch
      %8987 = sbr.rel (0) target = $region41
    $region40: #{tpu_custom_call.1} parent=1 // pred_region
      _
    $region41: #{tpu_custom_call.1} parent=1 // pred_fallthru
      _
    // Predicated region
    $region42: #{tpu_custom_call.1} parent=1 // pred_check
      _
    $region43: #{tpu_custom_call.1} parent=1 // pred_check_branch
      %8989 = sbr.rel (0) target = $region45
    $region44: #{tpu_custom_call.1} parent=1 // pred_region
      _
    $region45: #{tpu_custom_call.1} parent=1 // pred_fallthru
      _
    %8990 = vsyncpa [#allocation6], 1
    %8991 = vsyncpa [#allocation8], 1

</llo_original>
